<compile_context>
chip_gen: v7x
topology: tpu7x:2x2x1
jax: 0.10.0
libtpu: 0.0.40
codegen_flags: <defaults>
</compile_context>

<pallas_src>
import jax
import jax.numpy as jnp
import numpy as np
from jax.experimental import pallas as pl
from jax.experimental.pallas import tpu as pltpu

_EPS = 1e-5  # PyTorch InstanceNorm2d default eps


# ------------------------------ kernel helpers ------------------------------ #

def _reflect_pad_into(pad_ref, x3):
    """ReflectionPad2d(1): write the (H, W, Cp) value `x3`, padded, into the
    (H+2, W+2, Cp) VMEM scratch `pad_ref` (rows first, then columns — corners
    fall out of the column copies)."""
    H, W, _ = x3.shape
    pad_ref[1:H + 1, 1:W + 1, :] = x3                        # interior
    pad_ref[0:1, 1:W + 1, :] = x3[1:2]                       # top row    <- row 1
    pad_ref[H + 1:H + 2, 1:W + 1, :] = x3[H - 2:H - 1]       # bottom row <- row H-2
    left = pad_ref[:, 2:3, :]                                # padded col 2  == orig col 1
    right = pad_ref[:, W - 1:W, :]                           # padded col W-1 == orig col W-2
    pad_ref[:, 0:1, :] = left
    pad_ref[:, W + 1:W + 2, :] = right


def _conv3x3(pad_ref, patch_ref, w_ref):
    """3x3 VALID conv over the reflection-padded (H+2, W+2, Cp) bf16 scratch:
    VMEM-only im2col into `patch_ref` (HW, 9*Cp), then ONE MXU matmul against
    the (9*Cp, Cp) bf16 weight. Returns (HW, Cp) f32 (no bias: it would be
    cancelled by the following InstanceNorm anyway)."""
    Hp2, Wp2, Cp = pad_ref.shape
    H, W = Hp2 - 2, Wp2 - 2
    HW = H * W
    for t in range(9):                                       # static unroll, 9 taps
        kh, kw = divmod(t, 3)
        win = pad_ref[kh:kh + H, kw:kw + W, :]
        patch_ref[:, t * Cp:(t + 1) * Cp] = win.reshape(HW, Cp)
    return jnp.dot(patch_ref[...], w_ref[...], preferred_element_type=jnp.float32)


def _instance_norm(y2d, gamma_row, beta_row):
    """Per-channel instance norm over the flattened spatial axis (axis 0), f32."""
    mu = jnp.mean(y2d, axis=0, keepdims=True)
    var = jnp.mean(jnp.square(y2d - mu), axis=0, keepdims=True)
    return (y2d - mu) * jax.lax.rsqrt(var + _EPS) * gamma_row + beta_row


# --------------------------------- the kernel -------------------------------- #

def _residual_block_kernel(x_ref, w1_ref, g1_ref, be1_ref, w2_ref, g2_ref, be2_ref,
                           o_ref, pad_ref, patch_ref):
    """One sample per grid step; pads, im2col, both convs, both instance norms,
    ReLU and the residual add all stay in VMEM."""
    _, H, W, Cp = x_ref.shape
    HW = H * W

    # stage 1: reflect-pad(x) -> conv1 -> IN1 -> ReLU
    _reflect_pad_into(pad_ref, x_ref[0].astype(jnp.bfloat16))
    y1 = _conv3x3(pad_ref, patch_ref, w1_ref)
    h = jnp.maximum(_instance_norm(y1, g1_ref[...], be1_ref[...]), 0.0)

    # stage 2: reflect-pad(h) (scratch reused) -> conv2 -> IN2 -> + residual
    _reflect_pad_into(pad_ref, h.astype(jnp.bfloat16).reshape(H, W, Cp))
    y2 = _conv3x3(pad_ref, patch_ref, w2_ref)
    out = _instance_norm(y2, g2_ref[...], be2_ref[...]) + x_ref[0].reshape(HW, Cp)
    o_ref[0] = out.astype(o_ref.dtype)


# ---------------------------------- wrapper ---------------------------------- #

def _round_up(v, m):
    return ((v + m - 1) // m) * m


def residual_block(x_nchw, params):
    N, C, H, W = x_nchw.shape
    # Adaptive channel padding: lane-dense 128 only when C is already large;
    # small C (e.g. the C=4 test) pads just to a sublane multiple of 8.
    Cp = _round_up(C, 128) if C >= 128 else _round_up(C, 8)
    pad_c = Cp - C
    HW = H * W
    K = 9 * Cp

    # NCHW -> NHWC once (interface cost), zero-pad channels. Residual is read
    # from this exact f32 block inside the kernel.
    x_nhwc = jnp.transpose(x_nchw, (0, 2, 3, 1)).astype(jnp.float32)
    x_pc = jnp.pad(x_nhwc, ((0, 0), (0, 0), (0, 0), (0, pad_c)))

    def prep_w(w_oihw):
        # torch (Cout, Cin, kh, kw) -> (kh, kw, Cin, Cout) -> (9*Cp, Cp), bf16
        w = jnp.transpose(w_oihw, (2, 3, 1, 0))
        w = jnp.pad(w, ((0, 0), (0, 0), (0, pad_c), (0, pad_c)))
        return w.reshape(K, Cp).astype(jnp.bfloat16)

    def prep_v(v):
        return jnp.pad(v, (0, pad_c)).reshape(1, Cp).astype(jnp.float32)

    w1 = prep_w(params["conv1_w"])
    g1 = prep_v(params["in1_gamma"])
    be1 = prep_v(params["in1_beta"])
    w2 = prep_w(params["conv2_w"])
    g2 = prep_v(params["in2_gamma"])
    be2 = prep_v(params["in2_beta"])
    # NOTE: conv1_b / conv2_b are intentionally unused: a per-channel conv bias
    # is exactly removed by the InstanceNorm mean subtraction.

    x_spec = pl.BlockSpec((1, H, W, Cp), lambda n: (n, 0, 0, 0))
    w_spec = pl.BlockSpec((K, Cp), lambda n: (0, 0))
    vec_spec = pl.BlockSpec((1, Cp), lambda n: (0, 0))
    o_spec = pl.BlockSpec((1, HW, Cp), lambda n: (n, 0, 0))

    # Per-grid-step VMEM footprint -> explicit scoped-VMEM limit (clamped to
    # 64 MiB so it never exceeds v7x's smaller physical VMEM).
    est = (4 * HW * Cp * 4                  # double-buffered f32 in/out blocks
           + (H + 2) * (W + 2) * Cp * 2     # reflection-pad scratch (bf16)
           + HW * K * 2                     # im2col scratch (bf16)
           + 4 * K * Cp * 2                 # (double-buffered) weights
           + 8 * HW * Cp * 4)               # headroom for f32 temporaries
    vmem_limit = int(min(max(2 * est, 32 << 20), 64 << 20))

    out = pl.pallas_call(
        _residual_block_kernel,
        out_shape=jax.ShapeDtypeStruct((N, HW, Cp), jnp.float32),
        grid=(N,),
        in_specs=[x_spec, w_spec, vec_spec, vec_spec, w_spec, vec_spec, vec_spec],
        out_specs=o_spec,
        scratch_shapes=[pltpu.VMEM((H + 2, W + 2, Cp), jnp.bfloat16),  # pad buffer
                        pltpu.VMEM((HW, K), jnp.bfloat16)],            # im2col buffer
        compiler_params=pltpu.CompilerParams(
            dimension_semantics=("parallel",),
            vmem_limit_bytes=vmem_limit),
    )(x_pc, w1, g1, be1, w2, g2, be2)

    out_nhwc = out.reshape(N, H, W, Cp)[..., :C]
    return jnp.transpose(out_nhwc, (0, 3, 1, 2))


# ----------------------------- pure-JAX reference ----------------------------- #

def _reference(x, p):
    def refpad(t):
        return jnp.pad(t, ((0, 0), (0, 0), (1, 1), (1, 1)), mode="reflect")

    def conv(t, w, b):
        y = jax.lax.conv_general_dilated(
            refpad(t), w, (1, 1), "VALID",
            dimension_numbers=("NCHW", "OIHW", "NCHW"),
            precision=jax.lax.Precision.HIGHEST)
        return y + b[None, :, None, None]

    def inorm(t, g, be):
        mu = jnp.mean(t, axis=(2, 3), keepdims=True)
        var = jnp.mean(jnp.square(t - mu), axis=(2, 3), keepdims=True)
        return (t - mu) / jnp.sqrt(var + _EPS) * g[None, :, None, None] + be[None, :, None, None]

    h = jnp.maximum(inorm(conv(x, p["conv1_w"], p["conv1_b"]), p["in1_gamma"], p["in1_beta"]), 0.0)
    out = inorm(conv(h, p["conv2_w"], p["conv2_b"]), p["in2_gamma"], p["in2_beta"])
    return out + x


# ------------------------------------ main ------------------------------------ #

if __name__ == "__main__":
    N, C, H, W = 2, 4, 16, 16

    key = jax.random.PRNGKey(0)
    ks = jax.random.split(key, 9)
    params = {
        "conv1_w":   0.2 * jax.random.normal(ks[0], (C, C, 3, 3), jnp.float32),
        "conv1_b":   0.1 * jax.random.normal(ks[1], (C,), jnp.float32),
        "in1_gamma": jax.random.uniform(ks[2], (C,), jnp.float32, 0.5, 1.5),
        "in1_beta":  0.1 * jax.random.normal(ks[3], (C,), jnp.float32),
        "conv2_w":   0.2 * jax.random.normal(ks[4], (C, C, 3, 3), jnp.float32),
        "conv2_b":   0.1 * jax.random.normal(ks[5], (C,), jnp.float32),
        "in2_gamma": jax.random.uniform(ks[6], (C,), jnp.float32, 0.5, 1.5),
        "in2_beta":  0.1 * jax.random.normal(ks[7], (C,), jnp.float32),
    }
    x = jax.random.normal(ks[8], (N, C, H, W), jnp.float32)

    out = jax.block_until_ready(residual_block(x, params))
    ref = jax.block_until_ready(_reference(x, params))

    assert out.shape == (N, C, H, W), out.shape
    # bf16 matmul inputs / bf16 intermediate (f32 accumulation and f32 residual)
    # -> loosened tolerance vs the f32 HIGHEST reference.
    np.testing.assert_allclose(np.asarray(out), np.asarray(ref), rtol=5e-2, atol=5e-2)

    print("KERNEL_OK")
</pallas_src>

<mosaic_0001>
module attributes {stable_mosaic.version = 11 : i64} {
  func.func @_residual_block_kernel(%arg0: i32, %arg1: memref<1x16x16x8xf32, #tpu.memory_space<vmem>>, %arg2: memref<72x8xbf16, #tpu.memory_space<vmem>>, %arg3: memref<1x8xf32, #tpu.memory_space<vmem>>, %arg4: memref<1x8xf32, #tpu.memory_space<vmem>>, %arg5: memref<72x8xbf16, #tpu.memory_space<vmem>>, %arg6: memref<1x8xf32, #tpu.memory_space<vmem>>, %arg7: memref<1x8xf32, #tpu.memory_space<vmem>>, %arg8: memref<1x256x8xf32, #tpu.memory_space<vmem>>, %arg9: memref<18x18x8xbf16, #tpu.memory_space<vmem>>, %arg10: memref<256x72xbf16, #tpu.memory_space<vmem>>) attributes {dimension_semantics = [#tpu.dimension_semantics<parallel>], iteration_bounds = array<i64: 2>, scalar_prefetch = 0 : i64, scratch_operands = 2 : i64, tpu.core_type = #tpu.core_type<tc>, window_params = [{transform_indices = @transform_0, window_bounds = array<i64: 1, 16, 16, 8>}, {pipeline_mode = #tpu.pipeline_mode<synchronous>, transform_indices = @transform_1, window_bounds = array<i64: 72, 8>}, {pipeline_mode = #tpu.pipeline_mode<synchronous>, transform_indices = @transform_2, window_bounds = array<i64: 1, 8>}, {pipeline_mode = #tpu.pipeline_mode<synchronous>, transform_indices = @transform_3, window_bounds = array<i64: 1, 8>}, {pipeline_mode = #tpu.pipeline_mode<synchronous>, transform_indices = @transform_4, window_bounds = array<i64: 72, 8>}, {pipeline_mode = #tpu.pipeline_mode<synchronous>, transform_indices = @transform_5, window_bounds = array<i64: 1, 8>}, {pipeline_mode = #tpu.pipeline_mode<synchronous>, transform_indices = @transform_6, window_bounds = array<i64: 1, 8>}, {transform_indices = @transform_7, window_bounds = array<i64: 1, 256, 8>}]} {
    %c0 = arith.constant 0 : index
    %c0_0 = arith.constant 0 : index
    %c0_1 = arith.constant 0 : index
    %c0_2 = arith.constant 0 : index
    %0 = vector.load %arg1[%c0, %c0_0, %c0_1, %c0_2] : memref<1x16x16x8xf32, #tpu.memory_space<vmem>>, vector<1x16x16x8xf32>
    %1 = vector.shape_cast %0 : vector<1x16x16x8xf32> to vector<16x16x8xf32>
    %2 = arith.truncf %1 : vector<16x16x8xf32> to vector<16x16x8xbf16>
    %c1 = arith.constant 1 : index
    %c1_3 = arith.constant 1 : index
    %c0_4 = arith.constant 0 : index
    %3 = vector.load %arg9[%c1, %c1_3, %c0_4] : memref<18x18x8xbf16, #tpu.memory_space<vmem>>, vector<16x16x8xbf16>
    tpu.vector_store %arg9[%c1, %c1_3, %c0_4], %2 {strides = array<i32>} : memref<18x18x8xbf16, #tpu.memory_space<vmem>>, vector<16x16x8xbf16>,
    %4 = vector.extract_strided_slice %2 {offsets = [1, 0, 0], sizes = [1, 16, 8], strides = [1, 1, 1]} : vector<16x16x8xbf16> to vector<1x16x8xbf16>
    %c0_5 = arith.constant 0 : index
    %c1_6 = arith.constant 1 : index
    %c0_7 = arith.constant 0 : index
    %5 = vector.load %arg9[%c0_5, %c1_6, %c0_7] : memref<18x18x8xbf16, #tpu.memory_space<vmem>>, vector<1x16x8xbf16>
    tpu.vector_store %arg9[%c0_5, %c1_6, %c0_7], %4 {strides = array<i32>} : memref<18x18x8xbf16, #tpu.memory_space<vmem>>, vector<1x16x8xbf16>,
    %6 = vector.extract_strided_slice %2 {offsets = [14, 0, 0], sizes = [1, 16, 8], strides = [1, 1, 1]} : vector<16x16x8xbf16> to vector<1x16x8xbf16>
    %c17 = arith.constant 17 : index
    %c1_8 = arith.constant 1 : index
    %c0_9 = arith.constant 0 : index
    %7 = vector.load %arg9[%c17, %c1_8, %c0_9] : memref<18x18x8xbf16, #tpu.memory_space<vmem>>, vector<1x16x8xbf16>
    tpu.vector_store %arg9[%c17, %c1_8, %c0_9], %6 {strides = array<i32>} : memref<18x18x8xbf16, #tpu.memory_space<vmem>>, vector<1x16x8xbf16>,
    %c0_10 = arith.constant 0 : index
    %c2 = arith.constant 2 : index
    %c0_11 = arith.constant 0 : index
    %8 = vector.load %arg9[%c0_10, %c2, %c0_11] : memref<18x18x8xbf16, #tpu.memory_space<vmem>>, vector<18x1x8xbf16>
    %c0_12 = arith.constant 0 : index
    %c15 = arith.constant 15 : index
    %c0_13 = arith.constant 0 : index
    %9 = vector.load %arg9[%c0_12, %c15, %c0_13] : memref<18x18x8xbf16, #tpu.memory_space<vmem>>, vector<18x1x8xbf16>
    %c0_14 = arith.constant 0 : index
    %c0_15 = arith.constant 0 : index
    %c0_16 = arith.constant 0 : index
    %10 = vector.load %arg9[%c0_14, %c0_15, %c0_16] : memref<18x18x8xbf16, #tpu.memory_space<vmem>>, vector<18x1x8xbf16>
    tpu.vector_store %arg9[%c0_14, %c0_15, %c0_16], %8 {strides = array<i32>} : memref<18x18x8xbf16, #tpu.memory_space<vmem>>, vector<18x1x8xbf16>,
    %c0_17 = arith.constant 0 : index
    %c17_18 = arith.constant 17 : index
    %c0_19 = arith.constant 0 : index
    %11 = vector.load %arg9[%c0_17, %c17_18, %c0_19] : memref<18x18x8xbf16, #tpu.memory_space<vmem>>, vector<18x1x8xbf16>
    tpu.vector_store %arg9[%c0_17, %c17_18, %c0_19], %9 {strides = array<i32>} : memref<18x18x8xbf16, #tpu.memory_space<vmem>>, vector<18x1x8xbf16>,
    %c0_20 = arith.constant 0 : index
    %c0_21 = arith.constant 0 : index
    %c0_22 = arith.constant 0 : index
    %12 = vector.load %arg9[%c0_20, %c0_21, %c0_22] : memref<18x18x8xbf16, #tpu.memory_space<vmem>>, vector<16x16x8xbf16>
    %13 = vector.shape_cast %12 : vector<16x16x8xbf16> to vector<256x8xbf16>
    %c0_23 = arith.constant 0 : index
    %c0_24 = arith.constant 0 : index
    %14 = vector.load %arg10[%c0_23, %c0_24] : memref<256x72xbf16, #tpu.memory_space<vmem>>, vector<256x8xbf16>
    tpu.vector_store %arg10[%c0_23, %c0_24], %13 {strides = array<i32>} : memref<256x72xbf16, #tpu.memory_space<vmem>>, vector<256x8xbf16>,
    %c0_25 = arith.constant 0 : index
    %c1_26 = arith.constant 1 : index
    %c0_27 = arith.constant 0 : index
    %15 = vector.load %arg9[%c0_25, %c1_26, %c0_27] : memref<18x18x8xbf16, #tpu.memory_space<vmem>>, vector<16x16x8xbf16>
    %16 = vector.shape_cast %15 : vector<16x16x8xbf16> to vector<256x8xbf16>
    %c0_28 = arith.constant 0 : index
    %c8 = arith.constant 8 : index
    %17 = vector.load %arg10[%c0_28, %c8] : memref<256x72xbf16, #tpu.memory_space<vmem>>, vector<256x8xbf16>
    tpu.vector_store %arg10[%c0_28, %c8], %16 {strides = array<i32>} : memref<256x72xbf16, #tpu.memory_space<vmem>>, vector<256x8xbf16>,
    %c0_29 = arith.constant 0 : index
    %c2_30 = arith.constant 2 : index
    %c0_31 = arith.constant 0 : index
    %18 = vector.load %arg9[%c0_29, %c2_30, %c0_31] : memref<18x18x8xbf16, #tpu.memory_space<vmem>>, vector<16x16x8xbf16>
    %19 = vector.shape_cast %18 : vector<16x16x8xbf16> to vector<256x8xbf16>
    %c0_32 = arith.constant 0 : index
    %c16 = arith.constant 16 : index
    %20 = vector.load %arg10[%c0_32, %c16] : memref<256x72xbf16, #tpu.memory_space<vmem>>, vector<256x8xbf16>
    tpu.vector_store %arg10[%c0_32, %c16], %19 {strides = array<i32>} : memref<256x72xbf16, #tpu.memory_space<vmem>>, vector<256x8xbf16>,
    %c1_33 = arith.constant 1 : index
    %c0_34 = arith.constant 0 : index
    %c0_35 = arith.constant 0 : index
    %21 = vector.load %arg9[%c1_33, %c0_34, %c0_35] : memref<18x18x8xbf16, #tpu.memory_space<vmem>>, vector<16x16x8xbf16>
    %22 = vector.shape_cast %21 : vector<16x16x8xbf16> to vector<256x8xbf16>
    %c0_36 = arith.constant 0 : index
    %c24 = arith.constant 24 : index
    %23 = vector.load %arg10[%c0_36, %c24] : memref<256x72xbf16, #tpu.memory_space<vmem>>, vector<256x8xbf16>
    tpu.vector_store %arg10[%c0_36, %c24], %22 {strides = array<i32>} : memref<256x72xbf16, #tpu.memory_space<vmem>>, vector<256x8xbf16>,
    %c1_37 = arith.constant 1 : index
    %c1_38 = arith.constant 1 : index
    %c0_39 = arith.constant 0 : index
    %24 = vector.load %arg9[%c1_37, %c1_38, %c0_39] : memref<18x18x8xbf16, #tpu.memory_space<vmem>>, vector<16x16x8xbf16>
    %25 = vector.shape_cast %24 : vector<16x16x8xbf16> to vector<256x8xbf16>
    %c0_40 = arith.constant 0 : index
    %c32 = arith.constant 32 : index
    %26 = vector.load %arg10[%c0_40, %c32] : memref<256x72xbf16, #tpu.memory_space<vmem>>, vector<256x8xbf16>
    tpu.vector_store %arg10[%c0_40, %c32], %25 {strides = array<i32>} : memref<256x72xbf16, #tpu.memory_space<vmem>>, vector<256x8xbf16>,
    %c1_41 = arith.constant 1 : index
    %c2_42 = arith.constant 2 : index
    %c0_43 = arith.constant 0 : index
    %27 = vector.load %arg9[%c1_41, %c2_42, %c0_43] : memref<18x18x8xbf16, #tpu.memory_space<vmem>>, vector<16x16x8xbf16>
    %28 = vector.shape_cast %27 : vector<16x16x8xbf16> to vector<256x8xbf16>
    %c0_44 = arith.constant 0 : index
    %c40 = arith.constant 40 : index
    %29 = vector.load %arg10[%c0_44, %c40] : memref<256x72xbf16, #tpu.memory_space<vmem>>, vector<256x8xbf16>
    tpu.vector_store %arg10[%c0_44, %c40], %28 {strides = array<i32>} : memref<256x72xbf16, #tpu.memory_space<vmem>>, vector<256x8xbf16>,
    %c2_45 = arith.constant 2 : index
    %c0_46 = arith.constant 0 : index
    %c0_47 = arith.constant 0 : index
    %30 = vector.load %arg9[%c2_45, %c0_46, %c0_47] : memref<18x18x8xbf16, #tpu.memory_space<vmem>>, vector<16x16x8xbf16>
    %31 = vector.shape_cast %30 : vector<16x16x8xbf16> to vector<256x8xbf16>
    %c0_48 = arith.constant 0 : index
    %c48 = arith.constant 48 : index
    %32 = vector.load %arg10[%c0_48, %c48] : memref<256x72xbf16, #tpu.memory_space<vmem>>, vector<256x8xbf16>
    tpu.vector_store %arg10[%c0_48, %c48], %31 {strides = array<i32>} : memref<256x72xbf16, #tpu.memory_space<vmem>>, vector<256x8xbf16>,
    %c2_49 = arith.constant 2 : index
    %c1_50 = arith.constant 1 : index
    %c0_51 = arith.constant 0 : index
    %33 = vector.load %arg9[%c2_49, %c1_50, %c0_51] : memref<18x18x8xbf16, #tpu.memory_space<vmem>>, vector<16x16x8xbf16>
    %34 = vector.shape_cast %33 : vector<16x16x8xbf16> to vector<256x8xbf16>
    %c0_52 = arith.constant 0 : index
    %c56 = arith.constant 56 : index
    %35 = vector.load %arg10[%c0_52, %c56] : memref<256x72xbf16, #tpu.memory_space<vmem>>, vector<256x8xbf16>
    tpu.vector_store %arg10[%c0_52, %c56], %34 {strides = array<i32>} : memref<256x72xbf16, #tpu.memory_space<vmem>>, vector<256x8xbf16>,
    %c2_53 = arith.constant 2 : index
    %c2_54 = arith.constant 2 : index
    %c0_55 = arith.constant 0 : index
    %36 = vector.load %arg9[%c2_53, %c2_54, %c0_55] : memref<18x18x8xbf16, #tpu.memory_space<vmem>>, vector<16x16x8xbf16>
    %37 = vector.shape_cast %36 : vector<16x16x8xbf16> to vector<256x8xbf16>
    %c0_56 = arith.constant 0 : index
    %c64 = arith.constant 64 : index
    %38 = vector.load %arg10[%c0_56, %c64] : memref<256x72xbf16, #tpu.memory_space<vmem>>, vector<256x8xbf16>
    tpu.vector_store %arg10[%c0_56, %c64], %37 {strides = array<i32>} : memref<256x72xbf16, #tpu.memory_space<vmem>>, vector<256x8xbf16>,
    %c0_57 = arith.constant 0 : index
    %c0_58 = arith.constant 0 : index
    %39 = vector.load %arg10[%c0_57, %c0_58] : memref<256x72xbf16, #tpu.memory_space<vmem>>, vector<256x72xbf16>
    %c0_59 = arith.constant 0 : index
    %c0_60 = arith.constant 0 : index
    %40 = vector.load %arg2[%c0_59, %c0_60] : memref<72x8xbf16, #tpu.memory_space<vmem>>, vector<72x8xbf16>
    %cst = arith.constant dense<0.000000e+00> : vector<256x8xf32>
    %41 = tpu.matmul %39, %40, %cst {dimension_numbers = #tpu.dot_dimension_numbers<[1], [0], [0], [1], [0, 0, 1, 1], [], []>} : vector<256x72xbf16>, vector<72x8xbf16>, vector<256x8xf32> -> vector<256x8xf32>
    %c0_61 = arith.constant 0 : index
    %c0_62 = arith.constant 0 : index
    %42 = vector.load %arg3[%c0_61, %c0_62] : memref<1x8xf32, #tpu.memory_space<vmem>>, vector<1x8xf32>
    %c0_63 = arith.constant 0 : index
    %c0_64 = arith.constant 0 : index
    %43 = vector.load %arg4[%c0_63, %c0_64] : memref<1x8xf32, #tpu.memory_space<vmem>>, vector<1x8xf32>
    %cst_65 = arith.constant dense<0.000000e+00> : vector<8xf32>
    %44 = vector.multi_reduction <add>, %41, %cst_65 [0] : vector<256x8xf32> to vector<8xf32>
    %45 = vector.shape_cast %44 : vector<8xf32> to vector<1x8xf32>
    %cst_66 = arith.constant 2.560000e+02 : f32
    %46 = vector.broadcast %cst_66 : f32 to vector<1x8xf32>
    %47 = arith.divf %45, %46 : vector<1x8xf32>
    %48 = vector.broadcast %47 : vector<1x8xf32> to vector<256x8xf32>
    %49 = arith.subf %41, %48 : vector<256x8xf32>
    %50 = arith.mulf %49, %49 : vector<256x8xf32>
    %cst_67 = arith.constant dense<0.000000e+00> : vector<8xf32>
    %51 = vector.multi_reduction <add>, %50, %cst_67 [0] : vector<256x8xf32> to vector<8xf32>
    %52 = vector.shape_cast %51 : vector<8xf32> to vector<1x8xf32>
    %cst_68 = arith.constant 2.560000e+02 : f32
    %53 = vector.broadcast %cst_68 : f32 to vector<1x8xf32>
    %54 = arith.divf %52, %53 : vector<1x8xf32>
    %55 = vector.broadcast %47 : vector<1x8xf32> to vector<256x8xf32>
    %56 = arith.subf %41, %55 : vector<256x8xf32>
    %cst_69 = arith.constant 9.99999974E-6 : f32
    %57 = vector.broadcast %cst_69 : f32 to vector<1x8xf32>
    %58 = arith.addf %54, %57 : vector<1x8xf32>
    %59 = math.rsqrt %58 : vector<1x8xf32>
    %60 = vector.broadcast %59 : vector<1x8xf32> to vector<256x8xf32>
    %61 = arith.mulf %56, %60 : vector<256x8xf32>
    %62 = vector.broadcast %42 : vector<1x8xf32> to vector<256x8xf32>
    %63 = arith.mulf %61, %62 : vector<256x8xf32>
    %64 = vector.broadcast %43 : vector<1x8xf32> to vector<256x8xf32>
    %65 = arith.addf %63, %64 : vector<256x8xf32>
    %cst_70 = arith.constant 0.000000e+00 : f32
    %66 = vector.broadcast %cst_70 : f32 to vector<256x8xf32>
    %67 = arith.maximumf %65, %66 : vector<256x8xf32>
    %68 = arith.truncf %67 : vector<256x8xf32> to vector<256x8xbf16>
    %69 = vector.shape_cast %68 : vector<256x8xbf16> to vector<16x16x8xbf16>
    %c1_71 = arith.constant 1 : index
    %c1_72 = arith.constant 1 : index
    %c0_73 = arith.constant 0 : index
    %70 = vector.load %arg9[%c1_71, %c1_72, %c0_73] : memref<18x18x8xbf16, #tpu.memory_space<vmem>>, vector<16x16x8xbf16>
    tpu.vector_store %arg9[%c1_71, %c1_72, %c0_73], %69 {strides = array<i32>} : memref<18x18x8xbf16, #tpu.memory_space<vmem>>, vector<16x16x8xbf16>,
    %71 = vector.extract_strided_slice %69 {offsets = [1, 0, 0], sizes = [1, 16, 8], strides = [1, 1, 1]} : vector<16x16x8xbf16> to vector<1x16x8xbf16>
    %c0_74 = arith.constant 0 : index
    %c1_75 = arith.constant 1 : index
    %c0_76 = arith.constant 0 : index
    %72 = vector.load %arg9[%c0_74, %c1_75, %c0_76] : memref<18x18x8xbf16, #tpu.memory_space<vmem>>, vector<1x16x8xbf16>
    tpu.vector_store %arg9[%c0_74, %c1_75, %c0_76], %71 {strides = array<i32>} : memref<18x18x8xbf16, #tpu.memory_space<vmem>>, vector<1x16x8xbf16>,
    %73 = vector.extract_strided_slice %69 {offsets = [14, 0, 0], sizes = [1, 16, 8], strides = [1, 1, 1]} : vector<16x16x8xbf16> to vector<1x16x8xbf16>
    %c17_77 = arith.constant 17 : index
    %c1_78 = arith.constant 1 : index
    %c0_79 = arith.constant 0 : index
    %74 = vector.load %arg9[%c17_77, %c1_78, %c0_79] : memref<18x18x8xbf16, #tpu.memory_space<vmem>>, vector<1x16x8xbf16>
    tpu.vector_store %arg9[%c17_77, %c1_78, %c0_79], %73 {strides = array<i32>} : memref<18x18x8xbf16, #tpu.memory_space<vmem>>, vector<1x16x8xbf16>,
    %c0_80 = arith.constant 0 : index
    %c2_81 = arith.constant 2 : index
    %c0_82 = arith.constant 0 : index
    %75 = vector.load %arg9[%c0_80, %c2_81, %c0_82] : memref<18x18x8xbf16, #tpu.memory_space<vmem>>, vector<18x1x8xbf16>
    %c0_83 = arith.constant 0 : index
    %c15_84 = arith.constant 15 : index
    %c0_85 = arith.constant 0 : index
    %76 = vector.load %arg9[%c0_83, %c15_84, %c0_85] : memref<18x18x8xbf16, #tpu.memory_space<vmem>>, vector<18x1x8xbf16>
    %c0_86 = arith.constant 0 : index
    %c0_87 = arith.constant 0 : index
    %c0_88 = arith.constant 0 : index
    %77 = vector.load %arg9[%c0_86, %c0_87, %c0_88] : memref<18x18x8xbf16, #tpu.memory_space<vmem>>, vector<18x1x8xbf16>
    tpu.vector_store %arg9[%c0_86, %c0_87, %c0_88], %75 {strides = array<i32>} : memref<18x18x8xbf16, #tpu.memory_space<vmem>>, vector<18x1x8xbf16>,
    %c0_89 = arith.constant 0 : index
    %c17_90 = arith.constant 17 : index
    %c0_91 = arith.constant 0 : index
    %78 = vector.load %arg9[%c0_89, %c17_90, %c0_91] : memref<18x18x8xbf16, #tpu.memory_space<vmem>>, vector<18x1x8xbf16>
    tpu.vector_store %arg9[%c0_89, %c17_90, %c0_91], %76 {strides = array<i32>} : memref<18x18x8xbf16, #tpu.memory_space<vmem>>, vector<18x1x8xbf16>,
    %c0_92 = arith.constant 0 : index
    %c0_93 = arith.constant 0 : index
    %c0_94 = arith.constant 0 : index
    %79 = vector.load %arg9[%c0_92, %c0_93, %c0_94] : memref<18x18x8xbf16, #tpu.memory_space<vmem>>, vector<16x16x8xbf16>
    %80 = vector.shape_cast %79 : vector<16x16x8xbf16> to vector<256x8xbf16>
    %c0_95 = arith.constant 0 : index
    %c0_96 = arith.constant 0 : index
    %81 = vector.load %arg10[%c0_95, %c0_96] : memref<256x72xbf16, #tpu.memory_space<vmem>>, vector<256x8xbf16>
    tpu.vector_store %arg10[%c0_95, %c0_96], %80 {strides = array<i32>} : memref<256x72xbf16, #tpu.memory_space<vmem>>, vector<256x8xbf16>,
    %c0_97 = arith.constant 0 : index
    %c1_98 = arith.constant 1 : index
    %c0_99 = arith.constant 0 : index
    %82 = vector.load %arg9[%c0_97, %c1_98, %c0_99] : memref<18x18x8xbf16, #tpu.memory_space<vmem>>, vector<16x16x8xbf16>
    %83 = vector.shape_cast %82 : vector<16x16x8xbf16> to vector<256x8xbf16>
    %c0_100 = arith.constant 0 : index
    %c8_101 = arith.constant 8 : index
    %84 = vector.load %arg10[%c0_100, %c8_101] : memref<256x72xbf16, #tpu.memory_space<vmem>>, vector<256x8xbf16>
    tpu.vector_store %arg10[%c0_100, %c8_101], %83 {strides = array<i32>} : memref<256x72xbf16, #tpu.memory_space<vmem>>, vector<256x8xbf16>,
    %c0_102 = arith.constant 0 : index
    %c2_103 = arith.constant 2 : index
    %c0_104 = arith.constant 0 : index
    %85 = vector.load %arg9[%c0_102, %c2_103, %c0_104] : memref<18x18x8xbf16, #tpu.memory_space<vmem>>, vector<16x16x8xbf16>
    %86 = vector.shape_cast %85 : vector<16x16x8xbf16> to vector<256x8xbf16>
    %c0_105 = arith.constant 0 : index
    %c16_106 = arith.constant 16 : index
    %87 = vector.load %arg10[%c0_105, %c16_106] : memref<256x72xbf16, #tpu.memory_space<vmem>>, vector<256x8xbf16>
    tpu.vector_store %arg10[%c0_105, %c16_106], %86 {strides = array<i32>} : memref<256x72xbf16, #tpu.memory_space<vmem>>, vector<256x8xbf16>,
    %c1_107 = arith.constant 1 : index
    %c0_108 = arith.constant 0 : index
    %c0_109 = arith.constant 0 : index
    %88 = vector.load %arg9[%c1_107, %c0_108, %c0_109] : memref<18x18x8xbf16, #tpu.memory_space<vmem>>, vector<16x16x8xbf16>
    %89 = vector.shape_cast %88 : vector<16x16x8xbf16> to vector<256x8xbf16>
    %c0_110 = arith.constant 0 : index
    %c24_111 = arith.constant 24 : index
    %90 = vector.load %arg10[%c0_110, %c24_111] : memref<256x72xbf16, #tpu.memory_space<vmem>>, vector<256x8xbf16>
    tpu.vector_store %arg10[%c0_110, %c24_111], %89 {strides = array<i32>} : memref<256x72xbf16, #tpu.memory_space<vmem>>, vector<256x8xbf16>,
    %c1_112 = arith.constant 1 : index
    %c1_113 = arith.constant 1 : index
    %c0_114 = arith.constant 0 : index
    %91 = vector.load %arg9[%c1_112, %c1_113, %c0_114] : memref<18x18x8xbf16, #tpu.memory_space<vmem>>, vector<16x16x8xbf16>
    %92 = vector.shape_cast %91 : vector<16x16x8xbf16> to vector<256x8xbf16>
    %c0_115 = arith.constant 0 : index
    %c32_116 = arith.constant 32 : index
    %93 = vector.load %arg10[%c0_115, %c32_116] : memref<256x72xbf16, #tpu.memory_space<vmem>>, vector<256x8xbf16>
    tpu.vector_store %arg10[%c0_115, %c32_116], %92 {strides = array<i32>} : memref<256x72xbf16, #tpu.memory_space<vmem>>, vector<256x8xbf16>,
    %c1_117 = arith.constant 1 : index
    %c2_118 = arith.constant 2 : index
    %c0_119 = arith.constant 0 : index
    %94 = vector.load %arg9[%c1_117, %c2_118, %c0_119] : memref<18x18x8xbf16, #tpu.memory_space<vmem>>, vector<16x16x8xbf16>
    %95 = vector.shape_cast %94 : vector<16x16x8xbf16> to vector<256x8xbf16>
    %c0_120 = arith.constant 0 : index
    %c40_121 = arith.constant 40 : index
    %96 = vector.load %arg10[%c0_120, %c40_121] : memref<256x72xbf16, #tpu.memory_space<vmem>>, vector<256x8xbf16>
    tpu.vector_store %arg10[%c0_120, %c40_121], %95 {strides = array<i32>} : memref<256x72xbf16, #tpu.memory_space<vmem>>, vector<256x8xbf16>,
    %c2_122 = arith.constant 2 : index
    %c0_123 = arith.constant 0 : index
    %c0_124 = arith.constant 0 : index
    %97 = vector.load %arg9[%c2_122, %c0_123, %c0_124] : memref<18x18x8xbf16, #tpu.memory_space<vmem>>, vector<16x16x8xbf16>
    %98 = vector.shape_cast %97 : vector<16x16x8xbf16> to vector<256x8xbf16>
    %c0_125 = arith.constant 0 : index
    %c48_126 = arith.constant 48 : index
    %99 = vector.load %arg10[%c0_125, %c48_126] : memref<256x72xbf16, #tpu.memory_space<vmem>>, vector<256x8xbf16>
    tpu.vector_store %arg10[%c0_125, %c48_126], %98 {strides = array<i32>} : memref<256x72xbf16, #tpu.memory_space<vmem>>, vector<256x8xbf16>,
    %c2_127 = arith.constant 2 : index
    %c1_128 = arith.constant 1 : index
    %c0_129 = arith.constant 0 : index
    %100 = vector.load %arg9[%c2_127, %c1_128, %c0_129] : memref<18x18x8xbf16, #tpu.memory_space<vmem>>, vector<16x16x8xbf16>
    %101 = vector.shape_cast %100 : vector<16x16x8xbf16> to vector<256x8xbf16>
    %c0_130 = arith.constant 0 : index
    %c56_131 = arith.constant 56 : index
    %102 = vector.load %arg10[%c0_130, %c56_131] : memref<256x72xbf16, #tpu.memory_space<vmem>>, vector<256x8xbf16>
    tpu.vector_store %arg10[%c0_130, %c56_131], %101 {strides = array<i32>} : memref<256x72xbf16, #tpu.memory_space<vmem>>, vector<256x8xbf16>,
    %c2_132 = arith.constant 2 : index
    %c2_133 = arith.constant 2 : index
    %c0_134 = arith.constant 0 : index
    %103 = vector.load %arg9[%c2_132, %c2_133, %c0_134] : memref<18x18x8xbf16, #tpu.memory_space<vmem>>, vector<16x16x8xbf16>
    %104 = vector.shape_cast %103 : vector<16x16x8xbf16> to vector<256x8xbf16>
    %c0_135 = arith.constant 0 : index
    %c64_136 = arith.constant 64 : index
    %105 = vector.load %arg10[%c0_135, %c64_136] : memref<256x72xbf16, #tpu.memory_space<vmem>>, vector<256x8xbf16>
    tpu.vector_store %arg10[%c0_135, %c64_136], %104 {strides = array<i32>} : memref<256x72xbf16, #tpu.memory_space<vmem>>, vector<256x8xbf16>,
    %c0_137 = arith.constant 0 : index
    %c0_138 = arith.constant 0 : index
    %106 = vector.load %arg10[%c0_137, %c0_138] : memref<256x72xbf16, #tpu.memory_space<vmem>>, vector<256x72xbf16>
    %c0_139 = arith.constant 0 : index
    %c0_140 = arith.constant 0 : index
    %107 = vector.load %arg5[%c0_139, %c0_140] : memref<72x8xbf16, #tpu.memory_space<vmem>>, vector<72x8xbf16>
    %cst_141 = arith.constant dense<0.000000e+00> : vector<256x8xf32>
    %108 = tpu.matmul %106, %107, %cst_141 {dimension_numbers = #tpu.dot_dimension_numbers<[1], [0], [0], [1], [0, 0, 1, 1], [], []>} : vector<256x72xbf16>, vector<72x8xbf16>, vector<256x8xf32> -> vector<256x8xf32>
    %c0_142 = arith.constant 0 : index
    %c0_143 = arith.constant 0 : index
    %109 = vector.load %arg6[%c0_142, %c0_143] : memref<1x8xf32, #tpu.memory_space<vmem>>, vector<1x8xf32>
    %c0_144 = arith.constant 0 : index
    %c0_145 = arith.constant 0 : index
    %110 = vector.load %arg7[%c0_144, %c0_145] : memref<1x8xf32, #tpu.memory_space<vmem>>, vector<1x8xf32>
    %cst_146 = arith.constant dense<0.000000e+00> : vector<8xf32>
    %111 = vector.multi_reduction <add>, %108, %cst_146 [0] : vector<256x8xf32> to vector<8xf32>
    %112 = vector.shape_cast %111 : vector<8xf32> to vector<1x8xf32>
    %cst_147 = arith.constant 2.560000e+02 : f32
    %113 = vector.broadcast %cst_147 : f32 to vector<1x8xf32>
    %114 = arith.divf %112, %113 : vector<1x8xf32>
    %115 = vector.broadcast %114 : vector<1x8xf32> to vector<256x8xf32>
    %116 = arith.subf %108, %115 : vector<256x8xf32>
    %117 = arith.mulf %116, %116 : vector<256x8xf32>
    %cst_148 = arith.constant dense<0.000000e+00> : vector<8xf32>
    %118 = vector.multi_reduction <add>, %117, %cst_148 [0] : vector<256x8xf32> to vector<8xf32>
    %119 = vector.shape_cast %118 : vector<8xf32> to vector<1x8xf32>
    %cst_149 = arith.constant 2.560000e+02 : f32
    %120 = vector.broadcast %cst_149 : f32 to vector<1x8xf32>
    %121 = arith.divf %119, %120 : vector<1x8xf32>
    %122 = vector.broadcast %114 : vector<1x8xf32> to vector<256x8xf32>
    %123 = arith.subf %108, %122 : vector<256x8xf32>
    %cst_150 = arith.constant 9.99999974E-6 : f32
    %124 = vector.broadcast %cst_150 : f32 to vector<1x8xf32>
    %125 = arith.addf %121, %124 : vector<1x8xf32>
    %126 = math.rsqrt %125 : vector<1x8xf32>
    %127 = vector.broadcast %126 : vector<1x8xf32> to vector<256x8xf32>
    %128 = arith.mulf %123, %127 : vector<256x8xf32>
    %129 = vector.broadcast %109 : vector<1x8xf32> to vector<256x8xf32>
    %130 = arith.mulf %128, %129 : vector<256x8xf32>
    %131 = vector.broadcast %110 : vector<1x8xf32> to vector<256x8xf32>
    %132 = arith.addf %130, %131 : vector<256x8xf32>
    %c0_151 = arith.constant 0 : index
    %c0_152 = arith.constant 0 : index
    %c0_153 = arith.constant 0 : index
    %c0_154 = arith.constant 0 : index
    %133 = vector.load %arg1[%c0_151, %c0_152, %c0_153, %c0_154] : memref<1x16x16x8xf32, #tpu.memory_space<vmem>>, vector<1x16x16x8xf32>
    %134 = vector.shape_cast %133 : vector<1x16x16x8xf32> to vector<16x16x8xf32>
    %135 = vector.shape_cast %134 : vector<16x16x8xf32> to vector<256x8xf32>
    %136 = arith.addf %132, %135 : vector<256x8xf32>
    %c0_155 = arith.constant 0 : index
    %c0_156 = arith.constant 0 : index
    %c0_157 = arith.constant 0 : index
    %137 = vector.load %arg8[%c0_155, %c0_156, %c0_157] : memref<1x256x8xf32, #tpu.memory_space<vmem>>, vector<1x256x8xf32>
    %138 = vector.shape_cast %137 : vector<1x256x8xf32> to vector<256x8xf32>
    %139 = vector.shape_cast %136 : vector<256x8xf32> to vector<1x256x8xf32>
    tpu.vector_store %arg8[%c0_155, %c0_156, %c0_157], %139 {strides = array<i32>} : memref<1x256x8xf32, #tpu.memory_space<vmem>>, vector<1x256x8xf32>,
    return
  }
  func.func @transform_0(%arg0: i32) -> (i32, i32, i32, i32) {
    %c0_i32 = arith.constant 0 : i32
    %c0_i32_0 = arith.constant 0 : i32
    %c0_i32_1 = arith.constant 0 : i32
    %c0_i32_2 = arith.constant 0 : i32
    return %arg0, %c0_i32, %c0_i32_0, %c0_i32_1 : i32, i32, i32, i32
  }
  func.func @transform_1(%arg0: i32) -> (i32, i32) {
    %c0_i32 = arith.constant 0 : i32
    %c0_i32_0 = arith.constant 0 : i32
    %c0_i32_1 = arith.constant 0 : i32
    return %c0_i32, %c0_i32_0 : i32, i32
  }
  func.func @transform_2(%arg0: i32) -> (i32, i32) {
    %c0_i32 = arith.constant 0 : i32
    %c0_i32_0 = arith.constant 0 : i32
    %c0_i32_1 = arith.constant 0 : i32
    return %c0_i32, %c0_i32_0 : i32, i32
  }
  func.func @transform_3(%arg0: i32) -> (i32, i32) {
    %c0_i32 = arith.constant 0 : i32
    %c0_i32_0 = arith.constant 0 : i32
    %c0_i32_1 = arith.constant 0 : i32
    return %c0_i32, %c0_i32_0 : i32, i32
  }
  func.func @transform_4(%arg0: i32) -> (i32, i32) {
    %c0_i32 = arith.constant 0 : i32
    %c0_i32_0 = arith.constant 0 : i32
    %c0_i32_1 = arith.constant 0 : i32
    return %c0_i32, %c0_i32_0 : i32, i32
  }
  func.func @transform_5(%arg0: i32) -> (i32, i32) {
    %c0_i32 = arith.constant 0 : i32
    %c0_i32_0 = arith.constant 0 : i32
    %c0_i32_1 = arith.constant 0 : i32
    return %c0_i32, %c0_i32_0 : i32, i32
  }
  func.func @transform_6(%arg0: i32) -> (i32, i32) {
    %c0_i32 = arith.constant 0 : i32
    %c0_i32_0 = arith.constant 0 : i32
    %c0_i32_1 = arith.constant 0 : i32
    return %c0_i32, %c0_i32_0 : i32, i32
  }
  func.func @transform_7(%arg0: i32) -> (i32, i32, i32) {
    %c0_i32 = arith.constant 0 : i32
    %c0_i32_0 = arith.constant 0 : i32
    %c0_i32_1 = arith.constant 0 : i32
    return %arg0, %c0_i32, %c0_i32_0 : i32, i32, i32
  }
}

</mosaic_0001>

<llo_original>
// kernel: tpu_custom_call.1
$region0: #{tpu_custom_call.1}
  #allocation0 [shape = 'u32[]', space=smem, size = 0x4, offset = 0x4, fixed_abs, tag = 'smem constant byte address 0x4 - core index']
  #allocation1 [shape = 'u32[144,128]{1,0:T(1,128)}', space=vmem, size = 0x12000, scoped, tag = 'internal scratch']
  #allocation2 [shape = 'bf16[18,18,8]{2,1,0:T(8,128)(2,1)}', space=vmem, size = 0x1b000, scoped, tag = 'scratch operand']
  #allocation3 [shape = 'bf16[256,72]{1,0:T(16,128)(2,1)}', space=vmem, size = 0x10000, scoped, tag = 'scratch operand']
  %s0 = inlined_call_operand.vmem [shape: f32[2,16,16,8], index: 0, kind: input, shape index: {}]
  %s1 = inlined_call_operand.vmem [shape: bf16[72,8], index: 1, kind: input, shape index: {}]
  %s2 = inlined_call_operand.vmem [shape: f32[1,8], index: 2, kind: input, shape index: {}]
  %s3 = inlined_call_operand.vmem [shape: f32[1,8], index: 3, kind: input, shape index: {}]
  %s4 = inlined_call_operand.vmem [shape: bf16[72,8], index: 4, kind: input, shape index: {}]
  %s5 = inlined_call_operand.vmem [shape: f32[1,8], index: 5, kind: input, shape index: {}]
  %s6 = inlined_call_operand.vmem [shape: f32[1,8], index: 6, kind: input, shape index: {}]
  %s7 = inlined_call_operand.vmem [shape: f32[2,256,8], index: 7, kind: output, shape index: {}]
  %s8 = sld [smem:[#allocation0]]
  $region61: #{tpu_custom_call.1} parent=0
    _
  %s10 = ssub.s32 1, %s8
  %s11 = scalar_select 0, %s10, %s8
  loop: start=0, step=1, limit=4
  $region2: #{tpu_custom_call.1} parent=0 // loop_pre_header
    _
  $region3: #{tpu_custom_call.1} parent=0 // loop_header
    %s13 = sphi 0, %s17
    %p14 = scmp.ge.s32.totalorder %s13, 4
    %s23 = sphi 0, %s25
    %s26 = sphi 0, %s23
    %s27 = sphi 0, %s26
    %s43 = sphi 0, %s27
    %s47 = sphi 0, %s47
    %s49 = sphi 0, %s47
    %s50 = sphi 0, %s49
    %s64 = sphi 0, %s50
    %s68 = sphi 0, %s68
    %s70 = sphi 0, %s68
    %s71 = sphi 0, %s70
    %s85 = sphi 0, %s71
    %s89 = sphi 0, %s89
    %s91 = sphi 0, %s89
    %s92 = sphi 0, %s91
    %s106 = sphi 0, %s92
    %s110 = sphi 0, %s110
    %s112 = sphi 0, %s110
    %s113 = sphi 0, %s112
    %s127 = sphi 0, %s113
    %s131 = sphi 0, %s131
    %s133 = sphi 0, %s131
    %s134 = sphi 0, %s133
    %s148 = sphi 0, %s134
    %s152 = sphi 0, %s152
    %s154 = sphi 0, %s152
    %s155 = sphi 0, %s154
    %s169 = sphi 0, %s155
    %s175 = sphi 0, %s177
    %s178 = sphi 0, %s175
    %s179 = sphi 0, %s178
    %s195 = sphi 0, %s179
  $region4: #{tpu_custom_call.1} parent=0 // loop_header_branch
    %16 = sbr.rel (%p14) target = $region8
  $region5: #{tpu_custom_call.1} parent=0 // loop_body
    %s18 = ssub.s32 %s13, 1
    %s19 = ssub.s32 %s13, 2
    %s20 = sadd.s32 %s13, 1
    %s21 = ssub.s32 %s13, %s20
    %p22 = scmp.eq.s32.totalorder %s21, 0
    %s24 = sadd.s32 %s23, 1
    %s25 = scalar_select %p22, %s23, %s24
    %p28 = pneg %p22
    %p29 = scmp.eq.s32.totalorder %s13, 1
    %p30 = por %p28, %p29
    %p31 = scmp.ne.s32.totalorder %s23, %s26
    %p32 = scmp.eq.s32.totalorder %s13, 0
    %p33 = por %p31, %p32
    %p34 = scmp.ne.s32.totalorder %s23, %s26
    %p35 = scmp.eq.s32.totalorder %s18, 1
    %p36 = por %p34, %p35
    %p37 = scmp.ne.s32.totalorder %s26, %s27
    %p38 = scmp.eq.s32.totalorder %s18, 0
    %p39 = por %p37, %p38
    %p40 = scmp.ne.s32.totalorder %s26, %s27
    %p41 = scmp.eq.s32.totalorder %s19, 1
    %p42 = por %p40, %p41
    %p44 = scmp.ne.s32.totalorder %s27, %s43
    %p45 = scmp.eq.s32.totalorder %s19, 0
    %p46 = por %p44, %p45
    %s48 = sadd.s32 %s47, 1
    %p51 = scmp.eq.s32.totalorder %s13, 1
    %p52 = scmp.ne.s32.totalorder %s47, %s49
    %p53 = scmp.eq.s32.totalorder %s13, 0
    %p54 = por %p52, %p53
    %p55 = scmp.ne.s32.totalorder %s47, %s49
    %p56 = scmp.eq.s32.totalorder %s18, 1
    %p57 = por %p55, %p56
    %p58 = scmp.ne.s32.totalorder %s49, %s50
    %p59 = scmp.eq.s32.totalorder %s18, 0
    %p60 = por %p58, %p59
    %p61 = scmp.ne.s32.totalorder %s49, %s50
    %p62 = scmp.eq.s32.totalorder %s19, 1
    %p63 = por %p61, %p62
    %p65 = scmp.ne.s32.totalorder %s50, %s64
    %p66 = scmp.eq.s32.totalorder %s19, 0
    %p67 = por %p65, %p66
    %s69 = sadd.s32 %s68, 1
    %p72 = scmp.eq.s32.totalorder %s13, 1
    %p73 = scmp.ne.s32.totalorder %s68, %s70
    %p74 = scmp.eq.s32.totalorder %s13, 0
    %p75 = por %p73, %p74
    %p76 = scmp.ne.s32.totalorder %s68, %s70
    %p77 = scmp.eq.s32.totalorder %s18, 1
    %p78 = por %p76, %p77
    %p79 = scmp.ne.s32.totalorder %s70, %s71
    %p80 = scmp.eq.s32.totalorder %s18, 0
    %p81 = por %p79, %p80
    %p82 = scmp.ne.s32.totalorder %s70, %s71
    %p83 = scmp.eq.s32.totalorder %s19, 1
    %p84 = por %p82, %p83
    %p86 = scmp.ne.s32.totalorder %s71, %s85
    %p87 = scmp.eq.s32.totalorder %s19, 0
    %p88 = por %p86, %p87
    %s90 = sadd.s32 %s89, 1
    %p93 = scmp.eq.s32.totalorder %s13, 1
    %p94 = scmp.ne.s32.totalorder %s89, %s91
    %p95 = scmp.eq.s32.totalorder %s13, 0
    %p96 = por %p94, %p95
    %p97 = scmp.ne.s32.totalorder %s89, %s91
    %p98 = scmp.eq.s32.totalorder %s18, 1
    %p99 = por %p97, %p98
    %p100 = scmp.ne.s32.totalorder %s91, %s92
    %p101 = scmp.eq.s32.totalorder %s18, 0
    %p102 = por %p100, %p101
    %p103 = scmp.ne.s32.totalorder %s91, %s92
    %p104 = scmp.eq.s32.totalorder %s19, 1
    %p105 = por %p103, %p104
    %p107 = scmp.ne.s32.totalorder %s92, %s106
    %p108 = scmp.eq.s32.totalorder %s19, 0
    %p109 = por %p107, %p108
    %s111 = sadd.s32 %s110, 1
    %p114 = scmp.eq.s32.totalorder %s13, 1
    %p115 = scmp.ne.s32.totalorder %s110, %s112
    %p116 = scmp.eq.s32.totalorder %s13, 0
    %p117 = por %p115, %p116
    %p118 = scmp.ne.s32.totalorder %s110, %s112
    %p119 = scmp.eq.s32.totalorder %s18, 1
    %p120 = por %p118, %p119
    %p121 = scmp.ne.s32.totalorder %s112, %s113
    %p122 = scmp.eq.s32.totalorder %s18, 0
    %p123 = por %p121, %p122
    %p124 = scmp.ne.s32.totalorder %s112, %s113
    %p125 = scmp.eq.s32.totalorder %s19, 1
    %p126 = por %p124, %p125
    %p128 = scmp.ne.s32.totalorder %s113, %s127
    %p129 = scmp.eq.s32.totalorder %s19, 0
    %p130 = por %p128, %p129
    %s132 = sadd.s32 %s131, 1
    %p135 = scmp.eq.s32.totalorder %s13, 1
    %p136 = scmp.ne.s32.totalorder %s131, %s133
    %p137 = scmp.eq.s32.totalorder %s13, 0
    %p138 = por %p136, %p137
    %p139 = scmp.ne.s32.totalorder %s131, %s133
    %p140 = scmp.eq.s32.totalorder %s18, 1
    %p141 = por %p139, %p140
    %p142 = scmp.ne.s32.totalorder %s133, %s134
    %p143 = scmp.eq.s32.totalorder %s18, 0
    %p144 = por %p142, %p143
    %p145 = scmp.ne.s32.totalorder %s133, %s134
    %p146 = scmp.eq.s32.totalorder %s19, 1
    %p147 = por %p145, %p146
    %p149 = scmp.ne.s32.totalorder %s134, %s148
    %p150 = scmp.eq.s32.totalorder %s19, 0
    %p151 = por %p149, %p150
    %s153 = sadd.s32 %s152, 1
    %p156 = scmp.eq.s32.totalorder %s13, 1
    %p157 = scmp.ne.s32.totalorder %s152, %s154
    %p158 = scmp.eq.s32.totalorder %s13, 0
    %p159 = por %p157, %p158
    %p160 = scmp.ne.s32.totalorder %s152, %s154
    %p161 = scmp.eq.s32.totalorder %s18, 1
    %p162 = por %p160, %p161
    %p163 = scmp.ne.s32.totalorder %s154, %s155
    %p164 = scmp.eq.s32.totalorder %s18, 0
    %p165 = por %p163, %p164
    %p166 = scmp.ne.s32.totalorder %s154, %s155
    %p167 = scmp.eq.s32.totalorder %s19, 1
    %p168 = por %p166, %p167
    %p170 = scmp.ne.s32.totalorder %s155, %s169
    %p171 = scmp.eq.s32.totalorder %s19, 0
    %p172 = por %p170, %p171
    %s173 = ssub.s32 %s13, %s20
    %p174 = scmp.eq.s32.totalorder %s173, 0
    %s176 = sadd.s32 %s175, 1
    %s177 = scalar_select %p174, %s175, %s176
    %p180 = pneg %p174
    %p181 = scmp.eq.s32.totalorder %s13, 1
    %p182 = por %p180, %p181
    %p183 = scmp.ne.s32.totalorder %s175, %s178
    %p184 = scmp.eq.s32.totalorder %s13, 0
    %p185 = por %p183, %p184
    %p186 = scmp.ne.s32.totalorder %s175, %s178
    %p187 = scmp.eq.s32.totalorder %s18, 1
    %p188 = por %p186, %p187
    %p189 = scmp.ne.s32.totalorder %s178, %s179
    %p190 = scmp.eq.s32.totalorder %s18, 0
    %p191 = por %p189, %p190
    %p192 = scmp.ne.s32.totalorder %s178, %s179
    %p193 = scmp.eq.s32.totalorder %s19, 1
    %p194 = por %p192, %p193
    %p196 = scmp.ne.s32.totalorder %s179, %s195
    %p197 = scmp.eq.s32.totalorder %s19, 0
    %p198 = por %p196, %p197
    %p199 = scmp.le.s32.totalorder 1, %s13
    %p200 = scmp.lt.s32.totalorder %s13, 3
    %p201 = pnand %p199, %p200
    %p202 = pneg %p201
    // Predicated region
    $region9: #{tpu_custom_call.1} parent=5 // pred_check
      _
    $region10: #{tpu_custom_call.1} parent=5 // pred_check_branch
      %204 = sbr.rel (%p201) target = $region12
    $region11: #{tpu_custom_call.1} parent=5 // pred_region
      %s205 = ssub.s32 %s13, 1
      // Predicated region
      $region13: #{tpu_custom_call.1} parent=11 // pred_check
        %p206 = pneg %p60
      $region14: #{tpu_custom_call.1} parent=11 // pred_check_branch
        %208 = sbr.rel (%p206) target = $region16
      $region15: #{tpu_custom_call.1} parent=11 // pred_region
        _
      $region16: #{tpu_custom_call.1} parent=11 // pred_fallthru
        _
      // Predicated region
      $region17: #{tpu_custom_call.1} parent=11 // pred_check
        %p209 = pneg %p81
      $region18: #{tpu_custom_call.1} parent=11 // pred_check_branch
        %211 = sbr.rel (%p209) target = $region20
      $region19: #{tpu_custom_call.1} parent=11 // pred_region
        _
      $region20: #{tpu_custom_call.1} parent=11 // pred_fallthru
        _
      // Predicated region
      $region21: #{tpu_custom_call.1} parent=11 // pred_check
        %p212 = pneg %p102
      $region22: #{tpu_custom_call.1} parent=11 // pred_check_branch
        %214 = sbr.rel (%p212) target = $region24
      $region23: #{tpu_custom_call.1} parent=11 // pred_region
        _
      $region24: #{tpu_custom_call.1} parent=11 // pred_fallthru
        _
      // Predicated region
      $region25: #{tpu_custom_call.1} parent=11 // pred_check
        %p215 = pneg %p123
      $region26: #{tpu_custom_call.1} parent=11 // pred_check_branch
        %217 = sbr.rel (%p215) target = $region28
      $region27: #{tpu_custom_call.1} parent=11 // pred_region
        _
      $region28: #{tpu_custom_call.1} parent=11 // pred_fallthru
        _
      // Predicated region
      $region29: #{tpu_custom_call.1} parent=11 // pred_check
        %p218 = pneg %p144
      $region30: #{tpu_custom_call.1} parent=11 // pred_check_branch
        %220 = sbr.rel (%p218) target = $region32
      $region31: #{tpu_custom_call.1} parent=11 // pred_region
        _
      $region32: #{tpu_custom_call.1} parent=11 // pred_fallthru
        _
      // Predicated region
      $region33: #{tpu_custom_call.1} parent=11 // pred_check
        %p221 = pneg %p165
      $region34: #{tpu_custom_call.1} parent=11 // pred_check_branch
        %223 = sbr.rel (%p221) target = $region36
      $region35: #{tpu_custom_call.1} parent=11 // pred_region
        _
      $region36: #{tpu_custom_call.1} parent=11 // pred_fallthru
        _
    $region12: #{tpu_custom_call.1} parent=5 // pred_fallthru
      _
    %p224 = scmp.lt.s32.totalorder %s13, 2
    // Predicated region
    $region37: #{tpu_custom_call.1} parent=5 // pred_check
      %p225 = pneg %p224
    $region38: #{tpu_custom_call.1} parent=5 // pred_check_branch
      %227 = sbr.rel (%p225) target = $region40
    $region39: #{tpu_custom_call.1} parent=5 // pred_region
      // Predicated region
      $region41: #{tpu_custom_call.1} parent=39 // pred_check
        %p228 = pneg %p33
      $region42: #{tpu_custom_call.1} parent=39 // pred_check_branch
        %230 = sbr.rel (%p228) target = $region44
      $region43: #{tpu_custom_call.1} parent=39 // pred_region
        %p231 = scmp.lt.s32.totalorder %s13, 1
        %s232 = scalar_select %p231, %s13, 1
        %s233 = smul.addr %s232, 32
        %s234 = smul.addr %s233, 8
        %s235 = scalar_lea.vmem %s0, %s234
      $region44: #{tpu_custom_call.1} parent=39 // pred_fallthru
        _
    $region40: #{tpu_custom_call.1} parent=5 // pred_fallthru
      _
    %p236 = scmp.le.s32.totalorder 1, %s13
    %p237 = scmp.lt.s32.totalorder %s13, 3
    %p238 = pnand %p236, %p237
    %p239 = pneg %p238
    // Predicated region
    $region45: #{tpu_custom_call.1} parent=5 // pred_check
      _
    $region46: #{tpu_custom_call.1} parent=5 // pred_check_branch
      %241 = sbr.rel (%p238) target = $region48
    $region47: #{tpu_custom_call.1} parent=5 // pred_region
      %s242 = ssub.s32 %s13, 1
      %p243 = scmp.lt.s32.totalorder %s18, 1
      %s244 = scalar_select %p243, %s18, 1
      %s245 = smul.addr %s244, 32
      %s246 = smul.addr %s245, 8
      %s247 = scalar_lea.vmem %s0, %s246
      %p248 = pneg %p39
      %p249 = pneg %p36
      %p250 = pneg %p60
      %p251 = pneg %p57
      %p252 = pneg %p81
      %p253 = pneg %p78
      %p254 = pneg %p102
      %p255 = pneg %p99
      %p256 = pneg %p123
      %p257 = pneg %p120
      %p258 = pneg %p144
      %p259 = pneg %p141
      %p260 = pneg %p165
      %p261 = pneg %p162
      %p262 = pneg %p191
      %p263 = pneg %p188
      %p264 = scmp.lt.s32.totalorder %s18, 1
      %s265 = scalar_select %p264, %s18, 1
      %s266 = smul.addr %s265, 32
      %s267 = smul.addr %s266, 8
      %s268 = scalar_lea.vmem %s7, %s267
      %p269 = scmp.lt.s32.totalorder %s18, 1
      %s270 = scalar_select %p269, %s18, 1
      %s271 = smul.addr %s270, 32
      %s272 = smul.addr %s271, 8
      %s273 = scalar_lea.vmem %s0, %s272
      %p274 = scmp.lt.s32.totalorder %s18, 1
      %s275 = scalar_select %p274, %s18, 1
      %s276 = smul.addr %s275, 32
      %s277 = smul.addr %s276, 8
      %s278 = scalar_lea.vmem %s7, %s277
      %v280 = vld [vmem:[%s273] sm:$0xff]
      %v281 = vld [vmem:[%s273 + $0x8] sm:$0xff]
      %v282 = vld [vmem:[%s273 + $0x10] sm:$0xff]
      %v283 = vld [vmem:[%s273 + $0x18] sm:$0xff]
      %v284 = vld [vmem:[%s273 + $0x20] sm:$0xff]
      %v285 = vld [vmem:[%s273 + $0x28] sm:$0xff]
      %v286 = vld [vmem:[%s273 + $0x30] sm:$0xff]
      %v287 = vld [vmem:[%s273 + $0x38] sm:$0xff]
      %v288 = vld [vmem:[%s273 + $0x40] sm:$0xff]
      %v289 = vld [vmem:[%s273 + $0x48] sm:$0xff]
      %v290 = vld [vmem:[%s273 + $0x50] sm:$0xff]
      %v291 = vld [vmem:[%s273 + $0x58] sm:$0xff]
      %v292 = vld [vmem:[%s273 + $0x60] sm:$0xff]
      %v293 = vld [vmem:[%s273 + $0x68] sm:$0xff]
      %v294 = vld [vmem:[%s273 + $0x70] sm:$0xff]
      %v295 = vld [vmem:[%s273 + $0x78] sm:$0xff]
      %v296 = vld [vmem:[%s273 + $0x80] sm:$0xff]
      %v297 = vld [vmem:[%s273 + $0x88] sm:$0xff]
      %v298 = vld [vmem:[%s273 + $0x90] sm:$0xff]
      %v299 = vld [vmem:[%s273 + $0x98] sm:$0xff]
      %v300 = vld [vmem:[%s273 + $0xa0] sm:$0xff]
      %v301 = vld [vmem:[%s273 + $0xa8] sm:$0xff]
      %v302 = vld [vmem:[%s273 + $0xb0] sm:$0xff]
      %v303 = vld [vmem:[%s273 + $0xb8] sm:$0xff]
      %v304 = vld [vmem:[%s273 + $0xc0] sm:$0xff]
      %v305 = vld [vmem:[%s273 + $0xc8] sm:$0xff]
      %v306 = vld [vmem:[%s273 + $0xd0] sm:$0xff]
      %v307 = vld [vmem:[%s273 + $0xd8] sm:$0xff]
      %v308 = vld [vmem:[%s273 + $0xe0] sm:$0xff]
      %v309 = vld [vmem:[%s273 + $0xe8] sm:$0xff]
      %v310 = vld [vmem:[%s273 + $0xf0] sm:$0xff]
      %v311 = vld [vmem:[%s273 + $0xf8] sm:$0xff]
      %v312 = vpack.c.bf16 %v281, %v280
      %v313 = vpack.c.bf16 %v283, %v282
      %v314 = vpack.c.bf16 %v285, %v284
      %v315 = vpack.c.bf16 %v287, %v286
      %v316 = vpack.c.bf16 %v289, %v288
      %v317 = vpack.c.bf16 %v291, %v290
      %v318 = vpack.c.bf16 %v293, %v292
      %v319 = vpack.c.bf16 %v295, %v294
      %v320 = vpack.c.bf16 %v297, %v296
      %v321 = vpack.c.bf16 %v299, %v298
      %v322 = vpack.c.bf16 %v301, %v300
      %v323 = vpack.c.bf16 %v303, %v302
      %v324 = vpack.c.bf16 %v305, %v304
      %v325 = vpack.c.bf16 %v307, %v306
      %v326 = vpack.c.bf16 %v309, %v308
      %v327 = vpack.c.bf16 %v311, %v310
      %v344 = vunpack.c.l.b16 %v312
      %v345 = vunpack.c.h.b16 %v312
      %v346 = vunpack.c.l.b16 %v313
      %v347 = vunpack.c.h.b16 %v313
      %v348 = vunpack.c.l.b16 %v314
      %v349 = vunpack.c.h.b16 %v314
      %v350 = vunpack.c.l.b16 %v315
      %v351 = vunpack.c.h.b16 %v315
      %v352 = vunpack.c.l.b16 %v316
      %v353 = vunpack.c.h.b16 %v316
      %v354 = vunpack.c.l.b16 %v317
      %v355 = vunpack.c.h.b16 %v317
      %v356 = vunpack.c.l.b16 %v318
      %v357 = vunpack.c.h.b16 %v318
      %v358 = vunpack.c.l.b16 %v319
      %v359 = vunpack.c.h.b16 %v319
      %v360 = vunpack.c.l.b16 %v320
      %v361 = vunpack.c.h.b16 %v320
      %v362 = vunpack.c.l.b16 %v321
      %v363 = vunpack.c.h.b16 %v321
      %v364 = vunpack.c.l.b16 %v322
      %v365 = vunpack.c.h.b16 %v322
      %v366 = vunpack.c.l.b16 %v323
      %v367 = vunpack.c.h.b16 %v323
      %v368 = vunpack.c.l.b16 %v324
      %v369 = vunpack.c.h.b16 %v324
      %v370 = vunpack.c.l.b16 %v325
      %v371 = vunpack.c.h.b16 %v325
      %v372 = vunpack.c.l.b16 %v326
      %v373 = vunpack.c.h.b16 %v326
      %v374 = vunpack.c.l.b16 %v327
      %v375 = vunpack.c.h.b16 %v327
      %v376 = vpack.c.b16 %v344, %v344
      %v377 = vpack.c.b16 %v345, %v345
      %v378 = vpack.c.b16 %v346, %v346
      %v379 = vpack.c.b16 %v347, %v347
      %v380 = vpack.c.b16 %v348, %v348
      %v381 = vpack.c.b16 %v349, %v349
      %v382 = vpack.c.b16 %v350, %v350
      %v383 = vpack.c.b16 %v351, %v351
      %v384 = vpack.c.b16 %v352, %v352
      %v385 = vpack.c.b16 %v353, %v353
      %v386 = vpack.c.b16 %v354, %v354
      %v387 = vpack.c.b16 %v355, %v355
      %v388 = vpack.c.b16 %v356, %v356
      %v389 = vpack.c.b16 %v357, %v357
      %v390 = vpack.c.b16 %v358, %v358
      %v391 = vpack.c.b16 %v359, %v359
      %v392 = vpack.c.b16 %v360, %v360
      %v393 = vpack.c.b16 %v361, %v361
      %v394 = vpack.c.b16 %v362, %v362
      %v395 = vpack.c.b16 %v363, %v363
      %v396 = vpack.c.b16 %v364, %v364
      %v397 = vpack.c.b16 %v365, %v365
      %v398 = vpack.c.b16 %v366, %v366
      %v399 = vpack.c.b16 %v367, %v367
      %v400 = vpack.c.b16 %v368, %v368
      %v401 = vpack.c.b16 %v369, %v369
      %v402 = vpack.c.b16 %v370, %v370
      %v403 = vpack.c.b16 %v371, %v371
      %v404 = vpack.c.b16 %v372, %v372
      %v405 = vpack.c.b16 %v373, %v373
      %v406 = vpack.c.b16 %v374, %v374
      %v407 = vpack.c.b16 %v375, %v375
      %vm408 = vsmask.f32 256
      %vm409 = vsmask.f32 4368
      %vm410 = vmor %vm408, %vm409
      %v412 = vshrl.u32 %v376, 16
      %v414 = vrot.slane %v412, 7
      %v415 = vshll.u32 %v376, 16
      %v417 = vor.u32 %v414, %v415
      %v418 = vrot.slane %v414, 4
      %v420 = vshrl.u32 %v377, 16
      %v422 = vrot.slane %v420, 7
      %v423 = vshll.u32 %v377, 16
      %v425 = vor.u32 %v422, %v423
      %v426 = vsel %vm410, %v418, %v425
      %v427 = vrot.slane %v422, 4
      %v429 = vshrl.u32 %v378, 16
      %v431 = vrot.slane %v429, 7
      %v432 = vshll.u32 %v378, 16
      %v434 = vor.u32 %v431, %v432
      %v435 = vrot.slane %v431, 4
      %v437 = vshrl.u32 %v379, 16
      %v439 = vrot.slane %v437, 7
      %v440 = vshll.u32 %v379, 16
      %v442 = vor.u32 %v439, %v440
      %v443 = vsel %vm410, %v435, %v442
      %v444 = vrot.slane %v439, 4
      %v446 = vshrl.u32 %v380, 16
      %v448 = vrot.slane %v446, 7
      %v449 = vshll.u32 %v380, 16
      %v451 = vor.u32 %v448, %v449
      %v452 = vrot.slane %v448, 4
      %v454 = vshrl.u32 %v381, 16
      %v456 = vrot.slane %v454, 7
      %v457 = vshll.u32 %v381, 16
      %v459 = vor.u32 %v456, %v457
      %v460 = vsel %vm410, %v452, %v459
      %v461 = vrot.slane %v456, 4
      %v463 = vshrl.u32 %v382, 16
      %v465 = vrot.slane %v463, 7
      %v466 = vshll.u32 %v382, 16
      %v468 = vor.u32 %v465, %v466
      %v469 = vrot.slane %v465, 4
      %v471 = vshrl.u32 %v383, 16
      %v473 = vrot.slane %v471, 7
      %v474 = vshll.u32 %v383, 16
      %v476 = vor.u32 %v473, %v474
      %v477 = vsel %vm410, %v469, %v476
      %v478 = vrot.slane %v473, 4
      %v480 = vshrl.u32 %v384, 16
      %v482 = vrot.slane %v480, 7
      %v483 = vshll.u32 %v384, 16
      %v485 = vor.u32 %v482, %v483
      %v486 = vrot.slane %v482, 4
      %v488 = vshrl.u32 %v385, 16
      %v490 = vrot.slane %v488, 7
      %v491 = vshll.u32 %v385, 16
      %v493 = vor.u32 %v490, %v491
      %v494 = vsel %vm410, %v486, %v493
      %v495 = vrot.slane %v490, 4
      %v497 = vshrl.u32 %v386, 16
      %v499 = vrot.slane %v497, 7
      %v500 = vshll.u32 %v386, 16
      %v502 = vor.u32 %v499, %v500
      %v503 = vrot.slane %v499, 4
      %v505 = vshrl.u32 %v387, 16
      %v507 = vrot.slane %v505, 7
      %v508 = vshll.u32 %v387, 16
      %v510 = vor.u32 %v507, %v508
      %v511 = vsel %vm410, %v503, %v510
      %v512 = vrot.slane %v507, 4
      %v514 = vshrl.u32 %v388, 16
      %v516 = vrot.slane %v514, 7
      %v517 = vshll.u32 %v388, 16
      %v519 = vor.u32 %v516, %v517
      %v520 = vrot.slane %v516, 4
      %v522 = vshrl.u32 %v389, 16
      %v524 = vrot.slane %v522, 7
      %v525 = vshll.u32 %v389, 16
      %v527 = vor.u32 %v524, %v525
      %v528 = vsel %vm410, %v520, %v527
      %v529 = vrot.slane %v524, 4
      %v531 = vshrl.u32 %v390, 16
      %v533 = vrot.slane %v531, 7
      %v534 = vshll.u32 %v390, 16
      %v536 = vor.u32 %v533, %v534
      %v537 = vrot.slane %v533, 4
      %v539 = vshrl.u32 %v391, 16
      %v541 = vrot.slane %v539, 7
      %v542 = vshll.u32 %v391, 16
      %v544 = vor.u32 %v541, %v542
      %v545 = vsel %vm410, %v537, %v544
      %v546 = vrot.slane %v541, 4
      %v548 = vshrl.u32 %v392, 16
      %v550 = vrot.slane %v548, 7
      %v551 = vshll.u32 %v392, 16
      %v553 = vor.u32 %v550, %v551
      %v554 = vrot.slane %v550, 4
      %v556 = vshrl.u32 %v393, 16
      %v558 = vrot.slane %v556, 7
      %v559 = vshll.u32 %v393, 16
      %v561 = vor.u32 %v558, %v559
      %v562 = vsel %vm410, %v554, %v561
      %v563 = vrot.slane %v558, 4
      %v565 = vshrl.u32 %v394, 16
      %v567 = vrot.slane %v565, 7
      %v568 = vshll.u32 %v394, 16
      %v570 = vor.u32 %v567, %v568
      %v571 = vrot.slane %v567, 4
      %v573 = vshrl.u32 %v395, 16
      %v575 = vrot.slane %v573, 7
      %v576 = vshll.u32 %v395, 16
      %v578 = vor.u32 %v575, %v576
      %v579 = vsel %vm410, %v571, %v578
      %v580 = vrot.slane %v575, 4
      %v582 = vshrl.u32 %v396, 16
      %v584 = vrot.slane %v582, 7
      %v585 = vshll.u32 %v396, 16
      %v587 = vor.u32 %v584, %v585
      %v588 = vrot.slane %v584, 4
      %v590 = vshrl.u32 %v397, 16
      %v592 = vrot.slane %v590, 7
      %v593 = vshll.u32 %v397, 16
      %v595 = vor.u32 %v592, %v593
      %v596 = vsel %vm410, %v588, %v595
      %v597 = vrot.slane %v592, 4
      %v599 = vshrl.u32 %v398, 16
      %v601 = vrot.slane %v599, 7
      %v602 = vshll.u32 %v398, 16
      %v604 = vor.u32 %v601, %v602
      %v605 = vrot.slane %v601, 4
      %v607 = vshrl.u32 %v399, 16
      %v609 = vrot.slane %v607, 7
      %v610 = vshll.u32 %v399, 16
      %v612 = vor.u32 %v609, %v610
      %v613 = vsel %vm410, %v605, %v612
      %v614 = vrot.slane %v609, 4
      %v616 = vshrl.u32 %v400, 16
      %v618 = vrot.slane %v616, 7
      %v619 = vshll.u32 %v400, 16
      %v621 = vor.u32 %v618, %v619
      %v622 = vrot.slane %v618, 4
      %v624 = vshrl.u32 %v401, 16
      %v626 = vrot.slane %v624, 7
      %v627 = vshll.u32 %v401, 16
      %v629 = vor.u32 %v626, %v627
      %v630 = vsel %vm410, %v622, %v629
      %v631 = vrot.slane %v626, 4
      %v633 = vshrl.u32 %v402, 16
      %v635 = vrot.slane %v633, 7
      %v636 = vshll.u32 %v402, 16
      %v638 = vor.u32 %v635, %v636
      %v639 = vrot.slane %v635, 4
      %v641 = vshrl.u32 %v403, 16
      %v643 = vrot.slane %v641, 7
      %v644 = vshll.u32 %v403, 16
      %v646 = vor.u32 %v643, %v644
      %v647 = vsel %vm410, %v639, %v646
      %v648 = vrot.slane %v643, 4
      %v650 = vshrl.u32 %v404, 16
      %v652 = vrot.slane %v650, 7
      %v653 = vshll.u32 %v404, 16
      %v655 = vor.u32 %v652, %v653
      %v656 = vrot.slane %v652, 4
      %v658 = vshrl.u32 %v405, 16
      %v660 = vrot.slane %v658, 7
      %v661 = vshll.u32 %v405, 16
      %v663 = vor.u32 %v660, %v661
      %v664 = vsel %vm410, %v656, %v663
      %v665 = vrot.slane %v660, 4
      %v667 = vshrl.u32 %v406, 16
      %v669 = vrot.slane %v667, 7
      %v670 = vshll.u32 %v406, 16
      %v672 = vor.u32 %v669, %v670
      %v673 = vrot.slane %v669, 4
      %v675 = vshrl.u32 %v407, 16
      %v677 = vrot.slane %v675, 7
      %v678 = vshll.u32 %v407, 16
      %v680 = vor.u32 %v677, %v678
      %v681 = vsel %vm410, %v673, %v680
      %v682 = vrot.slane %v677, 4
      %s731 = scalar_lea.vmem [#allocation2], 12
      %vm732 = vcmask 60416
      %vm733 = vsmask.f32 7938
      %vm734 = vmand %vm732, %vm733
      %v735 = vld [vmem:[%s731] sm:$0xf]
      %v736 = vsel %vm734, %v417, %v735
      %737 = vst [vmem:[%s731] sm:$0xf] %v736
      %vm738 = vcmask 60416
      %739 = vst.msk [vmem:[%s731 + $0x4] sm:$0xf] %vm738, %v426
      %vm740 = vcmask 57344
      %vm741 = vmand %vm740, %vm408
      %v742 = vld [vmem:[%s731 + $0x8] sm:$0x1]
      %v743 = vsel %vm741, %v427, %v742
      %744 = vst [vmem:[%s731 + $0x8] sm:$0x1] %v743
      %v745 = vld [vmem:[%s731 + $0xc] sm:$0xf]
      %v746 = vsel %vm734, %v434, %v745
      %747 = vst [vmem:[%s731 + $0xc] sm:$0xf] %v746
      %748 = vst.msk [vmem:[%s731 + $0x10] sm:$0xf] %vm738, %v443
      %v749 = vld [vmem:[%s731 + $0x14] sm:$0x1]
      %v750 = vsel %vm741, %v444, %v749
      %751 = vst [vmem:[%s731 + $0x14] sm:$0x1] %v750
      %v752 = vld [vmem:[%s731 + $0x18] sm:$0xf]
      %v753 = vsel %vm734, %v451, %v752
      %754 = vst [vmem:[%s731 + $0x18] sm:$0xf] %v753
      %755 = vst.msk [vmem:[%s731 + $0x1c] sm:$0xf] %vm738, %v460
      %v756 = vld [vmem:[%s731 + $0x20] sm:$0x1]
      %v757 = vsel %vm741, %v461, %v756
      %758 = vst [vmem:[%s731 + $0x20] sm:$0x1] %v757
      %v759 = vld [vmem:[%s731 + $0x24] sm:$0xf]
      %v760 = vsel %vm734, %v468, %v759
      %761 = vst [vmem:[%s731 + $0x24] sm:$0xf] %v760
      %762 = vst.msk [vmem:[%s731 + $0x28] sm:$0xf] %vm738, %v477
      %v763 = vld [vmem:[%s731 + $0x2c] sm:$0x1]
      %v764 = vsel %vm741, %v478, %v763
      %765 = vst [vmem:[%s731 + $0x2c] sm:$0x1] %v764
      %v766 = vld [vmem:[%s731 + $0x30] sm:$0xf]
      %v767 = vsel %vm734, %v485, %v766
      %768 = vst [vmem:[%s731 + $0x30] sm:$0xf] %v767
      %769 = vst.msk [vmem:[%s731 + $0x34] sm:$0xf] %vm738, %v494
      %v770 = vld [vmem:[%s731 + $0x38] sm:$0x1]
      %v771 = vsel %vm741, %v495, %v770
      %772 = vst [vmem:[%s731 + $0x38] sm:$0x1] %v771
      %v773 = vld [vmem:[%s731 + $0x3c] sm:$0xf]
      %v774 = vsel %vm734, %v502, %v773
      %775 = vst [vmem:[%s731 + $0x3c] sm:$0xf] %v774
      %776 = vst.msk [vmem:[%s731 + $0x40] sm:$0xf] %vm738, %v511
      %v777 = vld [vmem:[%s731 + $0x44] sm:$0x1]
      %v778 = vsel %vm741, %v512, %v777
      %779 = vst [vmem:[%s731 + $0x44] sm:$0x1] %v778
      %v780 = vld [vmem:[%s731 + $0x48] sm:$0xf]
      %v781 = vsel %vm734, %v519, %v780
      %782 = vst [vmem:[%s731 + $0x48] sm:$0xf] %v781
      %783 = vst.msk [vmem:[%s731 + $0x4c] sm:$0xf] %vm738, %v528
      %v784 = vld [vmem:[%s731 + $0x50] sm:$0x1]
      %v785 = vsel %vm741, %v529, %v784
      %786 = vst [vmem:[%s731 + $0x50] sm:$0x1] %v785
      %v787 = vld [vmem:[%s731 + $0x54] sm:$0xf]
      %v788 = vsel %vm734, %v536, %v787
      %789 = vst [vmem:[%s731 + $0x54] sm:$0xf] %v788
      %790 = vst.msk [vmem:[%s731 + $0x58] sm:$0xf] %vm738, %v545
      %v791 = vld [vmem:[%s731 + $0x5c] sm:$0x1]
      %v792 = vsel %vm741, %v546, %v791
      %793 = vst [vmem:[%s731 + $0x5c] sm:$0x1] %v792
      %v794 = vld [vmem:[%s731 + $0x60] sm:$0xf]
      %v795 = vsel %vm734, %v553, %v794
      %796 = vst [vmem:[%s731 + $0x60] sm:$0xf] %v795
      %797 = vst.msk [vmem:[%s731 + $0x64] sm:$0xf] %vm738, %v562
      %v798 = vld [vmem:[%s731 + $0x68] sm:$0x1]
      %v799 = vsel %vm741, %v563, %v798
      %800 = vst [vmem:[%s731 + $0x68] sm:$0x1] %v799
      %v801 = vld [vmem:[%s731 + $0x6c] sm:$0xf]
      %v802 = vsel %vm734, %v570, %v801
      %803 = vst [vmem:[%s731 + $0x6c] sm:$0xf] %v802
      %804 = vst.msk [vmem:[%s731 + $0x70] sm:$0xf] %vm738, %v579
      %v805 = vld [vmem:[%s731 + $0x74] sm:$0x1]
      %v806 = vsel %vm741, %v580, %v805
      %807 = vst [vmem:[%s731 + $0x74] sm:$0x1] %v806
      %v808 = vld [vmem:[%s731 + $0x78] sm:$0xf]
      %v809 = vsel %vm734, %v587, %v808
      %810 = vst [vmem:[%s731 + $0x78] sm:$0xf] %v809
      %811 = vst.msk [vmem:[%s731 + $0x7c] sm:$0xf] %vm738, %v596
      %v812 = vld [vmem:[%s731 + $0x80] sm:$0x1]
      %v813 = vsel %vm741, %v597, %v812
      %814 = vst [vmem:[%s731 + $0x80] sm:$0x1] %v813
      %v815 = vld [vmem:[%s731 + $0x84] sm:$0xf]
      %v816 = vsel %vm734, %v604, %v815
      %817 = vst [vmem:[%s731 + $0x84] sm:$0xf] %v816
      %818 = vst.msk [vmem:[%s731 + $0x88] sm:$0xf] %vm738, %v613
      %v819 = vld [vmem:[%s731 + $0x8c] sm:$0x1]
      %v820 = vsel %vm741, %v614, %v819
      %821 = vst [vmem:[%s731 + $0x8c] sm:$0x1] %v820
      %v822 = vld [vmem:[%s731 + $0x90] sm:$0xf]
      %v823 = vsel %vm734, %v621, %v822
      %824 = vst [vmem:[%s731 + $0x90] sm:$0xf] %v823
      %825 = vst.msk [vmem:[%s731 + $0x94] sm:$0xf] %vm738, %v630
      %v826 = vld [vmem:[%s731 + $0x98] sm:$0x1]
      %v827 = vsel %vm741, %v631, %v826
      %828 = vst [vmem:[%s731 + $0x98] sm:$0x1] %v827
      %v829 = vld [vmem:[%s731 + $0x9c] sm:$0xf]
      %v830 = vsel %vm734, %v638, %v829
      %831 = vst [vmem:[%s731 + $0x9c] sm:$0xf] %v830
      %832 = vst.msk [vmem:[%s731 + $0xa0] sm:$0xf] %vm738, %v647
      %v833 = vld [vmem:[%s731 + $0xa4] sm:$0x1]
      %v834 = vsel %vm741, %v648, %v833
      %835 = vst [vmem:[%s731 + $0xa4] sm:$0x1] %v834
      %v836 = vld [vmem:[%s731 + $0xa8] sm:$0xf]
      %v837 = vsel %vm734, %v655, %v836
      %838 = vst [vmem:[%s731 + $0xa8] sm:$0xf] %v837
      %839 = vst.msk [vmem:[%s731 + $0xac] sm:$0xf] %vm738, %v664
      %v840 = vld [vmem:[%s731 + $0xb0] sm:$0x1]
      %v841 = vsel %vm741, %v665, %v840
      %842 = vst [vmem:[%s731 + $0xb0] sm:$0x1] %v841
      %v843 = vld [vmem:[%s731 + $0xb4] sm:$0xf]
      %v844 = vsel %vm734, %v672, %v843
      %845 = vst [vmem:[%s731 + $0xb4] sm:$0xf] %v844
      %846 = vst.msk [vmem:[%s731 + $0xb8] sm:$0xf] %vm738, %v681
      %v847 = vld [vmem:[%s731 + $0xbc] sm:$0x1]
      %v848 = vsel %vm741, %v682, %v847
      %849 = vst [vmem:[%s731 + $0xbc] sm:$0x1] %v848
      %v850 = vld [vmem:[#allocation2] sm:$0xf]
      %v851 = vsel %vm734, %v434, %v850
      %852 = vst [vmem:[#allocation2] sm:$0xf] %v851
      %853 = vst.msk [vmem:[#allocation2 + $0x4] sm:$0xf] %vm738, %v443
      %v854 = vld [vmem:[#allocation2 + $0x8] sm:$0x1]
      %v855 = vsel %vm741, %v444, %v854
      %856 = vst [vmem:[#allocation2 + $0x8] sm:$0x1] %v855
      %s857 = scalar_lea.vmem [#allocation2], 204
      %v858 = vld [vmem:[%s857] sm:$0xf]
      %v859 = vsel %vm734, %v655, %v858
      %860 = vst [vmem:[%s857] sm:$0xf] %v859
      %861 = vst.msk [vmem:[%s857 + $0x4] sm:$0xf] %vm738, %v664
      %v862 = vld [vmem:[%s857 + $0x8] sm:$0x1]
      %v863 = vsel %vm741, %v665, %v862
      %864 = vst [vmem:[%s857 + $0x8] sm:$0x1] %v863
      %v865 = vld [vmem:[#allocation2] sm:$0x2]
      %v866 = vld [vmem:[#allocation2 + $0xc] sm:$0x2]
      %v867 = vld [vmem:[#allocation2 + $0x18] sm:$0x2]
      %v868 = vld [vmem:[#allocation2 + $0x24] sm:$0x2]
      %v869 = vld [vmem:[#allocation2 + $0x30] sm:$0x2]
      %v870 = vld [vmem:[#allocation2 + $0x3c] sm:$0x2]
      %v871 = vld [vmem:[#allocation2 + $0x48] sm:$0x2]
      %v872 = vld [vmem:[#allocation2 + $0x54] sm:$0x2]
      %v873 = vld [vmem:[#allocation2 + $0x60] sm:$0x2]
      %v874 = vld [vmem:[#allocation2 + $0x6c] sm:$0x2]
      %v875 = vld [vmem:[#allocation2 + $0x78] sm:$0x2]
      %v876 = vld [vmem:[#allocation2 + $0x84] sm:$0x2]
      %v877 = vld [vmem:[#allocation2 + $0x90] sm:$0x2]
      %v878 = vld [vmem:[#allocation2 + $0x9c] sm:$0x2]
      %v879 = vld [vmem:[#allocation2 + $0xa8] sm:$0x2]
      %v880 = vld [vmem:[#allocation2 + $0xb4] sm:$0x2]
      %v881 = vld [vmem:[#allocation2 + $0xc0] sm:$0x2]
      %v882 = vld [vmem:[#allocation2 + $0xcc] sm:$0x2]
      %v883 = vld [vmem:[#allocation2 + $0x4] sm:$0x8]
      %v884 = vld [vmem:[#allocation2 + $0x10] sm:$0x8]
      %v885 = vld [vmem:[#allocation2 + $0x1c] sm:$0x8]
      %v886 = vld [vmem:[#allocation2 + $0x28] sm:$0x8]
      %v887 = vld [vmem:[#allocation2 + $0x34] sm:$0x8]
      %v888 = vld [vmem:[#allocation2 + $0x40] sm:$0x8]
      %v889 = vld [vmem:[#allocation2 + $0x4c] sm:$0x8]
      %v890 = vld [vmem:[#allocation2 + $0x58] sm:$0x8]
      %v891 = vld [vmem:[#allocation2 + $0x64] sm:$0x8]
      %v892 = vld [vmem:[#allocation2 + $0x70] sm:$0x8]
      %v893 = vld [vmem:[#allocation2 + $0x7c] sm:$0x8]
      %v894 = vld [vmem:[#allocation2 + $0x88] sm:$0x8]
      %v895 = vld [vmem:[#allocation2 + $0x94] sm:$0x8]
      %v896 = vld [vmem:[#allocation2 + $0xa0] sm:$0x8]
      %v897 = vld [vmem:[#allocation2 + $0xac] sm:$0x8]
      %v898 = vld [vmem:[#allocation2 + $0xb8] sm:$0x8]
      %v899 = vld [vmem:[#allocation2 + $0xc4] sm:$0x8]
      %v900 = vld [vmem:[#allocation2 + $0xd0] sm:$0x8]
      %v919 = vrot.slane %v865, 5
      %v920 = vrot.slane %v919, 4
      %v921 = vrot.slane %v866, 5
      %v922 = vrot.slane %v921, 4
      %v923 = vrot.slane %v867, 5
      %v924 = vrot.slane %v923, 4
      %v925 = vrot.slane %v868, 5
      %v926 = vrot.slane %v925, 4
      %v927 = vrot.slane %v869, 5
      %v928 = vrot.slane %v927, 4
      %v929 = vrot.slane %v870, 5
      %v930 = vrot.slane %v929, 4
      %v931 = vrot.slane %v871, 5
      %v932 = vrot.slane %v931, 4
      %v933 = vrot.slane %v872, 5
      %v934 = vrot.slane %v933, 4
      %v935 = vrot.slane %v873, 5
      %v936 = vrot.slane %v935, 4
      %v937 = vrot.slane %v874, 5
      %v938 = vrot.slane %v937, 4
      %v939 = vrot.slane %v875, 5
      %v940 = vrot.slane %v939, 4
      %v941 = vrot.slane %v876, 5
      %v942 = vrot.slane %v941, 4
      %v943 = vrot.slane %v877, 5
      %v944 = vrot.slane %v943, 4
      %v945 = vrot.slane %v878, 5
      %v946 = vrot.slane %v945, 4
      %v947 = vrot.slane %v879, 5
      %v948 = vrot.slane %v947, 4
      %v949 = vrot.slane %v880, 5
      %v950 = vrot.slane %v949, 4
      %v951 = vrot.slane %v881, 5
      %v952 = vrot.slane %v951, 4
      %v953 = vrot.slane %v882, 5
      %v954 = vrot.slane %v953, 4
      %v973 = vld [vmem:[#allocation2] sm:$0x1]
      %v974 = vsel %vm741, %v920, %v973
      %975 = vst [vmem:[#allocation2] sm:$0x1] %v974
      %v976 = vld [vmem:[#allocation2 + $0xc] sm:$0x1]
      %v977 = vsel %vm741, %v922, %v976
      %978 = vst [vmem:[#allocation2 + $0xc] sm:$0x1] %v977
      %v979 = vld [vmem:[#allocation2 + $0x18] sm:$0x1]
      %v980 = vsel %vm741, %v924, %v979
      %981 = vst [vmem:[#allocation2 + $0x18] sm:$0x1] %v980
      %v982 = vld [vmem:[#allocation2 + $0x24] sm:$0x1]
      %v983 = vsel %vm741, %v926, %v982
      %984 = vst [vmem:[#allocation2 + $0x24] sm:$0x1] %v983
      %v985 = vld [vmem:[#allocation2 + $0x30] sm:$0x1]
      %v986 = vsel %vm741, %v928, %v985
      %987 = vst [vmem:[#allocation2 + $0x30] sm:$0x1] %v986
      %v988 = vld [vmem:[#allocation2 + $0x3c] sm:$0x1]
      %v989 = vsel %vm741, %v930, %v988
      %990 = vst [vmem:[#allocation2 + $0x3c] sm:$0x1] %v989
      %v991 = vld [vmem:[#allocation2 + $0x48] sm:$0x1]
      %v992 = vsel %vm741, %v932, %v991
      %993 = vst [vmem:[#allocation2 + $0x48] sm:$0x1] %v992
      %v994 = vld [vmem:[#allocation2 + $0x54] sm:$0x1]
      %v995 = vsel %vm741, %v934, %v994
      %996 = vst [vmem:[#allocation2 + $0x54] sm:$0x1] %v995
      %v997 = vld [vmem:[#allocation2 + $0x60] sm:$0x1]
      %v998 = vsel %vm741, %v936, %v997
      %999 = vst [vmem:[#allocation2 + $0x60] sm:$0x1] %v998
      %v1000 = vld [vmem:[#allocation2 + $0x6c] sm:$0x1]
      %v1001 = vsel %vm741, %v938, %v1000
      %1002 = vst [vmem:[#allocation2 + $0x6c] sm:$0x1] %v1001
      %v1003 = vld [vmem:[#allocation2 + $0x78] sm:$0x1]
      %v1004 = vsel %vm741, %v940, %v1003
      %1005 = vst [vmem:[#allocation2 + $0x78] sm:$0x1] %v1004
      %v1006 = vld [vmem:[#allocation2 + $0x84] sm:$0x1]
      %v1007 = vsel %vm741, %v942, %v1006
      %1008 = vst [vmem:[#allocation2 + $0x84] sm:$0x1] %v1007
      %v1009 = vld [vmem:[#allocation2 + $0x90] sm:$0x1]
      %v1010 = vsel %vm741, %v944, %v1009
      %1011 = vst [vmem:[#allocation2 + $0x90] sm:$0x1] %v1010
      %v1012 = vld [vmem:[#allocation2 + $0x9c] sm:$0x1]
      %v1013 = vsel %vm741, %v946, %v1012
      %1014 = vst [vmem:[#allocation2 + $0x9c] sm:$0x1] %v1013
      %v1015 = vld [vmem:[#allocation2 + $0xa8] sm:$0x1]
      %v1016 = vsel %vm741, %v948, %v1015
      %1017 = vst [vmem:[#allocation2 + $0xa8] sm:$0x1] %v1016
      %v1018 = vld [vmem:[#allocation2 + $0xb4] sm:$0x1]
      %v1019 = vsel %vm741, %v950, %v1018
      %1020 = vst [vmem:[#allocation2 + $0xb4] sm:$0x1] %v1019
      %v1021 = vld [vmem:[#allocation2 + $0xc0] sm:$0x1]
      %v1022 = vsel %vm741, %v952, %v1021
      %1023 = vst [vmem:[#allocation2 + $0xc0] sm:$0x1] %v1022
      %v1024 = vld [vmem:[#allocation2 + $0xcc] sm:$0x1]
      %v1025 = vsel %vm741, %v954, %v1024
      %1026 = vst [vmem:[#allocation2 + $0xcc] sm:$0x1] %v1025
      %v1045 = vrot.slane %v883, 7
      %v1046 = vrot.slane %v1045, 4
      %v1047 = vrot.slane %v884, 7
      %v1048 = vrot.slane %v1047, 4
      %v1049 = vrot.slane %v885, 7
      %v1050 = vrot.slane %v1049, 4
      %v1051 = vrot.slane %v886, 7
      %v1052 = vrot.slane %v1051, 4
      %v1053 = vrot.slane %v887, 7
      %v1054 = vrot.slane %v1053, 4
      %v1055 = vrot.slane %v888, 7
      %v1056 = vrot.slane %v1055, 4
      %v1057 = vrot.slane %v889, 7
      %v1058 = vrot.slane %v1057, 4
      %v1059 = vrot.slane %v890, 7
      %v1060 = vrot.slane %v1059, 4
      %v1061 = vrot.slane %v891, 7
      %v1062 = vrot.slane %v1061, 4
      %v1063 = vrot.slane %v892, 7
      %v1064 = vrot.slane %v1063, 4
      %v1065 = vrot.slane %v893, 7
      %v1066 = vrot.slane %v1065, 4
      %v1067 = vrot.slane %v894, 7
      %v1068 = vrot.slane %v1067, 4
      %v1069 = vrot.slane %v895, 7
      %v1070 = vrot.slane %v1069, 4
      %v1071 = vrot.slane %v896, 7
      %v1072 = vrot.slane %v1071, 4
      %v1073 = vrot.slane %v897, 7
      %v1074 = vrot.slane %v1073, 4
      %v1075 = vrot.slane %v898, 7
      %v1076 = vrot.slane %v1075, 4
      %v1077 = vrot.slane %v899, 7
      %v1078 = vrot.slane %v1077, 4
      %v1079 = vrot.slane %v900, 7
      %v1080 = vrot.slane %v1079, 4
      %vm1099 = vmand %vm740, %vm733
      %v1100 = vld [vmem:[#allocation2 + $0x8] sm:$0x1]
      %v1101 = vsel %vm1099, %v1046, %v1100
      %1102 = vst [vmem:[#allocation2 + $0x8] sm:$0x1] %v1101
      %v1103 = vld [vmem:[#allocation2 + $0x14] sm:$0x1]
      %v1104 = vsel %vm1099, %v1048, %v1103
      %1105 = vst [vmem:[#allocation2 + $0x14] sm:$0x1] %v1104
      %v1106 = vld [vmem:[#allocation2 + $0x20] sm:$0x1]
      %v1107 = vsel %vm1099, %v1050, %v1106
      %1108 = vst [vmem:[#allocation2 + $0x20] sm:$0x1] %v1107
      %v1109 = vld [vmem:[#allocation2 + $0x2c] sm:$0x1]
      %v1110 = vsel %vm1099, %v1052, %v1109
      %1111 = vst [vmem:[#allocation2 + $0x2c] sm:$0x1] %v1110
      %v1112 = vld [vmem:[#allocation2 + $0x38] sm:$0x1]
      %v1113 = vsel %vm1099, %v1054, %v1112
      %1114 = vst [vmem:[#allocation2 + $0x38] sm:$0x1] %v1113
      %v1115 = vld [vmem:[#allocation2 + $0x44] sm:$0x1]
      %v1116 = vsel %vm1099, %v1056, %v1115
      %1117 = vst [vmem:[#allocation2 + $0x44] sm:$0x1] %v1116
      %v1118 = vld [vmem:[#allocation2 + $0x50] sm:$0x1]
      %v1119 = vsel %vm1099, %v1058, %v1118
      %1120 = vst [vmem:[#allocation2 + $0x50] sm:$0x1] %v1119
      %v1121 = vld [vmem:[#allocation2 + $0x5c] sm:$0x1]
      %v1122 = vsel %vm1099, %v1060, %v1121
      %1123 = vst [vmem:[#allocation2 + $0x5c] sm:$0x1] %v1122
      %v1124 = vld [vmem:[#allocation2 + $0x68] sm:$0x1]
      %v1125 = vsel %vm1099, %v1062, %v1124
      %1126 = vst [vmem:[#allocation2 + $0x68] sm:$0x1] %v1125
      %v1127 = vld [vmem:[#allocation2 + $0x74] sm:$0x1]
      %v1128 = vsel %vm1099, %v1064, %v1127
      %1129 = vst [vmem:[#allocation2 + $0x74] sm:$0x1] %v1128
      %v1130 = vld [vmem:[#allocation2 + $0x80] sm:$0x1]
      %v1131 = vsel %vm1099, %v1066, %v1130
      %1132 = vst [vmem:[#allocation2 + $0x80] sm:$0x1] %v1131
      %v1133 = vld [vmem:[#allocation2 + $0x8c] sm:$0x1]
      %v1134 = vsel %vm1099, %v1068, %v1133
      %1135 = vst [vmem:[#allocation2 + $0x8c] sm:$0x1] %v1134
      %v1136 = vld [vmem:[#allocation2 + $0x98] sm:$0x1]
      %v1137 = vsel %vm1099, %v1070, %v1136
      %1138 = vst [vmem:[#allocation2 + $0x98] sm:$0x1] %v1137
      %v1139 = vld [vmem:[#allocation2 + $0xa4] sm:$0x1]
      %v1140 = vsel %vm1099, %v1072, %v1139
      %1141 = vst [vmem:[#allocation2 + $0xa4] sm:$0x1] %v1140
      %v1142 = vld [vmem:[#allocation2 + $0xb0] sm:$0x1]
      %v1143 = vsel %vm1099, %v1074, %v1142
      %1144 = vst [vmem:[#allocation2 + $0xb0] sm:$0x1] %v1143
      %v1145 = vld [vmem:[#allocation2 + $0xbc] sm:$0x1]
      %v1146 = vsel %vm1099, %v1076, %v1145
      %1147 = vst [vmem:[#allocation2 + $0xbc] sm:$0x1] %v1146
      %v1148 = vld [vmem:[#allocation2 + $0xc8] sm:$0x1]
      %v1149 = vsel %vm1099, %v1078, %v1148
      %1150 = vst [vmem:[#allocation2 + $0xc8] sm:$0x1] %v1149
      %v1151 = vld [vmem:[#allocation2 + $0xd4] sm:$0x1]
      %v1152 = vsel %vm1099, %v1080, %v1151
      %1153 = vst [vmem:[#allocation2 + $0xd4] sm:$0x1] %v1152
      %v1154 = vld [vmem:[#allocation2] sm:$0xf]
      %v1155 = vld [vmem:[#allocation2 + $0x4] sm:$0xf]
      %v1156 = vld [vmem:[#allocation2 + $0xc] sm:$0xf]
      %v1157 = vld [vmem:[#allocation2 + $0x10] sm:$0xf]
      %v1158 = vld [vmem:[#allocation2 + $0x18] sm:$0xf]
      %v1159 = vld [vmem:[#allocation2 + $0x1c] sm:$0xf]
      %v1160 = vld [vmem:[#allocation2 + $0x24] sm:$0xf]
      %v1161 = vld [vmem:[#allocation2 + $0x28] sm:$0xf]
      %v1162 = vld [vmem:[#allocation2 + $0x30] sm:$0xf]
      %v1163 = vld [vmem:[#allocation2 + $0x34] sm:$0xf]
      %v1164 = vld [vmem:[#allocation2 + $0x3c] sm:$0xf]
      %v1165 = vld [vmem:[#allocation2 + $0x40] sm:$0xf]
      %v1166 = vld [vmem:[#allocation2 + $0x48] sm:$0xf]
      %v1167 = vld [vmem:[#allocation2 + $0x4c] sm:$0xf]
      %v1168 = vld [vmem:[#allocation2 + $0x54] sm:$0xf]
      %v1169 = vld [vmem:[#allocation2 + $0x58] sm:$0xf]
      %v1170 = vld [vmem:[#allocation2 + $0x60] sm:$0xf]
      %v1171 = vld [vmem:[#allocation2 + $0x64] sm:$0xf]
      %v1172 = vld [vmem:[#allocation2 + $0x6c] sm:$0xf]
      %v1173 = vld [vmem:[#allocation2 + $0x70] sm:$0xf]
      %v1174 = vld [vmem:[#allocation2 + $0x78] sm:$0xf]
      %v1175 = vld [vmem:[#allocation2 + $0x7c] sm:$0xf]
      %v1176 = vld [vmem:[#allocation2 + $0x84] sm:$0xf]
      %v1177 = vld [vmem:[#allocation2 + $0x88] sm:$0xf]
      %v1178 = vld [vmem:[#allocation2 + $0x90] sm:$0xf]
      %v1179 = vld [vmem:[#allocation2 + $0x94] sm:$0xf]
      %v1180 = vld [vmem:[#allocation2 + $0x9c] sm:$0xf]
      %v1181 = vld [vmem:[#allocation2 + $0xa0] sm:$0xf]
      %v1182 = vld [vmem:[#allocation2 + $0xa8] sm:$0xf]
      %v1183 = vld [vmem:[#allocation2 + $0xac] sm:$0xf]
      %v1184 = vld [vmem:[#allocation2 + $0xb4] sm:$0xf]
      %v1185 = vld [vmem:[#allocation2 + $0xb8] sm:$0xf]
      %v1218 = vunpack.c.l.b16 %v1154
      %v1219 = vunpack.c.l.b16 %v1155
      %v1220 = vunpack.c.l.b16 %v1156
      %v1221 = vunpack.c.l.b16 %v1157
      %v1222 = vunpack.c.l.b16 %v1158
      %v1223 = vunpack.c.l.b16 %v1159
      %v1224 = vunpack.c.l.b16 %v1160
      %v1225 = vunpack.c.l.b16 %v1161
      %v1226 = vunpack.c.l.b16 %v1162
      %v1227 = vunpack.c.l.b16 %v1163
      %v1228 = vunpack.c.l.b16 %v1164
      %v1229 = vunpack.c.l.b16 %v1165
      %v1230 = vunpack.c.l.b16 %v1166
      %v1231 = vunpack.c.l.b16 %v1167
      %v1232 = vunpack.c.l.b16 %v1168
      %v1233 = vunpack.c.l.b16 %v1169
      %v1234 = vunpack.c.l.b16 %v1170
      %v1235 = vunpack.c.l.b16 %v1171
      %v1236 = vunpack.c.l.b16 %v1172
      %v1237 = vunpack.c.l.b16 %v1173
      %v1238 = vunpack.c.l.b16 %v1174
      %v1239 = vunpack.c.l.b16 %v1175
      %v1240 = vunpack.c.l.b16 %v1176
      %v1241 = vunpack.c.l.b16 %v1177
      %v1242 = vunpack.c.l.b16 %v1178
      %v1243 = vunpack.c.l.b16 %v1179
      %v1244 = vunpack.c.l.b16 %v1180
      %v1245 = vunpack.c.l.b16 %v1181
      %v1246 = vunpack.c.l.b16 %v1182
      %v1247 = vunpack.c.l.b16 %v1183
      %v1248 = vunpack.c.l.b16 %v1184
      %v1249 = vunpack.c.l.b16 %v1185
      %v1250 = vpack.c.b16 %v1219, %v1218
      %v1251 = vpack.c.b16 %v1221, %v1220
      %v1252 = vpack.c.b16 %v1223, %v1222
      %v1253 = vpack.c.b16 %v1225, %v1224
      %v1254 = vpack.c.b16 %v1227, %v1226
      %v1255 = vpack.c.b16 %v1229, %v1228
      %v1256 = vpack.c.b16 %v1231, %v1230
      %v1257 = vpack.c.b16 %v1233, %v1232
      %v1258 = vpack.c.b16 %v1235, %v1234
      %v1259 = vpack.c.b16 %v1237, %v1236
      %v1260 = vpack.c.b16 %v1239, %v1238
      %v1261 = vpack.c.b16 %v1241, %v1240
      %v1262 = vpack.c.b16 %v1243, %v1242
      %v1263 = vpack.c.b16 %v1245, %v1244
      %v1264 = vpack.c.b16 %v1247, %v1246
      %v1265 = vpack.c.b16 %v1249, %v1248
      %vm1282 = vcmask 64512
      %1283 = vst.msk [vmem:[#allocation3] sm:$0xff] %vm1282, %v1250
      %1284 = vst.msk [vmem:[#allocation3 + $0x8] sm:$0xff] %vm1282, %v1251
      %1285 = vst.msk [vmem:[#allocation3 + $0x10] sm:$0xff] %vm1282, %v1252
      %1286 = vst.msk [vmem:[#allocation3 + $0x18] sm:$0xff] %vm1282, %v1253
      %1287 = vst.msk [vmem:[#allocation3 + $0x20] sm:$0xff] %vm1282, %v1254
      %1288 = vst.msk [vmem:[#allocation3 + $0x28] sm:$0xff] %vm1282, %v1255
      %1289 = vst.msk [vmem:[#allocation3 + $0x30] sm:$0xff] %vm1282, %v1256
      %1290 = vst.msk [vmem:[#allocation3 + $0x38] sm:$0xff] %vm1282, %v1257
      %1291 = vst.msk [vmem:[#allocation3 + $0x40] sm:$0xff] %vm1282, %v1258
      %1292 = vst.msk [vmem:[#allocation3 + $0x48] sm:$0xff] %vm1282, %v1259
      %1293 = vst.msk [vmem:[#allocation3 + $0x50] sm:$0xff] %vm1282, %v1260
      %1294 = vst.msk [vmem:[#allocation3 + $0x58] sm:$0xff] %vm1282, %v1261
      %1295 = vst.msk [vmem:[#allocation3 + $0x60] sm:$0xff] %vm1282, %v1262
      %1296 = vst.msk [vmem:[#allocation3 + $0x68] sm:$0xff] %vm1282, %v1263
      %1297 = vst.msk [vmem:[#allocation3 + $0x70] sm:$0xff] %vm1282, %v1264
      %1298 = vst.msk [vmem:[#allocation3 + $0x78] sm:$0xff] %vm1282, %v1265
      %v1299 = vld [vmem:[#allocation2] sm:$0xf]
      %v1300 = vld [vmem:[#allocation2 + $0x4] sm:$0xf]
      %v1301 = vld [vmem:[#allocation2 + $0x8] sm:$0x1]
      %v1302 = vld [vmem:[#allocation2 + $0xc] sm:$0xf]
      %v1303 = vld [vmem:[#allocation2 + $0x10] sm:$0xf]
      %v1304 = vld [vmem:[#allocation2 + $0x14] sm:$0x1]
      %v1305 = vld [vmem:[#allocation2 + $0x18] sm:$0xf]
      %v1306 = vld [vmem:[#allocation2 + $0x1c] sm:$0xf]
      %v1307 = vld [vmem:[#allocation2 + $0x20] sm:$0x1]
      %v1308 = vld [vmem:[#allocation2 + $0x24] sm:$0xf]
      %v1309 = vld [vmem:[#allocation2 + $0x28] sm:$0xf]
      %v1310 = vld [vmem:[#allocation2 + $0x2c] sm:$0x1]
      %v1311 = vld [vmem:[#allocation2 + $0x30] sm:$0xf]
      %v1312 = vld [vmem:[#allocation2 + $0x34] sm:$0xf]
      %v1313 = vld [vmem:[#allocation2 + $0x38] sm:$0x1]
      %v1314 = vld [vmem:[#allocation2 + $0x3c] sm:$0xf]
      %v1315 = vld [vmem:[#allocation2 + $0x40] sm:$0xf]
      %v1316 = vld [vmem:[#allocation2 + $0x44] sm:$0x1]
      %v1317 = vld [vmem:[#allocation2 + $0x48] sm:$0xf]
      %v1318 = vld [vmem:[#allocation2 + $0x4c] sm:$0xf]
      %v1319 = vld [vmem:[#allocation2 + $0x50] sm:$0x1]
      %v1320 = vld [vmem:[#allocation2 + $0x54] sm:$0xf]
      %v1321 = vld [vmem:[#allocation2 + $0x58] sm:$0xf]
      %v1322 = vld [vmem:[#allocation2 + $0x5c] sm:$0x1]
      %v1323 = vld [vmem:[#allocation2 + $0x60] sm:$0xf]
      %v1324 = vld [vmem:[#allocation2 + $0x64] sm:$0xf]
      %v1325 = vld [vmem:[#allocation2 + $0x68] sm:$0x1]
      %v1326 = vld [vmem:[#allocation2 + $0x6c] sm:$0xf]
      %v1327 = vld [vmem:[#allocation2 + $0x70] sm:$0xf]
      %v1328 = vld [vmem:[#allocation2 + $0x74] sm:$0x1]
      %v1329 = vld [vmem:[#allocation2 + $0x78] sm:$0xf]
      %v1330 = vld [vmem:[#allocation2 + $0x7c] sm:$0xf]
      %v1331 = vld [vmem:[#allocation2 + $0x80] sm:$0x1]
      %v1332 = vld [vmem:[#allocation2 + $0x84] sm:$0xf]
      %v1333 = vld [vmem:[#allocation2 + $0x88] sm:$0xf]
      %v1334 = vld [vmem:[#allocation2 + $0x8c] sm:$0x1]
      %v1335 = vld [vmem:[#allocation2 + $0x90] sm:$0xf]
      %v1336 = vld [vmem:[#allocation2 + $0x94] sm:$0xf]
      %v1337 = vld [vmem:[#allocation2 + $0x98] sm:$0x1]
      %v1338 = vld [vmem:[#allocation2 + $0x9c] sm:$0xf]
      %v1339 = vld [vmem:[#allocation2 + $0xa0] sm:$0xf]
      %v1340 = vld [vmem:[#allocation2 + $0xa4] sm:$0x1]
      %v1341 = vld [vmem:[#allocation2 + $0xa8] sm:$0xf]
      %v1342 = vld [vmem:[#allocation2 + $0xac] sm:$0xf]
      %v1343 = vld [vmem:[#allocation2 + $0xb0] sm:$0x1]
      %v1344 = vld [vmem:[#allocation2 + $0xb4] sm:$0xf]
      %v1345 = vld [vmem:[#allocation2 + $0xb8] sm:$0xf]
      %v1346 = vld [vmem:[#allocation2 + $0xbc] sm:$0x1]
      %vm1347 = vsmask.f32 3328
      %vm1348 = vsmask.f32 7440
      %vm1349 = vmor %vm1347, %vm1348
      %v1351 = vshrl.u32 %v1299, 16
      %v1353 = vrot.slane %v1351, 4
      %v1354 = vshll.u32 %v1299, 16
      %v1356 = vrot.slane %v1354, 5
      %v1357 = vor.u32 %v1353, %v1356
      %v1358 = vrot.slane %v1357, 4
      %v1360 = vshll.u32 %v1300, 16
      %v1362 = vrot.slane %v1360, 5
      %v1363 = vsel %vm1349, %v1358, %v1362
      %v1364 = vshrl.u32 %v1300, 16
      %v1366 = vrot.slane %v1364, 4
      %v1367 = vor.u32 %v1366, %v1362
      %v1368 = vrot.slane %v1367, 4
      %v1370 = vshll.u32 %v1301, 16
      %v1372 = vrot.slane %v1370, 5
      %v1373 = vsel %vm1349, %v1368, %v1372
      %v1375 = vshrl.u32 %v1302, 16
      %v1377 = vrot.slane %v1375, 4
      %v1378 = vshll.u32 %v1302, 16
      %v1380 = vrot.slane %v1378, 5
      %v1381 = vor.u32 %v1377, %v1380
      %v1382 = vrot.slane %v1381, 4
      %v1384 = vshll.u32 %v1303, 16
      %v1386 = vrot.slane %v1384, 5
      %v1387 = vsel %vm1349, %v1382, %v1386
      %v1388 = vshrl.u32 %v1303, 16
      %v1390 = vrot.slane %v1388, 4
      %v1391 = vor.u32 %v1390, %v1386
      %v1392 = vrot.slane %v1391, 4
      %v1394 = vshll.u32 %v1304, 16
      %v1396 = vrot.slane %v1394, 5
      %v1397 = vsel %vm1349, %v1392, %v1396
      %v1399 = vshrl.u32 %v1305, 16
      %v1401 = vrot.slane %v1399, 4
      %v1402 = vshll.u32 %v1305, 16
      %v1404 = vrot.slane %v1402, 5
      %v1405 = vor.u32 %v1401, %v1404
      %v1406 = vrot.slane %v1405, 4
      %v1408 = vshll.u32 %v1306, 16
      %v1410 = vrot.slane %v1408, 5
      %v1411 = vsel %vm1349, %v1406, %v1410
      %v1412 = vshrl.u32 %v1306, 16
      %v1414 = vrot.slane %v1412, 4
      %v1415 = vor.u32 %v1414, %v1410
      %v1416 = vrot.slane %v1415, 4
      %v1418 = vshll.u32 %v1307, 16
      %v1420 = vrot.slane %v1418, 5
      %v1421 = vsel %vm1349, %v1416, %v1420
      %v1423 = vshrl.u32 %v1308, 16
      %v1425 = vrot.slane %v1423, 4
      %v1426 = vshll.u32 %v1308, 16
      %v1428 = vrot.slane %v1426, 5
      %v1429 = vor.u32 %v1425, %v1428
      %v1430 = vrot.slane %v1429, 4
      %v1432 = vshll.u32 %v1309, 16
      %v1434 = vrot.slane %v1432, 5
      %v1435 = vsel %vm1349, %v1430, %v1434
      %v1436 = vshrl.u32 %v1309, 16
      %v1438 = vrot.slane %v1436, 4
      %v1439 = vor.u32 %v1438, %v1434
      %v1440 = vrot.slane %v1439, 4
      %v1442 = vshll.u32 %v1310, 16
      %v1444 = vrot.slane %v1442, 5
      %v1445 = vsel %vm1349, %v1440, %v1444
      %v1447 = vshrl.u32 %v1311, 16
      %v1449 = vrot.slane %v1447, 4
      %v1450 = vshll.u32 %v1311, 16
      %v1452 = vrot.slane %v1450, 5
      %v1453 = vor.u32 %v1449, %v1452
      %v1454 = vrot.slane %v1453, 4
      %v1456 = vshll.u32 %v1312, 16
      %v1458 = vrot.slane %v1456, 5
      %v1459 = vsel %vm1349, %v1454, %v1458
      %v1460 = vshrl.u32 %v1312, 16
      %v1462 = vrot.slane %v1460, 4
      %v1463 = vor.u32 %v1462, %v1458
      %v1464 = vrot.slane %v1463, 4
      %v1466 = vshll.u32 %v1313, 16
      %v1468 = vrot.slane %v1466, 5
      %v1469 = vsel %vm1349, %v1464, %v1468
      %v1471 = vshrl.u32 %v1314, 16
      %v1473 = vrot.slane %v1471, 4
      %v1474 = vshll.u32 %v1314, 16
      %v1476 = vrot.slane %v1474, 5
      %v1477 = vor.u32 %v1473, %v1476
      %v1478 = vrot.slane %v1477, 4
      %v1480 = vshll.u32 %v1315, 16
      %v1482 = vrot.slane %v1480, 5
      %v1483 = vsel %vm1349, %v1478, %v1482
      %v1484 = vshrl.u32 %v1315, 16
      %v1486 = vrot.slane %v1484, 4
      %v1487 = vor.u32 %v1486, %v1482
      %v1488 = vrot.slane %v1487, 4
      %v1490 = vshll.u32 %v1316, 16
      %v1492 = vrot.slane %v1490, 5
      %v1493 = vsel %vm1349, %v1488, %v1492
      %v1495 = vshrl.u32 %v1317, 16
      %v1497 = vrot.slane %v1495, 4
      %v1498 = vshll.u32 %v1317, 16
      %v1500 = vrot.slane %v1498, 5
      %v1501 = vor.u32 %v1497, %v1500
      %v1502 = vrot.slane %v1501, 4
      %v1504 = vshll.u32 %v1318, 16
      %v1506 = vrot.slane %v1504, 5
      %v1507 = vsel %vm1349, %v1502, %v1506
      %v1508 = vshrl.u32 %v1318, 16
      %v1510 = vrot.slane %v1508, 4
      %v1511 = vor.u32 %v1510, %v1506
      %v1512 = vrot.slane %v1511, 4
      %v1514 = vshll.u32 %v1319, 16
      %v1516 = vrot.slane %v1514, 5
      %v1517 = vsel %vm1349, %v1512, %v1516
      %v1519 = vshrl.u32 %v1320, 16
      %v1521 = vrot.slane %v1519, 4
      %v1522 = vshll.u32 %v1320, 16
      %v1524 = vrot.slane %v1522, 5
      %v1525 = vor.u32 %v1521, %v1524
      %v1526 = vrot.slane %v1525, 4
      %v1528 = vshll.u32 %v1321, 16
      %v1530 = vrot.slane %v1528, 5
      %v1531 = vsel %vm1349, %v1526, %v1530
      %v1532 = vshrl.u32 %v1321, 16
      %v1534 = vrot.slane %v1532, 4
      %v1535 = vor.u32 %v1534, %v1530
      %v1536 = vrot.slane %v1535, 4
      %v1538 = vshll.u32 %v1322, 16
      %v1540 = vrot.slane %v1538, 5
      %v1541 = vsel %vm1349, %v1536, %v1540
      %v1543 = vshrl.u32 %v1323, 16
      %v1545 = vrot.slane %v1543, 4
      %v1546 = vshll.u32 %v1323, 16
      %v1548 = vrot.slane %v1546, 5
      %v1549 = vor.u32 %v1545, %v1548
      %v1550 = vrot.slane %v1549, 4
      %v1552 = vshll.u32 %v1324, 16
      %v1554 = vrot.slane %v1552, 5
      %v1555 = vsel %vm1349, %v1550, %v1554
      %v1556 = vshrl.u32 %v1324, 16
      %v1558 = vrot.slane %v1556, 4
      %v1559 = vor.u32 %v1558, %v1554
      %v1560 = vrot.slane %v1559, 4
      %v1562 = vshll.u32 %v1325, 16
      %v1564 = vrot.slane %v1562, 5
      %v1565 = vsel %vm1349, %v1560, %v1564
      %v1567 = vshrl.u32 %v1326, 16
      %v1569 = vrot.slane %v1567, 4
      %v1570 = vshll.u32 %v1326, 16
      %v1572 = vrot.slane %v1570, 5
      %v1573 = vor.u32 %v1569, %v1572
      %v1574 = vrot.slane %v1573, 4
      %v1576 = vshll.u32 %v1327, 16
      %v1578 = vrot.slane %v1576, 5
      %v1579 = vsel %vm1349, %v1574, %v1578
      %v1580 = vshrl.u32 %v1327, 16
      %v1582 = vrot.slane %v1580, 4
      %v1583 = vor.u32 %v1582, %v1578
      %v1584 = vrot.slane %v1583, 4
      %v1586 = vshll.u32 %v1328, 16
      %v1588 = vrot.slane %v1586, 5
      %v1589 = vsel %vm1349, %v1584, %v1588
      %v1591 = vshrl.u32 %v1329, 16
      %v1593 = vrot.slane %v1591, 4
      %v1594 = vshll.u32 %v1329, 16
      %v1596 = vrot.slane %v1594, 5
      %v1597 = vor.u32 %v1593, %v1596
      %v1598 = vrot.slane %v1597, 4
      %v1600 = vshll.u32 %v1330, 16
      %v1602 = vrot.slane %v1600, 5
      %v1603 = vsel %vm1349, %v1598, %v1602
      %v1604 = vshrl.u32 %v1330, 16
      %v1606 = vrot.slane %v1604, 4
      %v1607 = vor.u32 %v1606, %v1602
      %v1608 = vrot.slane %v1607, 4
      %v1610 = vshll.u32 %v1331, 16
      %v1612 = vrot.slane %v1610, 5
      %v1613 = vsel %vm1349, %v1608, %v1612
      %v1615 = vshrl.u32 %v1332, 16
      %v1617 = vrot.slane %v1615, 4
      %v1618 = vshll.u32 %v1332, 16
      %v1620 = vrot.slane %v1618, 5
      %v1621 = vor.u32 %v1617, %v1620
      %v1622 = vrot.slane %v1621, 4
      %v1624 = vshll.u32 %v1333, 16
      %v1626 = vrot.slane %v1624, 5
      %v1627 = vsel %vm1349, %v1622, %v1626
      %v1628 = vshrl.u32 %v1333, 16
      %v1630 = vrot.slane %v1628, 4
      %v1631 = vor.u32 %v1630, %v1626
      %v1632 = vrot.slane %v1631, 4
      %v1634 = vshll.u32 %v1334, 16
      %v1636 = vrot.slane %v1634, 5
      %v1637 = vsel %vm1349, %v1632, %v1636
      %v1639 = vshrl.u32 %v1335, 16
      %v1641 = vrot.slane %v1639, 4
      %v1642 = vshll.u32 %v1335, 16
      %v1644 = vrot.slane %v1642, 5
      %v1645 = vor.u32 %v1641, %v1644
      %v1646 = vrot.slane %v1645, 4
      %v1648 = vshll.u32 %v1336, 16
      %v1650 = vrot.slane %v1648, 5
      %v1651 = vsel %vm1349, %v1646, %v1650
      %v1652 = vshrl.u32 %v1336, 16
      %v1654 = vrot.slane %v1652, 4
      %v1655 = vor.u32 %v1654, %v1650
      %v1656 = vrot.slane %v1655, 4
      %v1658 = vshll.u32 %v1337, 16
      %v1660 = vrot.slane %v1658, 5
      %v1661 = vsel %vm1349, %v1656, %v1660
      %v1663 = vshrl.u32 %v1338, 16
      %v1665 = vrot.slane %v1663, 4
      %v1666 = vshll.u32 %v1338, 16
      %v1668 = vrot.slane %v1666, 5
      %v1669 = vor.u32 %v1665, %v1668
      %v1670 = vrot.slane %v1669, 4
      %v1672 = vshll.u32 %v1339, 16
      %v1674 = vrot.slane %v1672, 5
      %v1675 = vsel %vm1349, %v1670, %v1674
      %v1676 = vshrl.u32 %v1339, 16
      %v1678 = vrot.slane %v1676, 4
      %v1679 = vor.u32 %v1678, %v1674
      %v1680 = vrot.slane %v1679, 4
      %v1682 = vshll.u32 %v1340, 16
      %v1684 = vrot.slane %v1682, 5
      %v1685 = vsel %vm1349, %v1680, %v1684
      %v1687 = vshrl.u32 %v1341, 16
      %v1689 = vrot.slane %v1687, 4
      %v1690 = vshll.u32 %v1341, 16
      %v1692 = vrot.slane %v1690, 5
      %v1693 = vor.u32 %v1689, %v1692
      %v1694 = vrot.slane %v1693, 4
      %v1696 = vshll.u32 %v1342, 16
      %v1698 = vrot.slane %v1696, 5
      %v1699 = vsel %vm1349, %v1694, %v1698
      %v1700 = vshrl.u32 %v1342, 16
      %v1702 = vrot.slane %v1700, 4
      %v1703 = vor.u32 %v1702, %v1698
      %v1704 = vrot.slane %v1703, 4
      %v1706 = vshll.u32 %v1343, 16
      %v1708 = vrot.slane %v1706, 5
      %v1709 = vsel %vm1349, %v1704, %v1708
      %v1711 = vshrl.u32 %v1344, 16
      %v1713 = vrot.slane %v1711, 4
      %v1714 = vshll.u32 %v1344, 16
      %v1716 = vrot.slane %v1714, 5
      %v1717 = vor.u32 %v1713, %v1716
      %v1718 = vrot.slane %v1717, 4
      %v1720 = vshll.u32 %v1345, 16
      %v1722 = vrot.slane %v1720, 5
      %v1723 = vsel %vm1349, %v1718, %v1722
      %v1724 = vshrl.u32 %v1345, 16
      %v1726 = vrot.slane %v1724, 4
      %v1727 = vor.u32 %v1726, %v1722
      %v1728 = vrot.slane %v1727, 4
      %v1730 = vshll.u32 %v1346, 16
      %v1732 = vrot.slane %v1730, 5
      %v1733 = vsel %vm1349, %v1728, %v1732
      %v1734 = vunpack.c.l.b16 %v1363
      %v1735 = vunpack.c.l.b16 %v1373
      %v1736 = vunpack.c.l.b16 %v1387
      %v1737 = vunpack.c.l.b16 %v1397
      %v1738 = vunpack.c.l.b16 %v1411
      %v1739 = vunpack.c.l.b16 %v1421
      %v1740 = vunpack.c.l.b16 %v1435
      %v1741 = vunpack.c.l.b16 %v1445
      %v1742 = vunpack.c.l.b16 %v1459
      %v1743 = vunpack.c.l.b16 %v1469
      %v1744 = vunpack.c.l.b16 %v1483
      %v1745 = vunpack.c.l.b16 %v1493
      %v1746 = vunpack.c.l.b16 %v1507
      %v1747 = vunpack.c.l.b16 %v1517
      %v1748 = vunpack.c.l.b16 %v1531
      %v1749 = vunpack.c.l.b16 %v1541
      %v1750 = vunpack.c.l.b16 %v1555
      %v1751 = vunpack.c.l.b16 %v1565
      %v1752 = vunpack.c.l.b16 %v1579
      %v1753 = vunpack.c.l.b16 %v1589
      %v1754 = vunpack.c.l.b16 %v1603
      %v1755 = vunpack.c.l.b16 %v1613
      %v1756 = vunpack.c.l.b16 %v1627
      %v1757 = vunpack.c.l.b16 %v1637
      %v1758 = vunpack.c.l.b16 %v1651
      %v1759 = vunpack.c.l.b16 %v1661
      %v1760 = vunpack.c.l.b16 %v1675
      %v1761 = vunpack.c.l.b16 %v1685
      %v1762 = vunpack.c.l.b16 %v1699
      %v1763 = vunpack.c.l.b16 %v1709
      %v1764 = vunpack.c.l.b16 %v1723
      %v1765 = vunpack.c.l.b16 %v1733
      %v1766 = vpack.c.b16 %v1735, %v1734
      %v1767 = vpack.c.b16 %v1737, %v1736
      %v1768 = vpack.c.b16 %v1739, %v1738
      %v1769 = vpack.c.b16 %v1741, %v1740
      %v1770 = vpack.c.b16 %v1743, %v1742
      %v1771 = vpack.c.b16 %v1745, %v1744
      %v1772 = vpack.c.b16 %v1747, %v1746
      %v1773 = vpack.c.b16 %v1749, %v1748
      %v1774 = vpack.c.b16 %v1751, %v1750
      %v1775 = vpack.c.b16 %v1753, %v1752
      %v1776 = vpack.c.b16 %v1755, %v1754
      %v1777 = vpack.c.b16 %v1757, %v1756
      %v1778 = vpack.c.b16 %v1759, %v1758
      %v1779 = vpack.c.b16 %v1761, %v1760
      %v1780 = vpack.c.b16 %v1763, %v1762
      %v1781 = vpack.c.b16 %v1765, %v1764
      %1782 = vrot.lane.b32.xlu0 %v1766, 8
      %v1783 = vpop.permute.xlu0 %1782
      %1784 = vrot.lane.b32.xlu0 %v1767, 8
      %v1785 = vpop.permute.xlu0 %1784
      %1786 = vrot.lane.b32.xlu0 %v1768, 8
      %v1787 = vpop.permute.xlu0 %1786
      %1788 = vrot.lane.b32.xlu0 %v1769, 8
      %v1789 = vpop.permute.xlu0 %1788
      %1790 = vrot.lane.b32.xlu0 %v1770, 8
      %v1791 = vpop.permute.xlu0 %1790
      %1792 = vrot.lane.b32.xlu0 %v1771, 8
      %v1793 = vpop.permute.xlu0 %1792
      %1794 = vrot.lane.b32.xlu0 %v1772, 8
      %v1795 = vpop.permute.xlu0 %1794
      %1796 = vrot.lane.b32.xlu0 %v1773, 8
      %v1797 = vpop.permute.xlu0 %1796
      %1798 = vrot.lane.b32.xlu0 %v1774, 8
      %v1799 = vpop.permute.xlu0 %1798
      %1800 = vrot.lane.b32.xlu0 %v1775, 8
      %v1801 = vpop.permute.xlu0 %1800
      %1802 = vrot.lane.b32.xlu0 %v1776, 8
      %v1803 = vpop.permute.xlu0 %1802
      %1804 = vrot.lane.b32.xlu0 %v1777, 8
      %v1805 = vpop.permute.xlu0 %1804
      %1806 = vrot.lane.b32.xlu0 %v1778, 8
      %v1807 = vpop.permute.xlu0 %1806
      %1808 = vrot.lane.b32.xlu0 %v1779, 8
      %v1809 = vpop.permute.xlu0 %1808
      %1810 = vrot.lane.b32.xlu0 %v1780, 8
      %v1811 = vpop.permute.xlu0 %1810
      %1812 = vrot.lane.b32.xlu0 %v1781, 8
      %v1813 = vpop.permute.xlu0 %1812
      %vm1830 = vcmask 130112
      %1831 = vst.msk [vmem:[#allocation3] sm:$0xff] %vm1830, %v1783
      %1832 = vst.msk [vmem:[#allocation3 + $0x8] sm:$0xff] %vm1830, %v1785
      %1833 = vst.msk [vmem:[#allocation3 + $0x10] sm:$0xff] %vm1830, %v1787
      %1834 = vst.msk [vmem:[#allocation3 + $0x18] sm:$0xff] %vm1830, %v1789
      %1835 = vst.msk [vmem:[#allocation3 + $0x20] sm:$0xff] %vm1830, %v1791
      %1836 = vst.msk [vmem:[#allocation3 + $0x28] sm:$0xff] %vm1830, %v1793
      %1837 = vst.msk [vmem:[#allocation3 + $0x30] sm:$0xff] %vm1830, %v1795
      %1838 = vst.msk [vmem:[#allocation3 + $0x38] sm:$0xff] %vm1830, %v1797
      %1839 = vst.msk [vmem:[#allocation3 + $0x40] sm:$0xff] %vm1830, %v1799
      %1840 = vst.msk [vmem:[#allocation3 + $0x48] sm:$0xff] %vm1830, %v1801
      %1841 = vst.msk [vmem:[#allocation3 + $0x50] sm:$0xff] %vm1830, %v1803
      %1842 = vst.msk [vmem:[#allocation3 + $0x58] sm:$0xff] %vm1830, %v1805
      %1843 = vst.msk [vmem:[#allocation3 + $0x60] sm:$0xff] %vm1830, %v1807
      %1844 = vst.msk [vmem:[#allocation3 + $0x68] sm:$0xff] %vm1830, %v1809
      %1845 = vst.msk [vmem:[#allocation3 + $0x70] sm:$0xff] %vm1830, %v1811
      %1846 = vst.msk [vmem:[#allocation3 + $0x78] sm:$0xff] %vm1830, %v1813
      %v1847 = vld [vmem:[#allocation2] sm:$0xe]
      %v1848 = vld [vmem:[#allocation2 + $0x4] sm:$0xf]
      %v1849 = vld [vmem:[#allocation2 + $0x8] sm:$0x1]
      %v1850 = vld [vmem:[#allocation2 + $0xc] sm:$0xe]
      %v1851 = vld [vmem:[#allocation2 + $0x10] sm:$0xf]
      %v1852 = vld [vmem:[#allocation2 + $0x14] sm:$0x1]
      %v1853 = vld [vmem:[#allocation2 + $0x18] sm:$0xe]
      %v1854 = vld [vmem:[#allocation2 + $0x1c] sm:$0xf]
      %v1855 = vld [vmem:[#allocation2 + $0x20] sm:$0x1]
      %v1856 = vld [vmem:[#allocation2 + $0x24] sm:$0xe]
      %v1857 = vld [vmem:[#allocation2 + $0x28] sm:$0xf]
      %v1858 = vld [vmem:[#allocation2 + $0x2c] sm:$0x1]
      %v1859 = vld [vmem:[#allocation2 + $0x30] sm:$0xe]
      %v1860 = vld [vmem:[#allocation2 + $0x34] sm:$0xf]
      %v1861 = vld [vmem:[#allocation2 + $0x38] sm:$0x1]
      %v1862 = vld [vmem:[#allocation2 + $0x3c] sm:$0xe]
      %v1863 = vld [vmem:[#allocation2 + $0x40] sm:$0xf]
      %v1864 = vld [vmem:[#allocation2 + $0x44] sm:$0x1]
      %v1865 = vld [vmem:[#allocation2 + $0x48] sm:$0xe]
      %v1866 = vld [vmem:[#allocation2 + $0x4c] sm:$0xf]
      %v1867 = vld [vmem:[#allocation2 + $0x50] sm:$0x1]
      %v1868 = vld [vmem:[#allocation2 + $0x54] sm:$0xe]
      %v1869 = vld [vmem:[#allocation2 + $0x58] sm:$0xf]
      %v1870 = vld [vmem:[#allocation2 + $0x5c] sm:$0x1]
      %v1871 = vld [vmem:[#allocation2 + $0x60] sm:$0xe]
      %v1872 = vld [vmem:[#allocation2 + $0x64] sm:$0xf]
      %v1873 = vld [vmem:[#allocation2 + $0x68] sm:$0x1]
      %v1874 = vld [vmem:[#allocation2 + $0x6c] sm:$0xe]
      %v1875 = vld [vmem:[#allocation2 + $0x70] sm:$0xf]
      %v1876 = vld [vmem:[#allocation2 + $0x74] sm:$0x1]
      %v1877 = vld [vmem:[#allocation2 + $0x78] sm:$0xe]
      %v1878 = vld [vmem:[#allocation2 + $0x7c] sm:$0xf]
      %v1879 = vld [vmem:[#allocation2 + $0x80] sm:$0x1]
      %v1880 = vld [vmem:[#allocation2 + $0x84] sm:$0xe]
      %v1881 = vld [vmem:[#allocation2 + $0x88] sm:$0xf]
      %v1882 = vld [vmem:[#allocation2 + $0x8c] sm:$0x1]
      %v1883 = vld [vmem:[#allocation2 + $0x90] sm:$0xe]
      %v1884 = vld [vmem:[#allocation2 + $0x94] sm:$0xf]
      %v1885 = vld [vmem:[#allocation2 + $0x98] sm:$0x1]
      %v1886 = vld [vmem:[#allocation2 + $0x9c] sm:$0xe]
      %v1887 = vld [vmem:[#allocation2 + $0xa0] sm:$0xf]
      %v1888 = vld [vmem:[#allocation2 + $0xa4] sm:$0x1]
      %v1889 = vld [vmem:[#allocation2 + $0xa8] sm:$0xe]
      %v1890 = vld [vmem:[#allocation2 + $0xac] sm:$0xf]
      %v1891 = vld [vmem:[#allocation2 + $0xb0] sm:$0x1]
      %v1892 = vld [vmem:[#allocation2 + $0xb4] sm:$0xe]
      %v1893 = vld [vmem:[#allocation2 + $0xb8] sm:$0xf]
      %v1894 = vld [vmem:[#allocation2 + $0xbc] sm:$0x1]
      %vm1943 = vcmask 1042432
      %vm1944 = vcmask 1046532
      %vm1945 = vmor %vm1943, %vm1944
      %v1946 = vrot.slane %v1847, 5
      %v1947 = vrot.slane %v1946, 4
      %v1948 = vrot.slane %v1848, 5
      %v1949 = vsel %vm1945, %v1947, %v1948
      %v1950 = vrot.slane %v1948, 4
      %v1951 = vrot.slane %v1849, 5
      %v1952 = vsel %vm1945, %v1950, %v1951
      %v1953 = vrot.slane %v1850, 5
      %v1954 = vrot.slane %v1953, 4
      %v1955 = vrot.slane %v1851, 5
      %v1956 = vsel %vm1945, %v1954, %v1955
      %v1957 = vrot.slane %v1955, 4
      %v1958 = vrot.slane %v1852, 5
      %v1959 = vsel %vm1945, %v1957, %v1958
      %v1960 = vrot.slane %v1853, 5
      %v1961 = vrot.slane %v1960, 4
      %v1962 = vrot.slane %v1854, 5
      %v1963 = vsel %vm1945, %v1961, %v1962
      %v1964 = vrot.slane %v1962, 4
      %v1965 = vrot.slane %v1855, 5
      %v1966 = vsel %vm1945, %v1964, %v1965
      %v1967 = vrot.slane %v1856, 5
      %v1968 = vrot.slane %v1967, 4
      %v1969 = vrot.slane %v1857, 5
      %v1970 = vsel %vm1945, %v1968, %v1969
      %v1971 = vrot.slane %v1969, 4
      %v1972 = vrot.slane %v1858, 5
      %v1973 = vsel %vm1945, %v1971, %v1972
      %v1974 = vrot.slane %v1859, 5
      %v1975 = vrot.slane %v1974, 4
      %v1976 = vrot.slane %v1860, 5
      %v1977 = vsel %vm1945, %v1975, %v1976
      %v1978 = vrot.slane %v1976, 4
      %v1979 = vrot.slane %v1861, 5
      %v1980 = vsel %vm1945, %v1978, %v1979
      %v1981 = vrot.slane %v1862, 5
      %v1982 = vrot.slane %v1981, 4
      %v1983 = vrot.slane %v1863, 5
      %v1984 = vsel %vm1945, %v1982, %v1983
      %v1985 = vrot.slane %v1983, 4
      %v1986 = vrot.slane %v1864, 5
      %v1987 = vsel %vm1945, %v1985, %v1986
      %v1988 = vrot.slane %v1865, 5
      %v1989 = vrot.slane %v1988, 4
      %v1990 = vrot.slane %v1866, 5
      %v1991 = vsel %vm1945, %v1989, %v1990
      %v1992 = vrot.slane %v1990, 4
      %v1993 = vrot.slane %v1867, 5
      %v1994 = vsel %vm1945, %v1992, %v1993
      %v1995 = vrot.slane %v1868, 5
      %v1996 = vrot.slane %v1995, 4
      %v1997 = vrot.slane %v1869, 5
      %v1998 = vsel %vm1945, %v1996, %v1997
      %v1999 = vrot.slane %v1997, 4
      %v2000 = vrot.slane %v1870, 5
      %v2001 = vsel %vm1945, %v1999, %v2000
      %v2002 = vrot.slane %v1871, 5
      %v2003 = vrot.slane %v2002, 4
      %v2004 = vrot.slane %v1872, 5
      %v2005 = vsel %vm1945, %v2003, %v2004
      %v2006 = vrot.slane %v2004, 4
      %v2007 = vrot.slane %v1873, 5
      %v2008 = vsel %vm1945, %v2006, %v2007
      %v2009 = vrot.slane %v1874, 5
      %v2010 = vrot.slane %v2009, 4
      %v2011 = vrot.slane %v1875, 5
      %v2012 = vsel %vm1945, %v2010, %v2011
      %v2013 = vrot.slane %v2011, 4
      %v2014 = vrot.slane %v1876, 5
      %v2015 = vsel %vm1945, %v2013, %v2014
      %v2016 = vrot.slane %v1877, 5
      %v2017 = vrot.slane %v2016, 4
      %v2018 = vrot.slane %v1878, 5
      %v2019 = vsel %vm1945, %v2017, %v2018
      %v2020 = vrot.slane %v2018, 4
      %v2021 = vrot.slane %v1879, 5
      %v2022 = vsel %vm1945, %v2020, %v2021
      %v2023 = vrot.slane %v1880, 5
      %v2024 = vrot.slane %v2023, 4
      %v2025 = vrot.slane %v1881, 5
      %v2026 = vsel %vm1945, %v2024, %v2025
      %v2027 = vrot.slane %v2025, 4
      %v2028 = vrot.slane %v1882, 5
      %v2029 = vsel %vm1945, %v2027, %v2028
      %v2030 = vrot.slane %v1883, 5
      %v2031 = vrot.slane %v2030, 4
      %v2032 = vrot.slane %v1884, 5
      %v2033 = vsel %vm1945, %v2031, %v2032
      %v2034 = vrot.slane %v2032, 4
      %v2035 = vrot.slane %v1885, 5
      %v2036 = vsel %vm1945, %v2034, %v2035
      %v2037 = vrot.slane %v1886, 5
      %v2038 = vrot.slane %v2037, 4
      %v2039 = vrot.slane %v1887, 5
      %v2040 = vsel %vm1945, %v2038, %v2039
      %v2041 = vrot.slane %v2039, 4
      %v2042 = vrot.slane %v1888, 5
      %v2043 = vsel %vm1945, %v2041, %v2042
      %v2044 = vrot.slane %v1889, 5
      %v2045 = vrot.slane %v2044, 4
      %v2046 = vrot.slane %v1890, 5
      %v2047 = vsel %vm1945, %v2045, %v2046
      %v2048 = vrot.slane %v2046, 4
      %v2049 = vrot.slane %v1891, 5
      %v2050 = vsel %vm1945, %v2048, %v2049
      %v2051 = vrot.slane %v1892, 5
      %v2052 = vrot.slane %v2051, 4
      %v2053 = vrot.slane %v1893, 5
      %v2054 = vsel %vm1945, %v2052, %v2053
      %v2055 = vrot.slane %v2053, 4
      %v2056 = vrot.slane %v1894, 5
      %v2057 = vsel %vm1945, %v2055, %v2056
      %v2058 = vunpack.c.l.b16 %v1949
      %v2059 = vunpack.c.l.b16 %v1952
      %v2060 = vunpack.c.l.b16 %v1956
      %v2061 = vunpack.c.l.b16 %v1959
      %v2062 = vunpack.c.l.b16 %v1963
      %v2063 = vunpack.c.l.b16 %v1966
      %v2064 = vunpack.c.l.b16 %v1970
      %v2065 = vunpack.c.l.b16 %v1973
      %v2066 = vunpack.c.l.b16 %v1977
      %v2067 = vunpack.c.l.b16 %v1980
      %v2068 = vunpack.c.l.b16 %v1984
      %v2069 = vunpack.c.l.b16 %v1987
      %v2070 = vunpack.c.l.b16 %v1991
      %v2071 = vunpack.c.l.b16 %v1994
      %v2072 = vunpack.c.l.b16 %v1998
      %v2073 = vunpack.c.l.b16 %v2001
      %v2074 = vunpack.c.l.b16 %v2005
      %v2075 = vunpack.c.l.b16 %v2008
      %v2076 = vunpack.c.l.b16 %v2012
      %v2077 = vunpack.c.l.b16 %v2015
      %v2078 = vunpack.c.l.b16 %v2019
      %v2079 = vunpack.c.l.b16 %v2022
      %v2080 = vunpack.c.l.b16 %v2026
      %v2081 = vunpack.c.l.b16 %v2029
      %v2082 = vunpack.c.l.b16 %v2033
      %v2083 = vunpack.c.l.b16 %v2036
      %v2084 = vunpack.c.l.b16 %v2040
      %v2085 = vunpack.c.l.b16 %v2043
      %v2086 = vunpack.c.l.b16 %v2047
      %v2087 = vunpack.c.l.b16 %v2050
      %v2088 = vunpack.c.l.b16 %v2054
      %v2089 = vunpack.c.l.b16 %v2057
      %v2090 = vpack.c.b16 %v2059, %v2058
      %v2091 = vpack.c.b16 %v2061, %v2060
      %v2092 = vpack.c.b16 %v2063, %v2062
      %v2093 = vpack.c.b16 %v2065, %v2064
      %v2094 = vpack.c.b16 %v2067, %v2066
      %v2095 = vpack.c.b16 %v2069, %v2068
      %v2096 = vpack.c.b16 %v2071, %v2070
      %v2097 = vpack.c.b16 %v2073, %v2072
      %v2098 = vpack.c.b16 %v2075, %v2074
      %v2099 = vpack.c.b16 %v2077, %v2076
      %v2100 = vpack.c.b16 %v2079, %v2078
      %v2101 = vpack.c.b16 %v2081, %v2080
      %v2102 = vpack.c.b16 %v2083, %v2082
      %v2103 = vpack.c.b16 %v2085, %v2084
      %v2104 = vpack.c.b16 %v2087, %v2086
      %v2105 = vpack.c.b16 %v2089, %v2088
      %2106 = vrot.lane.b32.xlu0 %v2090, 16
      %v2107 = vpop.permute.xlu0 %2106
      %2108 = vrot.lane.b32.xlu0 %v2091, 16
      %v2109 = vpop.permute.xlu0 %2108
      %2110 = vrot.lane.b32.xlu0 %v2092, 16
      %v2111 = vpop.permute.xlu0 %2110
      %2112 = vrot.lane.b32.xlu0 %v2093, 16
      %v2113 = vpop.permute.xlu0 %2112
      %2114 = vrot.lane.b32.xlu0 %v2094, 16
      %v2115 = vpop.permute.xlu0 %2114
      %2116 = vrot.lane.b32.xlu0 %v2095, 16
      %v2117 = vpop.permute.xlu0 %2116
      %2118 = vrot.lane.b32.xlu0 %v2096, 16
      %v2119 = vpop.permute.xlu0 %2118
      %2120 = vrot.lane.b32.xlu0 %v2097, 16
      %v2121 = vpop.permute.xlu0 %2120
      %2122 = vrot.lane.b32.xlu0 %v2098, 16
      %v2123 = vpop.permute.xlu0 %2122
      %2124 = vrot.lane.b32.xlu0 %v2099, 16
      %v2125 = vpop.permute.xlu0 %2124
      %2126 = vrot.lane.b32.xlu0 %v2100, 16
      %v2127 = vpop.permute.xlu0 %2126
      %2128 = vrot.lane.b32.xlu0 %v2101, 16
      %v2129 = vpop.permute.xlu0 %2128
      %2130 = vrot.lane.b32.xlu0 %v2102, 16
      %v2131 = vpop.permute.xlu0 %2130
      %2132 = vrot.lane.b32.xlu0 %v2103, 16
      %v2133 = vpop.permute.xlu0 %2132
      %2134 = vrot.lane.b32.xlu0 %v2104, 16
      %v2135 = vpop.permute.xlu0 %2134
      %2136 = vrot.lane.b32.xlu0 %v2105, 16
      %v2137 = vpop.permute.xlu0 %2136
      %vm2154 = vcmask 195712
      %2155 = vst.msk [vmem:[#allocation3] sm:$0xff] %vm2154, %v2107
      %2156 = vst.msk [vmem:[#allocation3 + $0x8] sm:$0xff] %vm2154, %v2109
      %2157 = vst.msk [vmem:[#allocation3 + $0x10] sm:$0xff] %vm2154, %v2111
      %2158 = vst.msk [vmem:[#allocation3 + $0x18] sm:$0xff] %vm2154, %v2113
      %2159 = vst.msk [vmem:[#allocation3 + $0x20] sm:$0xff] %vm2154, %v2115
      %2160 = vst.msk [vmem:[#allocation3 + $0x28] sm:$0xff] %vm2154, %v2117
      %2161 = vst.msk [vmem:[#allocation3 + $0x30] sm:$0xff] %vm2154, %v2119
      %2162 = vst.msk [vmem:[#allocation3 + $0x38] sm:$0xff] %vm2154, %v2121
      %2163 = vst.msk [vmem:[#allocation3 + $0x40] sm:$0xff] %vm2154, %v2123
      %2164 = vst.msk [vmem:[#allocation3 + $0x48] sm:$0xff] %vm2154, %v2125
      %2165 = vst.msk [vmem:[#allocation3 + $0x50] sm:$0xff] %vm2154, %v2127
      %2166 = vst.msk [vmem:[#allocation3 + $0x58] sm:$0xff] %vm2154, %v2129
      %2167 = vst.msk [vmem:[#allocation3 + $0x60] sm:$0xff] %vm2154, %v2131
      %2168 = vst.msk [vmem:[#allocation3 + $0x68] sm:$0xff] %vm2154, %v2133
      %2169 = vst.msk [vmem:[#allocation3 + $0x70] sm:$0xff] %vm2154, %v2135
      %2170 = vst.msk [vmem:[#allocation3 + $0x78] sm:$0xff] %vm2154, %v2137
      %v2171 = vld [vmem:[%s731] sm:$0xf]
      %v2172 = vld [vmem:[%s731 + $0x4] sm:$0xf]
      %v2173 = vld [vmem:[%s731 + $0xc] sm:$0xf]
      %v2174 = vld [vmem:[%s731 + $0x10] sm:$0xf]
      %v2175 = vld [vmem:[%s731 + $0x18] sm:$0xf]
      %v2176 = vld [vmem:[%s731 + $0x1c] sm:$0xf]
      %v2177 = vld [vmem:[%s731 + $0x24] sm:$0xf]
      %v2178 = vld [vmem:[%s731 + $0x28] sm:$0xf]
      %v2179 = vld [vmem:[%s731 + $0x30] sm:$0xf]
      %v2180 = vld [vmem:[%s731 + $0x34] sm:$0xf]
      %v2181 = vld [vmem:[%s731 + $0x3c] sm:$0xf]
      %v2182 = vld [vmem:[%s731 + $0x40] sm:$0xf]
      %v2183 = vld [vmem:[%s731 + $0x48] sm:$0xf]
      %v2184 = vld [vmem:[%s731 + $0x4c] sm:$0xf]
      %v2185 = vld [vmem:[%s731 + $0x54] sm:$0xf]
      %v2186 = vld [vmem:[%s731 + $0x58] sm:$0xf]
      %v2187 = vld [vmem:[%s731 + $0x60] sm:$0xf]
      %v2188 = vld [vmem:[%s731 + $0x64] sm:$0xf]
      %v2189 = vld [vmem:[%s731 + $0x6c] sm:$0xf]
      %v2190 = vld [vmem:[%s731 + $0x70] sm:$0xf]
      %v2191 = vld [vmem:[%s731 + $0x78] sm:$0xf]
      %v2192 = vld [vmem:[%s731 + $0x7c] sm:$0xf]
      %v2193 = vld [vmem:[%s731 + $0x84] sm:$0xf]
      %v2194 = vld [vmem:[%s731 + $0x88] sm:$0xf]
      %v2195 = vld [vmem:[%s731 + $0x90] sm:$0xf]
      %v2196 = vld [vmem:[%s731 + $0x94] sm:$0xf]
      %v2197 = vld [vmem:[%s731 + $0x9c] sm:$0xf]
      %v2198 = vld [vmem:[%s731 + $0xa0] sm:$0xf]
      %v2199 = vld [vmem:[%s731 + $0xa8] sm:$0xf]
      %v2200 = vld [vmem:[%s731 + $0xac] sm:$0xf]
      %v2201 = vld [vmem:[%s731 + $0xb4] sm:$0xf]
      %v2202 = vld [vmem:[%s731 + $0xb8] sm:$0xf]
      %v2235 = vunpack.c.l.b16 %v2171
      %v2236 = vunpack.c.l.b16 %v2172
      %v2237 = vunpack.c.l.b16 %v2173
      %v2238 = vunpack.c.l.b16 %v2174
      %v2239 = vunpack.c.l.b16 %v2175
      %v2240 = vunpack.c.l.b16 %v2176
      %v2241 = vunpack.c.l.b16 %v2177
      %v2242 = vunpack.c.l.b16 %v2178
      %v2243 = vunpack.c.l.b16 %v2179
      %v2244 = vunpack.c.l.b16 %v2180
      %v2245 = vunpack.c.l.b16 %v2181
      %v2246 = vunpack.c.l.b16 %v2182
      %v2247 = vunpack.c.l.b16 %v2183
      %v2248 = vunpack.c.l.b16 %v2184
      %v2249 = vunpack.c.l.b16 %v2185
      %v2250 = vunpack.c.l.b16 %v2186
      %v2251 = vunpack.c.l.b16 %v2187
      %v2252 = vunpack.c.l.b16 %v2188
      %v2253 = vunpack.c.l.b16 %v2189
      %v2254 = vunpack.c.l.b16 %v2190
      %v2255 = vunpack.c.l.b16 %v2191
      %v2256 = vunpack.c.l.b16 %v2192
      %v2257 = vunpack.c.l.b16 %v2193
      %v2258 = vunpack.c.l.b16 %v2194
      %v2259 = vunpack.c.l.b16 %v2195
      %v2260 = vunpack.c.l.b16 %v2196
      %v2261 = vunpack.c.l.b16 %v2197
      %v2262 = vunpack.c.l.b16 %v2198
      %v2263 = vunpack.c.l.b16 %v2199
      %v2264 = vunpack.c.l.b16 %v2200
      %v2265 = vunpack.c.l.b16 %v2201
      %v2266 = vunpack.c.l.b16 %v2202
      %v2267 = vpack.c.b16 %v2236, %v2235
      %v2268 = vpack.c.b16 %v2238, %v2237
      %v2269 = vpack.c.b16 %v2240, %v2239
      %v2270 = vpack.c.b16 %v2242, %v2241
      %v2271 = vpack.c.b16 %v2244, %v2243
      %v2272 = vpack.c.b16 %v2246, %v2245
      %v2273 = vpack.c.b16 %v2248, %v2247
      %v2274 = vpack.c.b16 %v2250, %v2249
      %v2275 = vpack.c.b16 %v2252, %v2251
      %v2276 = vpack.c.b16 %v2254, %v2253
      %v2277 = vpack.c.b16 %v2256, %v2255
      %v2278 = vpack.c.b16 %v2258, %v2257
      %v2279 = vpack.c.b16 %v2260, %v2259
      %v2280 = vpack.c.b16 %v2262, %v2261
      %v2281 = vpack.c.b16 %v2264, %v2263
      %v2282 = vpack.c.b16 %v2266, %v2265
      %2283 = vrot.lane.b32.xlu0 %v2267, 24
      %v2284 = vpop.permute.xlu0 %2283
      %2285 = vrot.lane.b32.xlu0 %v2268, 24
      %v2286 = vpop.permute.xlu0 %2285
      %2287 = vrot.lane.b32.xlu0 %v2269, 24
      %v2288 = vpop.permute.xlu0 %2287
      %2289 = vrot.lane.b32.xlu0 %v2270, 24
      %v2290 = vpop.permute.xlu0 %2289
      %2291 = vrot.lane.b32.xlu0 %v2271, 24
      %v2292 = vpop.permute.xlu0 %2291
      %2293 = vrot.lane.b32.xlu0 %v2272, 24
      %v2294 = vpop.permute.xlu0 %2293
      %2295 = vrot.lane.b32.xlu0 %v2273, 24
      %v2296 = vpop.permute.xlu0 %2295
      %2297 = vrot.lane.b32.xlu0 %v2274, 24
      %v2298 = vpop.permute.xlu0 %2297
      %2299 = vrot.lane.b32.xlu0 %v2275, 24
      %v2300 = vpop.permute.xlu0 %2299
      %2301 = vrot.lane.b32.xlu0 %v2276, 24
      %v2302 = vpop.permute.xlu0 %2301
      %2303 = vrot.lane.b32.xlu0 %v2277, 24
      %v2304 = vpop.permute.xlu0 %2303
      %2305 = vrot.lane.b32.xlu0 %v2278, 24
      %v2306 = vpop.permute.xlu0 %2305
      %2307 = vrot.lane.b32.xlu0 %v2279, 24
      %v2308 = vpop.permute.xlu0 %2307
      %2309 = vrot.lane.b32.xlu0 %v2280, 24
      %v2310 = vpop.permute.xlu0 %2309
      %2311 = vrot.lane.b32.xlu0 %v2281, 24
      %v2312 = vpop.permute.xlu0 %2311
      %2313 = vrot.lane.b32.xlu0 %v2282, 24
      %v2314 = vpop.permute.xlu0 %2313
      %vm2331 = vcmask 261312
      %2332 = vst.msk [vmem:[#allocation3] sm:$0xff] %vm2331, %v2284
      %2333 = vst.msk [vmem:[#allocation3 + $0x8] sm:$0xff] %vm2331, %v2286
      %2334 = vst.msk [vmem:[#allocation3 + $0x10] sm:$0xff] %vm2331, %v2288
      %2335 = vst.msk [vmem:[#allocation3 + $0x18] sm:$0xff] %vm2331, %v2290
      %2336 = vst.msk [vmem:[#allocation3 + $0x20] sm:$0xff] %vm2331, %v2292
      %2337 = vst.msk [vmem:[#allocation3 + $0x28] sm:$0xff] %vm2331, %v2294
      %2338 = vst.msk [vmem:[#allocation3 + $0x30] sm:$0xff] %vm2331, %v2296
      %2339 = vst.msk [vmem:[#allocation3 + $0x38] sm:$0xff] %vm2331, %v2298
      %2340 = vst.msk [vmem:[#allocation3 + $0x40] sm:$0xff] %vm2331, %v2300
      %2341 = vst.msk [vmem:[#allocation3 + $0x48] sm:$0xff] %vm2331, %v2302
      %2342 = vst.msk [vmem:[#allocation3 + $0x50] sm:$0xff] %vm2331, %v2304
      %2343 = vst.msk [vmem:[#allocation3 + $0x58] sm:$0xff] %vm2331, %v2306
      %2344 = vst.msk [vmem:[#allocation3 + $0x60] sm:$0xff] %vm2331, %v2308
      %2345 = vst.msk [vmem:[#allocation3 + $0x68] sm:$0xff] %vm2331, %v2310
      %2346 = vst.msk [vmem:[#allocation3 + $0x70] sm:$0xff] %vm2331, %v2312
      %2347 = vst.msk [vmem:[#allocation3 + $0x78] sm:$0xff] %vm2331, %v2314
      %v2348 = vld [vmem:[%s731] sm:$0xf]
      %v2349 = vld [vmem:[%s731 + $0x4] sm:$0xf]
      %v2350 = vld [vmem:[%s731 + $0x8] sm:$0x1]
      %v2351 = vld [vmem:[%s731 + $0xc] sm:$0xf]
      %v2352 = vld [vmem:[%s731 + $0x10] sm:$0xf]
      %v2353 = vld [vmem:[%s731 + $0x14] sm:$0x1]
      %v2354 = vld [vmem:[%s731 + $0x18] sm:$0xf]
      %v2355 = vld [vmem:[%s731 + $0x1c] sm:$0xf]
      %v2356 = vld [vmem:[%s731 + $0x20] sm:$0x1]
      %v2357 = vld [vmem:[%s731 + $0x24] sm:$0xf]
      %v2358 = vld [vmem:[%s731 + $0x28] sm:$0xf]
      %v2359 = vld [vmem:[%s731 + $0x2c] sm:$0x1]
      %v2360 = vld [vmem:[%s731 + $0x30] sm:$0xf]
      %v2361 = vld [vmem:[%s731 + $0x34] sm:$0xf]
      %v2362 = vld [vmem:[%s731 + $0x38] sm:$0x1]
      %v2363 = vld [vmem:[%s731 + $0x3c] sm:$0xf]
      %v2364 = vld [vmem:[%s731 + $0x40] sm:$0xf]
      %v2365 = vld [vmem:[%s731 + $0x44] sm:$0x1]
      %v2366 = vld [vmem:[%s731 + $0x48] sm:$0xf]
      %v2367 = vld [vmem:[%s731 + $0x4c] sm:$0xf]
      %v2368 = vld [vmem:[%s731 + $0x50] sm:$0x1]
      %v2369 = vld [vmem:[%s731 + $0x54] sm:$0xf]
      %v2370 = vld [vmem:[%s731 + $0x58] sm:$0xf]
      %v2371 = vld [vmem:[%s731 + $0x5c] sm:$0x1]
      %v2372 = vld [vmem:[%s731 + $0x60] sm:$0xf]
      %v2373 = vld [vmem:[%s731 + $0x64] sm:$0xf]
      %v2374 = vld [vmem:[%s731 + $0x68] sm:$0x1]
      %v2375 = vld [vmem:[%s731 + $0x6c] sm:$0xf]
      %v2376 = vld [vmem:[%s731 + $0x70] sm:$0xf]
      %v2377 = vld [vmem:[%s731 + $0x74] sm:$0x1]
      %v2378 = vld [vmem:[%s731 + $0x78] sm:$0xf]
      %v2379 = vld [vmem:[%s731 + $0x7c] sm:$0xf]
      %v2380 = vld [vmem:[%s731 + $0x80] sm:$0x1]
      %v2381 = vld [vmem:[%s731 + $0x84] sm:$0xf]
      %v2382 = vld [vmem:[%s731 + $0x88] sm:$0xf]
      %v2383 = vld [vmem:[%s731 + $0x8c] sm:$0x1]
      %v2384 = vld [vmem:[%s731 + $0x90] sm:$0xf]
      %v2385 = vld [vmem:[%s731 + $0x94] sm:$0xf]
      %v2386 = vld [vmem:[%s731 + $0x98] sm:$0x1]
      %v2387 = vld [vmem:[%s731 + $0x9c] sm:$0xf]
      %v2388 = vld [vmem:[%s731 + $0xa0] sm:$0xf]
      %v2389 = vld [vmem:[%s731 + $0xa4] sm:$0x1]
      %v2390 = vld [vmem:[%s731 + $0xa8] sm:$0xf]
      %v2391 = vld [vmem:[%s731 + $0xac] sm:$0xf]
      %v2392 = vld [vmem:[%s731 + $0xb0] sm:$0x1]
      %v2393 = vld [vmem:[%s731 + $0xb4] sm:$0xf]
      %v2394 = vld [vmem:[%s731 + $0xb8] sm:$0xf]
      %v2395 = vld [vmem:[%s731 + $0xbc] sm:$0x1]
      %v2397 = vshrl.u32 %v2348, 16
      %v2399 = vrot.slane %v2397, 4
      %v2400 = vshll.u32 %v2348, 16
      %v2402 = vrot.slane %v2400, 5
      %v2403 = vor.u32 %v2399, %v2402
      %v2404 = vrot.slane %v2403, 4
      %v2406 = vshll.u32 %v2349, 16
      %v2408 = vrot.slane %v2406, 5
      %v2409 = vsel %vm1349, %v2404, %v2408
      %v2410 = vshrl.u32 %v2349, 16
      %v2412 = vrot.slane %v2410, 4
      %v2413 = vor.u32 %v2412, %v2408
      %v2414 = vrot.slane %v2413, 4
      %v2416 = vshll.u32 %v2350, 16
      %v2418 = vrot.slane %v2416, 5
      %v2419 = vsel %vm1349, %v2414, %v2418
      %v2421 = vshrl.u32 %v2351, 16
      %v2423 = vrot.slane %v2421, 4
      %v2424 = vshll.u32 %v2351, 16
      %v2426 = vrot.slane %v2424, 5
      %v2427 = vor.u32 %v2423, %v2426
      %v2428 = vrot.slane %v2427, 4
      %v2430 = vshll.u32 %v2352, 16
      %v2432 = vrot.slane %v2430, 5
      %v2433 = vsel %vm1349, %v2428, %v2432
      %v2434 = vshrl.u32 %v2352, 16
      %v2436 = vrot.slane %v2434, 4
      %v2437 = vor.u32 %v2436, %v2432
      %v2438 = vrot.slane %v2437, 4
      %v2440 = vshll.u32 %v2353, 16
      %v2442 = vrot.slane %v2440, 5
      %v2443 = vsel %vm1349, %v2438, %v2442
      %v2445 = vshrl.u32 %v2354, 16
      %v2447 = vrot.slane %v2445, 4
      %v2448 = vshll.u32 %v2354, 16
      %v2450 = vrot.slane %v2448, 5
      %v2451 = vor.u32 %v2447, %v2450
      %v2452 = vrot.slane %v2451, 4
      %v2454 = vshll.u32 %v2355, 16
      %v2456 = vrot.slane %v2454, 5
      %v2457 = vsel %vm1349, %v2452, %v2456
      %v2458 = vshrl.u32 %v2355, 16
      %v2460 = vrot.slane %v2458, 4
      %v2461 = vor.u32 %v2460, %v2456
      %v2462 = vrot.slane %v2461, 4
      %v2464 = vshll.u32 %v2356, 16
      %v2466 = vrot.slane %v2464, 5
      %v2467 = vsel %vm1349, %v2462, %v2466
      %v2469 = vshrl.u32 %v2357, 16
      %v2471 = vrot.slane %v2469, 4
      %v2472 = vshll.u32 %v2357, 16
      %v2474 = vrot.slane %v2472, 5
      %v2475 = vor.u32 %v2471, %v2474
      %v2476 = vrot.slane %v2475, 4
      %v2478 = vshll.u32 %v2358, 16
      %v2480 = vrot.slane %v2478, 5
      %v2481 = vsel %vm1349, %v2476, %v2480
      %v2482 = vshrl.u32 %v2358, 16
      %v2484 = vrot.slane %v2482, 4
      %v2485 = vor.u32 %v2484, %v2480
      %v2486 = vrot.slane %v2485, 4
      %v2488 = vshll.u32 %v2359, 16
      %v2490 = vrot.slane %v2488, 5
      %v2491 = vsel %vm1349, %v2486, %v2490
      %v2493 = vshrl.u32 %v2360, 16
      %v2495 = vrot.slane %v2493, 4
      %v2496 = vshll.u32 %v2360, 16
      %v2498 = vrot.slane %v2496, 5
      %v2499 = vor.u32 %v2495, %v2498
      %v2500 = vrot.slane %v2499, 4
      %v2502 = vshll.u32 %v2361, 16
      %v2504 = vrot.slane %v2502, 5
      %v2505 = vsel %vm1349, %v2500, %v2504
      %v2506 = vshrl.u32 %v2361, 16
      %v2508 = vrot.slane %v2506, 4
      %v2509 = vor.u32 %v2508, %v2504
      %v2510 = vrot.slane %v2509, 4
      %v2512 = vshll.u32 %v2362, 16
      %v2514 = vrot.slane %v2512, 5
      %v2515 = vsel %vm1349, %v2510, %v2514
      %v2517 = vshrl.u32 %v2363, 16
      %v2519 = vrot.slane %v2517, 4
      %v2520 = vshll.u32 %v2363, 16
      %v2522 = vrot.slane %v2520, 5
      %v2523 = vor.u32 %v2519, %v2522
      %v2524 = vrot.slane %v2523, 4
      %v2526 = vshll.u32 %v2364, 16
      %v2528 = vrot.slane %v2526, 5
      %v2529 = vsel %vm1349, %v2524, %v2528
      %v2530 = vshrl.u32 %v2364, 16
      %v2532 = vrot.slane %v2530, 4
      %v2533 = vor.u32 %v2532, %v2528
      %v2534 = vrot.slane %v2533, 4
      %v2536 = vshll.u32 %v2365, 16
      %v2538 = vrot.slane %v2536, 5
      %v2539 = vsel %vm1349, %v2534, %v2538
      %v2541 = vshrl.u32 %v2366, 16
      %v2543 = vrot.slane %v2541, 4
      %v2544 = vshll.u32 %v2366, 16
      %v2546 = vrot.slane %v2544, 5
      %v2547 = vor.u32 %v2543, %v2546
      %v2548 = vrot.slane %v2547, 4
      %v2550 = vshll.u32 %v2367, 16
      %v2552 = vrot.slane %v2550, 5
      %v2553 = vsel %vm1349, %v2548, %v2552
      %v2554 = vshrl.u32 %v2367, 16
      %v2556 = vrot.slane %v2554, 4
      %v2557 = vor.u32 %v2556, %v2552
      %v2558 = vrot.slane %v2557, 4
      %v2560 = vshll.u32 %v2368, 16
      %v2562 = vrot.slane %v2560, 5
      %v2563 = vsel %vm1349, %v2558, %v2562
      %v2565 = vshrl.u32 %v2369, 16
      %v2567 = vrot.slane %v2565, 4
      %v2568 = vshll.u32 %v2369, 16
      %v2570 = vrot.slane %v2568, 5
      %v2571 = vor.u32 %v2567, %v2570
      %v2572 = vrot.slane %v2571, 4
      %v2574 = vshll.u32 %v2370, 16
      %v2576 = vrot.slane %v2574, 5
      %v2577 = vsel %vm1349, %v2572, %v2576
      %v2578 = vshrl.u32 %v2370, 16
      %v2580 = vrot.slane %v2578, 4
      %v2581 = vor.u32 %v2580, %v2576
      %v2582 = vrot.slane %v2581, 4
      %v2584 = vshll.u32 %v2371, 16
      %v2586 = vrot.slane %v2584, 5
      %v2587 = vsel %vm1349, %v2582, %v2586
      %v2589 = vshrl.u32 %v2372, 16
      %v2591 = vrot.slane %v2589, 4
      %v2592 = vshll.u32 %v2372, 16
      %v2594 = vrot.slane %v2592, 5
      %v2595 = vor.u32 %v2591, %v2594
      %v2596 = vrot.slane %v2595, 4
      %v2598 = vshll.u32 %v2373, 16
      %v2600 = vrot.slane %v2598, 5
      %v2601 = vsel %vm1349, %v2596, %v2600
      %v2602 = vshrl.u32 %v2373, 16
      %v2604 = vrot.slane %v2602, 4
      %v2605 = vor.u32 %v2604, %v2600
      %v2606 = vrot.slane %v2605, 4
      %v2608 = vshll.u32 %v2374, 16
      %v2610 = vrot.slane %v2608, 5
      %v2611 = vsel %vm1349, %v2606, %v2610
      %v2613 = vshrl.u32 %v2375, 16
      %v2615 = vrot.slane %v2613, 4
      %v2616 = vshll.u32 %v2375, 16
      %v2618 = vrot.slane %v2616, 5
      %v2619 = vor.u32 %v2615, %v2618
      %v2620 = vrot.slane %v2619, 4
      %v2622 = vshll.u32 %v2376, 16
      %v2624 = vrot.slane %v2622, 5
      %v2625 = vsel %vm1349, %v2620, %v2624
      %v2626 = vshrl.u32 %v2376, 16
      %v2628 = vrot.slane %v2626, 4
      %v2629 = vor.u32 %v2628, %v2624
      %v2630 = vrot.slane %v2629, 4
      %v2632 = vshll.u32 %v2377, 16
      %v2634 = vrot.slane %v2632, 5
      %v2635 = vsel %vm1349, %v2630, %v2634
      %v2637 = vshrl.u32 %v2378, 16
      %v2639 = vrot.slane %v2637, 4
      %v2640 = vshll.u32 %v2378, 16
      %v2642 = vrot.slane %v2640, 5
      %v2643 = vor.u32 %v2639, %v2642
      %v2644 = vrot.slane %v2643, 4
      %v2646 = vshll.u32 %v2379, 16
      %v2648 = vrot.slane %v2646, 5
      %v2649 = vsel %vm1349, %v2644, %v2648
      %v2650 = vshrl.u32 %v2379, 16
      %v2652 = vrot.slane %v2650, 4
      %v2653 = vor.u32 %v2652, %v2648
      %v2654 = vrot.slane %v2653, 4
      %v2656 = vshll.u32 %v2380, 16
      %v2658 = vrot.slane %v2656, 5
      %v2659 = vsel %vm1349, %v2654, %v2658
      %v2661 = vshrl.u32 %v2381, 16
      %v2663 = vrot.slane %v2661, 4
      %v2664 = vshll.u32 %v2381, 16
      %v2666 = vrot.slane %v2664, 5
      %v2667 = vor.u32 %v2663, %v2666
      %v2668 = vrot.slane %v2667, 4
      %v2670 = vshll.u32 %v2382, 16
      %v2672 = vrot.slane %v2670, 5
      %v2673 = vsel %vm1349, %v2668, %v2672
      %v2674 = vshrl.u32 %v2382, 16
      %v2676 = vrot.slane %v2674, 4
      %v2677 = vor.u32 %v2676, %v2672
      %v2678 = vrot.slane %v2677, 4
      %v2680 = vshll.u32 %v2383, 16
      %v2682 = vrot.slane %v2680, 5
      %v2683 = vsel %vm1349, %v2678, %v2682
      %v2685 = vshrl.u32 %v2384, 16
      %v2687 = vrot.slane %v2685, 4
      %v2688 = vshll.u32 %v2384, 16
      %v2690 = vrot.slane %v2688, 5
      %v2691 = vor.u32 %v2687, %v2690
      %v2692 = vrot.slane %v2691, 4
      %v2694 = vshll.u32 %v2385, 16
      %v2696 = vrot.slane %v2694, 5
      %v2697 = vsel %vm1349, %v2692, %v2696
      %v2698 = vshrl.u32 %v2385, 16
      %v2700 = vrot.slane %v2698, 4
      %v2701 = vor.u32 %v2700, %v2696
      %v2702 = vrot.slane %v2701, 4
      %v2704 = vshll.u32 %v2386, 16
      %v2706 = vrot.slane %v2704, 5
      %v2707 = vsel %vm1349, %v2702, %v2706
      %v2709 = vshrl.u32 %v2387, 16
      %v2711 = vrot.slane %v2709, 4
      %v2712 = vshll.u32 %v2387, 16
      %v2714 = vrot.slane %v2712, 5
      %v2715 = vor.u32 %v2711, %v2714
      %v2716 = vrot.slane %v2715, 4
      %v2718 = vshll.u32 %v2388, 16
      %v2720 = vrot.slane %v2718, 5
      %v2721 = vsel %vm1349, %v2716, %v2720
      %v2722 = vshrl.u32 %v2388, 16
      %v2724 = vrot.slane %v2722, 4
      %v2725 = vor.u32 %v2724, %v2720
      %v2726 = vrot.slane %v2725, 4
      %v2728 = vshll.u32 %v2389, 16
      %v2730 = vrot.slane %v2728, 5
      %v2731 = vsel %vm1349, %v2726, %v2730
      %v2733 = vshrl.u32 %v2390, 16
      %v2735 = vrot.slane %v2733, 4
      %v2736 = vshll.u32 %v2390, 16
      %v2738 = vrot.slane %v2736, 5
      %v2739 = vor.u32 %v2735, %v2738
      %v2740 = vrot.slane %v2739, 4
      %v2742 = vshll.u32 %v2391, 16
      %v2744 = vrot.slane %v2742, 5
      %v2745 = vsel %vm1349, %v2740, %v2744
      %v2746 = vshrl.u32 %v2391, 16
      %v2748 = vrot.slane %v2746, 4
      %v2749 = vor.u32 %v2748, %v2744
      %v2750 = vrot.slane %v2749, 4
      %v2752 = vshll.u32 %v2392, 16
      %v2754 = vrot.slane %v2752, 5
      %v2755 = vsel %vm1349, %v2750, %v2754
      %v2757 = vshrl.u32 %v2393, 16
      %v2759 = vrot.slane %v2757, 4
      %v2760 = vshll.u32 %v2393, 16
      %v2762 = vrot.slane %v2760, 5
      %v2763 = vor.u32 %v2759, %v2762
      %v2764 = vrot.slane %v2763, 4
      %v2766 = vshll.u32 %v2394, 16
      %v2768 = vrot.slane %v2766, 5
      %v2769 = vsel %vm1349, %v2764, %v2768
      %v2770 = vshrl.u32 %v2394, 16
      %v2772 = vrot.slane %v2770, 4
      %v2773 = vor.u32 %v2772, %v2768
      %v2774 = vrot.slane %v2773, 4
      %v2776 = vshll.u32 %v2395, 16
      %v2778 = vrot.slane %v2776, 5
      %v2779 = vsel %vm1349, %v2774, %v2778
      %v2780 = vunpack.c.l.b16 %v2409
      %v2781 = vunpack.c.l.b16 %v2419
      %v2782 = vunpack.c.l.b16 %v2433
      %v2783 = vunpack.c.l.b16 %v2443
      %v2784 = vunpack.c.l.b16 %v2457
      %v2785 = vunpack.c.l.b16 %v2467
      %v2786 = vunpack.c.l.b16 %v2481
      %v2787 = vunpack.c.l.b16 %v2491
      %v2788 = vunpack.c.l.b16 %v2505
      %v2789 = vunpack.c.l.b16 %v2515
      %v2790 = vunpack.c.l.b16 %v2529
      %v2791 = vunpack.c.l.b16 %v2539
      %v2792 = vunpack.c.l.b16 %v2553
      %v2793 = vunpack.c.l.b16 %v2563
      %v2794 = vunpack.c.l.b16 %v2577
      %v2795 = vunpack.c.l.b16 %v2587
      %v2796 = vunpack.c.l.b16 %v2601
      %v2797 = vunpack.c.l.b16 %v2611
      %v2798 = vunpack.c.l.b16 %v2625
      %v2799 = vunpack.c.l.b16 %v2635
      %v2800 = vunpack.c.l.b16 %v2649
      %v2801 = vunpack.c.l.b16 %v2659
      %v2802 = vunpack.c.l.b16 %v2673
      %v2803 = vunpack.c.l.b16 %v2683
      %v2804 = vunpack.c.l.b16 %v2697
      %v2805 = vunpack.c.l.b16 %v2707
      %v2806 = vunpack.c.l.b16 %v2721
      %v2807 = vunpack.c.l.b16 %v2731
      %v2808 = vunpack.c.l.b16 %v2745
      %v2809 = vunpack.c.l.b16 %v2755
      %v2810 = vunpack.c.l.b16 %v2769
      %v2811 = vunpack.c.l.b16 %v2779
      %v2812 = vpack.c.b16 %v2781, %v2780
      %v2813 = vpack.c.b16 %v2783, %v2782
      %v2814 = vpack.c.b16 %v2785, %v2784
      %v2815 = vpack.c.b16 %v2787, %v2786
      %v2816 = vpack.c.b16 %v2789, %v2788
      %v2817 = vpack.c.b16 %v2791, %v2790
      %v2818 = vpack.c.b16 %v2793, %v2792
      %v2819 = vpack.c.b16 %v2795, %v2794
      %v2820 = vpack.c.b16 %v2797, %v2796
      %v2821 = vpack.c.b16 %v2799, %v2798
      %v2822 = vpack.c.b16 %v2801, %v2800
      %v2823 = vpack.c.b16 %v2803, %v2802
      %v2824 = vpack.c.b16 %v2805, %v2804
      %v2825 = vpack.c.b16 %v2807, %v2806
      %v2826 = vpack.c.b16 %v2809, %v2808
      %v2827 = vpack.c.b16 %v2811, %v2810
      %2828 = vrot.lane.b32.xlu0 %v2812, 32
      %v2829 = vpop.permute.xlu0 %2828
      %2830 = vrot.lane.b32.xlu0 %v2813, 32
      %v2831 = vpop.permute.xlu0 %2830
      %2832 = vrot.lane.b32.xlu0 %v2814, 32
      %v2833 = vpop.permute.xlu0 %2832
      %2834 = vrot.lane.b32.xlu0 %v2815, 32
      %v2835 = vpop.permute.xlu0 %2834
      %2836 = vrot.lane.b32.xlu0 %v2816, 32
      %v2837 = vpop.permute.xlu0 %2836
      %2838 = vrot.lane.b32.xlu0 %v2817, 32
      %v2839 = vpop.permute.xlu0 %2838
      %2840 = vrot.lane.b32.xlu0 %v2818, 32
      %v2841 = vpop.permute.xlu0 %2840
      %2842 = vrot.lane.b32.xlu0 %v2819, 32
      %v2843 = vpop.permute.xlu0 %2842
      %2844 = vrot.lane.b32.xlu0 %v2820, 32
      %v2845 = vpop.permute.xlu0 %2844
      %2846 = vrot.lane.b32.xlu0 %v2821, 32
      %v2847 = vpop.permute.xlu0 %2846
      %2848 = vrot.lane.b32.xlu0 %v2822, 32
      %v2849 = vpop.permute.xlu0 %2848
      %2850 = vrot.lane.b32.xlu0 %v2823, 32
      %v2851 = vpop.permute.xlu0 %2850
      %2852 = vrot.lane.b32.xlu0 %v2824, 32
      %v2853 = vpop.permute.xlu0 %2852
      %2854 = vrot.lane.b32.xlu0 %v2825, 32
      %v2855 = vpop.permute.xlu0 %2854
      %2856 = vrot.lane.b32.xlu0 %v2826, 32
      %v2857 = vpop.permute.xlu0 %2856
      %2858 = vrot.lane.b32.xlu0 %v2827, 32
      %v2859 = vpop.permute.xlu0 %2858
      %vm2876 = vcmask 326912
      %2877 = vst.msk [vmem:[#allocation3] sm:$0xff] %vm2876, %v2829
      %2878 = vst.msk [vmem:[#allocation3 + $0x8] sm:$0xff] %vm2876, %v2831
      %2879 = vst.msk [vmem:[#allocation3 + $0x10] sm:$0xff] %vm2876, %v2833
      %2880 = vst.msk [vmem:[#allocation3 + $0x18] sm:$0xff] %vm2876, %v2835
      %2881 = vst.msk [vmem:[#allocation3 + $0x20] sm:$0xff] %vm2876, %v2837
      %2882 = vst.msk [vmem:[#allocation3 + $0x28] sm:$0xff] %vm2876, %v2839
      %2883 = vst.msk [vmem:[#allocation3 + $0x30] sm:$0xff] %vm2876, %v2841
      %2884 = vst.msk [vmem:[#allocation3 + $0x38] sm:$0xff] %vm2876, %v2843
      %2885 = vst.msk [vmem:[#allocation3 + $0x40] sm:$0xff] %vm2876, %v2845
      %2886 = vst.msk [vmem:[#allocation3 + $0x48] sm:$0xff] %vm2876, %v2847
      %2887 = vst.msk [vmem:[#allocation3 + $0x50] sm:$0xff] %vm2876, %v2849
      %2888 = vst.msk [vmem:[#allocation3 + $0x58] sm:$0xff] %vm2876, %v2851
      %2889 = vst.msk [vmem:[#allocation3 + $0x60] sm:$0xff] %vm2876, %v2853
      %2890 = vst.msk [vmem:[#allocation3 + $0x68] sm:$0xff] %vm2876, %v2855
      %2891 = vst.msk [vmem:[#allocation3 + $0x70] sm:$0xff] %vm2876, %v2857
      %2892 = vst.msk [vmem:[#allocation3 + $0x78] sm:$0xff] %vm2876, %v2859
      %v2893 = vld [vmem:[%s731] sm:$0xe]
      %v2894 = vld [vmem:[%s731 + $0x4] sm:$0xf]
      %v2895 = vld [vmem:[%s731 + $0x8] sm:$0x1]
      %v2896 = vld [vmem:[%s731 + $0xc] sm:$0xe]
      %v2897 = vld [vmem:[%s731 + $0x10] sm:$0xf]
      %v2898 = vld [vmem:[%s731 + $0x14] sm:$0x1]
      %v2899 = vld [vmem:[%s731 + $0x18] sm:$0xe]
      %v2900 = vld [vmem:[%s731 + $0x1c] sm:$0xf]
      %v2901 = vld [vmem:[%s731 + $0x20] sm:$0x1]
      %v2902 = vld [vmem:[%s731 + $0x24] sm:$0xe]
      %v2903 = vld [vmem:[%s731 + $0x28] sm:$0xf]
      %v2904 = vld [vmem:[%s731 + $0x2c] sm:$0x1]
      %v2905 = vld [vmem:[%s731 + $0x30] sm:$0xe]
      %v2906 = vld [vmem:[%s731 + $0x34] sm:$0xf]
      %v2907 = vld [vmem:[%s731 + $0x38] sm:$0x1]
      %v2908 = vld [vmem:[%s731 + $0x3c] sm:$0xe]
      %v2909 = vld [vmem:[%s731 + $0x40] sm:$0xf]
      %v2910 = vld [vmem:[%s731 + $0x44] sm:$0x1]
      %v2911 = vld [vmem:[%s731 + $0x48] sm:$0xe]
      %v2912 = vld [vmem:[%s731 + $0x4c] sm:$0xf]
      %v2913 = vld [vmem:[%s731 + $0x50] sm:$0x1]
      %v2914 = vld [vmem:[%s731 + $0x54] sm:$0xe]
      %v2915 = vld [vmem:[%s731 + $0x58] sm:$0xf]
      %v2916 = vld [vmem:[%s731 + $0x5c] sm:$0x1]
      %v2917 = vld [vmem:[%s731 + $0x60] sm:$0xe]
      %v2918 = vld [vmem:[%s731 + $0x64] sm:$0xf]
      %v2919 = vld [vmem:[%s731 + $0x68] sm:$0x1]
      %v2920 = vld [vmem:[%s731 + $0x6c] sm:$0xe]
      %v2921 = vld [vmem:[%s731 + $0x70] sm:$0xf]
      %v2922 = vld [vmem:[%s731 + $0x74] sm:$0x1]
      %v2923 = vld [vmem:[%s731 + $0x78] sm:$0xe]
      %v2924 = vld [vmem:[%s731 + $0x7c] sm:$0xf]
      %v2925 = vld [vmem:[%s731 + $0x80] sm:$0x1]
      %v2926 = vld [vmem:[%s731 + $0x84] sm:$0xe]
      %v2927 = vld [vmem:[%s731 + $0x88] sm:$0xf]
      %v2928 = vld [vmem:[%s731 + $0x8c] sm:$0x1]
      %v2929 = vld [vmem:[%s731 + $0x90] sm:$0xe]
      %v2930 = vld [vmem:[%s731 + $0x94] sm:$0xf]
      %v2931 = vld [vmem:[%s731 + $0x98] sm:$0x1]
      %v2932 = vld [vmem:[%s731 + $0x9c] sm:$0xe]
      %v2933 = vld [vmem:[%s731 + $0xa0] sm:$0xf]
      %v2934 = vld [vmem:[%s731 + $0xa4] sm:$0x1]
      %v2935 = vld [vmem:[%s731 + $0xa8] sm:$0xe]
      %v2936 = vld [vmem:[%s731 + $0xac] sm:$0xf]
      %v2937 = vld [vmem:[%s731 + $0xb0] sm:$0x1]
      %v2938 = vld [vmem:[%s731 + $0xb4] sm:$0xe]
      %v2939 = vld [vmem:[%s731 + $0xb8] sm:$0xf]
      %v2940 = vld [vmem:[%s731 + $0xbc] sm:$0x1]
      %v2989 = vrot.slane %v2893, 5
      %v2990 = vrot.slane %v2989, 4
      %v2991 = vrot.slane %v2894, 5
      %v2992 = vsel %vm1945, %v2990, %v2991
      %v2993 = vrot.slane %v2991, 4
      %v2994 = vrot.slane %v2895, 5
      %v2995 = vsel %vm1945, %v2993, %v2994
      %v2996 = vrot.slane %v2896, 5
      %v2997 = vrot.slane %v2996, 4
      %v2998 = vrot.slane %v2897, 5
      %v2999 = vsel %vm1945, %v2997, %v2998
      %v3000 = vrot.slane %v2998, 4
      %v3001 = vrot.slane %v2898, 5
      %v3002 = vsel %vm1945, %v3000, %v3001
      %v3003 = vrot.slane %v2899, 5
      %v3004 = vrot.slane %v3003, 4
      %v3005 = vrot.slane %v2900, 5
      %v3006 = vsel %vm1945, %v3004, %v3005
      %v3007 = vrot.slane %v3005, 4
      %v3008 = vrot.slane %v2901, 5
      %v3009 = vsel %vm1945, %v3007, %v3008
      %v3010 = vrot.slane %v2902, 5
      %v3011 = vrot.slane %v3010, 4
      %v3012 = vrot.slane %v2903, 5
      %v3013 = vsel %vm1945, %v3011, %v3012
      %v3014 = vrot.slane %v3012, 4
      %v3015 = vrot.slane %v2904, 5
      %v3016 = vsel %vm1945, %v3014, %v3015
      %v3017 = vrot.slane %v2905, 5
      %v3018 = vrot.slane %v3017, 4
      %v3019 = vrot.slane %v2906, 5
      %v3020 = vsel %vm1945, %v3018, %v3019
      %v3021 = vrot.slane %v3019, 4
      %v3022 = vrot.slane %v2907, 5
      %v3023 = vsel %vm1945, %v3021, %v3022
      %v3024 = vrot.slane %v2908, 5
      %v3025 = vrot.slane %v3024, 4
      %v3026 = vrot.slane %v2909, 5
      %v3027 = vsel %vm1945, %v3025, %v3026
      %v3028 = vrot.slane %v3026, 4
      %v3029 = vrot.slane %v2910, 5
      %v3030 = vsel %vm1945, %v3028, %v3029
      %v3031 = vrot.slane %v2911, 5
      %v3032 = vrot.slane %v3031, 4
      %v3033 = vrot.slane %v2912, 5
      %v3034 = vsel %vm1945, %v3032, %v3033
      %v3035 = vrot.slane %v3033, 4
      %v3036 = vrot.slane %v2913, 5
      %v3037 = vsel %vm1945, %v3035, %v3036
      %v3038 = vrot.slane %v2914, 5
      %v3039 = vrot.slane %v3038, 4
      %v3040 = vrot.slane %v2915, 5
      %v3041 = vsel %vm1945, %v3039, %v3040
      %v3042 = vrot.slane %v3040, 4
      %v3043 = vrot.slane %v2916, 5
      %v3044 = vsel %vm1945, %v3042, %v3043
      %v3045 = vrot.slane %v2917, 5
      %v3046 = vrot.slane %v3045, 4
      %v3047 = vrot.slane %v2918, 5
      %v3048 = vsel %vm1945, %v3046, %v3047
      %v3049 = vrot.slane %v3047, 4
      %v3050 = vrot.slane %v2919, 5
      %v3051 = vsel %vm1945, %v3049, %v3050
      %v3052 = vrot.slane %v2920, 5
      %v3053 = vrot.slane %v3052, 4
      %v3054 = vrot.slane %v2921, 5
      %v3055 = vsel %vm1945, %v3053, %v3054
      %v3056 = vrot.slane %v3054, 4
      %v3057 = vrot.slane %v2922, 5
      %v3058 = vsel %vm1945, %v3056, %v3057
      %v3059 = vrot.slane %v2923, 5
      %v3060 = vrot.slane %v3059, 4
      %v3061 = vrot.slane %v2924, 5
      %v3062 = vsel %vm1945, %v3060, %v3061
      %v3063 = vrot.slane %v3061, 4
      %v3064 = vrot.slane %v2925, 5
      %v3065 = vsel %vm1945, %v3063, %v3064
      %v3066 = vrot.slane %v2926, 5
      %v3067 = vrot.slane %v3066, 4
      %v3068 = vrot.slane %v2927, 5
      %v3069 = vsel %vm1945, %v3067, %v3068
      %v3070 = vrot.slane %v3068, 4
      %v3071 = vrot.slane %v2928, 5
      %v3072 = vsel %vm1945, %v3070, %v3071
      %v3073 = vrot.slane %v2929, 5
      %v3074 = vrot.slane %v3073, 4
      %v3075 = vrot.slane %v2930, 5
      %v3076 = vsel %vm1945, %v3074, %v3075
      %v3077 = vrot.slane %v3075, 4
      %v3078 = vrot.slane %v2931, 5
      %v3079 = vsel %vm1945, %v3077, %v3078
      %v3080 = vrot.slane %v2932, 5
      %v3081 = vrot.slane %v3080, 4
      %v3082 = vrot.slane %v2933, 5
      %v3083 = vsel %vm1945, %v3081, %v3082
      %v3084 = vrot.slane %v3082, 4
      %v3085 = vrot.slane %v2934, 5
      %v3086 = vsel %vm1945, %v3084, %v3085
      %v3087 = vrot.slane %v2935, 5
      %v3088 = vrot.slane %v3087, 4
      %v3089 = vrot.slane %v2936, 5
      %v3090 = vsel %vm1945, %v3088, %v3089
      %v3091 = vrot.slane %v3089, 4
      %v3092 = vrot.slane %v2937, 5
      %v3093 = vsel %vm1945, %v3091, %v3092
      %v3094 = vrot.slane %v2938, 5
      %v3095 = vrot.slane %v3094, 4
      %v3096 = vrot.slane %v2939, 5
      %v3097 = vsel %vm1945, %v3095, %v3096
      %v3098 = vrot.slane %v3096, 4
      %v3099 = vrot.slane %v2940, 5
      %v3100 = vsel %vm1945, %v3098, %v3099
      %v3101 = vunpack.c.l.b16 %v2992
      %v3102 = vunpack.c.l.b16 %v2995
      %v3103 = vunpack.c.l.b16 %v2999
      %v3104 = vunpack.c.l.b16 %v3002
      %v3105 = vunpack.c.l.b16 %v3006
      %v3106 = vunpack.c.l.b16 %v3009
      %v3107 = vunpack.c.l.b16 %v3013
      %v3108 = vunpack.c.l.b16 %v3016
      %v3109 = vunpack.c.l.b16 %v3020
      %v3110 = vunpack.c.l.b16 %v3023
      %v3111 = vunpack.c.l.b16 %v3027
      %v3112 = vunpack.c.l.b16 %v3030
      %v3113 = vunpack.c.l.b16 %v3034
      %v3114 = vunpack.c.l.b16 %v3037
      %v3115 = vunpack.c.l.b16 %v3041
      %v3116 = vunpack.c.l.b16 %v3044
      %v3117 = vunpack.c.l.b16 %v3048
      %v3118 = vunpack.c.l.b16 %v3051
      %v3119 = vunpack.c.l.b16 %v3055
      %v3120 = vunpack.c.l.b16 %v3058
      %v3121 = vunpack.c.l.b16 %v3062
      %v3122 = vunpack.c.l.b16 %v3065
      %v3123 = vunpack.c.l.b16 %v3069
      %v3124 = vunpack.c.l.b16 %v3072
      %v3125 = vunpack.c.l.b16 %v3076
      %v3126 = vunpack.c.l.b16 %v3079
      %v3127 = vunpack.c.l.b16 %v3083
      %v3128 = vunpack.c.l.b16 %v3086
      %v3129 = vunpack.c.l.b16 %v3090
      %v3130 = vunpack.c.l.b16 %v3093
      %v3131 = vunpack.c.l.b16 %v3097
      %v3132 = vunpack.c.l.b16 %v3100
      %v3133 = vpack.c.b16 %v3102, %v3101
      %v3134 = vpack.c.b16 %v3104, %v3103
      %v3135 = vpack.c.b16 %v3106, %v3105
      %v3136 = vpack.c.b16 %v3108, %v3107
      %v3137 = vpack.c.b16 %v3110, %v3109
      %v3138 = vpack.c.b16 %v3112, %v3111
      %v3139 = vpack.c.b16 %v3114, %v3113
      %v3140 = vpack.c.b16 %v3116, %v3115
      %v3141 = vpack.c.b16 %v3118, %v3117
      %v3142 = vpack.c.b16 %v3120, %v3119
      %v3143 = vpack.c.b16 %v3122, %v3121
      %v3144 = vpack.c.b16 %v3124, %v3123
      %v3145 = vpack.c.b16 %v3126, %v3125
      %v3146 = vpack.c.b16 %v3128, %v3127
      %v3147 = vpack.c.b16 %v3130, %v3129
      %v3148 = vpack.c.b16 %v3132, %v3131
      %3149 = vrot.lane.b32.xlu0 %v3133, 40
      %v3150 = vpop.permute.xlu0 %3149
      %3151 = vrot.lane.b32.xlu0 %v3134, 40
      %v3152 = vpop.permute.xlu0 %3151
      %3153 = vrot.lane.b32.xlu0 %v3135, 40
      %v3154 = vpop.permute.xlu0 %3153
      %3155 = vrot.lane.b32.xlu0 %v3136, 40
      %v3156 = vpop.permute.xlu0 %3155
      %3157 = vrot.lane.b32.xlu0 %v3137, 40
      %v3158 = vpop.permute.xlu0 %3157
      %3159 = vrot.lane.b32.xlu0 %v3138, 40
      %v3160 = vpop.permute.xlu0 %3159
      %3161 = vrot.lane.b32.xlu0 %v3139, 40
      %v3162 = vpop.permute.xlu0 %3161
      %3163 = vrot.lane.b32.xlu0 %v3140, 40
      %v3164 = vpop.permute.xlu0 %3163
      %3165 = vrot.lane.b32.xlu0 %v3141, 40
      %v3166 = vpop.permute.xlu0 %3165
      %3167 = vrot.lane.b32.xlu0 %v3142, 40
      %v3168 = vpop.permute.xlu0 %3167
      %3169 = vrot.lane.b32.xlu0 %v3143, 40
      %v3170 = vpop.permute.xlu0 %3169
      %3171 = vrot.lane.b32.xlu0 %v3144, 40
      %v3172 = vpop.permute.xlu0 %3171
      %3173 = vrot.lane.b32.xlu0 %v3145, 40
      %v3174 = vpop.permute.xlu0 %3173
      %3175 = vrot.lane.b32.xlu0 %v3146, 40
      %v3176 = vpop.permute.xlu0 %3175
      %3177 = vrot.lane.b32.xlu0 %v3147, 40
      %v3178 = vpop.permute.xlu0 %3177
      %3179 = vrot.lane.b32.xlu0 %v3148, 40
      %v3180 = vpop.permute.xlu0 %3179
      %vm3197 = vcmask 392512
      %3198 = vst.msk [vmem:[#allocation3] sm:$0xff] %vm3197, %v3150
      %3199 = vst.msk [vmem:[#allocation3 + $0x8] sm:$0xff] %vm3197, %v3152
      %3200 = vst.msk [vmem:[#allocation3 + $0x10] sm:$0xff] %vm3197, %v3154
      %3201 = vst.msk [vmem:[#allocation3 + $0x18] sm:$0xff] %vm3197, %v3156
      %3202 = vst.msk [vmem:[#allocation3 + $0x20] sm:$0xff] %vm3197, %v3158
      %3203 = vst.msk [vmem:[#allocation3 + $0x28] sm:$0xff] %vm3197, %v3160
      %3204 = vst.msk [vmem:[#allocation3 + $0x30] sm:$0xff] %vm3197, %v3162
      %3205 = vst.msk [vmem:[#allocation3 + $0x38] sm:$0xff] %vm3197, %v3164
      %3206 = vst.msk [vmem:[#allocation3 + $0x40] sm:$0xff] %vm3197, %v3166
      %3207 = vst.msk [vmem:[#allocation3 + $0x48] sm:$0xff] %vm3197, %v3168
      %3208 = vst.msk [vmem:[#allocation3 + $0x50] sm:$0xff] %vm3197, %v3170
      %3209 = vst.msk [vmem:[#allocation3 + $0x58] sm:$0xff] %vm3197, %v3172
      %3210 = vst.msk [vmem:[#allocation3 + $0x60] sm:$0xff] %vm3197, %v3174
      %3211 = vst.msk [vmem:[#allocation3 + $0x68] sm:$0xff] %vm3197, %v3176
      %3212 = vst.msk [vmem:[#allocation3 + $0x70] sm:$0xff] %vm3197, %v3178
      %3213 = vst.msk [vmem:[#allocation3 + $0x78] sm:$0xff] %vm3197, %v3180
      %s3214 = scalar_lea.vmem [#allocation2], 24
      %v3215 = vld [vmem:[%s3214] sm:$0xf]
      %v3216 = vld [vmem:[%s3214 + $0x4] sm:$0xf]
      %v3217 = vld [vmem:[%s3214 + $0xc] sm:$0xf]
      %v3218 = vld [vmem:[%s3214 + $0x10] sm:$0xf]
      %v3219 = vld [vmem:[%s3214 + $0x18] sm:$0xf]
      %v3220 = vld [vmem:[%s3214 + $0x1c] sm:$0xf]
      %v3221 = vld [vmem:[%s3214 + $0x24] sm:$0xf]
      %v3222 = vld [vmem:[%s3214 + $0x28] sm:$0xf]
      %v3223 = vld [vmem:[%s3214 + $0x30] sm:$0xf]
      %v3224 = vld [vmem:[%s3214 + $0x34] sm:$0xf]
      %v3225 = vld [vmem:[%s3214 + $0x3c] sm:$0xf]
      %v3226 = vld [vmem:[%s3214 + $0x40] sm:$0xf]
      %v3227 = vld [vmem:[%s3214 + $0x48] sm:$0xf]
      %v3228 = vld [vmem:[%s3214 + $0x4c] sm:$0xf]
      %v3229 = vld [vmem:[%s3214 + $0x54] sm:$0xf]
      %v3230 = vld [vmem:[%s3214 + $0x58] sm:$0xf]
      %v3231 = vld [vmem:[%s3214 + $0x60] sm:$0xf]
      %v3232 = vld [vmem:[%s3214 + $0x64] sm:$0xf]
      %v3233 = vld [vmem:[%s3214 + $0x6c] sm:$0xf]
      %v3234 = vld [vmem:[%s3214 + $0x70] sm:$0xf]
      %v3235 = vld [vmem:[%s3214 + $0x78] sm:$0xf]
      %v3236 = vld [vmem:[%s3214 + $0x7c] sm:$0xf]
      %v3237 = vld [vmem:[%s3214 + $0x84] sm:$0xf]
      %v3238 = vld [vmem:[%s3214 + $0x88] sm:$0xf]
      %v3239 = vld [vmem:[%s3214 + $0x90] sm:$0xf]
      %v3240 = vld [vmem:[%s3214 + $0x94] sm:$0xf]
      %v3241 = vld [vmem:[%s3214 + $0x9c] sm:$0xf]
      %v3242 = vld [vmem:[%s3214 + $0xa0] sm:$0xf]
      %v3243 = vld [vmem:[%s3214 + $0xa8] sm:$0xf]
      %v3244 = vld [vmem:[%s3214 + $0xac] sm:$0xf]
      %v3245 = vld [vmem:[%s3214 + $0xb4] sm:$0xf]
      %v3246 = vld [vmem:[%s3214 + $0xb8] sm:$0xf]
      %v3279 = vunpack.c.l.b16 %v3215
      %v3280 = vunpack.c.l.b16 %v3216
      %v3281 = vunpack.c.l.b16 %v3217
      %v3282 = vunpack.c.l.b16 %v3218
      %v3283 = vunpack.c.l.b16 %v3219
      %v3284 = vunpack.c.l.b16 %v3220
      %v3285 = vunpack.c.l.b16 %v3221
      %v3286 = vunpack.c.l.b16 %v3222
      %v3287 = vunpack.c.l.b16 %v3223
      %v3288 = vunpack.c.l.b16 %v3224
      %v3289 = vunpack.c.l.b16 %v3225
      %v3290 = vunpack.c.l.b16 %v3226
      %v3291 = vunpack.c.l.b16 %v3227
      %v3292 = vunpack.c.l.b16 %v3228
      %v3293 = vunpack.c.l.b16 %v3229
      %v3294 = vunpack.c.l.b16 %v3230
      %v3295 = vunpack.c.l.b16 %v3231
      %v3296 = vunpack.c.l.b16 %v3232
      %v3297 = vunpack.c.l.b16 %v3233
      %v3298 = vunpack.c.l.b16 %v3234
      %v3299 = vunpack.c.l.b16 %v3235
      %v3300 = vunpack.c.l.b16 %v3236
      %v3301 = vunpack.c.l.b16 %v3237
      %v3302 = vunpack.c.l.b16 %v3238
      %v3303 = vunpack.c.l.b16 %v3239
      %v3304 = vunpack.c.l.b16 %v3240
      %v3305 = vunpack.c.l.b16 %v3241
      %v3306 = vunpack.c.l.b16 %v3242
      %v3307 = vunpack.c.l.b16 %v3243
      %v3308 = vunpack.c.l.b16 %v3244
      %v3309 = vunpack.c.l.b16 %v3245
      %v3310 = vunpack.c.l.b16 %v3246
      %v3311 = vpack.c.b16 %v3280, %v3279
      %v3312 = vpack.c.b16 %v3282, %v3281
      %v3313 = vpack.c.b16 %v3284, %v3283
      %v3314 = vpack.c.b16 %v3286, %v3285
      %v3315 = vpack.c.b16 %v3288, %v3287
      %v3316 = vpack.c.b16 %v3290, %v3289
      %v3317 = vpack.c.b16 %v3292, %v3291
      %v3318 = vpack.c.b16 %v3294, %v3293
      %v3319 = vpack.c.b16 %v3296, %v3295
      %v3320 = vpack.c.b16 %v3298, %v3297
      %v3321 = vpack.c.b16 %v3300, %v3299
      %v3322 = vpack.c.b16 %v3302, %v3301
      %v3323 = vpack.c.b16 %v3304, %v3303
      %v3324 = vpack.c.b16 %v3306, %v3305
      %v3325 = vpack.c.b16 %v3308, %v3307
      %v3326 = vpack.c.b16 %v3310, %v3309
      %3327 = vrot.lane.b32.xlu0 %v3311, 48
      %v3328 = vpop.permute.xlu0 %3327
      %3329 = vrot.lane.b32.xlu0 %v3312, 48
      %v3330 = vpop.permute.xlu0 %3329
      %3331 = vrot.lane.b32.xlu0 %v3313, 48
      %v3332 = vpop.permute.xlu0 %3331
      %3333 = vrot.lane.b32.xlu0 %v3314, 48
      %v3334 = vpop.permute.xlu0 %3333
      %3335 = vrot.lane.b32.xlu0 %v3315, 48
      %v3336 = vpop.permute.xlu0 %3335
      %3337 = vrot.lane.b32.xlu0 %v3316, 48
      %v3338 = vpop.permute.xlu0 %3337
      %3339 = vrot.lane.b32.xlu0 %v3317, 48
      %v3340 = vpop.permute.xlu0 %3339
      %3341 = vrot.lane.b32.xlu0 %v3318, 48
      %v3342 = vpop.permute.xlu0 %3341
      %3343 = vrot.lane.b32.xlu0 %v3319, 48
      %v3344 = vpop.permute.xlu0 %3343
      %3345 = vrot.lane.b32.xlu0 %v3320, 48
      %v3346 = vpop.permute.xlu0 %3345
      %3347 = vrot.lane.b32.xlu0 %v3321, 48
      %v3348 = vpop.permute.xlu0 %3347
      %3349 = vrot.lane.b32.xlu0 %v3322, 48
      %v3350 = vpop.permute.xlu0 %3349
      %3351 = vrot.lane.b32.xlu0 %v3323, 48
      %v3352 = vpop.permute.xlu0 %3351
      %3353 = vrot.lane.b32.xlu0 %v3324, 48
      %v3354 = vpop.permute.xlu0 %3353
      %3355 = vrot.lane.b32.xlu0 %v3325, 48
      %v3356 = vpop.permute.xlu0 %3355
      %3357 = vrot.lane.b32.xlu0 %v3326, 48
      %v3358 = vpop.permute.xlu0 %3357
      %vm3375 = vcmask 458112
      %3376 = vst.msk [vmem:[#allocation3] sm:$0xff] %vm3375, %v3328
      %3377 = vst.msk [vmem:[#allocation3 + $0x8] sm:$0xff] %vm3375, %v3330
      %3378 = vst.msk [vmem:[#allocation3 + $0x10] sm:$0xff] %vm3375, %v3332
      %3379 = vst.msk [vmem:[#allocation3 + $0x18] sm:$0xff] %vm3375, %v3334
      %3380 = vst.msk [vmem:[#allocation3 + $0x20] sm:$0xff] %vm3375, %v3336
      %3381 = vst.msk [vmem:[#allocation3 + $0x28] sm:$0xff] %vm3375, %v3338
      %3382 = vst.msk [vmem:[#allocation3 + $0x30] sm:$0xff] %vm3375, %v3340
      %3383 = vst.msk [vmem:[#allocation3 + $0x38] sm:$0xff] %vm3375, %v3342
      %3384 = vst.msk [vmem:[#allocation3 + $0x40] sm:$0xff] %vm3375, %v3344
      %3385 = vst.msk [vmem:[#allocation3 + $0x48] sm:$0xff] %vm3375, %v3346
      %3386 = vst.msk [vmem:[#allocation3 + $0x50] sm:$0xff] %vm3375, %v3348
      %3387 = vst.msk [vmem:[#allocation3 + $0x58] sm:$0xff] %vm3375, %v3350
      %3388 = vst.msk [vmem:[#allocation3 + $0x60] sm:$0xff] %vm3375, %v3352
      %3389 = vst.msk [vmem:[#allocation3 + $0x68] sm:$0xff] %vm3375, %v3354
      %3390 = vst.msk [vmem:[#allocation3 + $0x70] sm:$0xff] %vm3375, %v3356
      %3391 = vst.msk [vmem:[#allocation3 + $0x78] sm:$0xff] %vm3375, %v3358
      %v3392 = vld [vmem:[%s3214] sm:$0xf]
      %v3393 = vld [vmem:[%s3214 + $0x4] sm:$0xf]
      %v3394 = vld [vmem:[%s3214 + $0x8] sm:$0x1]
      %v3395 = vld [vmem:[%s3214 + $0xc] sm:$0xf]
      %v3396 = vld [vmem:[%s3214 + $0x10] sm:$0xf]
      %v3397 = vld [vmem:[%s3214 + $0x14] sm:$0x1]
      %v3398 = vld [vmem:[%s3214 + $0x18] sm:$0xf]
      %v3399 = vld [vmem:[%s3214 + $0x1c] sm:$0xf]
      %v3400 = vld [vmem:[%s3214 + $0x20] sm:$0x1]
      %v3401 = vld [vmem:[%s3214 + $0x24] sm:$0xf]
      %v3402 = vld [vmem:[%s3214 + $0x28] sm:$0xf]
      %v3403 = vld [vmem:[%s3214 + $0x2c] sm:$0x1]
      %v3404 = vld [vmem:[%s3214 + $0x30] sm:$0xf]
      %v3405 = vld [vmem:[%s3214 + $0x34] sm:$0xf]
      %v3406 = vld [vmem:[%s3214 + $0x38] sm:$0x1]
      %v3407 = vld [vmem:[%s3214 + $0x3c] sm:$0xf]
      %v3408 = vld [vmem:[%s3214 + $0x40] sm:$0xf]
      %v3409 = vld [vmem:[%s3214 + $0x44] sm:$0x1]
      %v3410 = vld [vmem:[%s3214 + $0x48] sm:$0xf]
      %v3411 = vld [vmem:[%s3214 + $0x4c] sm:$0xf]
      %v3412 = vld [vmem:[%s3214 + $0x50] sm:$0x1]
      %v3413 = vld [vmem:[%s3214 + $0x54] sm:$0xf]
      %v3414 = vld [vmem:[%s3214 + $0x58] sm:$0xf]
      %v3415 = vld [vmem:[%s3214 + $0x5c] sm:$0x1]
      %v3416 = vld [vmem:[%s3214 + $0x60] sm:$0xf]
      %v3417 = vld [vmem:[%s3214 + $0x64] sm:$0xf]
      %v3418 = vld [vmem:[%s3214 + $0x68] sm:$0x1]
      %v3419 = vld [vmem:[%s3214 + $0x6c] sm:$0xf]
      %v3420 = vld [vmem:[%s3214 + $0x70] sm:$0xf]
      %v3421 = vld [vmem:[%s3214 + $0x74] sm:$0x1]
      %v3422 = vld [vmem:[%s3214 + $0x78] sm:$0xf]
      %v3423 = vld [vmem:[%s3214 + $0x7c] sm:$0xf]
      %v3424 = vld [vmem:[%s3214 + $0x80] sm:$0x1]
      %v3425 = vld [vmem:[%s3214 + $0x84] sm:$0xf]
      %v3426 = vld [vmem:[%s3214 + $0x88] sm:$0xf]
      %v3427 = vld [vmem:[%s3214 + $0x8c] sm:$0x1]
      %v3428 = vld [vmem:[%s3214 + $0x90] sm:$0xf]
      %v3429 = vld [vmem:[%s3214 + $0x94] sm:$0xf]
      %v3430 = vld [vmem:[%s3214 + $0x98] sm:$0x1]
      %v3431 = vld [vmem:[%s3214 + $0x9c] sm:$0xf]
      %v3432 = vld [vmem:[%s3214 + $0xa0] sm:$0xf]
      %v3433 = vld [vmem:[%s3214 + $0xa4] sm:$0x1]
      %v3434 = vld [vmem:[%s3214 + $0xa8] sm:$0xf]
      %v3435 = vld [vmem:[%s3214 + $0xac] sm:$0xf]
      %v3436 = vld [vmem:[%s3214 + $0xb0] sm:$0x1]
      %v3437 = vld [vmem:[%s3214 + $0xb4] sm:$0xf]
      %v3438 = vld [vmem:[%s3214 + $0xb8] sm:$0xf]
      %v3439 = vld [vmem:[%s3214 + $0xbc] sm:$0x1]
      %v3441 = vshrl.u32 %v3392, 16
      %v3443 = vrot.slane %v3441, 4
      %v3444 = vshll.u32 %v3392, 16
      %v3446 = vrot.slane %v3444, 5
      %v3447 = vor.u32 %v3443, %v3446
      %v3448 = vrot.slane %v3447, 4
      %v3450 = vshll.u32 %v3393, 16
      %v3452 = vrot.slane %v3450, 5
      %v3453 = vsel %vm1349, %v3448, %v3452
      %v3454 = vshrl.u32 %v3393, 16
      %v3456 = vrot.slane %v3454, 4
      %v3457 = vor.u32 %v3456, %v3452
      %v3458 = vrot.slane %v3457, 4
      %v3460 = vshll.u32 %v3394, 16
      %v3462 = vrot.slane %v3460, 5
      %v3463 = vsel %vm1349, %v3458, %v3462
      %v3465 = vshrl.u32 %v3395, 16
      %v3467 = vrot.slane %v3465, 4
      %v3468 = vshll.u32 %v3395, 16
      %v3470 = vrot.slane %v3468, 5
      %v3471 = vor.u32 %v3467, %v3470
      %v3472 = vrot.slane %v3471, 4
      %v3474 = vshll.u32 %v3396, 16
      %v3476 = vrot.slane %v3474, 5
      %v3477 = vsel %vm1349, %v3472, %v3476
      %v3478 = vshrl.u32 %v3396, 16
      %v3480 = vrot.slane %v3478, 4
      %v3481 = vor.u32 %v3480, %v3476
      %v3482 = vrot.slane %v3481, 4
      %v3484 = vshll.u32 %v3397, 16
      %v3486 = vrot.slane %v3484, 5
      %v3487 = vsel %vm1349, %v3482, %v3486
      %v3489 = vshrl.u32 %v3398, 16
      %v3491 = vrot.slane %v3489, 4
      %v3492 = vshll.u32 %v3398, 16
      %v3494 = vrot.slane %v3492, 5
      %v3495 = vor.u32 %v3491, %v3494
      %v3496 = vrot.slane %v3495, 4
      %v3498 = vshll.u32 %v3399, 16
      %v3500 = vrot.slane %v3498, 5
      %v3501 = vsel %vm1349, %v3496, %v3500
      %v3502 = vshrl.u32 %v3399, 16
      %v3504 = vrot.slane %v3502, 4
      %v3505 = vor.u32 %v3504, %v3500
      %v3506 = vrot.slane %v3505, 4
      %v3508 = vshll.u32 %v3400, 16
      %v3510 = vrot.slane %v3508, 5
      %v3511 = vsel %vm1349, %v3506, %v3510
      %v3513 = vshrl.u32 %v3401, 16
      %v3515 = vrot.slane %v3513, 4
      %v3516 = vshll.u32 %v3401, 16
      %v3518 = vrot.slane %v3516, 5
      %v3519 = vor.u32 %v3515, %v3518
      %v3520 = vrot.slane %v3519, 4
      %v3522 = vshll.u32 %v3402, 16
      %v3524 = vrot.slane %v3522, 5
      %v3525 = vsel %vm1349, %v3520, %v3524
      %v3526 = vshrl.u32 %v3402, 16
      %v3528 = vrot.slane %v3526, 4
      %v3529 = vor.u32 %v3528, %v3524
      %v3530 = vrot.slane %v3529, 4
      %v3532 = vshll.u32 %v3403, 16
      %v3534 = vrot.slane %v3532, 5
      %v3535 = vsel %vm1349, %v3530, %v3534
      %v3537 = vshrl.u32 %v3404, 16
      %v3539 = vrot.slane %v3537, 4
      %v3540 = vshll.u32 %v3404, 16
      %v3542 = vrot.slane %v3540, 5
      %v3543 = vor.u32 %v3539, %v3542
      %v3544 = vrot.slane %v3543, 4
      %v3546 = vshll.u32 %v3405, 16
      %v3548 = vrot.slane %v3546, 5
      %v3549 = vsel %vm1349, %v3544, %v3548
      %v3550 = vshrl.u32 %v3405, 16
      %v3552 = vrot.slane %v3550, 4
      %v3553 = vor.u32 %v3552, %v3548
      %v3554 = vrot.slane %v3553, 4
      %v3556 = vshll.u32 %v3406, 16
      %v3558 = vrot.slane %v3556, 5
      %v3559 = vsel %vm1349, %v3554, %v3558
      %v3561 = vshrl.u32 %v3407, 16
      %v3563 = vrot.slane %v3561, 4
      %v3564 = vshll.u32 %v3407, 16
      %v3566 = vrot.slane %v3564, 5
      %v3567 = vor.u32 %v3563, %v3566
      %v3568 = vrot.slane %v3567, 4
      %v3570 = vshll.u32 %v3408, 16
      %v3572 = vrot.slane %v3570, 5
      %v3573 = vsel %vm1349, %v3568, %v3572
      %v3574 = vshrl.u32 %v3408, 16
      %v3576 = vrot.slane %v3574, 4
      %v3577 = vor.u32 %v3576, %v3572
      %v3578 = vrot.slane %v3577, 4
      %v3580 = vshll.u32 %v3409, 16
      %v3582 = vrot.slane %v3580, 5
      %v3583 = vsel %vm1349, %v3578, %v3582
      %v3585 = vshrl.u32 %v3410, 16
      %v3587 = vrot.slane %v3585, 4
      %v3588 = vshll.u32 %v3410, 16
      %v3590 = vrot.slane %v3588, 5
      %v3591 = vor.u32 %v3587, %v3590
      %v3592 = vrot.slane %v3591, 4
      %v3594 = vshll.u32 %v3411, 16
      %v3596 = vrot.slane %v3594, 5
      %v3597 = vsel %vm1349, %v3592, %v3596
      %v3598 = vshrl.u32 %v3411, 16
      %v3600 = vrot.slane %v3598, 4
      %v3601 = vor.u32 %v3600, %v3596
      %v3602 = vrot.slane %v3601, 4
      %v3604 = vshll.u32 %v3412, 16
      %v3606 = vrot.slane %v3604, 5
      %v3607 = vsel %vm1349, %v3602, %v3606
      %v3609 = vshrl.u32 %v3413, 16
      %v3611 = vrot.slane %v3609, 4
      %v3612 = vshll.u32 %v3413, 16
      %v3614 = vrot.slane %v3612, 5
      %v3615 = vor.u32 %v3611, %v3614
      %v3616 = vrot.slane %v3615, 4
      %v3618 = vshll.u32 %v3414, 16
      %v3620 = vrot.slane %v3618, 5
      %v3621 = vsel %vm1349, %v3616, %v3620
      %v3622 = vshrl.u32 %v3414, 16
      %v3624 = vrot.slane %v3622, 4
      %v3625 = vor.u32 %v3624, %v3620
      %v3626 = vrot.slane %v3625, 4
      %v3628 = vshll.u32 %v3415, 16
      %v3630 = vrot.slane %v3628, 5
      %v3631 = vsel %vm1349, %v3626, %v3630
      %v3633 = vshrl.u32 %v3416, 16
      %v3635 = vrot.slane %v3633, 4
      %v3636 = vshll.u32 %v3416, 16
      %v3638 = vrot.slane %v3636, 5
      %v3639 = vor.u32 %v3635, %v3638
      %v3640 = vrot.slane %v3639, 4
      %v3642 = vshll.u32 %v3417, 16
      %v3644 = vrot.slane %v3642, 5
      %v3645 = vsel %vm1349, %v3640, %v3644
      %v3646 = vshrl.u32 %v3417, 16
      %v3648 = vrot.slane %v3646, 4
      %v3649 = vor.u32 %v3648, %v3644
      %v3650 = vrot.slane %v3649, 4
      %v3652 = vshll.u32 %v3418, 16
      %v3654 = vrot.slane %v3652, 5
      %v3655 = vsel %vm1349, %v3650, %v3654
      %v3657 = vshrl.u32 %v3419, 16
      %v3659 = vrot.slane %v3657, 4
      %v3660 = vshll.u32 %v3419, 16
      %v3662 = vrot.slane %v3660, 5
      %v3663 = vor.u32 %v3659, %v3662
      %v3664 = vrot.slane %v3663, 4
      %v3666 = vshll.u32 %v3420, 16
      %v3668 = vrot.slane %v3666, 5
      %v3669 = vsel %vm1349, %v3664, %v3668
      %v3670 = vshrl.u32 %v3420, 16
      %v3672 = vrot.slane %v3670, 4
      %v3673 = vor.u32 %v3672, %v3668
      %v3674 = vrot.slane %v3673, 4
      %v3676 = vshll.u32 %v3421, 16
      %v3678 = vrot.slane %v3676, 5
      %v3679 = vsel %vm1349, %v3674, %v3678
      %v3681 = vshrl.u32 %v3422, 16
      %v3683 = vrot.slane %v3681, 4
      %v3684 = vshll.u32 %v3422, 16
      %v3686 = vrot.slane %v3684, 5
      %v3687 = vor.u32 %v3683, %v3686
      %v3688 = vrot.slane %v3687, 4
      %v3690 = vshll.u32 %v3423, 16
      %v3692 = vrot.slane %v3690, 5
      %v3693 = vsel %vm1349, %v3688, %v3692
      %v3694 = vshrl.u32 %v3423, 16
      %v3696 = vrot.slane %v3694, 4
      %v3697 = vor.u32 %v3696, %v3692
      %v3698 = vrot.slane %v3697, 4
      %v3700 = vshll.u32 %v3424, 16
      %v3702 = vrot.slane %v3700, 5
      %v3703 = vsel %vm1349, %v3698, %v3702
      %v3705 = vshrl.u32 %v3425, 16
      %v3707 = vrot.slane %v3705, 4
      %v3708 = vshll.u32 %v3425, 16
      %v3710 = vrot.slane %v3708, 5
      %v3711 = vor.u32 %v3707, %v3710
      %v3712 = vrot.slane %v3711, 4
      %v3714 = vshll.u32 %v3426, 16
      %v3716 = vrot.slane %v3714, 5
      %v3717 = vsel %vm1349, %v3712, %v3716
      %v3718 = vshrl.u32 %v3426, 16
      %v3720 = vrot.slane %v3718, 4
      %v3721 = vor.u32 %v3720, %v3716
      %v3722 = vrot.slane %v3721, 4
      %v3724 = vshll.u32 %v3427, 16
      %v3726 = vrot.slane %v3724, 5
      %v3727 = vsel %vm1349, %v3722, %v3726
      %v3729 = vshrl.u32 %v3428, 16
      %v3731 = vrot.slane %v3729, 4
      %v3732 = vshll.u32 %v3428, 16
      %v3734 = vrot.slane %v3732, 5
      %v3735 = vor.u32 %v3731, %v3734
      %v3736 = vrot.slane %v3735, 4
      %v3738 = vshll.u32 %v3429, 16
      %v3740 = vrot.slane %v3738, 5
      %v3741 = vsel %vm1349, %v3736, %v3740
      %v3742 = vshrl.u32 %v3429, 16
      %v3744 = vrot.slane %v3742, 4
      %v3745 = vor.u32 %v3744, %v3740
      %v3746 = vrot.slane %v3745, 4
      %v3748 = vshll.u32 %v3430, 16
      %v3750 = vrot.slane %v3748, 5
      %v3751 = vsel %vm1349, %v3746, %v3750
      %v3753 = vshrl.u32 %v3431, 16
      %v3755 = vrot.slane %v3753, 4
      %v3756 = vshll.u32 %v3431, 16
      %v3758 = vrot.slane %v3756, 5
      %v3759 = vor.u32 %v3755, %v3758
      %v3760 = vrot.slane %v3759, 4
      %v3762 = vshll.u32 %v3432, 16
      %v3764 = vrot.slane %v3762, 5
      %v3765 = vsel %vm1349, %v3760, %v3764
      %v3766 = vshrl.u32 %v3432, 16
      %v3768 = vrot.slane %v3766, 4
      %v3769 = vor.u32 %v3768, %v3764
      %v3770 = vrot.slane %v3769, 4
      %v3772 = vshll.u32 %v3433, 16
      %v3774 = vrot.slane %v3772, 5
      %v3775 = vsel %vm1349, %v3770, %v3774
      %v3777 = vshrl.u32 %v3434, 16
      %v3779 = vrot.slane %v3777, 4
      %v3780 = vshll.u32 %v3434, 16
      %v3782 = vrot.slane %v3780, 5
      %v3783 = vor.u32 %v3779, %v3782
      %v3784 = vrot.slane %v3783, 4
      %v3786 = vshll.u32 %v3435, 16
      %v3788 = vrot.slane %v3786, 5
      %v3789 = vsel %vm1349, %v3784, %v3788
      %v3790 = vshrl.u32 %v3435, 16
      %v3792 = vrot.slane %v3790, 4
      %v3793 = vor.u32 %v3792, %v3788
      %v3794 = vrot.slane %v3793, 4
      %v3796 = vshll.u32 %v3436, 16
      %v3798 = vrot.slane %v3796, 5
      %v3799 = vsel %vm1349, %v3794, %v3798
      %v3801 = vshrl.u32 %v3437, 16
      %v3803 = vrot.slane %v3801, 4
      %v3804 = vshll.u32 %v3437, 16
      %v3806 = vrot.slane %v3804, 5
      %v3807 = vor.u32 %v3803, %v3806
      %v3808 = vrot.slane %v3807, 4
      %v3810 = vshll.u32 %v3438, 16
      %v3812 = vrot.slane %v3810, 5
      %v3813 = vsel %vm1349, %v3808, %v3812
      %v3814 = vshrl.u32 %v3438, 16
      %v3816 = vrot.slane %v3814, 4
      %v3817 = vor.u32 %v3816, %v3812
      %v3818 = vrot.slane %v3817, 4
      %v3820 = vshll.u32 %v3439, 16
      %v3822 = vrot.slane %v3820, 5
      %v3823 = vsel %vm1349, %v3818, %v3822
      %v3824 = vunpack.c.l.b16 %v3453
      %v3825 = vunpack.c.l.b16 %v3463
      %v3826 = vunpack.c.l.b16 %v3477
      %v3827 = vunpack.c.l.b16 %v3487
      %v3828 = vunpack.c.l.b16 %v3501
      %v3829 = vunpack.c.l.b16 %v3511
      %v3830 = vunpack.c.l.b16 %v3525
      %v3831 = vunpack.c.l.b16 %v3535
      %v3832 = vunpack.c.l.b16 %v3549
      %v3833 = vunpack.c.l.b16 %v3559
      %v3834 = vunpack.c.l.b16 %v3573
      %v3835 = vunpack.c.l.b16 %v3583
      %v3836 = vunpack.c.l.b16 %v3597
      %v3837 = vunpack.c.l.b16 %v3607
      %v3838 = vunpack.c.l.b16 %v3621
      %v3839 = vunpack.c.l.b16 %v3631
      %v3840 = vunpack.c.l.b16 %v3645
      %v3841 = vunpack.c.l.b16 %v3655
      %v3842 = vunpack.c.l.b16 %v3669
      %v3843 = vunpack.c.l.b16 %v3679
      %v3844 = vunpack.c.l.b16 %v3693
      %v3845 = vunpack.c.l.b16 %v3703
      %v3846 = vunpack.c.l.b16 %v3717
      %v3847 = vunpack.c.l.b16 %v3727
      %v3848 = vunpack.c.l.b16 %v3741
      %v3849 = vunpack.c.l.b16 %v3751
      %v3850 = vunpack.c.l.b16 %v3765
      %v3851 = vunpack.c.l.b16 %v3775
      %v3852 = vunpack.c.l.b16 %v3789
      %v3853 = vunpack.c.l.b16 %v3799
      %v3854 = vunpack.c.l.b16 %v3813
      %v3855 = vunpack.c.l.b16 %v3823
      %v3856 = vpack.c.b16 %v3825, %v3824
      %v3857 = vpack.c.b16 %v3827, %v3826
      %v3858 = vpack.c.b16 %v3829, %v3828
      %v3859 = vpack.c.b16 %v3831, %v3830
      %v3860 = vpack.c.b16 %v3833, %v3832
      %v3861 = vpack.c.b16 %v3835, %v3834
      %v3862 = vpack.c.b16 %v3837, %v3836
      %v3863 = vpack.c.b16 %v3839, %v3838
      %v3864 = vpack.c.b16 %v3841, %v3840
      %v3865 = vpack.c.b16 %v3843, %v3842
      %v3866 = vpack.c.b16 %v3845, %v3844
      %v3867 = vpack.c.b16 %v3847, %v3846
      %v3868 = vpack.c.b16 %v3849, %v3848
      %v3869 = vpack.c.b16 %v3851, %v3850
      %v3870 = vpack.c.b16 %v3853, %v3852
      %v3871 = vpack.c.b16 %v3855, %v3854
      %3872 = vrot.lane.b32.xlu0 %v3856, 56
      %v3873 = vpop.permute.xlu0 %3872
      %3874 = vrot.lane.b32.xlu0 %v3857, 56
      %v3875 = vpop.permute.xlu0 %3874
      %3876 = vrot.lane.b32.xlu0 %v3858, 56
      %v3877 = vpop.permute.xlu0 %3876
      %3878 = vrot.lane.b32.xlu0 %v3859, 56
      %v3879 = vpop.permute.xlu0 %3878
      %3880 = vrot.lane.b32.xlu0 %v3860, 56
      %v3881 = vpop.permute.xlu0 %3880
      %3882 = vrot.lane.b32.xlu0 %v3861, 56
      %v3883 = vpop.permute.xlu0 %3882
      %3884 = vrot.lane.b32.xlu0 %v3862, 56
      %v3885 = vpop.permute.xlu0 %3884
      %3886 = vrot.lane.b32.xlu0 %v3863, 56
      %v3887 = vpop.permute.xlu0 %3886
      %3888 = vrot.lane.b32.xlu0 %v3864, 56
      %v3889 = vpop.permute.xlu0 %3888
      %3890 = vrot.lane.b32.xlu0 %v3865, 56
      %v3891 = vpop.permute.xlu0 %3890
      %3892 = vrot.lane.b32.xlu0 %v3866, 56
      %v3893 = vpop.permute.xlu0 %3892
      %3894 = vrot.lane.b32.xlu0 %v3867, 56
      %v3895 = vpop.permute.xlu0 %3894
      %3896 = vrot.lane.b32.xlu0 %v3868, 56
      %v3897 = vpop.permute.xlu0 %3896
      %3898 = vrot.lane.b32.xlu0 %v3869, 56
      %v3899 = vpop.permute.xlu0 %3898
      %3900 = vrot.lane.b32.xlu0 %v3870, 56
      %v3901 = vpop.permute.xlu0 %3900
      %3902 = vrot.lane.b32.xlu0 %v3871, 56
      %v3903 = vpop.permute.xlu0 %3902
      %vm3920 = vcmask 523712
      %3921 = vst.msk [vmem:[#allocation3] sm:$0xff] %vm3920, %v3873
      %3922 = vst.msk [vmem:[#allocation3 + $0x8] sm:$0xff] %vm3920, %v3875
      %3923 = vst.msk [vmem:[#allocation3 + $0x10] sm:$0xff] %vm3920, %v3877
      %3924 = vst.msk [vmem:[#allocation3 + $0x18] sm:$0xff] %vm3920, %v3879
      %3925 = vst.msk [vmem:[#allocation3 + $0x20] sm:$0xff] %vm3920, %v3881
      %3926 = vst.msk [vmem:[#allocation3 + $0x28] sm:$0xff] %vm3920, %v3883
      %3927 = vst.msk [vmem:[#allocation3 + $0x30] sm:$0xff] %vm3920, %v3885
      %3928 = vst.msk [vmem:[#allocation3 + $0x38] sm:$0xff] %vm3920, %v3887
      %3929 = vst.msk [vmem:[#allocation3 + $0x40] sm:$0xff] %vm3920, %v3889
      %3930 = vst.msk [vmem:[#allocation3 + $0x48] sm:$0xff] %vm3920, %v3891
      %3931 = vst.msk [vmem:[#allocation3 + $0x50] sm:$0xff] %vm3920, %v3893
      %3932 = vst.msk [vmem:[#allocation3 + $0x58] sm:$0xff] %vm3920, %v3895
      %3933 = vst.msk [vmem:[#allocation3 + $0x60] sm:$0xff] %vm3920, %v3897
      %3934 = vst.msk [vmem:[#allocation3 + $0x68] sm:$0xff] %vm3920, %v3899
      %3935 = vst.msk [vmem:[#allocation3 + $0x70] sm:$0xff] %vm3920, %v3901
      %3936 = vst.msk [vmem:[#allocation3 + $0x78] sm:$0xff] %vm3920, %v3903
      %v3937 = vld [vmem:[%s3214] sm:$0xe]
      %v3938 = vld [vmem:[%s3214 + $0x4] sm:$0xf]
      %v3939 = vld [vmem:[%s3214 + $0x8] sm:$0x1]
      %v3940 = vld [vmem:[%s3214 + $0xc] sm:$0xe]
      %v3941 = vld [vmem:[%s3214 + $0x10] sm:$0xf]
      %v3942 = vld [vmem:[%s3214 + $0x14] sm:$0x1]
      %v3943 = vld [vmem:[%s3214 + $0x18] sm:$0xe]
      %v3944 = vld [vmem:[%s3214 + $0x1c] sm:$0xf]
      %v3945 = vld [vmem:[%s3214 + $0x20] sm:$0x1]
      %v3946 = vld [vmem:[%s3214 + $0x24] sm:$0xe]
      %v3947 = vld [vmem:[%s3214 + $0x28] sm:$0xf]
      %v3948 = vld [vmem:[%s3214 + $0x2c] sm:$0x1]
      %v3949 = vld [vmem:[%s3214 + $0x30] sm:$0xe]
      %v3950 = vld [vmem:[%s3214 + $0x34] sm:$0xf]
      %v3951 = vld [vmem:[%s3214 + $0x38] sm:$0x1]
      %v3952 = vld [vmem:[%s3214 + $0x3c] sm:$0xe]
      %v3953 = vld [vmem:[%s3214 + $0x40] sm:$0xf]
      %v3954 = vld [vmem:[%s3214 + $0x44] sm:$0x1]
      %v3955 = vld [vmem:[%s3214 + $0x48] sm:$0xe]
      %v3956 = vld [vmem:[%s3214 + $0x4c] sm:$0xf]
      %v3957 = vld [vmem:[%s3214 + $0x50] sm:$0x1]
      %v3958 = vld [vmem:[%s3214 + $0x54] sm:$0xe]
      %v3959 = vld [vmem:[%s3214 + $0x58] sm:$0xf]
      %v3960 = vld [vmem:[%s3214 + $0x5c] sm:$0x1]
      %v3961 = vld [vmem:[%s3214 + $0x60] sm:$0xe]
      %v3962 = vld [vmem:[%s3214 + $0x64] sm:$0xf]
      %v3963 = vld [vmem:[%s3214 + $0x68] sm:$0x1]
      %v3964 = vld [vmem:[%s3214 + $0x6c] sm:$0xe]
      %v3965 = vld [vmem:[%s3214 + $0x70] sm:$0xf]
      %v3966 = vld [vmem:[%s3214 + $0x74] sm:$0x1]
      %v3967 = vld [vmem:[%s3214 + $0x78] sm:$0xe]
      %v3968 = vld [vmem:[%s3214 + $0x7c] sm:$0xf]
      %v3969 = vld [vmem:[%s3214 + $0x80] sm:$0x1]
      %v3970 = vld [vmem:[%s3214 + $0x84] sm:$0xe]
      %v3971 = vld [vmem:[%s3214 + $0x88] sm:$0xf]
      %v3972 = vld [vmem:[%s3214 + $0x8c] sm:$0x1]
      %v3973 = vld [vmem:[%s3214 + $0x90] sm:$0xe]
      %v3974 = vld [vmem:[%s3214 + $0x94] sm:$0xf]
      %v3975 = vld [vmem:[%s3214 + $0x98] sm:$0x1]
      %v3976 = vld [vmem:[%s3214 + $0x9c] sm:$0xe]
      %v3977 = vld [vmem:[%s3214 + $0xa0] sm:$0xf]
      %v3978 = vld [vmem:[%s3214 + $0xa4] sm:$0x1]
      %v3979 = vld [vmem:[%s3214 + $0xa8] sm:$0xe]
      %v3980 = vld [vmem:[%s3214 + $0xac] sm:$0xf]
      %v3981 = vld [vmem:[%s3214 + $0xb0] sm:$0x1]
      %v3982 = vld [vmem:[%s3214 + $0xb4] sm:$0xe]
      %v3983 = vld [vmem:[%s3214 + $0xb8] sm:$0xf]
      %v3984 = vld [vmem:[%s3214 + $0xbc] sm:$0x1]
      %v4033 = vrot.slane %v3937, 5
      %v4034 = vrot.slane %v4033, 4
      %v4035 = vrot.slane %v3938, 5
      %v4036 = vsel %vm1945, %v4034, %v4035
      %v4037 = vrot.slane %v4035, 4
      %v4038 = vrot.slane %v3939, 5
      %v4039 = vsel %vm1945, %v4037, %v4038
      %v4040 = vrot.slane %v3940, 5
      %v4041 = vrot.slane %v4040, 4
      %v4042 = vrot.slane %v3941, 5
      %v4043 = vsel %vm1945, %v4041, %v4042
      %v4044 = vrot.slane %v4042, 4
      %v4045 = vrot.slane %v3942, 5
      %v4046 = vsel %vm1945, %v4044, %v4045
      %v4047 = vrot.slane %v3943, 5
      %v4048 = vrot.slane %v4047, 4
      %v4049 = vrot.slane %v3944, 5
      %v4050 = vsel %vm1945, %v4048, %v4049
      %v4051 = vrot.slane %v4049, 4
      %v4052 = vrot.slane %v3945, 5
      %v4053 = vsel %vm1945, %v4051, %v4052
      %v4054 = vrot.slane %v3946, 5
      %v4055 = vrot.slane %v4054, 4
      %v4056 = vrot.slane %v3947, 5
      %v4057 = vsel %vm1945, %v4055, %v4056
      %v4058 = vrot.slane %v4056, 4
      %v4059 = vrot.slane %v3948, 5
      %v4060 = vsel %vm1945, %v4058, %v4059
      %v4061 = vrot.slane %v3949, 5
      %v4062 = vrot.slane %v4061, 4
      %v4063 = vrot.slane %v3950, 5
      %v4064 = vsel %vm1945, %v4062, %v4063
      %v4065 = vrot.slane %v4063, 4
      %v4066 = vrot.slane %v3951, 5
      %v4067 = vsel %vm1945, %v4065, %v4066
      %v4068 = vrot.slane %v3952, 5
      %v4069 = vrot.slane %v4068, 4
      %v4070 = vrot.slane %v3953, 5
      %v4071 = vsel %vm1945, %v4069, %v4070
      %v4072 = vrot.slane %v4070, 4
      %v4073 = vrot.slane %v3954, 5
      %v4074 = vsel %vm1945, %v4072, %v4073
      %v4075 = vrot.slane %v3955, 5
      %v4076 = vrot.slane %v4075, 4
      %v4077 = vrot.slane %v3956, 5
      %v4078 = vsel %vm1945, %v4076, %v4077
      %v4079 = vrot.slane %v4077, 4
      %v4080 = vrot.slane %v3957, 5
      %v4081 = vsel %vm1945, %v4079, %v4080
      %v4082 = vrot.slane %v3958, 5
      %v4083 = vrot.slane %v4082, 4
      %v4084 = vrot.slane %v3959, 5
      %v4085 = vsel %vm1945, %v4083, %v4084
      %v4086 = vrot.slane %v4084, 4
      %v4087 = vrot.slane %v3960, 5
      %v4088 = vsel %vm1945, %v4086, %v4087
      %v4089 = vrot.slane %v3961, 5
      %v4090 = vrot.slane %v4089, 4
      %v4091 = vrot.slane %v3962, 5
      %v4092 = vsel %vm1945, %v4090, %v4091
      %v4093 = vrot.slane %v4091, 4
      %v4094 = vrot.slane %v3963, 5
      %v4095 = vsel %vm1945, %v4093, %v4094
      %v4096 = vrot.slane %v3964, 5
      %v4097 = vrot.slane %v4096, 4
      %v4098 = vrot.slane %v3965, 5
      %v4099 = vsel %vm1945, %v4097, %v4098
      %v4100 = vrot.slane %v4098, 4
      %v4101 = vrot.slane %v3966, 5
      %v4102 = vsel %vm1945, %v4100, %v4101
      %v4103 = vrot.slane %v3967, 5
      %v4104 = vrot.slane %v4103, 4
      %v4105 = vrot.slane %v3968, 5
      %v4106 = vsel %vm1945, %v4104, %v4105
      %v4107 = vrot.slane %v4105, 4
      %v4108 = vrot.slane %v3969, 5
      %v4109 = vsel %vm1945, %v4107, %v4108
      %v4110 = vrot.slane %v3970, 5
      %v4111 = vrot.slane %v4110, 4
      %v4112 = vrot.slane %v3971, 5
      %v4113 = vsel %vm1945, %v4111, %v4112
      %v4114 = vrot.slane %v4112, 4
      %v4115 = vrot.slane %v3972, 5
      %v4116 = vsel %vm1945, %v4114, %v4115
      %v4117 = vrot.slane %v3973, 5
      %v4118 = vrot.slane %v4117, 4
      %v4119 = vrot.slane %v3974, 5
      %v4120 = vsel %vm1945, %v4118, %v4119
      %v4121 = vrot.slane %v4119, 4
      %v4122 = vrot.slane %v3975, 5
      %v4123 = vsel %vm1945, %v4121, %v4122
      %v4124 = vrot.slane %v3976, 5
      %v4125 = vrot.slane %v4124, 4
      %v4126 = vrot.slane %v3977, 5
      %v4127 = vsel %vm1945, %v4125, %v4126
      %v4128 = vrot.slane %v4126, 4
      %v4129 = vrot.slane %v3978, 5
      %v4130 = vsel %vm1945, %v4128, %v4129
      %v4131 = vrot.slane %v3979, 5
      %v4132 = vrot.slane %v4131, 4
      %v4133 = vrot.slane %v3980, 5
      %v4134 = vsel %vm1945, %v4132, %v4133
      %v4135 = vrot.slane %v4133, 4
      %v4136 = vrot.slane %v3981, 5
      %v4137 = vsel %vm1945, %v4135, %v4136
      %v4138 = vrot.slane %v3982, 5
      %v4139 = vrot.slane %v4138, 4
      %v4140 = vrot.slane %v3983, 5
      %v4141 = vsel %vm1945, %v4139, %v4140
      %v4142 = vrot.slane %v4140, 4
      %v4143 = vrot.slane %v3984, 5
      %v4144 = vsel %vm1945, %v4142, %v4143
      %v4145 = vunpack.c.l.b16 %v4036
      %v4146 = vunpack.c.l.b16 %v4039
      %v4147 = vunpack.c.l.b16 %v4043
      %v4148 = vunpack.c.l.b16 %v4046
      %v4149 = vunpack.c.l.b16 %v4050
      %v4150 = vunpack.c.l.b16 %v4053
      %v4151 = vunpack.c.l.b16 %v4057
      %v4152 = vunpack.c.l.b16 %v4060
      %v4153 = vunpack.c.l.b16 %v4064
      %v4154 = vunpack.c.l.b16 %v4067
      %v4155 = vunpack.c.l.b16 %v4071
      %v4156 = vunpack.c.l.b16 %v4074
      %v4157 = vunpack.c.l.b16 %v4078
      %v4158 = vunpack.c.l.b16 %v4081
      %v4159 = vunpack.c.l.b16 %v4085
      %v4160 = vunpack.c.l.b16 %v4088
      %v4161 = vunpack.c.l.b16 %v4092
      %v4162 = vunpack.c.l.b16 %v4095
      %v4163 = vunpack.c.l.b16 %v4099
      %v4164 = vunpack.c.l.b16 %v4102
      %v4165 = vunpack.c.l.b16 %v4106
      %v4166 = vunpack.c.l.b16 %v4109
      %v4167 = vunpack.c.l.b16 %v4113
      %v4168 = vunpack.c.l.b16 %v4116
      %v4169 = vunpack.c.l.b16 %v4120
      %v4170 = vunpack.c.l.b16 %v4123
      %v4171 = vunpack.c.l.b16 %v4127
      %v4172 = vunpack.c.l.b16 %v4130
      %v4173 = vunpack.c.l.b16 %v4134
      %v4174 = vunpack.c.l.b16 %v4137
      %v4175 = vunpack.c.l.b16 %v4141
      %v4176 = vunpack.c.l.b16 %v4144
      %v4177 = vpack.c.b16 %v4146, %v4145
      %v4178 = vpack.c.b16 %v4148, %v4147
      %v4179 = vpack.c.b16 %v4150, %v4149
      %v4180 = vpack.c.b16 %v4152, %v4151
      %v4181 = vpack.c.b16 %v4154, %v4153
      %v4182 = vpack.c.b16 %v4156, %v4155
      %v4183 = vpack.c.b16 %v4158, %v4157
      %v4184 = vpack.c.b16 %v4160, %v4159
      %v4185 = vpack.c.b16 %v4162, %v4161
      %v4186 = vpack.c.b16 %v4164, %v4163
      %v4187 = vpack.c.b16 %v4166, %v4165
      %v4188 = vpack.c.b16 %v4168, %v4167
      %v4189 = vpack.c.b16 %v4170, %v4169
      %v4190 = vpack.c.b16 %v4172, %v4171
      %v4191 = vpack.c.b16 %v4174, %v4173
      %v4192 = vpack.c.b16 %v4176, %v4175
      %4193 = vrot.lane.b32.xlu0 %v4177, 64
      %v4194 = vpop.permute.xlu0 %4193
      %4195 = vrot.lane.b32.xlu0 %v4178, 64
      %v4196 = vpop.permute.xlu0 %4195
      %4197 = vrot.lane.b32.xlu0 %v4179, 64
      %v4198 = vpop.permute.xlu0 %4197
      %4199 = vrot.lane.b32.xlu0 %v4180, 64
      %v4200 = vpop.permute.xlu0 %4199
      %4201 = vrot.lane.b32.xlu0 %v4181, 64
      %v4202 = vpop.permute.xlu0 %4201
      %4203 = vrot.lane.b32.xlu0 %v4182, 64
      %v4204 = vpop.permute.xlu0 %4203
      %4205 = vrot.lane.b32.xlu0 %v4183, 64
      %v4206 = vpop.permute.xlu0 %4205
      %4207 = vrot.lane.b32.xlu0 %v4184, 64
      %v4208 = vpop.permute.xlu0 %4207
      %4209 = vrot.lane.b32.xlu0 %v4185, 64
      %v4210 = vpop.permute.xlu0 %4209
      %4211 = vrot.lane.b32.xlu0 %v4186, 64
      %v4212 = vpop.permute.xlu0 %4211
      %4213 = vrot.lane.b32.xlu0 %v4187, 64
      %v4214 = vpop.permute.xlu0 %4213
      %4215 = vrot.lane.b32.xlu0 %v4188, 64
      %v4216 = vpop.permute.xlu0 %4215
      %4217 = vrot.lane.b32.xlu0 %v4189, 64
      %v4218 = vpop.permute.xlu0 %4217
      %4219 = vrot.lane.b32.xlu0 %v4190, 64
      %v4220 = vpop.permute.xlu0 %4219
      %4221 = vrot.lane.b32.xlu0 %v4191, 64
      %v4222 = vpop.permute.xlu0 %4221
      %4223 = vrot.lane.b32.xlu0 %v4192, 64
      %v4224 = vpop.permute.xlu0 %4223
      %vm4241 = vcmask 589312
      %4242 = vst.msk [vmem:[#allocation3] sm:$0xff] %vm4241, %v4194
      %4243 = vst.msk [vmem:[#allocation3 + $0x8] sm:$0xff] %vm4241, %v4196
      %4244 = vst.msk [vmem:[#allocation3 + $0x10] sm:$0xff] %vm4241, %v4198
      %4245 = vst.msk [vmem:[#allocation3 + $0x18] sm:$0xff] %vm4241, %v4200
      %4246 = vst.msk [vmem:[#allocation3 + $0x20] sm:$0xff] %vm4241, %v4202
      %4247 = vst.msk [vmem:[#allocation3 + $0x28] sm:$0xff] %vm4241, %v4204
      %4248 = vst.msk [vmem:[#allocation3 + $0x30] sm:$0xff] %vm4241, %v4206
      %4249 = vst.msk [vmem:[#allocation3 + $0x38] sm:$0xff] %vm4241, %v4208
      %4250 = vst.msk [vmem:[#allocation3 + $0x40] sm:$0xff] %vm4241, %v4210
      %4251 = vst.msk [vmem:[#allocation3 + $0x48] sm:$0xff] %vm4241, %v4212
      %4252 = vst.msk [vmem:[#allocation3 + $0x50] sm:$0xff] %vm4241, %v4214
      %4253 = vst.msk [vmem:[#allocation3 + $0x58] sm:$0xff] %vm4241, %v4216
      %4254 = vst.msk [vmem:[#allocation3 + $0x60] sm:$0xff] %vm4241, %v4218
      %4255 = vst.msk [vmem:[#allocation3 + $0x68] sm:$0xff] %vm4241, %v4220
      %4256 = vst.msk [vmem:[#allocation3 + $0x70] sm:$0xff] %vm4241, %v4222
      %4257 = vst.msk [vmem:[#allocation3 + $0x78] sm:$0xff] %vm4241, %v4224
      %v4258 = vld [vmem:[#allocation3] sm:$0xff]
      %v4259 = vld [vmem:[#allocation3 + $0x8] sm:$0xff]
      %v4260 = vld [vmem:[#allocation3 + $0x10] sm:$0xff]
      %v4261 = vld [vmem:[#allocation3 + $0x18] sm:$0xff]
      %v4262 = vld [vmem:[#allocation3 + $0x20] sm:$0xff]
      %v4263 = vld [vmem:[#allocation3 + $0x28] sm:$0xff]
      %v4264 = vld [vmem:[#allocation3 + $0x30] sm:$0xff]
      %v4265 = vld [vmem:[#allocation3 + $0x38] sm:$0xff]
      %v4266 = vld [vmem:[#allocation3 + $0x40] sm:$0xff]
      %v4267 = vld [vmem:[#allocation3 + $0x48] sm:$0xff]
      %v4268 = vld [vmem:[#allocation3 + $0x50] sm:$0xff]
      %v4269 = vld [vmem:[#allocation3 + $0x58] sm:$0xff]
      %v4270 = vld [vmem:[#allocation3 + $0x60] sm:$0xff]
      %v4271 = vld [vmem:[#allocation3 + $0x68] sm:$0xff]
      %v4272 = vld [vmem:[#allocation3 + $0x70] sm:$0xff]
      %v4273 = vld [vmem:[#allocation3 + $0x78] sm:$0xff]
      %v4274 = vld [vmem:[%s1] sm:$0xf]
      %v4275 = vld [vmem:[%s1 + $0x4] sm:$0xf]
      %v4276 = vld [vmem:[%s1 + $0x8] sm:$0xf]
      %v4277 = vld [vmem:[%s1 + $0xc] sm:$0xf]
      %v4278 = vld [vmem:[%s1 + $0x10] sm:$0xf]
      %v4279 = vld [vmem:[%s1 + $0x14] sm:$0xf]
      %v4280 = vld [vmem:[%s1 + $0x18] sm:$0xf]
      %v4281 = vld [vmem:[%s1 + $0x1c] sm:$0xf]
      %v4282 = vld [vmem:[%s1 + $0x20] sm:$0xf]
      %v4292 = vunpack.c.l.b16 %v4274
      %v4293 = vunpack.c.l.b16 %v4275
      %v4294 = vunpack.c.l.b16 %v4276
      %v4295 = vunpack.c.l.b16 %v4277
      %v4296 = vunpack.c.l.b16 %v4278
      %v4297 = vunpack.c.l.b16 %v4279
      %v4298 = vunpack.c.l.b16 %v4280
      %v4299 = vunpack.c.l.b16 %v4281
      %v4300 = vunpack.c.l.b16 %v4282
      %v4301 = vpack.c.b16 %v4293, %v4292
      %v4302 = vpack.c.b16 %v4295, %v4294
      %v4303 = vpack.c.b16 %v4297, %v4296
      %v4304 = vpack.c.b16 %v4299, %v4298
      %v4305 = vpack.c.b16 %v4300, %v4300
      %vm4310 = vcmask 588800
      %v4312 = vsel %vm4310, %v4258, 0
      %v4315 = vsel %vm4310, %v4259, 0
      %v4318 = vsel %vm4310, %v4260, 0
      %v4321 = vsel %vm4310, %v4261, 0
      %v4324 = vsel %vm4310, %v4262, 0
      %v4327 = vsel %vm4310, %v4263, 0
      %v4330 = vsel %vm4310, %v4264, 0
      %v4333 = vsel %vm4310, %v4265, 0
      %v4336 = vsel %vm4310, %v4266, 0
      %v4339 = vsel %vm4310, %v4267, 0
      %v4342 = vsel %vm4310, %v4268, 0
      %v4345 = vsel %vm4310, %v4269, 0
      %v4348 = vsel %vm4310, %v4270, 0
      %v4351 = vsel %vm4310, %v4271, 0
      %v4354 = vsel %vm4310, %v4272, 0
      %v4357 = vsel %vm4310, %v4273, 0
      %vm4359 = vcmask 1043456
      %v4361 = vsel %vm4359, %v4305, 0
      %4363 = vmatprep.subr.bf16.mxu0 0
      %4364 = vmatpush1.bf16.msra.mxu0 %v4301
      %4365 = vmatprep.subr.bf16.mxu0 0
      %4366 = vmatpush1.bf16.msra.mxu0 %v4302
      %4367 = vmatprep.subr.bf16.mxu0 0
      %4368 = vmatpush1.bf16.msra.mxu0 %v4303
      %4369 = vmatprep.subr.bf16.mxu0 0
      %4370 = vmatpush1.bf16.msra.mxu0 %v4304
      %4371 = vmatprep.subr.bf16.mxu0 0
      %4372 = vmatpush1.bf16.msra.mxu0 %v4361
      %4373 = vmatprep.subr.bf16.mxu0 0
      %4374 = vmatpush1.bf16.msra.mxu0 0
      %4375 = vmatprep.subr.bf16.mxu0 0
      %4376 = vmatpush1.bf16.msra.mxu0 0
      %4377 = vmatprep.subr.bf16.mxu0 0
      %4378 = vmatpush1.bf16.msra.mxu0 0
      %4379 = vmatprep.subr.bf16.mxu0 0
      %4380 = vmatpush1.bf16.msra.mxu0 0
      %4381 = vmatprep.subr.bf16.mxu0 0
      %4382 = vmatpush1.bf16.msra.mxu0 0
      %4383 = vmatprep.subr.bf16.mxu0 0
      %4384 = vmatpush1.bf16.msra.mxu0 0
      %4385 = vmatprep.subr.bf16.mxu0 0
      %4386 = vmatpush1.bf16.msra.mxu0 0
      %4387 = vmatprep.subr.bf16.mxu0 0
      %4388 = vmatpush1.bf16.msra.mxu0 0
      %4389 = vmatprep.subr.bf16.mxu0 0
      %4390 = vmatpush1.bf16.msra.mxu0 0
      %4391 = vmatprep.subr.bf16.mxu0 0
      %4392 = vmatpush1.bf16.msra.mxu0 0
      %4393 = vmatprep.subr.bf16.mxu0 0
      %4394 = vmatpush1.bf16.msra.mxu0 0
      %4395 = vmatprep.mubr.bf16.mxu0 0
      %4396 = vmatmul.mubr.bf16.gmra.mrb[0].mxu0 %v4312
      %v4397 = vpop.f32.mrb[0].mxu0
      %v4398 = vadd.f32 0.0, %v4397
      %v4399 = vpop.f32.mrb[0].mxu0
      %v4400 = vpop.f32.mrb[0].mxu0
      %v4401 = vadd.f32 0.0, %v4400
      %v4402 = vpop.f32.mrb[0].mxu0
      %4403 = vmatprep.mubr.bf16.mxu0 0
      %4404 = vmatmul.mubr.bf16.gmra.mrb[0].mxu0 %v4315
      %v4405 = vpop.f32.mrb[0].mxu0
      %v4406 = vadd.f32 0.0, %v4405
      %v4407 = vpop.f32.mrb[0].mxu0
      %v4408 = vpop.f32.mrb[0].mxu0
      %v4409 = vadd.f32 0.0, %v4408
      %v4410 = vpop.f32.mrb[0].mxu0
      %4411 = vmatprep.mubr.bf16.mxu0 0
      %4412 = vmatmul.mubr.bf16.gmra.mrb[0].mxu0 %v4318
      %v4413 = vpop.f32.mrb[0].mxu0
      %v4414 = vadd.f32 0.0, %v4413
      %v4415 = vpop.f32.mrb[0].mxu0
      %v4416 = vpop.f32.mrb[0].mxu0
      %v4417 = vadd.f32 0.0, %v4416
      %v4418 = vpop.f32.mrb[0].mxu0
      %4419 = vmatprep.mubr.bf16.mxu0 0
      %4420 = vmatmul.mubr.bf16.gmra.mrb[0].mxu0 %v4321
      %v4421 = vpop.f32.mrb[0].mxu0
      %v4422 = vadd.f32 0.0, %v4421
      %v4423 = vpop.f32.mrb[0].mxu0
      %v4424 = vpop.f32.mrb[0].mxu0
      %v4425 = vadd.f32 0.0, %v4424
      %v4426 = vpop.f32.mrb[0].mxu0
      %4427 = vmatprep.mubr.bf16.mxu0 0
      %4428 = vmatmul.mubr.bf16.gmra.mrb[0].mxu0 %v4324
      %v4429 = vpop.f32.mrb[0].mxu0
      %v4430 = vadd.f32 0.0, %v4429
      %v4431 = vpop.f32.mrb[0].mxu0
      %v4432 = vpop.f32.mrb[0].mxu0
      %v4433 = vadd.f32 0.0, %v4432
      %v4434 = vpop.f32.mrb[0].mxu0
      %4435 = vmatprep.mubr.bf16.mxu0 0
      %4436 = vmatmul.mubr.bf16.gmra.mrb[0].mxu0 %v4327
      %v4437 = vpop.f32.mrb[0].mxu0
      %v4438 = vadd.f32 0.0, %v4437
      %v4439 = vpop.f32.mrb[0].mxu0
      %v4440 = vpop.f32.mrb[0].mxu0
      %v4441 = vadd.f32 0.0, %v4440
      %v4442 = vpop.f32.mrb[0].mxu0
      %4443 = vmatprep.mubr.bf16.mxu0 0
      %4444 = vmatmul.mubr.bf16.gmra.mrb[0].mxu0 %v4330
      %v4445 = vpop.f32.mrb[0].mxu0
      %v4446 = vadd.f32 0.0, %v4445
      %v4447 = vpop.f32.mrb[0].mxu0
      %v4448 = vpop.f32.mrb[0].mxu0
      %v4449 = vadd.f32 0.0, %v4448
      %v4450 = vpop.f32.mrb[0].mxu0
      %4451 = vmatprep.mubr.bf16.mxu0 0
      %4452 = vmatmul.mubr.bf16.gmra.mrb[0].mxu0 %v4333
      %v4453 = vpop.f32.mrb[0].mxu0
      %v4454 = vadd.f32 0.0, %v4453
      %v4455 = vpop.f32.mrb[0].mxu0
      %v4456 = vpop.f32.mrb[0].mxu0
      %v4457 = vadd.f32 0.0, %v4456
      %v4458 = vpop.f32.mrb[0].mxu0
      %4459 = vmatprep.mubr.bf16.mxu0 0
      %4460 = vmatmul.mubr.bf16.gmra.mrb[0].mxu0 %v4336
      %v4461 = vpop.f32.mrb[0].mxu0
      %v4462 = vadd.f32 0.0, %v4461
      %v4463 = vpop.f32.mrb[0].mxu0
      %v4464 = vpop.f32.mrb[0].mxu0
      %v4465 = vadd.f32 0.0, %v4464
      %v4466 = vpop.f32.mrb[0].mxu0
      %4467 = vmatprep.mubr.bf16.mxu0 0
      %4468 = vmatmul.mubr.bf16.gmra.mrb[0].mxu0 %v4339
      %v4469 = vpop.f32.mrb[0].mxu0
      %v4470 = vadd.f32 0.0, %v4469
      %v4471 = vpop.f32.mrb[0].mxu0
      %v4472 = vpop.f32.mrb[0].mxu0
      %v4473 = vadd.f32 0.0, %v4472
      %v4474 = vpop.f32.mrb[0].mxu0
      %4475 = vmatprep.mubr.bf16.mxu0 0
      %4476 = vmatmul.mubr.bf16.gmra.mrb[0].mxu0 %v4342
      %v4477 = vpop.f32.mrb[0].mxu0
      %v4478 = vadd.f32 0.0, %v4477
      %v4479 = vpop.f32.mrb[0].mxu0
      %v4480 = vpop.f32.mrb[0].mxu0
      %v4481 = vadd.f32 0.0, %v4480
      %v4482 = vpop.f32.mrb[0].mxu0
      %4483 = vmatprep.mubr.bf16.mxu0 0
      %4484 = vmatmul.mubr.bf16.gmra.mrb[0].mxu0 %v4345
      %v4485 = vpop.f32.mrb[0].mxu0
      %v4486 = vadd.f32 0.0, %v4485
      %v4487 = vpop.f32.mrb[0].mxu0
      %v4488 = vpop.f32.mrb[0].mxu0
      %v4489 = vadd.f32 0.0, %v4488
      %v4490 = vpop.f32.mrb[0].mxu0
      %4491 = vmatprep.mubr.bf16.mxu0 0
      %4492 = vmatmul.mubr.bf16.gmra.mrb[0].mxu0 %v4348
      %v4493 = vpop.f32.mrb[0].mxu0
      %v4494 = vadd.f32 0.0, %v4493
      %v4495 = vpop.f32.mrb[0].mxu0
      %v4496 = vpop.f32.mrb[0].mxu0
      %v4497 = vadd.f32 0.0, %v4496
      %v4498 = vpop.f32.mrb[0].mxu0
      %4499 = vmatprep.mubr.bf16.mxu0 0
      %4500 = vmatmul.mubr.bf16.gmra.mrb[0].mxu0 %v4351
      %v4501 = vpop.f32.mrb[0].mxu0
      %v4502 = vadd.f32 0.0, %v4501
      %v4503 = vpop.f32.mrb[0].mxu0
      %v4504 = vpop.f32.mrb[0].mxu0
      %v4505 = vadd.f32 0.0, %v4504
      %v4506 = vpop.f32.mrb[0].mxu0
      %4507 = vmatprep.mubr.bf16.mxu0 0
      %4508 = vmatmul.mubr.bf16.gmra.mrb[0].mxu0 %v4354
      %v4509 = vpop.f32.mrb[0].mxu0
      %v4510 = vadd.f32 0.0, %v4509
      %v4511 = vpop.f32.mrb[0].mxu0
      %v4512 = vpop.f32.mrb[0].mxu0
      %v4513 = vadd.f32 0.0, %v4512
      %v4514 = vpop.f32.mrb[0].mxu0
      %4515 = vmatprep.mubr.bf16.mxu0 0
      %4516 = vmatmul.mubr.bf16.gmra.mrb[0].mxu0 %v4357
      %v4517 = vpop.f32.mrb[0].mxu0
      %v4518 = vadd.f32 0.0, %v4517
      %v4519 = vpop.f32.mrb[0].mxu0
      %v4520 = vpop.f32.mrb[0].mxu0
      %v4521 = vadd.f32 0.0, %v4520
      %v4522 = vpop.f32.mrb[0].mxu0
      %4523 = vdwg.mxu0
      %v4524 = vld [vmem:[%s2] sm:$0x1]
      %v4525 = vld [vmem:[%s3] sm:$0x1]
      %v4526 = vsel %vm1282, %v4398, 0.0
      %v4527 = vsel %vm1282, %v4401, 0.0
      %v4528 = vadd.f32 %v4526, %v4527
      %v4529 = vsel %vm1282, %v4406, 0.0
      %v4530 = vadd.f32 %v4528, %v4529
      %v4531 = vsel %vm1282, %v4409, 0.0
      %v4532 = vadd.f32 %v4530, %v4531
      %v4533 = vsel %vm1282, %v4414, 0.0
      %v4534 = vadd.f32 %v4532, %v4533
      %v4535 = vsel %vm1282, %v4417, 0.0
      %v4536 = vadd.f32 %v4534, %v4535
      %v4537 = vsel %vm1282, %v4422, 0.0
      %v4538 = vadd.f32 %v4536, %v4537
      %v4539 = vsel %vm1282, %v4425, 0.0
      %v4540 = vadd.f32 %v4538, %v4539
      %v4541 = vsel %vm1282, %v4430, 0.0
      %v4542 = vadd.f32 %v4540, %v4541
      %v4543 = vsel %vm1282, %v4433, 0.0
      %v4544 = vadd.f32 %v4542, %v4543
      %v4545 = vsel %vm1282, %v4438, 0.0
      %v4546 = vadd.f32 %v4544, %v4545
      %v4547 = vsel %vm1282, %v4441, 0.0
      %v4548 = vadd.f32 %v4546, %v4547
      %v4549 = vsel %vm1282, %v4446, 0.0
      %v4550 = vadd.f32 %v4548, %v4549
      %v4551 = vsel %vm1282, %v4449, 0.0
      %v4552 = vadd.f32 %v4550, %v4551
      %v4553 = vsel %vm1282, %v4454, 0.0
      %v4554 = vadd.f32 %v4552, %v4553
      %v4555 = vsel %vm1282, %v4457, 0.0
      %v4556 = vadd.f32 %v4554, %v4555
      %v4557 = vsel %vm1282, %v4462, 0.0
      %v4558 = vadd.f32 %v4556, %v4557
      %v4559 = vsel %vm1282, %v4465, 0.0
      %v4560 = vadd.f32 %v4558, %v4559
      %v4561 = vsel %vm1282, %v4470, 0.0
      %v4562 = vadd.f32 %v4560, %v4561
      %v4563 = vsel %vm1282, %v4473, 0.0
      %v4564 = vadd.f32 %v4562, %v4563
      %v4565 = vsel %vm1282, %v4478, 0.0
      %v4566 = vadd.f32 %v4564, %v4565
      %v4567 = vsel %vm1282, %v4481, 0.0
      %v4568 = vadd.f32 %v4566, %v4567
      %v4569 = vsel %vm1282, %v4486, 0.0
      %v4570 = vadd.f32 %v4568, %v4569
      %v4571 = vsel %vm1282, %v4489, 0.0
      %v4572 = vadd.f32 %v4570, %v4571
      %v4573 = vsel %vm1282, %v4494, 0.0
      %v4574 = vadd.f32 %v4572, %v4573
      %v4575 = vsel %vm1282, %v4497, 0.0
      %v4576 = vadd.f32 %v4574, %v4575
      %v4577 = vsel %vm1282, %v4502, 0.0
      %v4578 = vadd.f32 %v4576, %v4577
      %v4579 = vsel %vm1282, %v4505, 0.0
      %v4580 = vadd.f32 %v4578, %v4579
      %v4581 = vsel %vm1282, %v4510, 0.0
      %v4582 = vadd.f32 %v4580, %v4581
      %v4583 = vsel %vm1282, %v4513, 0.0
      %v4584 = vadd.f32 %v4582, %v4583
      %v4585 = vsel %vm1282, %v4518, 0.0
      %v4586 = vadd.f32 %v4584, %v4585
      %v4587 = vsel %vm1282, %v4521, 0.0
      %v4588 = vadd.f32 %v4586, %v4587
      %v4589 = vrot.slane %v4588, 4
      %v4590 = vadd.f32 %v4588, %v4589
      %v4591 = vrot.slane %v4590, 2
      %v4592 = vadd.f32 %v4590, %v4591
      %v4593 = vrot.slane %v4592, 1
      %v4594 = vadd.f32 %v4592, %v4593
      %v4595 = vrcp.pop 256.0
      %v4596 = vmul.f32 %v4594, %v4595
      %v4597 = vsub.f32 %v4398, %v4596
      %v4598 = vsub.f32 %v4401, %v4596
      %v4599 = vsub.f32 %v4406, %v4596
      %v4600 = vsub.f32 %v4409, %v4596
      %v4601 = vsub.f32 %v4414, %v4596
      %v4602 = vsub.f32 %v4417, %v4596
      %v4603 = vsub.f32 %v4422, %v4596
      %v4604 = vsub.f32 %v4425, %v4596
      %v4605 = vsub.f32 %v4430, %v4596
      %v4606 = vsub.f32 %v4433, %v4596
      %v4607 = vsub.f32 %v4438, %v4596
      %v4608 = vsub.f32 %v4441, %v4596
      %v4609 = vsub.f32 %v4446, %v4596
      %v4610 = vsub.f32 %v4449, %v4596
      %v4611 = vsub.f32 %v4454, %v4596
      %v4612 = vsub.f32 %v4457, %v4596
      %v4613 = vsub.f32 %v4462, %v4596
      %v4614 = vsub.f32 %v4465, %v4596
      %v4615 = vsub.f32 %v4470, %v4596
      %v4616 = vsub.f32 %v4473, %v4596
      %v4617 = vsub.f32 %v4478, %v4596
      %v4618 = vsub.f32 %v4481, %v4596
      %v4619 = vsub.f32 %v4486, %v4596
      %v4620 = vsub.f32 %v4489, %v4596
      %v4621 = vsub.f32 %v4494, %v4596
      %v4622 = vsub.f32 %v4497, %v4596
      %v4623 = vsub.f32 %v4502, %v4596
      %v4624 = vsub.f32 %v4505, %v4596
      %v4625 = vsub.f32 %v4510, %v4596
      %v4626 = vsub.f32 %v4513, %v4596
      %v4627 = vsub.f32 %v4518, %v4596
      %v4628 = vsub.f32 %v4521, %v4596
      %v4629 = vmul.f32 %v4597, %v4597
      %v4630 = vmul.f32 %v4598, %v4598
      %v4631 = vmul.f32 %v4599, %v4599
      %v4632 = vmul.f32 %v4600, %v4600
      %v4633 = vmul.f32 %v4601, %v4601
      %v4634 = vmul.f32 %v4602, %v4602
      %v4635 = vmul.f32 %v4603, %v4603
      %v4636 = vmul.f32 %v4604, %v4604
      %v4637 = vmul.f32 %v4605, %v4605
      %v4638 = vmul.f32 %v4606, %v4606
      %v4639 = vmul.f32 %v4607, %v4607
      %v4640 = vmul.f32 %v4608, %v4608
      %v4641 = vmul.f32 %v4609, %v4609
      %v4642 = vmul.f32 %v4610, %v4610
      %v4643 = vmul.f32 %v4611, %v4611
      %v4644 = vmul.f32 %v4612, %v4612
      %v4645 = vmul.f32 %v4613, %v4613
      %v4646 = vmul.f32 %v4614, %v4614
      %v4647 = vmul.f32 %v4615, %v4615
      %v4648 = vmul.f32 %v4616, %v4616
      %v4649 = vmul.f32 %v4617, %v4617
      %v4650 = vmul.f32 %v4618, %v4618
      %v4651 = vmul.f32 %v4619, %v4619
      %v4652 = vmul.f32 %v4620, %v4620
      %v4653 = vmul.f32 %v4621, %v4621
      %v4654 = vmul.f32 %v4622, %v4622
      %v4655 = vmul.f32 %v4623, %v4623
      %v4656 = vmul.f32 %v4624, %v4624
      %v4657 = vmul.f32 %v4625, %v4625
      %v4658 = vmul.f32 %v4626, %v4626
      %v4659 = vmul.f32 %v4627, %v4627
      %v4660 = vmul.f32 %v4628, %v4628
      %v4661 = vsel %vm1282, %v4629, 0.0
      %v4662 = vsel %vm1282, %v4630, 0.0
      %v4663 = vadd.f32 %v4661, %v4662
      %v4664 = vsel %vm1282, %v4631, 0.0
      %v4665 = vadd.f32 %v4663, %v4664
      %v4666 = vsel %vm1282, %v4632, 0.0
      %v4667 = vadd.f32 %v4665, %v4666
      %v4668 = vsel %vm1282, %v4633, 0.0
      %v4669 = vadd.f32 %v4667, %v4668
      %v4670 = vsel %vm1282, %v4634, 0.0
      %v4671 = vadd.f32 %v4669, %v4670
      %v4672 = vsel %vm1282, %v4635, 0.0
      %v4673 = vadd.f32 %v4671, %v4672
      %v4674 = vsel %vm1282, %v4636, 0.0
      %v4675 = vadd.f32 %v4673, %v4674
      %v4676 = vsel %vm1282, %v4637, 0.0
      %v4677 = vadd.f32 %v4675, %v4676
      %v4678 = vsel %vm1282, %v4638, 0.0
      %v4679 = vadd.f32 %v4677, %v4678
      %v4680 = vsel %vm1282, %v4639, 0.0
      %v4681 = vadd.f32 %v4679, %v4680
      %v4682 = vsel %vm1282, %v4640, 0.0
      %v4683 = vadd.f32 %v4681, %v4682
      %v4684 = vsel %vm1282, %v4641, 0.0
      %v4685 = vadd.f32 %v4683, %v4684
      %v4686 = vsel %vm1282, %v4642, 0.0
      %v4687 = vadd.f32 %v4685, %v4686
      %v4688 = vsel %vm1282, %v4643, 0.0
      %v4689 = vadd.f32 %v4687, %v4688
      %v4690 = vsel %vm1282, %v4644, 0.0
      %v4691 = vadd.f32 %v4689, %v4690
      %v4692 = vsel %vm1282, %v4645, 0.0
      %v4693 = vadd.f32 %v4691, %v4692
      %v4694 = vsel %vm1282, %v4646, 0.0
      %v4695 = vadd.f32 %v4693, %v4694
      %v4696 = vsel %vm1282, %v4647, 0.0
      %v4697 = vadd.f32 %v4695, %v4696
      %v4698 = vsel %vm1282, %v4648, 0.0
      %v4699 = vadd.f32 %v4697, %v4698
      %v4700 = vsel %vm1282, %v4649, 0.0
      %v4701 = vadd.f32 %v4699, %v4700
      %v4702 = vsel %vm1282, %v4650, 0.0
      %v4703 = vadd.f32 %v4701, %v4702
      %v4704 = vsel %vm1282, %v4651, 0.0
      %v4705 = vadd.f32 %v4703, %v4704
      %v4706 = vsel %vm1282, %v4652, 0.0
      %v4707 = vadd.f32 %v4705, %v4706
      %v4708 = vsel %vm1282, %v4653, 0.0
      %v4709 = vadd.f32 %v4707, %v4708
      %v4710 = vsel %vm1282, %v4654, 0.0
      %v4711 = vadd.f32 %v4709, %v4710
      %v4712 = vsel %vm1282, %v4655, 0.0
      %v4713 = vadd.f32 %v4711, %v4712
      %v4714 = vsel %vm1282, %v4656, 0.0
      %v4715 = vadd.f32 %v4713, %v4714
      %v4716 = vsel %vm1282, %v4657, 0.0
      %v4717 = vadd.f32 %v4715, %v4716
      %v4718 = vsel %vm1282, %v4658, 0.0
      %v4719 = vadd.f32 %v4717, %v4718
      %v4720 = vsel %vm1282, %v4659, 0.0
      %v4721 = vadd.f32 %v4719, %v4720
      %v4722 = vsel %vm1282, %v4660, 0.0
      %v4723 = vadd.f32 %v4721, %v4722
      %v4724 = vrot.slane %v4723, 4
      %v4725 = vadd.f32 %v4723, %v4724
      %v4726 = vrot.slane %v4725, 2
      %v4727 = vadd.f32 %v4725, %v4726
      %v4728 = vrot.slane %v4727, 1
      %v4729 = vadd.f32 %v4727, %v4728
      %v4730 = vmul.f32 %v4729, %v4595
      %v4731 = vadd.f32 %v4730, 1e-05
      %v4732 = vrsqrt.pop %v4731
      %v4733 = vmul.f32 %v4597, %v4732
      %v4734 = vmul.f32 %v4598, %v4732
      %v4735 = vmul.f32 %v4599, %v4732
      %v4736 = vmul.f32 %v4600, %v4732
      %v4737 = vmul.f32 %v4601, %v4732
      %v4738 = vmul.f32 %v4602, %v4732
      %v4739 = vmul.f32 %v4603, %v4732
      %v4740 = vmul.f32 %v4604, %v4732
      %v4741 = vmul.f32 %v4605, %v4732
      %v4742 = vmul.f32 %v4606, %v4732
      %v4743 = vmul.f32 %v4607, %v4732
      %v4744 = vmul.f32 %v4608, %v4732
      %v4745 = vmul.f32 %v4609, %v4732
      %v4746 = vmul.f32 %v4610, %v4732
      %v4747 = vmul.f32 %v4611, %v4732
      %v4748 = vmul.f32 %v4612, %v4732
      %v4749 = vmul.f32 %v4613, %v4732
      %v4750 = vmul.f32 %v4614, %v4732
      %v4751 = vmul.f32 %v4615, %v4732
      %v4752 = vmul.f32 %v4616, %v4732
      %v4753 = vmul.f32 %v4617, %v4732
      %v4754 = vmul.f32 %v4618, %v4732
      %v4755 = vmul.f32 %v4619, %v4732
      %v4756 = vmul.f32 %v4620, %v4732
      %v4757 = vmul.f32 %v4621, %v4732
      %v4758 = vmul.f32 %v4622, %v4732
      %v4759 = vmul.f32 %v4623, %v4732
      %v4760 = vmul.f32 %v4624, %v4732
      %v4761 = vmul.f32 %v4625, %v4732
      %v4762 = vmul.f32 %v4626, %v4732
      %v4763 = vmul.f32 %v4627, %v4732
      %v4764 = vmul.f32 %v4628, %v4732
      %v4766 = vlaneseq
      %v4767 = vshrl.u32 %v4766, 7
      %v4768 = vsub.s32 0, %v4767
      %v4769 = vrot.slane %v4524, %v4768
      %v4771 = vmul.f32 %v4733, %v4769
      %v4772 = vmul.f32 %v4734, %v4769
      %v4773 = vmul.f32 %v4735, %v4769
      %v4774 = vmul.f32 %v4736, %v4769
      %v4775 = vmul.f32 %v4737, %v4769
      %v4776 = vmul.f32 %v4738, %v4769
      %v4777 = vmul.f32 %v4739, %v4769
      %v4778 = vmul.f32 %v4740, %v4769
      %v4779 = vmul.f32 %v4741, %v4769
      %v4780 = vmul.f32 %v4742, %v4769
      %v4781 = vmul.f32 %v4743, %v4769
      %v4782 = vmul.f32 %v4744, %v4769
      %v4783 = vmul.f32 %v4745, %v4769
      %v4784 = vmul.f32 %v4746, %v4769
      %v4785 = vmul.f32 %v4747, %v4769
      %v4786 = vmul.f32 %v4748, %v4769
      %v4787 = vmul.f32 %v4749, %v4769
      %v4788 = vmul.f32 %v4750, %v4769
      %v4789 = vmul.f32 %v4751, %v4769
      %v4790 = vmul.f32 %v4752, %v4769
      %v4791 = vmul.f32 %v4753, %v4769
      %v4792 = vmul.f32 %v4754, %v4769
      %v4793 = vmul.f32 %v4755, %v4769
      %v4794 = vmul.f32 %v4756, %v4769
      %v4795 = vmul.f32 %v4757, %v4769
      %v4796 = vmul.f32 %v4758, %v4769
      %v4797 = vmul.f32 %v4759, %v4769
      %v4798 = vmul.f32 %v4760, %v4769
      %v4799 = vmul.f32 %v4761, %v4769
      %v4800 = vmul.f32 %v4762, %v4769
      %v4801 = vmul.f32 %v4763, %v4769
      %v4802 = vmul.f32 %v4764, %v4769
      %v4804 = vlaneseq
      %v4805 = vshrl.u32 %v4804, 7
      %v4806 = vsub.s32 0, %v4805
      %v4807 = vrot.slane %v4525, %v4806
      %v4809 = vadd.f32 %v4771, %v4807
      %v4810 = vadd.f32 %v4772, %v4807
      %v4811 = vadd.f32 %v4773, %v4807
      %v4812 = vadd.f32 %v4774, %v4807
      %v4813 = vadd.f32 %v4775, %v4807
      %v4814 = vadd.f32 %v4776, %v4807
      %v4815 = vadd.f32 %v4777, %v4807
      %v4816 = vadd.f32 %v4778, %v4807
      %v4817 = vadd.f32 %v4779, %v4807
      %v4818 = vadd.f32 %v4780, %v4807
      %v4819 = vadd.f32 %v4781, %v4807
      %v4820 = vadd.f32 %v4782, %v4807
      %v4821 = vadd.f32 %v4783, %v4807
      %v4822 = vadd.f32 %v4784, %v4807
      %v4823 = vadd.f32 %v4785, %v4807
      %v4824 = vadd.f32 %v4786, %v4807
      %v4825 = vadd.f32 %v4787, %v4807
      %v4826 = vadd.f32 %v4788, %v4807
      %v4827 = vadd.f32 %v4789, %v4807
      %v4828 = vadd.f32 %v4790, %v4807
      %v4829 = vadd.f32 %v4791, %v4807
      %v4830 = vadd.f32 %v4792, %v4807
      %v4831 = vadd.f32 %v4793, %v4807
      %v4832 = vadd.f32 %v4794, %v4807
      %v4833 = vadd.f32 %v4795, %v4807
      %v4834 = vadd.f32 %v4796, %v4807
      %v4835 = vadd.f32 %v4797, %v4807
      %v4836 = vadd.f32 %v4798, %v4807
      %v4837 = vadd.f32 %v4799, %v4807
      %v4838 = vadd.f32 %v4800, %v4807
      %v4839 = vadd.f32 %v4801, %v4807
      %v4840 = vadd.f32 %v4802, %v4807
      %v4841 = vmax.f32 %v4809, 0.0
      %v4842 = vmax.f32 %v4810, 0.0
      %v4843 = vmax.f32 %v4811, 0.0
      %v4844 = vmax.f32 %v4812, 0.0
      %v4845 = vmax.f32 %v4813, 0.0
      %v4846 = vmax.f32 %v4814, 0.0
      %v4847 = vmax.f32 %v4815, 0.0
      %v4848 = vmax.f32 %v4816, 0.0
      %v4849 = vmax.f32 %v4817, 0.0
      %v4850 = vmax.f32 %v4818, 0.0
      %v4851 = vmax.f32 %v4819, 0.0
      %v4852 = vmax.f32 %v4820, 0.0
      %v4853 = vmax.f32 %v4821, 0.0
      %v4854 = vmax.f32 %v4822, 0.0
      %v4855 = vmax.f32 %v4823, 0.0
      %v4856 = vmax.f32 %v4824, 0.0
      %v4857 = vmax.f32 %v4825, 0.0
      %v4858 = vmax.f32 %v4826, 0.0
      %v4859 = vmax.f32 %v4827, 0.0
      %v4860 = vmax.f32 %v4828, 0.0
      %v4861 = vmax.f32 %v4829, 0.0
      %v4862 = vmax.f32 %v4830, 0.0
      %v4863 = vmax.f32 %v4831, 0.0
      %v4864 = vmax.f32 %v4832, 0.0
      %v4865 = vmax.f32 %v4833, 0.0
      %v4866 = vmax.f32 %v4834, 0.0
      %v4867 = vmax.f32 %v4835, 0.0
      %v4868 = vmax.f32 %v4836, 0.0
      %v4869 = vmax.f32 %v4837, 0.0
      %v4870 = vmax.f32 %v4838, 0.0
      %v4871 = vmax.f32 %v4839, 0.0
      %v4872 = vmax.f32 %v4840, 0.0
      %v4873 = vpack.c.bf16 %v4842, %v4841
      %v4874 = vpack.c.bf16 %v4844, %v4843
      %v4875 = vpack.c.bf16 %v4846, %v4845
      %v4876 = vpack.c.bf16 %v4848, %v4847
      %v4877 = vpack.c.bf16 %v4850, %v4849
      %v4878 = vpack.c.bf16 %v4852, %v4851
      %v4879 = vpack.c.bf16 %v4854, %v4853
      %v4880 = vpack.c.bf16 %v4856, %v4855
      %v4881 = vpack.c.bf16 %v4858, %v4857
      %v4882 = vpack.c.bf16 %v4860, %v4859
      %v4883 = vpack.c.bf16 %v4862, %v4861
      %v4884 = vpack.c.bf16 %v4864, %v4863
      %v4885 = vpack.c.bf16 %v4866, %v4865
      %v4886 = vpack.c.bf16 %v4868, %v4867
      %v4887 = vpack.c.bf16 %v4870, %v4869
      %v4888 = vpack.c.bf16 %v4872, %v4871
      %v4905 = vunpack.c.l.b16 %v4873
      %v4906 = vunpack.c.h.b16 %v4873
      %v4907 = vunpack.c.l.b16 %v4874
      %v4908 = vunpack.c.h.b16 %v4874
      %v4909 = vunpack.c.l.b16 %v4875
      %v4910 = vunpack.c.h.b16 %v4875
      %v4911 = vunpack.c.l.b16 %v4876
      %v4912 = vunpack.c.h.b16 %v4876
      %v4913 = vunpack.c.l.b16 %v4877
      %v4914 = vunpack.c.h.b16 %v4877
      %v4915 = vunpack.c.l.b16 %v4878
      %v4916 = vunpack.c.h.b16 %v4878
      %v4917 = vunpack.c.l.b16 %v4879
      %v4918 = vunpack.c.h.b16 %v4879
      %v4919 = vunpack.c.l.b16 %v4880
      %v4920 = vunpack.c.h.b16 %v4880
      %v4921 = vunpack.c.l.b16 %v4881
      %v4922 = vunpack.c.h.b16 %v4881
      %v4923 = vunpack.c.l.b16 %v4882
      %v4924 = vunpack.c.h.b16 %v4882
      %v4925 = vunpack.c.l.b16 %v4883
      %v4926 = vunpack.c.h.b16 %v4883
      %v4927 = vunpack.c.l.b16 %v4884
      %v4928 = vunpack.c.h.b16 %v4884
      %v4929 = vunpack.c.l.b16 %v4885
      %v4930 = vunpack.c.h.b16 %v4885
      %v4931 = vunpack.c.l.b16 %v4886
      %v4932 = vunpack.c.h.b16 %v4886
      %v4933 = vunpack.c.l.b16 %v4887
      %v4934 = vunpack.c.h.b16 %v4887
      %v4935 = vunpack.c.l.b16 %v4888
      %v4936 = vunpack.c.h.b16 %v4888
      %v4937 = vpack.c.b16 %v4905, %v4905
      %v4938 = vpack.c.b16 %v4906, %v4906
      %v4939 = vpack.c.b16 %v4907, %v4907
      %v4940 = vpack.c.b16 %v4908, %v4908
      %v4941 = vpack.c.b16 %v4909, %v4909
      %v4942 = vpack.c.b16 %v4910, %v4910
      %v4943 = vpack.c.b16 %v4911, %v4911
      %v4944 = vpack.c.b16 %v4912, %v4912
      %v4945 = vpack.c.b16 %v4913, %v4913
      %v4946 = vpack.c.b16 %v4914, %v4914
      %v4947 = vpack.c.b16 %v4915, %v4915
      %v4948 = vpack.c.b16 %v4916, %v4916
      %v4949 = vpack.c.b16 %v4917, %v4917
      %v4950 = vpack.c.b16 %v4918, %v4918
      %v4951 = vpack.c.b16 %v4919, %v4919
      %v4952 = vpack.c.b16 %v4920, %v4920
      %v4953 = vpack.c.b16 %v4921, %v4921
      %v4954 = vpack.c.b16 %v4922, %v4922
      %v4955 = vpack.c.b16 %v4923, %v4923
      %v4956 = vpack.c.b16 %v4924, %v4924
      %v4957 = vpack.c.b16 %v4925, %v4925
      %v4958 = vpack.c.b16 %v4926, %v4926
      %v4959 = vpack.c.b16 %v4927, %v4927
      %v4960 = vpack.c.b16 %v4928, %v4928
      %v4961 = vpack.c.b16 %v4929, %v4929
      %v4962 = vpack.c.b16 %v4930, %v4930
      %v4963 = vpack.c.b16 %v4931, %v4931
      %v4964 = vpack.c.b16 %v4932, %v4932
      %v4965 = vpack.c.b16 %v4933, %v4933
      %v4966 = vpack.c.b16 %v4934, %v4934
      %v4967 = vpack.c.b16 %v4935, %v4935
      %v4968 = vpack.c.b16 %v4936, %v4936
      %v4970 = vshrl.u32 %v4937, 16
      %v4972 = vrot.slane %v4970, 7
      %v4973 = vshll.u32 %v4937, 16
      %v4975 = vor.u32 %v4972, %v4973
      %v4976 = vrot.slane %v4972, 4
      %v4978 = vshrl.u32 %v4938, 16
      %v4980 = vrot.slane %v4978, 7
      %v4981 = vshll.u32 %v4938, 16
      %v4983 = vor.u32 %v4980, %v4981
      %v4984 = vsel %vm410, %v4976, %v4983
      %v4985 = vrot.slane %v4980, 4
      %v4987 = vshrl.u32 %v4939, 16
      %v4989 = vrot.slane %v4987, 7
      %v4990 = vshll.u32 %v4939, 16
      %v4992 = vor.u32 %v4989, %v4990
      %v4993 = vrot.slane %v4989, 4
      %v4995 = vshrl.u32 %v4940, 16
      %v4997 = vrot.slane %v4995, 7
      %v4998 = vshll.u32 %v4940, 16
      %v5000 = vor.u32 %v4997, %v4998
      %v5001 = vsel %vm410, %v4993, %v5000
      %v5002 = vrot.slane %v4997, 4
      %v5004 = vshrl.u32 %v4941, 16
      %v5006 = vrot.slane %v5004, 7
      %v5007 = vshll.u32 %v4941, 16
      %v5009 = vor.u32 %v5006, %v5007
      %v5010 = vrot.slane %v5006, 4
      %v5012 = vshrl.u32 %v4942, 16
      %v5014 = vrot.slane %v5012, 7
      %v5015 = vshll.u32 %v4942, 16
      %v5017 = vor.u32 %v5014, %v5015
      %v5018 = vsel %vm410, %v5010, %v5017
      %v5019 = vrot.slane %v5014, 4
      %v5021 = vshrl.u32 %v4943, 16
      %v5023 = vrot.slane %v5021, 7
      %v5024 = vshll.u32 %v4943, 16
      %v5026 = vor.u32 %v5023, %v5024
      %v5027 = vrot.slane %v5023, 4
      %v5029 = vshrl.u32 %v4944, 16
      %v5031 = vrot.slane %v5029, 7
      %v5032 = vshll.u32 %v4944, 16
      %v5034 = vor.u32 %v5031, %v5032
      %v5035 = vsel %vm410, %v5027, %v5034
      %v5036 = vrot.slane %v5031, 4
      %v5038 = vshrl.u32 %v4945, 16
      %v5040 = vrot.slane %v5038, 7
      %v5041 = vshll.u32 %v4945, 16
      %v5043 = vor.u32 %v5040, %v5041
      %v5044 = vrot.slane %v5040, 4
      %v5046 = vshrl.u32 %v4946, 16
      %v5048 = vrot.slane %v5046, 7
      %v5049 = vshll.u32 %v4946, 16
      %v5051 = vor.u32 %v5048, %v5049
      %v5052 = vsel %vm410, %v5044, %v5051
      %v5053 = vrot.slane %v5048, 4
      %v5055 = vshrl.u32 %v4947, 16
      %v5057 = vrot.slane %v5055, 7
      %v5058 = vshll.u32 %v4947, 16
      %v5060 = vor.u32 %v5057, %v5058
      %v5061 = vrot.slane %v5057, 4
      %v5063 = vshrl.u32 %v4948, 16
      %v5065 = vrot.slane %v5063, 7
      %v5066 = vshll.u32 %v4948, 16
      %v5068 = vor.u32 %v5065, %v5066
      %v5069 = vsel %vm410, %v5061, %v5068
      %v5070 = vrot.slane %v5065, 4
      %v5072 = vshrl.u32 %v4949, 16
      %v5074 = vrot.slane %v5072, 7
      %v5075 = vshll.u32 %v4949, 16
      %v5077 = vor.u32 %v5074, %v5075
      %v5078 = vrot.slane %v5074, 4
      %v5080 = vshrl.u32 %v4950, 16
      %v5082 = vrot.slane %v5080, 7
      %v5083 = vshll.u32 %v4950, 16
      %v5085 = vor.u32 %v5082, %v5083
      %v5086 = vsel %vm410, %v5078, %v5085
      %v5087 = vrot.slane %v5082, 4
      %v5089 = vshrl.u32 %v4951, 16
      %v5091 = vrot.slane %v5089, 7
      %v5092 = vshll.u32 %v4951, 16
      %v5094 = vor.u32 %v5091, %v5092
      %v5095 = vrot.slane %v5091, 4
      %v5097 = vshrl.u32 %v4952, 16
      %v5099 = vrot.slane %v5097, 7
      %v5100 = vshll.u32 %v4952, 16
      %v5102 = vor.u32 %v5099, %v5100
      %v5103 = vsel %vm410, %v5095, %v5102
      %v5104 = vrot.slane %v5099, 4
      %v5106 = vshrl.u32 %v4953, 16
      %v5108 = vrot.slane %v5106, 7
      %v5109 = vshll.u32 %v4953, 16
      %v5111 = vor.u32 %v5108, %v5109
      %v5112 = vrot.slane %v5108, 4
      %v5114 = vshrl.u32 %v4954, 16
      %v5116 = vrot.slane %v5114, 7
      %v5117 = vshll.u32 %v4954, 16
      %v5119 = vor.u32 %v5116, %v5117
      %v5120 = vsel %vm410, %v5112, %v5119
      %v5121 = vrot.slane %v5116, 4
      %v5123 = vshrl.u32 %v4955, 16
      %v5125 = vrot.slane %v5123, 7
      %v5126 = vshll.u32 %v4955, 16
      %v5128 = vor.u32 %v5125, %v5126
      %v5129 = vrot.slane %v5125, 4
      %v5131 = vshrl.u32 %v4956, 16
      %v5133 = vrot.slane %v5131, 7
      %v5134 = vshll.u32 %v4956, 16
      %v5136 = vor.u32 %v5133, %v5134
      %v5137 = vsel %vm410, %v5129, %v5136
      %v5138 = vrot.slane %v5133, 4
      %v5140 = vshrl.u32 %v4957, 16
      %v5142 = vrot.slane %v5140, 7
      %v5143 = vshll.u32 %v4957, 16
      %v5145 = vor.u32 %v5142, %v5143
      %v5146 = vrot.slane %v5142, 4
      %v5148 = vshrl.u32 %v4958, 16
      %v5150 = vrot.slane %v5148, 7
      %v5151 = vshll.u32 %v4958, 16
      %v5153 = vor.u32 %v5150, %v5151
      %v5154 = vsel %vm410, %v5146, %v5153
      %v5155 = vrot.slane %v5150, 4
      %v5157 = vshrl.u32 %v4959, 16
      %v5159 = vrot.slane %v5157, 7
      %v5160 = vshll.u32 %v4959, 16
      %v5162 = vor.u32 %v5159, %v5160
      %v5163 = vrot.slane %v5159, 4
      %v5165 = vshrl.u32 %v4960, 16
      %v5167 = vrot.slane %v5165, 7
      %v5168 = vshll.u32 %v4960, 16
      %v5170 = vor.u32 %v5167, %v5168
      %v5171 = vsel %vm410, %v5163, %v5170
      %v5172 = vrot.slane %v5167, 4
      %v5174 = vshrl.u32 %v4961, 16
      %v5176 = vrot.slane %v5174, 7
      %v5177 = vshll.u32 %v4961, 16
      %v5179 = vor.u32 %v5176, %v5177
      %v5180 = vrot.slane %v5176, 4
      %v5182 = vshrl.u32 %v4962, 16
      %v5184 = vrot.slane %v5182, 7
      %v5185 = vshll.u32 %v4962, 16
      %v5187 = vor.u32 %v5184, %v5185
      %v5188 = vsel %vm410, %v5180, %v5187
      %v5189 = vrot.slane %v5184, 4
      %v5191 = vshrl.u32 %v4963, 16
      %v5193 = vrot.slane %v5191, 7
      %v5194 = vshll.u32 %v4963, 16
      %v5196 = vor.u32 %v5193, %v5194
      %v5197 = vrot.slane %v5193, 4
      %v5199 = vshrl.u32 %v4964, 16
      %v5201 = vrot.slane %v5199, 7
      %v5202 = vshll.u32 %v4964, 16
      %v5204 = vor.u32 %v5201, %v5202
      %v5205 = vsel %vm410, %v5197, %v5204
      %v5206 = vrot.slane %v5201, 4
      %v5208 = vshrl.u32 %v4965, 16
      %v5210 = vrot.slane %v5208, 7
      %v5211 = vshll.u32 %v4965, 16
      %v5213 = vor.u32 %v5210, %v5211
      %v5214 = vrot.slane %v5210, 4
      %v5216 = vshrl.u32 %v4966, 16
      %v5218 = vrot.slane %v5216, 7
      %v5219 = vshll.u32 %v4966, 16
      %v5221 = vor.u32 %v5218, %v5219
      %v5222 = vsel %vm410, %v5214, %v5221
      %v5223 = vrot.slane %v5218, 4
      %v5225 = vshrl.u32 %v4967, 16
      %v5227 = vrot.slane %v5225, 7
      %v5228 = vshll.u32 %v4967, 16
      %v5230 = vor.u32 %v5227, %v5228
      %v5231 = vrot.slane %v5227, 4
      %v5233 = vshrl.u32 %v4968, 16
      %v5235 = vrot.slane %v5233, 7
      %v5236 = vshll.u32 %v4968, 16
      %v5238 = vor.u32 %v5235, %v5236
      %v5239 = vsel %vm410, %v5231, %v5238
      %v5240 = vrot.slane %v5235, 4
      %v5289 = vld [vmem:[%s731] sm:$0xf]
      %v5290 = vsel %vm734, %v4975, %v5289
      %5291 = vst [vmem:[%s731] sm:$0xf] %v5290
      %5292 = vst.msk [vmem:[%s731 + $0x4] sm:$0xf] %vm738, %v4984
      %v5293 = vld [vmem:[%s731 + $0x8] sm:$0x1]
      %v5294 = vsel %vm741, %v4985, %v5293
      %5295 = vst [vmem:[%s731 + $0x8] sm:$0x1] %v5294
      %v5296 = vld [vmem:[%s731 + $0xc] sm:$0xf]
      %v5297 = vsel %vm734, %v4992, %v5296
      %5298 = vst [vmem:[%s731 + $0xc] sm:$0xf] %v5297
      %5299 = vst.msk [vmem:[%s731 + $0x10] sm:$0xf] %vm738, %v5001
      %v5300 = vld [vmem:[%s731 + $0x14] sm:$0x1]
      %v5301 = vsel %vm741, %v5002, %v5300
      %5302 = vst [vmem:[%s731 + $0x14] sm:$0x1] %v5301
      %v5303 = vld [vmem:[%s731 + $0x18] sm:$0xf]
      %v5304 = vsel %vm734, %v5009, %v5303
      %5305 = vst [vmem:[%s731 + $0x18] sm:$0xf] %v5304
      %5306 = vst.msk [vmem:[%s731 + $0x1c] sm:$0xf] %vm738, %v5018
      %v5307 = vld [vmem:[%s731 + $0x20] sm:$0x1]
      %v5308 = vsel %vm741, %v5019, %v5307
      %5309 = vst [vmem:[%s731 + $0x20] sm:$0x1] %v5308
      %v5310 = vld [vmem:[%s731 + $0x24] sm:$0xf]
      %v5311 = vsel %vm734, %v5026, %v5310
      %5312 = vst [vmem:[%s731 + $0x24] sm:$0xf] %v5311
      %5313 = vst.msk [vmem:[%s731 + $0x28] sm:$0xf] %vm738, %v5035
      %v5314 = vld [vmem:[%s731 + $0x2c] sm:$0x1]
      %v5315 = vsel %vm741, %v5036, %v5314
      %5316 = vst [vmem:[%s731 + $0x2c] sm:$0x1] %v5315
      %v5317 = vld [vmem:[%s731 + $0x30] sm:$0xf]
      %v5318 = vsel %vm734, %v5043, %v5317
      %5319 = vst [vmem:[%s731 + $0x30] sm:$0xf] %v5318
      %5320 = vst.msk [vmem:[%s731 + $0x34] sm:$0xf] %vm738, %v5052
      %v5321 = vld [vmem:[%s731 + $0x38] sm:$0x1]
      %v5322 = vsel %vm741, %v5053, %v5321
      %5323 = vst [vmem:[%s731 + $0x38] sm:$0x1] %v5322
      %v5324 = vld [vmem:[%s731 + $0x3c] sm:$0xf]
      %v5325 = vsel %vm734, %v5060, %v5324
      %5326 = vst [vmem:[%s731 + $0x3c] sm:$0xf] %v5325
      %5327 = vst.msk [vmem:[%s731 + $0x40] sm:$0xf] %vm738, %v5069
      %v5328 = vld [vmem:[%s731 + $0x44] sm:$0x1]
      %v5329 = vsel %vm741, %v5070, %v5328
      %5330 = vst [vmem:[%s731 + $0x44] sm:$0x1] %v5329
      %v5331 = vld [vmem:[%s731 + $0x48] sm:$0xf]
      %v5332 = vsel %vm734, %v5077, %v5331
      %5333 = vst [vmem:[%s731 + $0x48] sm:$0xf] %v5332
      %5334 = vst.msk [vmem:[%s731 + $0x4c] sm:$0xf] %vm738, %v5086
      %v5335 = vld [vmem:[%s731 + $0x50] sm:$0x1]
      %v5336 = vsel %vm741, %v5087, %v5335
      %5337 = vst [vmem:[%s731 + $0x50] sm:$0x1] %v5336
      %v5338 = vld [vmem:[%s731 + $0x54] sm:$0xf]
      %v5339 = vsel %vm734, %v5094, %v5338
      %5340 = vst [vmem:[%s731 + $0x54] sm:$0xf] %v5339
      %5341 = vst.msk [vmem:[%s731 + $0x58] sm:$0xf] %vm738, %v5103
      %v5342 = vld [vmem:[%s731 + $0x5c] sm:$0x1]
      %v5343 = vsel %vm741, %v5104, %v5342
      %5344 = vst [vmem:[%s731 + $0x5c] sm:$0x1] %v5343
      %v5345 = vld [vmem:[%s731 + $0x60] sm:$0xf]
      %v5346 = vsel %vm734, %v5111, %v5345
      %5347 = vst [vmem:[%s731 + $0x60] sm:$0xf] %v5346
      %5348 = vst.msk [vmem:[%s731 + $0x64] sm:$0xf] %vm738, %v5120
      %v5349 = vld [vmem:[%s731 + $0x68] sm:$0x1]
      %v5350 = vsel %vm741, %v5121, %v5349
      %5351 = vst [vmem:[%s731 + $0x68] sm:$0x1] %v5350
      %v5352 = vld [vmem:[%s731 + $0x6c] sm:$0xf]
      %v5353 = vsel %vm734, %v5128, %v5352
      %5354 = vst [vmem:[%s731 + $0x6c] sm:$0xf] %v5353
      %5355 = vst.msk [vmem:[%s731 + $0x70] sm:$0xf] %vm738, %v5137
      %v5356 = vld [vmem:[%s731 + $0x74] sm:$0x1]
      %v5357 = vsel %vm741, %v5138, %v5356
      %5358 = vst [vmem:[%s731 + $0x74] sm:$0x1] %v5357
      %v5359 = vld [vmem:[%s731 + $0x78] sm:$0xf]
      %v5360 = vsel %vm734, %v5145, %v5359
      %5361 = vst [vmem:[%s731 + $0x78] sm:$0xf] %v5360
      %5362 = vst.msk [vmem:[%s731 + $0x7c] sm:$0xf] %vm738, %v5154
      %v5363 = vld [vmem:[%s731 + $0x80] sm:$0x1]
      %v5364 = vsel %vm741, %v5155, %v5363
      %5365 = vst [vmem:[%s731 + $0x80] sm:$0x1] %v5364
      %v5366 = vld [vmem:[%s731 + $0x84] sm:$0xf]
      %v5367 = vsel %vm734, %v5162, %v5366
      %5368 = vst [vmem:[%s731 + $0x84] sm:$0xf] %v5367
      %5369 = vst.msk [vmem:[%s731 + $0x88] sm:$0xf] %vm738, %v5171
      %v5370 = vld [vmem:[%s731 + $0x8c] sm:$0x1]
      %v5371 = vsel %vm741, %v5172, %v5370
      %5372 = vst [vmem:[%s731 + $0x8c] sm:$0x1] %v5371
      %v5373 = vld [vmem:[%s731 + $0x90] sm:$0xf]
      %v5374 = vsel %vm734, %v5179, %v5373
      %5375 = vst [vmem:[%s731 + $0x90] sm:$0xf] %v5374
      %5376 = vst.msk [vmem:[%s731 + $0x94] sm:$0xf] %vm738, %v5188
      %v5377 = vld [vmem:[%s731 + $0x98] sm:$0x1]
      %v5378 = vsel %vm741, %v5189, %v5377
      %5379 = vst [vmem:[%s731 + $0x98] sm:$0x1] %v5378
      %v5380 = vld [vmem:[%s731 + $0x9c] sm:$0xf]
      %v5381 = vsel %vm734, %v5196, %v5380
      %5382 = vst [vmem:[%s731 + $0x9c] sm:$0xf] %v5381
      %5383 = vst.msk [vmem:[%s731 + $0xa0] sm:$0xf] %vm738, %v5205
      %v5384 = vld [vmem:[%s731 + $0xa4] sm:$0x1]
      %v5385 = vsel %vm741, %v5206, %v5384
      %5386 = vst [vmem:[%s731 + $0xa4] sm:$0x1] %v5385
      %v5387 = vld [vmem:[%s731 + $0xa8] sm:$0xf]
      %v5388 = vsel %vm734, %v5213, %v5387
      %5389 = vst [vmem:[%s731 + $0xa8] sm:$0xf] %v5388
      %5390 = vst.msk [vmem:[%s731 + $0xac] sm:$0xf] %vm738, %v5222
      %v5391 = vld [vmem:[%s731 + $0xb0] sm:$0x1]
      %v5392 = vsel %vm741, %v5223, %v5391
      %5393 = vst [vmem:[%s731 + $0xb0] sm:$0x1] %v5392
      %v5394 = vld [vmem:[%s731 + $0xb4] sm:$0xf]
      %v5395 = vsel %vm734, %v5230, %v5394
      %5396 = vst [vmem:[%s731 + $0xb4] sm:$0xf] %v5395
      %5397 = vst.msk [vmem:[%s731 + $0xb8] sm:$0xf] %vm738, %v5239
      %v5398 = vld [vmem:[%s731 + $0xbc] sm:$0x1]
      %v5399 = vsel %vm741, %v5240, %v5398
      %5400 = vst [vmem:[%s731 + $0xbc] sm:$0x1] %v5399
      %v5401 = vld [vmem:[#allocation2] sm:$0xf]
      %v5402 = vsel %vm734, %v4992, %v5401
      %5403 = vst [vmem:[#allocation2] sm:$0xf] %v5402
      %5404 = vst.msk [vmem:[#allocation2 + $0x4] sm:$0xf] %vm738, %v5001
      %v5405 = vld [vmem:[#allocation2 + $0x8] sm:$0x1]
      %v5406 = vsel %vm741, %v5002, %v5405
      %5407 = vst [vmem:[#allocation2 + $0x8] sm:$0x1] %v5406
      %v5408 = vld [vmem:[%s857] sm:$0xf]
      %v5409 = vsel %vm734, %v5213, %v5408
      %5410 = vst [vmem:[%s857] sm:$0xf] %v5409
      %5411 = vst.msk [vmem:[%s857 + $0x4] sm:$0xf] %vm738, %v5222
      %v5412 = vld [vmem:[%s857 + $0x8] sm:$0x1]
      %v5413 = vsel %vm741, %v5223, %v5412
      %5414 = vst [vmem:[%s857 + $0x8] sm:$0x1] %v5413
      %v5415 = vld [vmem:[#allocation2] sm:$0x2]
      %v5416 = vld [vmem:[#allocation2 + $0xc] sm:$0x2]
      %v5417 = vld [vmem:[#allocation2 + $0x18] sm:$0x2]
      %v5418 = vld [vmem:[#allocation2 + $0x24] sm:$0x2]
      %v5419 = vld [vmem:[#allocation2 + $0x30] sm:$0x2]
      %v5420 = vld [vmem:[#allocation2 + $0x3c] sm:$0x2]
      %v5421 = vld [vmem:[#allocation2 + $0x48] sm:$0x2]
      %v5422 = vld [vmem:[#allocation2 + $0x54] sm:$0x2]
      %v5423 = vld [vmem:[#allocation2 + $0x60] sm:$0x2]
      %v5424 = vld [vmem:[#allocation2 + $0x6c] sm:$0x2]
      %v5425 = vld [vmem:[#allocation2 + $0x78] sm:$0x2]
      %v5426 = vld [vmem:[#allocation2 + $0x84] sm:$0x2]
      %v5427 = vld [vmem:[#allocation2 + $0x90] sm:$0x2]
      %v5428 = vld [vmem:[#allocation2 + $0x9c] sm:$0x2]
      %v5429 = vld [vmem:[#allocation2 + $0xa8] sm:$0x2]
      %v5430 = vld [vmem:[#allocation2 + $0xb4] sm:$0x2]
      %v5431 = vld [vmem:[#allocation2 + $0xc0] sm:$0x2]
      %v5432 = vld [vmem:[#allocation2 + $0xcc] sm:$0x2]
      %v5433 = vld [vmem:[#allocation2 + $0x4] sm:$0x8]
      %v5434 = vld [vmem:[#allocation2 + $0x10] sm:$0x8]
      %v5435 = vld [vmem:[#allocation2 + $0x1c] sm:$0x8]
      %v5436 = vld [vmem:[#allocation2 + $0x28] sm:$0x8]
      %v5437 = vld [vmem:[#allocation2 + $0x34] sm:$0x8]
      %v5438 = vld [vmem:[#allocation2 + $0x40] sm:$0x8]
      %v5439 = vld [vmem:[#allocation2 + $0x4c] sm:$0x8]
      %v5440 = vld [vmem:[#allocation2 + $0x58] sm:$0x8]
      %v5441 = vld [vmem:[#allocation2 + $0x64] sm:$0x8]
      %v5442 = vld [vmem:[#allocation2 + $0x70] sm:$0x8]
      %v5443 = vld [vmem:[#allocation2 + $0x7c] sm:$0x8]
      %v5444 = vld [vmem:[#allocation2 + $0x88] sm:$0x8]
      %v5445 = vld [vmem:[#allocation2 + $0x94] sm:$0x8]
      %v5446 = vld [vmem:[#allocation2 + $0xa0] sm:$0x8]
      %v5447 = vld [vmem:[#allocation2 + $0xac] sm:$0x8]
      %v5448 = vld [vmem:[#allocation2 + $0xb8] sm:$0x8]
      %v5449 = vld [vmem:[#allocation2 + $0xc4] sm:$0x8]
      %v5450 = vld [vmem:[#allocation2 + $0xd0] sm:$0x8]
      %v5469 = vrot.slane %v5415, 5
      %v5470 = vrot.slane %v5469, 4
      %v5471 = vrot.slane %v5416, 5
      %v5472 = vrot.slane %v5471, 4
      %v5473 = vrot.slane %v5417, 5
      %v5474 = vrot.slane %v5473, 4
      %v5475 = vrot.slane %v5418, 5
      %v5476 = vrot.slane %v5475, 4
      %v5477 = vrot.slane %v5419, 5
      %v5478 = vrot.slane %v5477, 4
      %v5479 = vrot.slane %v5420, 5
      %v5480 = vrot.slane %v5479, 4
      %v5481 = vrot.slane %v5421, 5
      %v5482 = vrot.slane %v5481, 4
      %v5483 = vrot.slane %v5422, 5
      %v5484 = vrot.slane %v5483, 4
      %v5485 = vrot.slane %v5423, 5
      %v5486 = vrot.slane %v5485, 4
      %v5487 = vrot.slane %v5424, 5
      %v5488 = vrot.slane %v5487, 4
      %v5489 = vrot.slane %v5425, 5
      %v5490 = vrot.slane %v5489, 4
      %v5491 = vrot.slane %v5426, 5
      %v5492 = vrot.slane %v5491, 4
      %v5493 = vrot.slane %v5427, 5
      %v5494 = vrot.slane %v5493, 4
      %v5495 = vrot.slane %v5428, 5
      %v5496 = vrot.slane %v5495, 4
      %v5497 = vrot.slane %v5429, 5
      %v5498 = vrot.slane %v5497, 4
      %v5499 = vrot.slane %v5430, 5
      %v5500 = vrot.slane %v5499, 4
      %v5501 = vrot.slane %v5431, 5
      %v5502 = vrot.slane %v5501, 4
      %v5503 = vrot.slane %v5432, 5
      %v5504 = vrot.slane %v5503, 4
      %v5523 = vld [vmem:[#allocation2] sm:$0x1]
      %v5524 = vsel %vm741, %v5470, %v5523
      %5525 = vst [vmem:[#allocation2] sm:$0x1] %v5524
      %v5526 = vld [vmem:[#allocation2 + $0xc] sm:$0x1]
      %v5527 = vsel %vm741, %v5472, %v5526
      %5528 = vst [vmem:[#allocation2 + $0xc] sm:$0x1] %v5527
      %v5529 = vld [vmem:[#allocation2 + $0x18] sm:$0x1]
      %v5530 = vsel %vm741, %v5474, %v5529
      %5531 = vst [vmem:[#allocation2 + $0x18] sm:$0x1] %v5530
      %v5532 = vld [vmem:[#allocation2 + $0x24] sm:$0x1]
      %v5533 = vsel %vm741, %v5476, %v5532
      %5534 = vst [vmem:[#allocation2 + $0x24] sm:$0x1] %v5533
      %v5535 = vld [vmem:[#allocation2 + $0x30] sm:$0x1]
      %v5536 = vsel %vm741, %v5478, %v5535
      %5537 = vst [vmem:[#allocation2 + $0x30] sm:$0x1] %v5536
      %v5538 = vld [vmem:[#allocation2 + $0x3c] sm:$0x1]
      %v5539 = vsel %vm741, %v5480, %v5538
      %5540 = vst [vmem:[#allocation2 + $0x3c] sm:$0x1] %v5539
      %v5541 = vld [vmem:[#allocation2 + $0x48] sm:$0x1]
      %v5542 = vsel %vm741, %v5482, %v5541
      %5543 = vst [vmem:[#allocation2 + $0x48] sm:$0x1] %v5542
      %v5544 = vld [vmem:[#allocation2 + $0x54] sm:$0x1]
      %v5545 = vsel %vm741, %v5484, %v5544
      %5546 = vst [vmem:[#allocation2 + $0x54] sm:$0x1] %v5545
      %v5547 = vld [vmem:[#allocation2 + $0x60] sm:$0x1]
      %v5548 = vsel %vm741, %v5486, %v5547
      %5549 = vst [vmem:[#allocation2 + $0x60] sm:$0x1] %v5548
      %v5550 = vld [vmem:[#allocation2 + $0x6c] sm:$0x1]
      %v5551 = vsel %vm741, %v5488, %v5550
      %5552 = vst [vmem:[#allocation2 + $0x6c] sm:$0x1] %v5551
      %v5553 = vld [vmem:[#allocation2 + $0x78] sm:$0x1]
      %v5554 = vsel %vm741, %v5490, %v5553
      %5555 = vst [vmem:[#allocation2 + $0x78] sm:$0x1] %v5554
      %v5556 = vld [vmem:[#allocation2 + $0x84] sm:$0x1]
      %v5557 = vsel %vm741, %v5492, %v5556
      %5558 = vst [vmem:[#allocation2 + $0x84] sm:$0x1] %v5557
      %v5559 = vld [vmem:[#allocation2 + $0x90] sm:$0x1]
      %v5560 = vsel %vm741, %v5494, %v5559
      %5561 = vst [vmem:[#allocation2 + $0x90] sm:$0x1] %v5560
      %v5562 = vld [vmem:[#allocation2 + $0x9c] sm:$0x1]
      %v5563 = vsel %vm741, %v5496, %v5562
      %5564 = vst [vmem:[#allocation2 + $0x9c] sm:$0x1] %v5563
      %v5565 = vld [vmem:[#allocation2 + $0xa8] sm:$0x1]
      %v5566 = vsel %vm741, %v5498, %v5565
      %5567 = vst [vmem:[#allocation2 + $0xa8] sm:$0x1] %v5566
      %v5568 = vld [vmem:[#allocation2 + $0xb4] sm:$0x1]
      %v5569 = vsel %vm741, %v5500, %v5568
      %5570 = vst [vmem:[#allocation2 + $0xb4] sm:$0x1] %v5569
      %v5571 = vld [vmem:[#allocation2 + $0xc0] sm:$0x1]
      %v5572 = vsel %vm741, %v5502, %v5571
      %5573 = vst [vmem:[#allocation2 + $0xc0] sm:$0x1] %v5572
      %v5574 = vld [vmem:[#allocation2 + $0xcc] sm:$0x1]
      %v5575 = vsel %vm741, %v5504, %v5574
      %5576 = vst [vmem:[#allocation2 + $0xcc] sm:$0x1] %v5575
      %v5595 = vrot.slane %v5433, 7
      %v5596 = vrot.slane %v5595, 4
      %v5597 = vrot.slane %v5434, 7
      %v5598 = vrot.slane %v5597, 4
      %v5599 = vrot.slane %v5435, 7
      %v5600 = vrot.slane %v5599, 4
      %v5601 = vrot.slane %v5436, 7
      %v5602 = vrot.slane %v5601, 4
      %v5603 = vrot.slane %v5437, 7
      %v5604 = vrot.slane %v5603, 4
      %v5605 = vrot.slane %v5438, 7
      %v5606 = vrot.slane %v5605, 4
      %v5607 = vrot.slane %v5439, 7
      %v5608 = vrot.slane %v5607, 4
      %v5609 = vrot.slane %v5440, 7
      %v5610 = vrot.slane %v5609, 4
      %v5611 = vrot.slane %v5441, 7
      %v5612 = vrot.slane %v5611, 4
      %v5613 = vrot.slane %v5442, 7
      %v5614 = vrot.slane %v5613, 4
      %v5615 = vrot.slane %v5443, 7
      %v5616 = vrot.slane %v5615, 4
      %v5617 = vrot.slane %v5444, 7
      %v5618 = vrot.slane %v5617, 4
      %v5619 = vrot.slane %v5445, 7
      %v5620 = vrot.slane %v5619, 4
      %v5621 = vrot.slane %v5446, 7
      %v5622 = vrot.slane %v5621, 4
      %v5623 = vrot.slane %v5447, 7
      %v5624 = vrot.slane %v5623, 4
      %v5625 = vrot.slane %v5448, 7
      %v5626 = vrot.slane %v5625, 4
      %v5627 = vrot.slane %v5449, 7
      %v5628 = vrot.slane %v5627, 4
      %v5629 = vrot.slane %v5450, 7
      %v5630 = vrot.slane %v5629, 4
      %v5649 = vld [vmem:[#allocation2 + $0x8] sm:$0x1]
      %v5650 = vsel %vm1099, %v5596, %v5649
      %5651 = vst [vmem:[#allocation2 + $0x8] sm:$0x1] %v5650
      %v5652 = vld [vmem:[#allocation2 + $0x14] sm:$0x1]
      %v5653 = vsel %vm1099, %v5598, %v5652
      %5654 = vst [vmem:[#allocation2 + $0x14] sm:$0x1] %v5653
      %v5655 = vld [vmem:[#allocation2 + $0x20] sm:$0x1]
      %v5656 = vsel %vm1099, %v5600, %v5655
      %5657 = vst [vmem:[#allocation2 + $0x20] sm:$0x1] %v5656
      %v5658 = vld [vmem:[#allocation2 + $0x2c] sm:$0x1]
      %v5659 = vsel %vm1099, %v5602, %v5658
      %5660 = vst [vmem:[#allocation2 + $0x2c] sm:$0x1] %v5659
      %v5661 = vld [vmem:[#allocation2 + $0x38] sm:$0x1]
      %v5662 = vsel %vm1099, %v5604, %v5661
      %5663 = vst [vmem:[#allocation2 + $0x38] sm:$0x1] %v5662
      %v5664 = vld [vmem:[#allocation2 + $0x44] sm:$0x1]
      %v5665 = vsel %vm1099, %v5606, %v5664
      %5666 = vst [vmem:[#allocation2 + $0x44] sm:$0x1] %v5665
      %v5667 = vld [vmem:[#allocation2 + $0x50] sm:$0x1]
      %v5668 = vsel %vm1099, %v5608, %v5667
      %5669 = vst [vmem:[#allocation2 + $0x50] sm:$0x1] %v5668
      %v5670 = vld [vmem:[#allocation2 + $0x5c] sm:$0x1]
      %v5671 = vsel %vm1099, %v5610, %v5670
      %5672 = vst [vmem:[#allocation2 + $0x5c] sm:$0x1] %v5671
      %v5673 = vld [vmem:[#allocation2 + $0x68] sm:$0x1]
      %v5674 = vsel %vm1099, %v5612, %v5673
      %5675 = vst [vmem:[#allocation2 + $0x68] sm:$0x1] %v5674
      %v5676 = vld [vmem:[#allocation2 + $0x74] sm:$0x1]
      %v5677 = vsel %vm1099, %v5614, %v5676
      %5678 = vst [vmem:[#allocation2 + $0x74] sm:$0x1] %v5677
      %v5679 = vld [vmem:[#allocation2 + $0x80] sm:$0x1]
      %v5680 = vsel %vm1099, %v5616, %v5679
      %5681 = vst [vmem:[#allocation2 + $0x80] sm:$0x1] %v5680
      %v5682 = vld [vmem:[#allocation2 + $0x8c] sm:$0x1]
      %v5683 = vsel %vm1099, %v5618, %v5682
      %5684 = vst [vmem:[#allocation2 + $0x8c] sm:$0x1] %v5683
      %v5685 = vld [vmem:[#allocation2 + $0x98] sm:$0x1]
      %v5686 = vsel %vm1099, %v5620, %v5685
      %5687 = vst [vmem:[#allocation2 + $0x98] sm:$0x1] %v5686
      %v5688 = vld [vmem:[#allocation2 + $0xa4] sm:$0x1]
      %v5689 = vsel %vm1099, %v5622, %v5688
      %5690 = vst [vmem:[#allocation2 + $0xa4] sm:$0x1] %v5689
      %v5691 = vld [vmem:[#allocation2 + $0xb0] sm:$0x1]
      %v5692 = vsel %vm1099, %v5624, %v5691
      %5693 = vst [vmem:[#allocation2 + $0xb0] sm:$0x1] %v5692
      %v5694 = vld [vmem:[#allocation2 + $0xbc] sm:$0x1]
      %v5695 = vsel %vm1099, %v5626, %v5694
      %5696 = vst [vmem:[#allocation2 + $0xbc] sm:$0x1] %v5695
      %v5697 = vld [vmem:[#allocation2 + $0xc8] sm:$0x1]
      %v5698 = vsel %vm1099, %v5628, %v5697
      %5699 = vst [vmem:[#allocation2 + $0xc8] sm:$0x1] %v5698
      %v5700 = vld [vmem:[#allocation2 + $0xd4] sm:$0x1]
      %v5701 = vsel %vm1099, %v5630, %v5700
      %5702 = vst [vmem:[#allocation2 + $0xd4] sm:$0x1] %v5701
      %v5703 = vld [vmem:[#allocation2] sm:$0xf]
      %v5704 = vld [vmem:[#allocation2 + $0x4] sm:$0xf]
      %v5705 = vld [vmem:[#allocation2 + $0xc] sm:$0xf]
      %v5706 = vld [vmem:[#allocation2 + $0x10] sm:$0xf]
      %v5707 = vld [vmem:[#allocation2 + $0x18] sm:$0xf]
      %v5708 = vld [vmem:[#allocation2 + $0x1c] sm:$0xf]
      %v5709 = vld [vmem:[#allocation2 + $0x24] sm:$0xf]
      %v5710 = vld [vmem:[#allocation2 + $0x28] sm:$0xf]
      %v5711 = vld [vmem:[#allocation2 + $0x30] sm:$0xf]
      %v5712 = vld [vmem:[#allocation2 + $0x34] sm:$0xf]
      %v5713 = vld [vmem:[#allocation2 + $0x3c] sm:$0xf]
      %v5714 = vld [vmem:[#allocation2 + $0x40] sm:$0xf]
      %v5715 = vld [vmem:[#allocation2 + $0x48] sm:$0xf]
      %v5716 = vld [vmem:[#allocation2 + $0x4c] sm:$0xf]
      %v5717 = vld [vmem:[#allocation2 + $0x54] sm:$0xf]
      %v5718 = vld [vmem:[#allocation2 + $0x58] sm:$0xf]
      %v5719 = vld [vmem:[#allocation2 + $0x60] sm:$0xf]
      %v5720 = vld [vmem:[#allocation2 + $0x64] sm:$0xf]
      %v5721 = vld [vmem:[#allocation2 + $0x6c] sm:$0xf]
      %v5722 = vld [vmem:[#allocation2 + $0x70] sm:$0xf]
      %v5723 = vld [vmem:[#allocation2 + $0x78] sm:$0xf]
      %v5724 = vld [vmem:[#allocation2 + $0x7c] sm:$0xf]
      %v5725 = vld [vmem:[#allocation2 + $0x84] sm:$0xf]
      %v5726 = vld [vmem:[#allocation2 + $0x88] sm:$0xf]
      %v5727 = vld [vmem:[#allocation2 + $0x90] sm:$0xf]
      %v5728 = vld [vmem:[#allocation2 + $0x94] sm:$0xf]
      %v5729 = vld [vmem:[#allocation2 + $0x9c] sm:$0xf]
      %v5730 = vld [vmem:[#allocation2 + $0xa0] sm:$0xf]
      %v5731 = vld [vmem:[#allocation2 + $0xa8] sm:$0xf]
      %v5732 = vld [vmem:[#allocation2 + $0xac] sm:$0xf]
      %v5733 = vld [vmem:[#allocation2 + $0xb4] sm:$0xf]
      %v5734 = vld [vmem:[#allocation2 + $0xb8] sm:$0xf]
      %v5767 = vunpack.c.l.b16 %v5703
      %v5768 = vunpack.c.l.b16 %v5704
      %v5769 = vunpack.c.l.b16 %v5705
      %v5770 = vunpack.c.l.b16 %v5706
      %v5771 = vunpack.c.l.b16 %v5707
      %v5772 = vunpack.c.l.b16 %v5708
      %v5773 = vunpack.c.l.b16 %v5709
      %v5774 = vunpack.c.l.b16 %v5710
      %v5775 = vunpack.c.l.b16 %v5711
      %v5776 = vunpack.c.l.b16 %v5712
      %v5777 = vunpack.c.l.b16 %v5713
      %v5778 = vunpack.c.l.b16 %v5714
      %v5779 = vunpack.c.l.b16 %v5715
      %v5780 = vunpack.c.l.b16 %v5716
      %v5781 = vunpack.c.l.b16 %v5717
      %v5782 = vunpack.c.l.b16 %v5718
      %v5783 = vunpack.c.l.b16 %v5719
      %v5784 = vunpack.c.l.b16 %v5720
      %v5785 = vunpack.c.l.b16 %v5721
      %v5786 = vunpack.c.l.b16 %v5722
      %v5787 = vunpack.c.l.b16 %v5723
      %v5788 = vunpack.c.l.b16 %v5724
      %v5789 = vunpack.c.l.b16 %v5725
      %v5790 = vunpack.c.l.b16 %v5726
      %v5791 = vunpack.c.l.b16 %v5727
      %v5792 = vunpack.c.l.b16 %v5728
      %v5793 = vunpack.c.l.b16 %v5729
      %v5794 = vunpack.c.l.b16 %v5730
      %v5795 = vunpack.c.l.b16 %v5731
      %v5796 = vunpack.c.l.b16 %v5732
      %v5797 = vunpack.c.l.b16 %v5733
      %v5798 = vunpack.c.l.b16 %v5734
      %v5799 = vpack.c.b16 %v5768, %v5767
      %v5800 = vpack.c.b16 %v5770, %v5769
      %v5801 = vpack.c.b16 %v5772, %v5771
      %v5802 = vpack.c.b16 %v5774, %v5773
      %v5803 = vpack.c.b16 %v5776, %v5775
      %v5804 = vpack.c.b16 %v5778, %v5777
      %v5805 = vpack.c.b16 %v5780, %v5779
      %v5806 = vpack.c.b16 %v5782, %v5781
      %v5807 = vpack.c.b16 %v5784, %v5783
      %v5808 = vpack.c.b16 %v5786, %v5785
      %v5809 = vpack.c.b16 %v5788, %v5787
      %v5810 = vpack.c.b16 %v5790, %v5789
      %v5811 = vpack.c.b16 %v5792, %v5791
      %v5812 = vpack.c.b16 %v5794, %v5793
      %v5813 = vpack.c.b16 %v5796, %v5795
      %v5814 = vpack.c.b16 %v5798, %v5797
      %5831 = vst.msk [vmem:[#allocation3] sm:$0xff] %vm1282, %v5799
      %5832 = vst.msk [vmem:[#allocation3 + $0x8] sm:$0xff] %vm1282, %v5800
      %5833 = vst.msk [vmem:[#allocation3 + $0x10] sm:$0xff] %vm1282, %v5801
      %5834 = vst.msk [vmem:[#allocation3 + $0x18] sm:$0xff] %vm1282, %v5802
      %5835 = vst.msk [vmem:[#allocation3 + $0x20] sm:$0xff] %vm1282, %v5803
      %5836 = vst.msk [vmem:[#allocation3 + $0x28] sm:$0xff] %vm1282, %v5804
      %5837 = vst.msk [vmem:[#allocation3 + $0x30] sm:$0xff] %vm1282, %v5805
      %5838 = vst.msk [vmem:[#allocation3 + $0x38] sm:$0xff] %vm1282, %v5806
      %5839 = vst.msk [vmem:[#allocation3 + $0x40] sm:$0xff] %vm1282, %v5807
      %5840 = vst.msk [vmem:[#allocation3 + $0x48] sm:$0xff] %vm1282, %v5808
      %5841 = vst.msk [vmem:[#allocation3 + $0x50] sm:$0xff] %vm1282, %v5809
      %5842 = vst.msk [vmem:[#allocation3 + $0x58] sm:$0xff] %vm1282, %v5810
      %5843 = vst.msk [vmem:[#allocation3 + $0x60] sm:$0xff] %vm1282, %v5811
      %5844 = vst.msk [vmem:[#allocation3 + $0x68] sm:$0xff] %vm1282, %v5812
      %5845 = vst.msk [vmem:[#allocation3 + $0x70] sm:$0xff] %vm1282, %v5813
      %5846 = vst.msk [vmem:[#allocation3 + $0x78] sm:$0xff] %vm1282, %v5814
      %v5847 = vld [vmem:[#allocation2] sm:$0xf]
      %v5848 = vld [vmem:[#allocation2 + $0x4] sm:$0xf]
      %v5849 = vld [vmem:[#allocation2 + $0x8] sm:$0x1]
      %v5850 = vld [vmem:[#allocation2 + $0xc] sm:$0xf]
      %v5851 = vld [vmem:[#allocation2 + $0x10] sm:$0xf]
      %v5852 = vld [vmem:[#allocation2 + $0x14] sm:$0x1]
      %v5853 = vld [vmem:[#allocation2 + $0x18] sm:$0xf]
      %v5854 = vld [vmem:[#allocation2 + $0x1c] sm:$0xf]
      %v5855 = vld [vmem:[#allocation2 + $0x20] sm:$0x1]
      %v5856 = vld [vmem:[#allocation2 + $0x24] sm:$0xf]
      %v5857 = vld [vmem:[#allocation2 + $0x28] sm:$0xf]
      %v5858 = vld [vmem:[#allocation2 + $0x2c] sm:$0x1]
      %v5859 = vld [vmem:[#allocation2 + $0x30] sm:$0xf]
      %v5860 = vld [vmem:[#allocation2 + $0x34] sm:$0xf]
      %v5861 = vld [vmem:[#allocation2 + $0x38] sm:$0x1]
      %v5862 = vld [vmem:[#allocation2 + $0x3c] sm:$0xf]
      %v5863 = vld [vmem:[#allocation2 + $0x40] sm:$0xf]
      %v5864 = vld [vmem:[#allocation2 + $0x44] sm:$0x1]
      %v5865 = vld [vmem:[#allocation2 + $0x48] sm:$0xf]
      %v5866 = vld [vmem:[#allocation2 + $0x4c] sm:$0xf]
      %v5867 = vld [vmem:[#allocation2 + $0x50] sm:$0x1]
      %v5868 = vld [vmem:[#allocation2 + $0x54] sm:$0xf]
      %v5869 = vld [vmem:[#allocation2 + $0x58] sm:$0xf]
      %v5870 = vld [vmem:[#allocation2 + $0x5c] sm:$0x1]
      %v5871 = vld [vmem:[#allocation2 + $0x60] sm:$0xf]
      %v5872 = vld [vmem:[#allocation2 + $0x64] sm:$0xf]
      %v5873 = vld [vmem:[#allocation2 + $0x68] sm:$0x1]
      %v5874 = vld [vmem:[#allocation2 + $0x6c] sm:$0xf]
      %v5875 = vld [vmem:[#allocation2 + $0x70] sm:$0xf]
      %v5876 = vld [vmem:[#allocation2 + $0x74] sm:$0x1]
      %v5877 = vld [vmem:[#allocation2 + $0x78] sm:$0xf]
      %v5878 = vld [vmem:[#allocation2 + $0x7c] sm:$0xf]
      %v5879 = vld [vmem:[#allocation2 + $0x80] sm:$0x1]
      %v5880 = vld [vmem:[#allocation2 + $0x84] sm:$0xf]
      %v5881 = vld [vmem:[#allocation2 + $0x88] sm:$0xf]
      %v5882 = vld [vmem:[#allocation2 + $0x8c] sm:$0x1]
      %v5883 = vld [vmem:[#allocation2 + $0x90] sm:$0xf]
      %v5884 = vld [vmem:[#allocation2 + $0x94] sm:$0xf]
      %v5885 = vld [vmem:[#allocation2 + $0x98] sm:$0x1]
      %v5886 = vld [vmem:[#allocation2 + $0x9c] sm:$0xf]
      %v5887 = vld [vmem:[#allocation2 + $0xa0] sm:$0xf]
      %v5888 = vld [vmem:[#allocation2 + $0xa4] sm:$0x1]
      %v5889 = vld [vmem:[#allocation2 + $0xa8] sm:$0xf]
      %v5890 = vld [vmem:[#allocation2 + $0xac] sm:$0xf]
      %v5891 = vld [vmem:[#allocation2 + $0xb0] sm:$0x1]
      %v5892 = vld [vmem:[#allocation2 + $0xb4] sm:$0xf]
      %v5893 = vld [vmem:[#allocation2 + $0xb8] sm:$0xf]
      %v5894 = vld [vmem:[#allocation2 + $0xbc] sm:$0x1]
      %v5896 = vshrl.u32 %v5847, 16
      %v5898 = vrot.slane %v5896, 4
      %v5899 = vshll.u32 %v5847, 16
      %v5901 = vrot.slane %v5899, 5
      %v5902 = vor.u32 %v5898, %v5901
      %v5903 = vrot.slane %v5902, 4
      %v5905 = vshll.u32 %v5848, 16
      %v5907 = vrot.slane %v5905, 5
      %v5908 = vsel %vm1349, %v5903, %v5907
      %v5909 = vshrl.u32 %v5848, 16
      %v5911 = vrot.slane %v5909, 4
      %v5912 = vor.u32 %v5911, %v5907
      %v5913 = vrot.slane %v5912, 4
      %v5915 = vshll.u32 %v5849, 16
      %v5917 = vrot.slane %v5915, 5
      %v5918 = vsel %vm1349, %v5913, %v5917
      %v5920 = vshrl.u32 %v5850, 16
      %v5922 = vrot.slane %v5920, 4
      %v5923 = vshll.u32 %v5850, 16
      %v5925 = vrot.slane %v5923, 5
      %v5926 = vor.u32 %v5922, %v5925
      %v5927 = vrot.slane %v5926, 4
      %v5929 = vshll.u32 %v5851, 16
      %v5931 = vrot.slane %v5929, 5
      %v5932 = vsel %vm1349, %v5927, %v5931
      %v5933 = vshrl.u32 %v5851, 16
      %v5935 = vrot.slane %v5933, 4
      %v5936 = vor.u32 %v5935, %v5931
      %v5937 = vrot.slane %v5936, 4
      %v5939 = vshll.u32 %v5852, 16
      %v5941 = vrot.slane %v5939, 5
      %v5942 = vsel %vm1349, %v5937, %v5941
      %v5944 = vshrl.u32 %v5853, 16
      %v5946 = vrot.slane %v5944, 4
      %v5947 = vshll.u32 %v5853, 16
      %v5949 = vrot.slane %v5947, 5
      %v5950 = vor.u32 %v5946, %v5949
      %v5951 = vrot.slane %v5950, 4
      %v5953 = vshll.u32 %v5854, 16
      %v5955 = vrot.slane %v5953, 5
      %v5956 = vsel %vm1349, %v5951, %v5955
      %v5957 = vshrl.u32 %v5854, 16
      %v5959 = vrot.slane %v5957, 4
      %v5960 = vor.u32 %v5959, %v5955
      %v5961 = vrot.slane %v5960, 4
      %v5963 = vshll.u32 %v5855, 16
      %v5965 = vrot.slane %v5963, 5
      %v5966 = vsel %vm1349, %v5961, %v5965
      %v5968 = vshrl.u32 %v5856, 16
      %v5970 = vrot.slane %v5968, 4
      %v5971 = vshll.u32 %v5856, 16
      %v5973 = vrot.slane %v5971, 5
      %v5974 = vor.u32 %v5970, %v5973
      %v5975 = vrot.slane %v5974, 4
      %v5977 = vshll.u32 %v5857, 16
      %v5979 = vrot.slane %v5977, 5
      %v5980 = vsel %vm1349, %v5975, %v5979
      %v5981 = vshrl.u32 %v5857, 16
      %v5983 = vrot.slane %v5981, 4
      %v5984 = vor.u32 %v5983, %v5979
      %v5985 = vrot.slane %v5984, 4
      %v5987 = vshll.u32 %v5858, 16
      %v5989 = vrot.slane %v5987, 5
      %v5990 = vsel %vm1349, %v5985, %v5989
      %v5992 = vshrl.u32 %v5859, 16
      %v5994 = vrot.slane %v5992, 4
      %v5995 = vshll.u32 %v5859, 16
      %v5997 = vrot.slane %v5995, 5
      %v5998 = vor.u32 %v5994, %v5997
      %v5999 = vrot.slane %v5998, 4
      %v6001 = vshll.u32 %v5860, 16
      %v6003 = vrot.slane %v6001, 5
      %v6004 = vsel %vm1349, %v5999, %v6003
      %v6005 = vshrl.u32 %v5860, 16
      %v6007 = vrot.slane %v6005, 4
      %v6008 = vor.u32 %v6007, %v6003
      %v6009 = vrot.slane %v6008, 4
      %v6011 = vshll.u32 %v5861, 16
      %v6013 = vrot.slane %v6011, 5
      %v6014 = vsel %vm1349, %v6009, %v6013
      %v6016 = vshrl.u32 %v5862, 16
      %v6018 = vrot.slane %v6016, 4
      %v6019 = vshll.u32 %v5862, 16
      %v6021 = vrot.slane %v6019, 5
      %v6022 = vor.u32 %v6018, %v6021
      %v6023 = vrot.slane %v6022, 4
      %v6025 = vshll.u32 %v5863, 16
      %v6027 = vrot.slane %v6025, 5
      %v6028 = vsel %vm1349, %v6023, %v6027
      %v6029 = vshrl.u32 %v5863, 16
      %v6031 = vrot.slane %v6029, 4
      %v6032 = vor.u32 %v6031, %v6027
      %v6033 = vrot.slane %v6032, 4
      %v6035 = vshll.u32 %v5864, 16
      %v6037 = vrot.slane %v6035, 5
      %v6038 = vsel %vm1349, %v6033, %v6037
      %v6040 = vshrl.u32 %v5865, 16
      %v6042 = vrot.slane %v6040, 4
      %v6043 = vshll.u32 %v5865, 16
      %v6045 = vrot.slane %v6043, 5
      %v6046 = vor.u32 %v6042, %v6045
      %v6047 = vrot.slane %v6046, 4
      %v6049 = vshll.u32 %v5866, 16
      %v6051 = vrot.slane %v6049, 5
      %v6052 = vsel %vm1349, %v6047, %v6051
      %v6053 = vshrl.u32 %v5866, 16
      %v6055 = vrot.slane %v6053, 4
      %v6056 = vor.u32 %v6055, %v6051
      %v6057 = vrot.slane %v6056, 4
      %v6059 = vshll.u32 %v5867, 16
      %v6061 = vrot.slane %v6059, 5
      %v6062 = vsel %vm1349, %v6057, %v6061
      %v6064 = vshrl.u32 %v5868, 16
      %v6066 = vrot.slane %v6064, 4
      %v6067 = vshll.u32 %v5868, 16
      %v6069 = vrot.slane %v6067, 5
      %v6070 = vor.u32 %v6066, %v6069
      %v6071 = vrot.slane %v6070, 4
      %v6073 = vshll.u32 %v5869, 16
      %v6075 = vrot.slane %v6073, 5
      %v6076 = vsel %vm1349, %v6071, %v6075
      %v6077 = vshrl.u32 %v5869, 16
      %v6079 = vrot.slane %v6077, 4
      %v6080 = vor.u32 %v6079, %v6075
      %v6081 = vrot.slane %v6080, 4
      %v6083 = vshll.u32 %v5870, 16
      %v6085 = vrot.slane %v6083, 5
      %v6086 = vsel %vm1349, %v6081, %v6085
      %v6088 = vshrl.u32 %v5871, 16
      %v6090 = vrot.slane %v6088, 4
      %v6091 = vshll.u32 %v5871, 16
      %v6093 = vrot.slane %v6091, 5
      %v6094 = vor.u32 %v6090, %v6093
      %v6095 = vrot.slane %v6094, 4
      %v6097 = vshll.u32 %v5872, 16
      %v6099 = vrot.slane %v6097, 5
      %v6100 = vsel %vm1349, %v6095, %v6099
      %v6101 = vshrl.u32 %v5872, 16
      %v6103 = vrot.slane %v6101, 4
      %v6104 = vor.u32 %v6103, %v6099
      %v6105 = vrot.slane %v6104, 4
      %v6107 = vshll.u32 %v5873, 16
      %v6109 = vrot.slane %v6107, 5
      %v6110 = vsel %vm1349, %v6105, %v6109
      %v6112 = vshrl.u32 %v5874, 16
      %v6114 = vrot.slane %v6112, 4
      %v6115 = vshll.u32 %v5874, 16
      %v6117 = vrot.slane %v6115, 5
      %v6118 = vor.u32 %v6114, %v6117
      %v6119 = vrot.slane %v6118, 4
      %v6121 = vshll.u32 %v5875, 16
      %v6123 = vrot.slane %v6121, 5
      %v6124 = vsel %vm1349, %v6119, %v6123
      %v6125 = vshrl.u32 %v5875, 16
      %v6127 = vrot.slane %v6125, 4
      %v6128 = vor.u32 %v6127, %v6123
      %v6129 = vrot.slane %v6128, 4
      %v6131 = vshll.u32 %v5876, 16
      %v6133 = vrot.slane %v6131, 5
      %v6134 = vsel %vm1349, %v6129, %v6133
      %v6136 = vshrl.u32 %v5877, 16
      %v6138 = vrot.slane %v6136, 4
      %v6139 = vshll.u32 %v5877, 16
      %v6141 = vrot.slane %v6139, 5
      %v6142 = vor.u32 %v6138, %v6141
      %v6143 = vrot.slane %v6142, 4
      %v6145 = vshll.u32 %v5878, 16
      %v6147 = vrot.slane %v6145, 5
      %v6148 = vsel %vm1349, %v6143, %v6147
      %v6149 = vshrl.u32 %v5878, 16
      %v6151 = vrot.slane %v6149, 4
      %v6152 = vor.u32 %v6151, %v6147
      %v6153 = vrot.slane %v6152, 4
      %v6155 = vshll.u32 %v5879, 16
      %v6157 = vrot.slane %v6155, 5
      %v6158 = vsel %vm1349, %v6153, %v6157
      %v6160 = vshrl.u32 %v5880, 16
      %v6162 = vrot.slane %v6160, 4
      %v6163 = vshll.u32 %v5880, 16
      %v6165 = vrot.slane %v6163, 5
      %v6166 = vor.u32 %v6162, %v6165
      %v6167 = vrot.slane %v6166, 4
      %v6169 = vshll.u32 %v5881, 16
      %v6171 = vrot.slane %v6169, 5
      %v6172 = vsel %vm1349, %v6167, %v6171
      %v6173 = vshrl.u32 %v5881, 16
      %v6175 = vrot.slane %v6173, 4
      %v6176 = vor.u32 %v6175, %v6171
      %v6177 = vrot.slane %v6176, 4
      %v6179 = vshll.u32 %v5882, 16
      %v6181 = vrot.slane %v6179, 5
      %v6182 = vsel %vm1349, %v6177, %v6181
      %v6184 = vshrl.u32 %v5883, 16
      %v6186 = vrot.slane %v6184, 4
      %v6187 = vshll.u32 %v5883, 16
      %v6189 = vrot.slane %v6187, 5
      %v6190 = vor.u32 %v6186, %v6189
      %v6191 = vrot.slane %v6190, 4
      %v6193 = vshll.u32 %v5884, 16
      %v6195 = vrot.slane %v6193, 5
      %v6196 = vsel %vm1349, %v6191, %v6195
      %v6197 = vshrl.u32 %v5884, 16
      %v6199 = vrot.slane %v6197, 4
      %v6200 = vor.u32 %v6199, %v6195
      %v6201 = vrot.slane %v6200, 4
      %v6203 = vshll.u32 %v5885, 16
      %v6205 = vrot.slane %v6203, 5
      %v6206 = vsel %vm1349, %v6201, %v6205
      %v6208 = vshrl.u32 %v5886, 16
      %v6210 = vrot.slane %v6208, 4
      %v6211 = vshll.u32 %v5886, 16
      %v6213 = vrot.slane %v6211, 5
      %v6214 = vor.u32 %v6210, %v6213
      %v6215 = vrot.slane %v6214, 4
      %v6217 = vshll.u32 %v5887, 16
      %v6219 = vrot.slane %v6217, 5
      %v6220 = vsel %vm1349, %v6215, %v6219
      %v6221 = vshrl.u32 %v5887, 16
      %v6223 = vrot.slane %v6221, 4
      %v6224 = vor.u32 %v6223, %v6219
      %v6225 = vrot.slane %v6224, 4
      %v6227 = vshll.u32 %v5888, 16
      %v6229 = vrot.slane %v6227, 5
      %v6230 = vsel %vm1349, %v6225, %v6229
      %v6232 = vshrl.u32 %v5889, 16
      %v6234 = vrot.slane %v6232, 4
      %v6235 = vshll.u32 %v5889, 16
      %v6237 = vrot.slane %v6235, 5
      %v6238 = vor.u32 %v6234, %v6237
      %v6239 = vrot.slane %v6238, 4
      %v6241 = vshll.u32 %v5890, 16
      %v6243 = vrot.slane %v6241, 5
      %v6244 = vsel %vm1349, %v6239, %v6243
      %v6245 = vshrl.u32 %v5890, 16
      %v6247 = vrot.slane %v6245, 4
      %v6248 = vor.u32 %v6247, %v6243
      %v6249 = vrot.slane %v6248, 4
      %v6251 = vshll.u32 %v5891, 16
      %v6253 = vrot.slane %v6251, 5
      %v6254 = vsel %vm1349, %v6249, %v6253
      %v6256 = vshrl.u32 %v5892, 16
      %v6258 = vrot.slane %v6256, 4
      %v6259 = vshll.u32 %v5892, 16
      %v6261 = vrot.slane %v6259, 5
      %v6262 = vor.u32 %v6258, %v6261
      %v6263 = vrot.slane %v6262, 4
      %v6265 = vshll.u32 %v5893, 16
      %v6267 = vrot.slane %v6265, 5
      %v6268 = vsel %vm1349, %v6263, %v6267
      %v6269 = vshrl.u32 %v5893, 16
      %v6271 = vrot.slane %v6269, 4
      %v6272 = vor.u32 %v6271, %v6267
      %v6273 = vrot.slane %v6272, 4
      %v6275 = vshll.u32 %v5894, 16
      %v6277 = vrot.slane %v6275, 5
      %v6278 = vsel %vm1349, %v6273, %v6277
      %v6279 = vunpack.c.l.b16 %v5908
      %v6280 = vunpack.c.l.b16 %v5918
      %v6281 = vunpack.c.l.b16 %v5932
      %v6282 = vunpack.c.l.b16 %v5942
      %v6283 = vunpack.c.l.b16 %v5956
      %v6284 = vunpack.c.l.b16 %v5966
      %v6285 = vunpack.c.l.b16 %v5980
      %v6286 = vunpack.c.l.b16 %v5990
      %v6287 = vunpack.c.l.b16 %v6004
      %v6288 = vunpack.c.l.b16 %v6014
      %v6289 = vunpack.c.l.b16 %v6028
      %v6290 = vunpack.c.l.b16 %v6038
      %v6291 = vunpack.c.l.b16 %v6052
      %v6292 = vunpack.c.l.b16 %v6062
      %v6293 = vunpack.c.l.b16 %v6076
      %v6294 = vunpack.c.l.b16 %v6086
      %v6295 = vunpack.c.l.b16 %v6100
      %v6296 = vunpack.c.l.b16 %v6110
      %v6297 = vunpack.c.l.b16 %v6124
      %v6298 = vunpack.c.l.b16 %v6134
      %v6299 = vunpack.c.l.b16 %v6148
      %v6300 = vunpack.c.l.b16 %v6158
      %v6301 = vunpack.c.l.b16 %v6172
      %v6302 = vunpack.c.l.b16 %v6182
      %v6303 = vunpack.c.l.b16 %v6196
      %v6304 = vunpack.c.l.b16 %v6206
      %v6305 = vunpack.c.l.b16 %v6220
      %v6306 = vunpack.c.l.b16 %v6230
      %v6307 = vunpack.c.l.b16 %v6244
      %v6308 = vunpack.c.l.b16 %v6254
      %v6309 = vunpack.c.l.b16 %v6268
      %v6310 = vunpack.c.l.b16 %v6278
      %v6311 = vpack.c.b16 %v6280, %v6279
      %v6312 = vpack.c.b16 %v6282, %v6281
      %v6313 = vpack.c.b16 %v6284, %v6283
      %v6314 = vpack.c.b16 %v6286, %v6285
      %v6315 = vpack.c.b16 %v6288, %v6287
      %v6316 = vpack.c.b16 %v6290, %v6289
      %v6317 = vpack.c.b16 %v6292, %v6291
      %v6318 = vpack.c.b16 %v6294, %v6293
      %v6319 = vpack.c.b16 %v6296, %v6295
      %v6320 = vpack.c.b16 %v6298, %v6297
      %v6321 = vpack.c.b16 %v6300, %v6299
      %v6322 = vpack.c.b16 %v6302, %v6301
      %v6323 = vpack.c.b16 %v6304, %v6303
      %v6324 = vpack.c.b16 %v6306, %v6305
      %v6325 = vpack.c.b16 %v6308, %v6307
      %v6326 = vpack.c.b16 %v6310, %v6309
      %6327 = vrot.lane.b32.xlu0 %v6311, 8
      %v6328 = vpop.permute.xlu0 %6327
      %6329 = vrot.lane.b32.xlu0 %v6312, 8
      %v6330 = vpop.permute.xlu0 %6329
      %6331 = vrot.lane.b32.xlu0 %v6313, 8
      %v6332 = vpop.permute.xlu0 %6331
      %6333 = vrot.lane.b32.xlu0 %v6314, 8
      %v6334 = vpop.permute.xlu0 %6333
      %6335 = vrot.lane.b32.xlu0 %v6315, 8
      %v6336 = vpop.permute.xlu0 %6335
      %6337 = vrot.lane.b32.xlu0 %v6316, 8
      %v6338 = vpop.permute.xlu0 %6337
      %6339 = vrot.lane.b32.xlu0 %v6317, 8
      %v6340 = vpop.permute.xlu0 %6339
      %6341 = vrot.lane.b32.xlu0 %v6318, 8
      %v6342 = vpop.permute.xlu0 %6341
      %6343 = vrot.lane.b32.xlu0 %v6319, 8
      %v6344 = vpop.permute.xlu0 %6343
      %6345 = vrot.lane.b32.xlu0 %v6320, 8
      %v6346 = vpop.permute.xlu0 %6345
      %6347 = vrot.lane.b32.xlu0 %v6321, 8
      %v6348 = vpop.permute.xlu0 %6347
      %6349 = vrot.lane.b32.xlu0 %v6322, 8
      %v6350 = vpop.permute.xlu0 %6349
      %6351 = vrot.lane.b32.xlu0 %v6323, 8
      %v6352 = vpop.permute.xlu0 %6351
      %6353 = vrot.lane.b32.xlu0 %v6324, 8
      %v6354 = vpop.permute.xlu0 %6353
      %6355 = vrot.lane.b32.xlu0 %v6325, 8
      %v6356 = vpop.permute.xlu0 %6355
      %6357 = vrot.lane.b32.xlu0 %v6326, 8
      %v6358 = vpop.permute.xlu0 %6357
      %6375 = vst.msk [vmem:[#allocation3] sm:$0xff] %vm1830, %v6328
      %6376 = vst.msk [vmem:[#allocation3 + $0x8] sm:$0xff] %vm1830, %v6330
      %6377 = vst.msk [vmem:[#allocation3 + $0x10] sm:$0xff] %vm1830, %v6332
      %6378 = vst.msk [vmem:[#allocation3 + $0x18] sm:$0xff] %vm1830, %v6334
      %6379 = vst.msk [vmem:[#allocation3 + $0x20] sm:$0xff] %vm1830, %v6336
      %6380 = vst.msk [vmem:[#allocation3 + $0x28] sm:$0xff] %vm1830, %v6338
      %6381 = vst.msk [vmem:[#allocation3 + $0x30] sm:$0xff] %vm1830, %v6340
      %6382 = vst.msk [vmem:[#allocation3 + $0x38] sm:$0xff] %vm1830, %v6342
      %6383 = vst.msk [vmem:[#allocation3 + $0x40] sm:$0xff] %vm1830, %v6344
      %6384 = vst.msk [vmem:[#allocation3 + $0x48] sm:$0xff] %vm1830, %v6346
      %6385 = vst.msk [vmem:[#allocation3 + $0x50] sm:$0xff] %vm1830, %v6348
      %6386 = vst.msk [vmem:[#allocation3 + $0x58] sm:$0xff] %vm1830, %v6350
      %6387 = vst.msk [vmem:[#allocation3 + $0x60] sm:$0xff] %vm1830, %v6352
      %6388 = vst.msk [vmem:[#allocation3 + $0x68] sm:$0xff] %vm1830, %v6354
      %6389 = vst.msk [vmem:[#allocation3 + $0x70] sm:$0xff] %vm1830, %v6356
      %6390 = vst.msk [vmem:[#allocation3 + $0x78] sm:$0xff] %vm1830, %v6358
      %v6391 = vld [vmem:[#allocation2] sm:$0xe]
      %v6392 = vld [vmem:[#allocation2 + $0x4] sm:$0xf]
      %v6393 = vld [vmem:[#allocation2 + $0x8] sm:$0x1]
      %v6394 = vld [vmem:[#allocation2 + $0xc] sm:$0xe]
      %v6395 = vld [vmem:[#allocation2 + $0x10] sm:$0xf]
      %v6396 = vld [vmem:[#allocation2 + $0x14] sm:$0x1]
      %v6397 = vld [vmem:[#allocation2 + $0x18] sm:$0xe]
      %v6398 = vld [vmem:[#allocation2 + $0x1c] sm:$0xf]
      %v6399 = vld [vmem:[#allocation2 + $0x20] sm:$0x1]
      %v6400 = vld [vmem:[#allocation2 + $0x24] sm:$0xe]
      %v6401 = vld [vmem:[#allocation2 + $0x28] sm:$0xf]
      %v6402 = vld [vmem:[#allocation2 + $0x2c] sm:$0x1]
      %v6403 = vld [vmem:[#allocation2 + $0x30] sm:$0xe]
      %v6404 = vld [vmem:[#allocation2 + $0x34] sm:$0xf]
      %v6405 = vld [vmem:[#allocation2 + $0x38] sm:$0x1]
      %v6406 = vld [vmem:[#allocation2 + $0x3c] sm:$0xe]
      %v6407 = vld [vmem:[#allocation2 + $0x40] sm:$0xf]
      %v6408 = vld [vmem:[#allocation2 + $0x44] sm:$0x1]
      %v6409 = vld [vmem:[#allocation2 + $0x48] sm:$0xe]
      %v6410 = vld [vmem:[#allocation2 + $0x4c] sm:$0xf]
      %v6411 = vld [vmem:[#allocation2 + $0x50] sm:$0x1]
      %v6412 = vld [vmem:[#allocation2 + $0x54] sm:$0xe]
      %v6413 = vld [vmem:[#allocation2 + $0x58] sm:$0xf]
      %v6414 = vld [vmem:[#allocation2 + $0x5c] sm:$0x1]
      %v6415 = vld [vmem:[#allocation2 + $0x60] sm:$0xe]
      %v6416 = vld [vmem:[#allocation2 + $0x64] sm:$0xf]
      %v6417 = vld [vmem:[#allocation2 + $0x68] sm:$0x1]
      %v6418 = vld [vmem:[#allocation2 + $0x6c] sm:$0xe]
      %v6419 = vld [vmem:[#allocation2 + $0x70] sm:$0xf]
      %v6420 = vld [vmem:[#allocation2 + $0x74] sm:$0x1]
      %v6421 = vld [vmem:[#allocation2 + $0x78] sm:$0xe]
      %v6422 = vld [vmem:[#allocation2 + $0x7c] sm:$0xf]
      %v6423 = vld [vmem:[#allocation2 + $0x80] sm:$0x1]
      %v6424 = vld [vmem:[#allocation2 + $0x84] sm:$0xe]
      %v6425 = vld [vmem:[#allocation2 + $0x88] sm:$0xf]
      %v6426 = vld [vmem:[#allocation2 + $0x8c] sm:$0x1]
      %v6427 = vld [vmem:[#allocation2 + $0x90] sm:$0xe]
      %v6428 = vld [vmem:[#allocation2 + $0x94] sm:$0xf]
      %v6429 = vld [vmem:[#allocation2 + $0x98] sm:$0x1]
      %v6430 = vld [vmem:[#allocation2 + $0x9c] sm:$0xe]
      %v6431 = vld [vmem:[#allocation2 + $0xa0] sm:$0xf]
      %v6432 = vld [vmem:[#allocation2 + $0xa4] sm:$0x1]
      %v6433 = vld [vmem:[#allocation2 + $0xa8] sm:$0xe]
      %v6434 = vld [vmem:[#allocation2 + $0xac] sm:$0xf]
      %v6435 = vld [vmem:[#allocation2 + $0xb0] sm:$0x1]
      %v6436 = vld [vmem:[#allocation2 + $0xb4] sm:$0xe]
      %v6437 = vld [vmem:[#allocation2 + $0xb8] sm:$0xf]
      %v6438 = vld [vmem:[#allocation2 + $0xbc] sm:$0x1]
      %v6487 = vrot.slane %v6391, 5
      %v6488 = vrot.slane %v6487, 4
      %v6489 = vrot.slane %v6392, 5
      %v6490 = vsel %vm1945, %v6488, %v6489
      %v6491 = vrot.slane %v6489, 4
      %v6492 = vrot.slane %v6393, 5
      %v6493 = vsel %vm1945, %v6491, %v6492
      %v6494 = vrot.slane %v6394, 5
      %v6495 = vrot.slane %v6494, 4
      %v6496 = vrot.slane %v6395, 5
      %v6497 = vsel %vm1945, %v6495, %v6496
      %v6498 = vrot.slane %v6496, 4
      %v6499 = vrot.slane %v6396, 5
      %v6500 = vsel %vm1945, %v6498, %v6499
      %v6501 = vrot.slane %v6397, 5
      %v6502 = vrot.slane %v6501, 4
      %v6503 = vrot.slane %v6398, 5
      %v6504 = vsel %vm1945, %v6502, %v6503
      %v6505 = vrot.slane %v6503, 4
      %v6506 = vrot.slane %v6399, 5
      %v6507 = vsel %vm1945, %v6505, %v6506
      %v6508 = vrot.slane %v6400, 5
      %v6509 = vrot.slane %v6508, 4
      %v6510 = vrot.slane %v6401, 5
      %v6511 = vsel %vm1945, %v6509, %v6510
      %v6512 = vrot.slane %v6510, 4
      %v6513 = vrot.slane %v6402, 5
      %v6514 = vsel %vm1945, %v6512, %v6513
      %v6515 = vrot.slane %v6403, 5
      %v6516 = vrot.slane %v6515, 4
      %v6517 = vrot.slane %v6404, 5
      %v6518 = vsel %vm1945, %v6516, %v6517
      %v6519 = vrot.slane %v6517, 4
      %v6520 = vrot.slane %v6405, 5
      %v6521 = vsel %vm1945, %v6519, %v6520
      %v6522 = vrot.slane %v6406, 5
      %v6523 = vrot.slane %v6522, 4
      %v6524 = vrot.slane %v6407, 5
      %v6525 = vsel %vm1945, %v6523, %v6524
      %v6526 = vrot.slane %v6524, 4
      %v6527 = vrot.slane %v6408, 5
      %v6528 = vsel %vm1945, %v6526, %v6527
      %v6529 = vrot.slane %v6409, 5
      %v6530 = vrot.slane %v6529, 4
      %v6531 = vrot.slane %v6410, 5
      %v6532 = vsel %vm1945, %v6530, %v6531
      %v6533 = vrot.slane %v6531, 4
      %v6534 = vrot.slane %v6411, 5
      %v6535 = vsel %vm1945, %v6533, %v6534
      %v6536 = vrot.slane %v6412, 5
      %v6537 = vrot.slane %v6536, 4
      %v6538 = vrot.slane %v6413, 5
      %v6539 = vsel %vm1945, %v6537, %v6538
      %v6540 = vrot.slane %v6538, 4
      %v6541 = vrot.slane %v6414, 5
      %v6542 = vsel %vm1945, %v6540, %v6541
      %v6543 = vrot.slane %v6415, 5
      %v6544 = vrot.slane %v6543, 4
      %v6545 = vrot.slane %v6416, 5
      %v6546 = vsel %vm1945, %v6544, %v6545
      %v6547 = vrot.slane %v6545, 4
      %v6548 = vrot.slane %v6417, 5
      %v6549 = vsel %vm1945, %v6547, %v6548
      %v6550 = vrot.slane %v6418, 5
      %v6551 = vrot.slane %v6550, 4
      %v6552 = vrot.slane %v6419, 5
      %v6553 = vsel %vm1945, %v6551, %v6552
      %v6554 = vrot.slane %v6552, 4
      %v6555 = vrot.slane %v6420, 5
      %v6556 = vsel %vm1945, %v6554, %v6555
      %v6557 = vrot.slane %v6421, 5
      %v6558 = vrot.slane %v6557, 4
      %v6559 = vrot.slane %v6422, 5
      %v6560 = vsel %vm1945, %v6558, %v6559
      %v6561 = vrot.slane %v6559, 4
      %v6562 = vrot.slane %v6423, 5
      %v6563 = vsel %vm1945, %v6561, %v6562
      %v6564 = vrot.slane %v6424, 5
      %v6565 = vrot.slane %v6564, 4
      %v6566 = vrot.slane %v6425, 5
      %v6567 = vsel %vm1945, %v6565, %v6566
      %v6568 = vrot.slane %v6566, 4
      %v6569 = vrot.slane %v6426, 5
      %v6570 = vsel %vm1945, %v6568, %v6569
      %v6571 = vrot.slane %v6427, 5
      %v6572 = vrot.slane %v6571, 4
      %v6573 = vrot.slane %v6428, 5
      %v6574 = vsel %vm1945, %v6572, %v6573
      %v6575 = vrot.slane %v6573, 4
      %v6576 = vrot.slane %v6429, 5
      %v6577 = vsel %vm1945, %v6575, %v6576
      %v6578 = vrot.slane %v6430, 5
      %v6579 = vrot.slane %v6578, 4
      %v6580 = vrot.slane %v6431, 5
      %v6581 = vsel %vm1945, %v6579, %v6580
      %v6582 = vrot.slane %v6580, 4
      %v6583 = vrot.slane %v6432, 5
      %v6584 = vsel %vm1945, %v6582, %v6583
      %v6585 = vrot.slane %v6433, 5
      %v6586 = vrot.slane %v6585, 4
      %v6587 = vrot.slane %v6434, 5
      %v6588 = vsel %vm1945, %v6586, %v6587
      %v6589 = vrot.slane %v6587, 4
      %v6590 = vrot.slane %v6435, 5
      %v6591 = vsel %vm1945, %v6589, %v6590
      %v6592 = vrot.slane %v6436, 5
      %v6593 = vrot.slane %v6592, 4
      %v6594 = vrot.slane %v6437, 5
      %v6595 = vsel %vm1945, %v6593, %v6594
      %v6596 = vrot.slane %v6594, 4
      %v6597 = vrot.slane %v6438, 5
      %v6598 = vsel %vm1945, %v6596, %v6597
      %v6599 = vunpack.c.l.b16 %v6490
      %v6600 = vunpack.c.l.b16 %v6493
      %v6601 = vunpack.c.l.b16 %v6497
      %v6602 = vunpack.c.l.b16 %v6500
      %v6603 = vunpack.c.l.b16 %v6504
      %v6604 = vunpack.c.l.b16 %v6507
      %v6605 = vunpack.c.l.b16 %v6511
      %v6606 = vunpack.c.l.b16 %v6514
      %v6607 = vunpack.c.l.b16 %v6518
      %v6608 = vunpack.c.l.b16 %v6521
      %v6609 = vunpack.c.l.b16 %v6525
      %v6610 = vunpack.c.l.b16 %v6528
      %v6611 = vunpack.c.l.b16 %v6532
      %v6612 = vunpack.c.l.b16 %v6535
      %v6613 = vunpack.c.l.b16 %v6539
      %v6614 = vunpack.c.l.b16 %v6542
      %v6615 = vunpack.c.l.b16 %v6546
      %v6616 = vunpack.c.l.b16 %v6549
      %v6617 = vunpack.c.l.b16 %v6553
      %v6618 = vunpack.c.l.b16 %v6556
      %v6619 = vunpack.c.l.b16 %v6560
      %v6620 = vunpack.c.l.b16 %v6563
      %v6621 = vunpack.c.l.b16 %v6567
      %v6622 = vunpack.c.l.b16 %v6570
      %v6623 = vunpack.c.l.b16 %v6574
      %v6624 = vunpack.c.l.b16 %v6577
      %v6625 = vunpack.c.l.b16 %v6581
      %v6626 = vunpack.c.l.b16 %v6584
      %v6627 = vunpack.c.l.b16 %v6588
      %v6628 = vunpack.c.l.b16 %v6591
      %v6629 = vunpack.c.l.b16 %v6595
      %v6630 = vunpack.c.l.b16 %v6598
      %v6631 = vpack.c.b16 %v6600, %v6599
      %v6632 = vpack.c.b16 %v6602, %v6601
      %v6633 = vpack.c.b16 %v6604, %v6603
      %v6634 = vpack.c.b16 %v6606, %v6605
      %v6635 = vpack.c.b16 %v6608, %v6607
      %v6636 = vpack.c.b16 %v6610, %v6609
      %v6637 = vpack.c.b16 %v6612, %v6611
      %v6638 = vpack.c.b16 %v6614, %v6613
      %v6639 = vpack.c.b16 %v6616, %v6615
      %v6640 = vpack.c.b16 %v6618, %v6617
      %v6641 = vpack.c.b16 %v6620, %v6619
      %v6642 = vpack.c.b16 %v6622, %v6621
      %v6643 = vpack.c.b16 %v6624, %v6623
      %v6644 = vpack.c.b16 %v6626, %v6625
      %v6645 = vpack.c.b16 %v6628, %v6627
      %v6646 = vpack.c.b16 %v6630, %v6629
      %6647 = vrot.lane.b32.xlu0 %v6631, 16
      %v6648 = vpop.permute.xlu0 %6647
      %6649 = vrot.lane.b32.xlu0 %v6632, 16
      %v6650 = vpop.permute.xlu0 %6649
      %6651 = vrot.lane.b32.xlu0 %v6633, 16
      %v6652 = vpop.permute.xlu0 %6651
      %6653 = vrot.lane.b32.xlu0 %v6634, 16
      %v6654 = vpop.permute.xlu0 %6653
      %6655 = vrot.lane.b32.xlu0 %v6635, 16
      %v6656 = vpop.permute.xlu0 %6655
      %6657 = vrot.lane.b32.xlu0 %v6636, 16
      %v6658 = vpop.permute.xlu0 %6657
      %6659 = vrot.lane.b32.xlu0 %v6637, 16
      %v6660 = vpop.permute.xlu0 %6659
      %6661 = vrot.lane.b32.xlu0 %v6638, 16
      %v6662 = vpop.permute.xlu0 %6661
      %6663 = vrot.lane.b32.xlu0 %v6639, 16
      %v6664 = vpop.permute.xlu0 %6663
      %6665 = vrot.lane.b32.xlu0 %v6640, 16
      %v6666 = vpop.permute.xlu0 %6665
      %6667 = vrot.lane.b32.xlu0 %v6641, 16
      %v6668 = vpop.permute.xlu0 %6667
      %6669 = vrot.lane.b32.xlu0 %v6642, 16
      %v6670 = vpop.permute.xlu0 %6669
      %6671 = vrot.lane.b32.xlu0 %v6643, 16
      %v6672 = vpop.permute.xlu0 %6671
      %6673 = vrot.lane.b32.xlu0 %v6644, 16
      %v6674 = vpop.permute.xlu0 %6673
      %6675 = vrot.lane.b32.xlu0 %v6645, 16
      %v6676 = vpop.permute.xlu0 %6675
      %6677 = vrot.lane.b32.xlu0 %v6646, 16
      %v6678 = vpop.permute.xlu0 %6677
      %6695 = vst.msk [vmem:[#allocation3] sm:$0xff] %vm2154, %v6648
      %6696 = vst.msk [vmem:[#allocation3 + $0x8] sm:$0xff] %vm2154, %v6650
      %6697 = vst.msk [vmem:[#allocation3 + $0x10] sm:$0xff] %vm2154, %v6652
      %6698 = vst.msk [vmem:[#allocation3 + $0x18] sm:$0xff] %vm2154, %v6654
      %6699 = vst.msk [vmem:[#allocation3 + $0x20] sm:$0xff] %vm2154, %v6656
      %6700 = vst.msk [vmem:[#allocation3 + $0x28] sm:$0xff] %vm2154, %v6658
      %6701 = vst.msk [vmem:[#allocation3 + $0x30] sm:$0xff] %vm2154, %v6660
      %6702 = vst.msk [vmem:[#allocation3 + $0x38] sm:$0xff] %vm2154, %v6662
      %6703 = vst.msk [vmem:[#allocation3 + $0x40] sm:$0xff] %vm2154, %v6664
      %6704 = vst.msk [vmem:[#allocation3 + $0x48] sm:$0xff] %vm2154, %v6666
      %6705 = vst.msk [vmem:[#allocation3 + $0x50] sm:$0xff] %vm2154, %v6668
      %6706 = vst.msk [vmem:[#allocation3 + $0x58] sm:$0xff] %vm2154, %v6670
      %6707 = vst.msk [vmem:[#allocation3 + $0x60] sm:$0xff] %vm2154, %v6672
      %6708 = vst.msk [vmem:[#allocation3 + $0x68] sm:$0xff] %vm2154, %v6674
      %6709 = vst.msk [vmem:[#allocation3 + $0x70] sm:$0xff] %vm2154, %v6676
      %6710 = vst.msk [vmem:[#allocation3 + $0x78] sm:$0xff] %vm2154, %v6678
      %v6711 = vld [vmem:[%s731] sm:$0xf]
      %v6712 = vld [vmem:[%s731 + $0x4] sm:$0xf]
      %v6713 = vld [vmem:[%s731 + $0xc] sm:$0xf]
      %v6714 = vld [vmem:[%s731 + $0x10] sm:$0xf]
      %v6715 = vld [vmem:[%s731 + $0x18] sm:$0xf]
      %v6716 = vld [vmem:[%s731 + $0x1c] sm:$0xf]
      %v6717 = vld [vmem:[%s731 + $0x24] sm:$0xf]
      %v6718 = vld [vmem:[%s731 + $0x28] sm:$0xf]
      %v6719 = vld [vmem:[%s731 + $0x30] sm:$0xf]
      %v6720 = vld [vmem:[%s731 + $0x34] sm:$0xf]
      %v6721 = vld [vmem:[%s731 + $0x3c] sm:$0xf]
      %v6722 = vld [vmem:[%s731 + $0x40] sm:$0xf]
      %v6723 = vld [vmem:[%s731 + $0x48] sm:$0xf]
      %v6724 = vld [vmem:[%s731 + $0x4c] sm:$0xf]
      %v6725 = vld [vmem:[%s731 + $0x54] sm:$0xf]
      %v6726 = vld [vmem:[%s731 + $0x58] sm:$0xf]
      %v6727 = vld [vmem:[%s731 + $0x60] sm:$0xf]
      %v6728 = vld [vmem:[%s731 + $0x64] sm:$0xf]
      %v6729 = vld [vmem:[%s731 + $0x6c] sm:$0xf]
      %v6730 = vld [vmem:[%s731 + $0x70] sm:$0xf]
      %v6731 = vld [vmem:[%s731 + $0x78] sm:$0xf]
      %v6732 = vld [vmem:[%s731 + $0x7c] sm:$0xf]
      %v6733 = vld [vmem:[%s731 + $0x84] sm:$0xf]
      %v6734 = vld [vmem:[%s731 + $0x88] sm:$0xf]
      %v6735 = vld [vmem:[%s731 + $0x90] sm:$0xf]
      %v6736 = vld [vmem:[%s731 + $0x94] sm:$0xf]
      %v6737 = vld [vmem:[%s731 + $0x9c] sm:$0xf]
      %v6738 = vld [vmem:[%s731 + $0xa0] sm:$0xf]
      %v6739 = vld [vmem:[%s731 + $0xa8] sm:$0xf]
      %v6740 = vld [vmem:[%s731 + $0xac] sm:$0xf]
      %v6741 = vld [vmem:[%s731 + $0xb4] sm:$0xf]
      %v6742 = vld [vmem:[%s731 + $0xb8] sm:$0xf]
      %v6775 = vunpack.c.l.b16 %v6711
      %v6776 = vunpack.c.l.b16 %v6712
      %v6777 = vunpack.c.l.b16 %v6713
      %v6778 = vunpack.c.l.b16 %v6714
      %v6779 = vunpack.c.l.b16 %v6715
      %v6780 = vunpack.c.l.b16 %v6716
      %v6781 = vunpack.c.l.b16 %v6717
      %v6782 = vunpack.c.l.b16 %v6718
      %v6783 = vunpack.c.l.b16 %v6719
      %v6784 = vunpack.c.l.b16 %v6720
      %v6785 = vunpack.c.l.b16 %v6721
      %v6786 = vunpack.c.l.b16 %v6722
      %v6787 = vunpack.c.l.b16 %v6723
      %v6788 = vunpack.c.l.b16 %v6724
      %v6789 = vunpack.c.l.b16 %v6725
      %v6790 = vunpack.c.l.b16 %v6726
      %v6791 = vunpack.c.l.b16 %v6727
      %v6792 = vunpack.c.l.b16 %v6728
      %v6793 = vunpack.c.l.b16 %v6729
      %v6794 = vunpack.c.l.b16 %v6730
      %v6795 = vunpack.c.l.b16 %v6731
      %v6796 = vunpack.c.l.b16 %v6732
      %v6797 = vunpack.c.l.b16 %v6733
      %v6798 = vunpack.c.l.b16 %v6734
      %v6799 = vunpack.c.l.b16 %v6735
      %v6800 = vunpack.c.l.b16 %v6736
      %v6801 = vunpack.c.l.b16 %v6737
      %v6802 = vunpack.c.l.b16 %v6738
      %v6803 = vunpack.c.l.b16 %v6739
      %v6804 = vunpack.c.l.b16 %v6740
      %v6805 = vunpack.c.l.b16 %v6741
      %v6806 = vunpack.c.l.b16 %v6742
      %v6807 = vpack.c.b16 %v6776, %v6775
      %v6808 = vpack.c.b16 %v6778, %v6777
      %v6809 = vpack.c.b16 %v6780, %v6779
      %v6810 = vpack.c.b16 %v6782, %v6781
      %v6811 = vpack.c.b16 %v6784, %v6783
      %v6812 = vpack.c.b16 %v6786, %v6785
      %v6813 = vpack.c.b16 %v6788, %v6787
      %v6814 = vpack.c.b16 %v6790, %v6789
      %v6815 = vpack.c.b16 %v6792, %v6791
      %v6816 = vpack.c.b16 %v6794, %v6793
      %v6817 = vpack.c.b16 %v6796, %v6795
      %v6818 = vpack.c.b16 %v6798, %v6797
      %v6819 = vpack.c.b16 %v6800, %v6799
      %v6820 = vpack.c.b16 %v6802, %v6801
      %v6821 = vpack.c.b16 %v6804, %v6803
      %v6822 = vpack.c.b16 %v6806, %v6805
      %6823 = vrot.lane.b32.xlu0 %v6807, 24
      %v6824 = vpop.permute.xlu0 %6823
      %6825 = vrot.lane.b32.xlu0 %v6808, 24
      %v6826 = vpop.permute.xlu0 %6825
      %6827 = vrot.lane.b32.xlu0 %v6809, 24
      %v6828 = vpop.permute.xlu0 %6827
      %6829 = vrot.lane.b32.xlu0 %v6810, 24
      %v6830 = vpop.permute.xlu0 %6829
      %6831 = vrot.lane.b32.xlu0 %v6811, 24
      %v6832 = vpop.permute.xlu0 %6831
      %6833 = vrot.lane.b32.xlu0 %v6812, 24
      %v6834 = vpop.permute.xlu0 %6833
      %6835 = vrot.lane.b32.xlu0 %v6813, 24
      %v6836 = vpop.permute.xlu0 %6835
      %6837 = vrot.lane.b32.xlu0 %v6814, 24
      %v6838 = vpop.permute.xlu0 %6837
      %6839 = vrot.lane.b32.xlu0 %v6815, 24
      %v6840 = vpop.permute.xlu0 %6839
      %6841 = vrot.lane.b32.xlu0 %v6816, 24
      %v6842 = vpop.permute.xlu0 %6841
      %6843 = vrot.lane.b32.xlu0 %v6817, 24
      %v6844 = vpop.permute.xlu0 %6843
      %6845 = vrot.lane.b32.xlu0 %v6818, 24
      %v6846 = vpop.permute.xlu0 %6845
      %6847 = vrot.lane.b32.xlu0 %v6819, 24
      %v6848 = vpop.permute.xlu0 %6847
      %6849 = vrot.lane.b32.xlu0 %v6820, 24
      %v6850 = vpop.permute.xlu0 %6849
      %6851 = vrot.lane.b32.xlu0 %v6821, 24
      %v6852 = vpop.permute.xlu0 %6851
      %6853 = vrot.lane.b32.xlu0 %v6822, 24
      %v6854 = vpop.permute.xlu0 %6853
      %6871 = vst.msk [vmem:[#allocation3] sm:$0xff] %vm2331, %v6824
      %6872 = vst.msk [vmem:[#allocation3 + $0x8] sm:$0xff] %vm2331, %v6826
      %6873 = vst.msk [vmem:[#allocation3 + $0x10] sm:$0xff] %vm2331, %v6828
      %6874 = vst.msk [vmem:[#allocation3 + $0x18] sm:$0xff] %vm2331, %v6830
      %6875 = vst.msk [vmem:[#allocation3 + $0x20] sm:$0xff] %vm2331, %v6832
      %6876 = vst.msk [vmem:[#allocation3 + $0x28] sm:$0xff] %vm2331, %v6834
      %6877 = vst.msk [vmem:[#allocation3 + $0x30] sm:$0xff] %vm2331, %v6836
      %6878 = vst.msk [vmem:[#allocation3 + $0x38] sm:$0xff] %vm2331, %v6838
      %6879 = vst.msk [vmem:[#allocation3 + $0x40] sm:$0xff] %vm2331, %v6840
      %6880 = vst.msk [vmem:[#allocation3 + $0x48] sm:$0xff] %vm2331, %v6842
      %6881 = vst.msk [vmem:[#allocation3 + $0x50] sm:$0xff] %vm2331, %v6844
      %6882 = vst.msk [vmem:[#allocation3 + $0x58] sm:$0xff] %vm2331, %v6846
      %6883 = vst.msk [vmem:[#allocation3 + $0x60] sm:$0xff] %vm2331, %v6848
      %6884 = vst.msk [vmem:[#allocation3 + $0x68] sm:$0xff] %vm2331, %v6850
      %6885 = vst.msk [vmem:[#allocation3 + $0x70] sm:$0xff] %vm2331, %v6852
      %6886 = vst.msk [vmem:[#allocation3 + $0x78] sm:$0xff] %vm2331, %v6854
      %v6887 = vld [vmem:[%s731] sm:$0xf]
      %v6888 = vld [vmem:[%s731 + $0x4] sm:$0xf]
      %v6889 = vld [vmem:[%s731 + $0x8] sm:$0x1]
      %v6890 = vld [vmem:[%s731 + $0xc] sm:$0xf]
      %v6891 = vld [vmem:[%s731 + $0x10] sm:$0xf]
      %v6892 = vld [vmem:[%s731 + $0x14] sm:$0x1]
      %v6893 = vld [vmem:[%s731 + $0x18] sm:$0xf]
      %v6894 = vld [vmem:[%s731 + $0x1c] sm:$0xf]
      %v6895 = vld [vmem:[%s731 + $0x20] sm:$0x1]
      %v6896 = vld [vmem:[%s731 + $0x24] sm:$0xf]
      %v6897 = vld [vmem:[%s731 + $0x28] sm:$0xf]
      %v6898 = vld [vmem:[%s731 + $0x2c] sm:$0x1]
      %v6899 = vld [vmem:[%s731 + $0x30] sm:$0xf]
      %v6900 = vld [vmem:[%s731 + $0x34] sm:$0xf]
      %v6901 = vld [vmem:[%s731 + $0x38] sm:$0x1]
      %v6902 = vld [vmem:[%s731 + $0x3c] sm:$0xf]
      %v6903 = vld [vmem:[%s731 + $0x40] sm:$0xf]
      %v6904 = vld [vmem:[%s731 + $0x44] sm:$0x1]
      %v6905 = vld [vmem:[%s731 + $0x48] sm:$0xf]
      %v6906 = vld [vmem:[%s731 + $0x4c] sm:$0xf]
      %v6907 = vld [vmem:[%s731 + $0x50] sm:$0x1]
      %v6908 = vld [vmem:[%s731 + $0x54] sm:$0xf]
      %v6909 = vld [vmem:[%s731 + $0x58] sm:$0xf]
      %v6910 = vld [vmem:[%s731 + $0x5c] sm:$0x1]
      %v6911 = vld [vmem:[%s731 + $0x60] sm:$0xf]
      %v6912 = vld [vmem:[%s731 + $0x64] sm:$0xf]
      %v6913 = vld [vmem:[%s731 + $0x68] sm:$0x1]
      %v6914 = vld [vmem:[%s731 + $0x6c] sm:$0xf]
      %v6915 = vld [vmem:[%s731 + $0x70] sm:$0xf]
      %v6916 = vld [vmem:[%s731 + $0x74] sm:$0x1]
      %v6917 = vld [vmem:[%s731 + $0x78] sm:$0xf]
      %v6918 = vld [vmem:[%s731 + $0x7c] sm:$0xf]
      %v6919 = vld [vmem:[%s731 + $0x80] sm:$0x1]
      %v6920 = vld [vmem:[%s731 + $0x84] sm:$0xf]
      %v6921 = vld [vmem:[%s731 + $0x88] sm:$0xf]
      %v6922 = vld [vmem:[%s731 + $0x8c] sm:$0x1]
      %v6923 = vld [vmem:[%s731 + $0x90] sm:$0xf]
      %v6924 = vld [vmem:[%s731 + $0x94] sm:$0xf]
      %v6925 = vld [vmem:[%s731 + $0x98] sm:$0x1]
      %v6926 = vld [vmem:[%s731 + $0x9c] sm:$0xf]
      %v6927 = vld [vmem:[%s731 + $0xa0] sm:$0xf]
      %v6928 = vld [vmem:[%s731 + $0xa4] sm:$0x1]
      %v6929 = vld [vmem:[%s731 + $0xa8] sm:$0xf]
      %v6930 = vld [vmem:[%s731 + $0xac] sm:$0xf]
      %v6931 = vld [vmem:[%s731 + $0xb0] sm:$0x1]
      %v6932 = vld [vmem:[%s731 + $0xb4] sm:$0xf]
      %v6933 = vld [vmem:[%s731 + $0xb8] sm:$0xf]
      %v6934 = vld [vmem:[%s731 + $0xbc] sm:$0x1]
      %v6936 = vshrl.u32 %v6887, 16
      %v6938 = vrot.slane %v6936, 4
      %v6939 = vshll.u32 %v6887, 16
      %v6941 = vrot.slane %v6939, 5
      %v6942 = vor.u32 %v6938, %v6941
      %v6943 = vrot.slane %v6942, 4
      %v6945 = vshll.u32 %v6888, 16
      %v6947 = vrot.slane %v6945, 5
      %v6948 = vsel %vm1349, %v6943, %v6947
      %v6949 = vshrl.u32 %v6888, 16
      %v6951 = vrot.slane %v6949, 4
      %v6952 = vor.u32 %v6951, %v6947
      %v6953 = vrot.slane %v6952, 4
      %v6955 = vshll.u32 %v6889, 16
      %v6957 = vrot.slane %v6955, 5
      %v6958 = vsel %vm1349, %v6953, %v6957
      %v6960 = vshrl.u32 %v6890, 16
      %v6962 = vrot.slane %v6960, 4
      %v6963 = vshll.u32 %v6890, 16
      %v6965 = vrot.slane %v6963, 5
      %v6966 = vor.u32 %v6962, %v6965
      %v6967 = vrot.slane %v6966, 4
      %v6969 = vshll.u32 %v6891, 16
      %v6971 = vrot.slane %v6969, 5
      %v6972 = vsel %vm1349, %v6967, %v6971
      %v6973 = vshrl.u32 %v6891, 16
      %v6975 = vrot.slane %v6973, 4
      %v6976 = vor.u32 %v6975, %v6971
      %v6977 = vrot.slane %v6976, 4
      %v6979 = vshll.u32 %v6892, 16
      %v6981 = vrot.slane %v6979, 5
      %v6982 = vsel %vm1349, %v6977, %v6981
      %v6984 = vshrl.u32 %v6893, 16
      %v6986 = vrot.slane %v6984, 4
      %v6987 = vshll.u32 %v6893, 16
      %v6989 = vrot.slane %v6987, 5
      %v6990 = vor.u32 %v6986, %v6989
      %v6991 = vrot.slane %v6990, 4
      %v6993 = vshll.u32 %v6894, 16
      %v6995 = vrot.slane %v6993, 5
      %v6996 = vsel %vm1349, %v6991, %v6995
      %v6997 = vshrl.u32 %v6894, 16
      %v6999 = vrot.slane %v6997, 4
      %v7000 = vor.u32 %v6999, %v6995
      %v7001 = vrot.slane %v7000, 4
      %v7003 = vshll.u32 %v6895, 16
      %v7005 = vrot.slane %v7003, 5
      %v7006 = vsel %vm1349, %v7001, %v7005
      %v7008 = vshrl.u32 %v6896, 16
      %v7010 = vrot.slane %v7008, 4
      %v7011 = vshll.u32 %v6896, 16
      %v7013 = vrot.slane %v7011, 5
      %v7014 = vor.u32 %v7010, %v7013
      %v7015 = vrot.slane %v7014, 4
      %v7017 = vshll.u32 %v6897, 16
      %v7019 = vrot.slane %v7017, 5
      %v7020 = vsel %vm1349, %v7015, %v7019
      %v7021 = vshrl.u32 %v6897, 16
      %v7023 = vrot.slane %v7021, 4
      %v7024 = vor.u32 %v7023, %v7019
      %v7025 = vrot.slane %v7024, 4
      %v7027 = vshll.u32 %v6898, 16
      %v7029 = vrot.slane %v7027, 5
      %v7030 = vsel %vm1349, %v7025, %v7029
      %v7032 = vshrl.u32 %v6899, 16
      %v7034 = vrot.slane %v7032, 4
      %v7035 = vshll.u32 %v6899, 16
      %v7037 = vrot.slane %v7035, 5
      %v7038 = vor.u32 %v7034, %v7037
      %v7039 = vrot.slane %v7038, 4
      %v7041 = vshll.u32 %v6900, 16
      %v7043 = vrot.slane %v7041, 5
      %v7044 = vsel %vm1349, %v7039, %v7043
      %v7045 = vshrl.u32 %v6900, 16
      %v7047 = vrot.slane %v7045, 4
      %v7048 = vor.u32 %v7047, %v7043
      %v7049 = vrot.slane %v7048, 4
      %v7051 = vshll.u32 %v6901, 16
      %v7053 = vrot.slane %v7051, 5
      %v7054 = vsel %vm1349, %v7049, %v7053
      %v7056 = vshrl.u32 %v6902, 16
      %v7058 = vrot.slane %v7056, 4
      %v7059 = vshll.u32 %v6902, 16
      %v7061 = vrot.slane %v7059, 5
      %v7062 = vor.u32 %v7058, %v7061
      %v7063 = vrot.slane %v7062, 4
      %v7065 = vshll.u32 %v6903, 16
      %v7067 = vrot.slane %v7065, 5
      %v7068 = vsel %vm1349, %v7063, %v7067
      %v7069 = vshrl.u32 %v6903, 16
      %v7071 = vrot.slane %v7069, 4
      %v7072 = vor.u32 %v7071, %v7067
      %v7073 = vrot.slane %v7072, 4
      %v7075 = vshll.u32 %v6904, 16
      %v7077 = vrot.slane %v7075, 5
      %v7078 = vsel %vm1349, %v7073, %v7077
      %v7080 = vshrl.u32 %v6905, 16
      %v7082 = vrot.slane %v7080, 4
      %v7083 = vshll.u32 %v6905, 16
      %v7085 = vrot.slane %v7083, 5
      %v7086 = vor.u32 %v7082, %v7085
      %v7087 = vrot.slane %v7086, 4
      %v7089 = vshll.u32 %v6906, 16
      %v7091 = vrot.slane %v7089, 5
      %v7092 = vsel %vm1349, %v7087, %v7091
      %v7093 = vshrl.u32 %v6906, 16
      %v7095 = vrot.slane %v7093, 4
      %v7096 = vor.u32 %v7095, %v7091
      %v7097 = vrot.slane %v7096, 4
      %v7099 = vshll.u32 %v6907, 16
      %v7101 = vrot.slane %v7099, 5
      %v7102 = vsel %vm1349, %v7097, %v7101
      %v7104 = vshrl.u32 %v6908, 16
      %v7106 = vrot.slane %v7104, 4
      %v7107 = vshll.u32 %v6908, 16
      %v7109 = vrot.slane %v7107, 5
      %v7110 = vor.u32 %v7106, %v7109
      %v7111 = vrot.slane %v7110, 4
      %v7113 = vshll.u32 %v6909, 16
      %v7115 = vrot.slane %v7113, 5
      %v7116 = vsel %vm1349, %v7111, %v7115
      %v7117 = vshrl.u32 %v6909, 16
      %v7119 = vrot.slane %v7117, 4
      %v7120 = vor.u32 %v7119, %v7115
      %v7121 = vrot.slane %v7120, 4
      %v7123 = vshll.u32 %v6910, 16
      %v7125 = vrot.slane %v7123, 5
      %v7126 = vsel %vm1349, %v7121, %v7125
      %v7128 = vshrl.u32 %v6911, 16
      %v7130 = vrot.slane %v7128, 4
      %v7131 = vshll.u32 %v6911, 16
      %v7133 = vrot.slane %v7131, 5
      %v7134 = vor.u32 %v7130, %v7133
      %v7135 = vrot.slane %v7134, 4
      %v7137 = vshll.u32 %v6912, 16
      %v7139 = vrot.slane %v7137, 5
      %v7140 = vsel %vm1349, %v7135, %v7139
      %v7141 = vshrl.u32 %v6912, 16
      %v7143 = vrot.slane %v7141, 4
      %v7144 = vor.u32 %v7143, %v7139
      %v7145 = vrot.slane %v7144, 4
      %v7147 = vshll.u32 %v6913, 16
      %v7149 = vrot.slane %v7147, 5
      %v7150 = vsel %vm1349, %v7145, %v7149
      %v7152 = vshrl.u32 %v6914, 16
      %v7154 = vrot.slane %v7152, 4
      %v7155 = vshll.u32 %v6914, 16
      %v7157 = vrot.slane %v7155, 5
      %v7158 = vor.u32 %v7154, %v7157
      %v7159 = vrot.slane %v7158, 4
      %v7161 = vshll.u32 %v6915, 16
      %v7163 = vrot.slane %v7161, 5
      %v7164 = vsel %vm1349, %v7159, %v7163
      %v7165 = vshrl.u32 %v6915, 16
      %v7167 = vrot.slane %v7165, 4
      %v7168 = vor.u32 %v7167, %v7163
      %v7169 = vrot.slane %v7168, 4
      %v7171 = vshll.u32 %v6916, 16
      %v7173 = vrot.slane %v7171, 5
      %v7174 = vsel %vm1349, %v7169, %v7173
      %v7176 = vshrl.u32 %v6917, 16
      %v7178 = vrot.slane %v7176, 4
      %v7179 = vshll.u32 %v6917, 16
      %v7181 = vrot.slane %v7179, 5
      %v7182 = vor.u32 %v7178, %v7181
      %v7183 = vrot.slane %v7182, 4
      %v7185 = vshll.u32 %v6918, 16
      %v7187 = vrot.slane %v7185, 5
      %v7188 = vsel %vm1349, %v7183, %v7187
      %v7189 = vshrl.u32 %v6918, 16
      %v7191 = vrot.slane %v7189, 4
      %v7192 = vor.u32 %v7191, %v7187
      %v7193 = vrot.slane %v7192, 4
      %v7195 = vshll.u32 %v6919, 16
      %v7197 = vrot.slane %v7195, 5
      %v7198 = vsel %vm1349, %v7193, %v7197
      %v7200 = vshrl.u32 %v6920, 16
      %v7202 = vrot.slane %v7200, 4
      %v7203 = vshll.u32 %v6920, 16
      %v7205 = vrot.slane %v7203, 5
      %v7206 = vor.u32 %v7202, %v7205
      %v7207 = vrot.slane %v7206, 4
      %v7209 = vshll.u32 %v6921, 16
      %v7211 = vrot.slane %v7209, 5
      %v7212 = vsel %vm1349, %v7207, %v7211
      %v7213 = vshrl.u32 %v6921, 16
      %v7215 = vrot.slane %v7213, 4
      %v7216 = vor.u32 %v7215, %v7211
      %v7217 = vrot.slane %v7216, 4
      %v7219 = vshll.u32 %v6922, 16
      %v7221 = vrot.slane %v7219, 5
      %v7222 = vsel %vm1349, %v7217, %v7221
      %v7224 = vshrl.u32 %v6923, 16
      %v7226 = vrot.slane %v7224, 4
      %v7227 = vshll.u32 %v6923, 16
      %v7229 = vrot.slane %v7227, 5
      %v7230 = vor.u32 %v7226, %v7229
      %v7231 = vrot.slane %v7230, 4
      %v7233 = vshll.u32 %v6924, 16
      %v7235 = vrot.slane %v7233, 5
      %v7236 = vsel %vm1349, %v7231, %v7235
      %v7237 = vshrl.u32 %v6924, 16
      %v7239 = vrot.slane %v7237, 4
      %v7240 = vor.u32 %v7239, %v7235
      %v7241 = vrot.slane %v7240, 4
      %v7243 = vshll.u32 %v6925, 16
      %v7245 = vrot.slane %v7243, 5
      %v7246 = vsel %vm1349, %v7241, %v7245
      %v7248 = vshrl.u32 %v6926, 16
      %v7250 = vrot.slane %v7248, 4
      %v7251 = vshll.u32 %v6926, 16
      %v7253 = vrot.slane %v7251, 5
      %v7254 = vor.u32 %v7250, %v7253
      %v7255 = vrot.slane %v7254, 4
      %v7257 = vshll.u32 %v6927, 16
      %v7259 = vrot.slane %v7257, 5
      %v7260 = vsel %vm1349, %v7255, %v7259
      %v7261 = vshrl.u32 %v6927, 16
      %v7263 = vrot.slane %v7261, 4
      %v7264 = vor.u32 %v7263, %v7259
      %v7265 = vrot.slane %v7264, 4
      %v7267 = vshll.u32 %v6928, 16
      %v7269 = vrot.slane %v7267, 5
      %v7270 = vsel %vm1349, %v7265, %v7269
      %v7272 = vshrl.u32 %v6929, 16
      %v7274 = vrot.slane %v7272, 4
      %v7275 = vshll.u32 %v6929, 16
      %v7277 = vrot.slane %v7275, 5
      %v7278 = vor.u32 %v7274, %v7277
      %v7279 = vrot.slane %v7278, 4
      %v7281 = vshll.u32 %v6930, 16
      %v7283 = vrot.slane %v7281, 5
      %v7284 = vsel %vm1349, %v7279, %v7283
      %v7285 = vshrl.u32 %v6930, 16
      %v7287 = vrot.slane %v7285, 4
      %v7288 = vor.u32 %v7287, %v7283
      %v7289 = vrot.slane %v7288, 4
      %v7291 = vshll.u32 %v6931, 16
      %v7293 = vrot.slane %v7291, 5
      %v7294 = vsel %vm1349, %v7289, %v7293
      %v7296 = vshrl.u32 %v6932, 16
      %v7298 = vrot.slane %v7296, 4
      %v7299 = vshll.u32 %v6932, 16
      %v7301 = vrot.slane %v7299, 5
      %v7302 = vor.u32 %v7298, %v7301
      %v7303 = vrot.slane %v7302, 4
      %v7305 = vshll.u32 %v6933, 16
      %v7307 = vrot.slane %v7305, 5
      %v7308 = vsel %vm1349, %v7303, %v7307
      %v7309 = vshrl.u32 %v6933, 16
      %v7311 = vrot.slane %v7309, 4
      %v7312 = vor.u32 %v7311, %v7307
      %v7313 = vrot.slane %v7312, 4
      %v7315 = vshll.u32 %v6934, 16
      %v7317 = vrot.slane %v7315, 5
      %v7318 = vsel %vm1349, %v7313, %v7317
      %v7319 = vunpack.c.l.b16 %v6948
      %v7320 = vunpack.c.l.b16 %v6958
      %v7321 = vunpack.c.l.b16 %v6972
      %v7322 = vunpack.c.l.b16 %v6982
      %v7323 = vunpack.c.l.b16 %v6996
      %v7324 = vunpack.c.l.b16 %v7006
      %v7325 = vunpack.c.l.b16 %v7020
      %v7326 = vunpack.c.l.b16 %v7030
      %v7327 = vunpack.c.l.b16 %v7044
      %v7328 = vunpack.c.l.b16 %v7054
      %v7329 = vunpack.c.l.b16 %v7068
      %v7330 = vunpack.c.l.b16 %v7078
      %v7331 = vunpack.c.l.b16 %v7092
      %v7332 = vunpack.c.l.b16 %v7102
      %v7333 = vunpack.c.l.b16 %v7116
      %v7334 = vunpack.c.l.b16 %v7126
      %v7335 = vunpack.c.l.b16 %v7140
      %v7336 = vunpack.c.l.b16 %v7150
      %v7337 = vunpack.c.l.b16 %v7164
      %v7338 = vunpack.c.l.b16 %v7174
      %v7339 = vunpack.c.l.b16 %v7188
      %v7340 = vunpack.c.l.b16 %v7198
      %v7341 = vunpack.c.l.b16 %v7212
      %v7342 = vunpack.c.l.b16 %v7222
      %v7343 = vunpack.c.l.b16 %v7236
      %v7344 = vunpack.c.l.b16 %v7246
      %v7345 = vunpack.c.l.b16 %v7260
      %v7346 = vunpack.c.l.b16 %v7270
      %v7347 = vunpack.c.l.b16 %v7284
      %v7348 = vunpack.c.l.b16 %v7294
      %v7349 = vunpack.c.l.b16 %v7308
      %v7350 = vunpack.c.l.b16 %v7318
      %v7351 = vpack.c.b16 %v7320, %v7319
      %v7352 = vpack.c.b16 %v7322, %v7321
      %v7353 = vpack.c.b16 %v7324, %v7323
      %v7354 = vpack.c.b16 %v7326, %v7325
      %v7355 = vpack.c.b16 %v7328, %v7327
      %v7356 = vpack.c.b16 %v7330, %v7329
      %v7357 = vpack.c.b16 %v7332, %v7331
      %v7358 = vpack.c.b16 %v7334, %v7333
      %v7359 = vpack.c.b16 %v7336, %v7335
      %v7360 = vpack.c.b16 %v7338, %v7337
      %v7361 = vpack.c.b16 %v7340, %v7339
      %v7362 = vpack.c.b16 %v7342, %v7341
      %v7363 = vpack.c.b16 %v7344, %v7343
      %v7364 = vpack.c.b16 %v7346, %v7345
      %v7365 = vpack.c.b16 %v7348, %v7347
      %v7366 = vpack.c.b16 %v7350, %v7349
      %7367 = vrot.lane.b32.xlu0 %v7351, 32
      %v7368 = vpop.permute.xlu0 %7367
      %7369 = vrot.lane.b32.xlu0 %v7352, 32
      %v7370 = vpop.permute.xlu0 %7369
      %7371 = vrot.lane.b32.xlu0 %v7353, 32
      %v7372 = vpop.permute.xlu0 %7371
      %7373 = vrot.lane.b32.xlu0 %v7354, 32
      %v7374 = vpop.permute.xlu0 %7373
      %7375 = vrot.lane.b32.xlu0 %v7355, 32
      %v7376 = vpop.permute.xlu0 %7375
      %7377 = vrot.lane.b32.xlu0 %v7356, 32
      %v7378 = vpop.permute.xlu0 %7377
      %7379 = vrot.lane.b32.xlu0 %v7357, 32
      %v7380 = vpop.permute.xlu0 %7379
      %7381 = vrot.lane.b32.xlu0 %v7358, 32
      %v7382 = vpop.permute.xlu0 %7381
      %7383 = vrot.lane.b32.xlu0 %v7359, 32
      %v7384 = vpop.permute.xlu0 %7383
      %7385 = vrot.lane.b32.xlu0 %v7360, 32
      %v7386 = vpop.permute.xlu0 %7385
      %7387 = vrot.lane.b32.xlu0 %v7361, 32
      %v7388 = vpop.permute.xlu0 %7387
      %7389 = vrot.lane.b32.xlu0 %v7362, 32
      %v7390 = vpop.permute.xlu0 %7389
      %7391 = vrot.lane.b32.xlu0 %v7363, 32
      %v7392 = vpop.permute.xlu0 %7391
      %7393 = vrot.lane.b32.xlu0 %v7364, 32
      %v7394 = vpop.permute.xlu0 %7393
      %7395 = vrot.lane.b32.xlu0 %v7365, 32
      %v7396 = vpop.permute.xlu0 %7395
      %7397 = vrot.lane.b32.xlu0 %v7366, 32
      %v7398 = vpop.permute.xlu0 %7397
      %7415 = vst.msk [vmem:[#allocation3] sm:$0xff] %vm2876, %v7368
      %7416 = vst.msk [vmem:[#allocation3 + $0x8] sm:$0xff] %vm2876, %v7370
      %7417 = vst.msk [vmem:[#allocation3 + $0x10] sm:$0xff] %vm2876, %v7372
      %7418 = vst.msk [vmem:[#allocation3 + $0x18] sm:$0xff] %vm2876, %v7374
      %7419 = vst.msk [vmem:[#allocation3 + $0x20] sm:$0xff] %vm2876, %v7376
      %7420 = vst.msk [vmem:[#allocation3 + $0x28] sm:$0xff] %vm2876, %v7378
      %7421 = vst.msk [vmem:[#allocation3 + $0x30] sm:$0xff] %vm2876, %v7380
      %7422 = vst.msk [vmem:[#allocation3 + $0x38] sm:$0xff] %vm2876, %v7382
      %7423 = vst.msk [vmem:[#allocation3 + $0x40] sm:$0xff] %vm2876, %v7384
      %7424 = vst.msk [vmem:[#allocation3 + $0x48] sm:$0xff] %vm2876, %v7386
      %7425 = vst.msk [vmem:[#allocation3 + $0x50] sm:$0xff] %vm2876, %v7388
      %7426 = vst.msk [vmem:[#allocation3 + $0x58] sm:$0xff] %vm2876, %v7390
      %7427 = vst.msk [vmem:[#allocation3 + $0x60] sm:$0xff] %vm2876, %v7392
      %7428 = vst.msk [vmem:[#allocation3 + $0x68] sm:$0xff] %vm2876, %v7394
      %7429 = vst.msk [vmem:[#allocation3 + $0x70] sm:$0xff] %vm2876, %v7396
      %7430 = vst.msk [vmem:[#allocation3 + $0x78] sm:$0xff] %vm2876, %v7398
      %v7431 = vld [vmem:[%s731] sm:$0xe]
      %v7432 = vld [vmem:[%s731 + $0x4] sm:$0xf]
      %v7433 = vld [vmem:[%s731 + $0x8] sm:$0x1]
      %v7434 = vld [vmem:[%s731 + $0xc] sm:$0xe]
      %v7435 = vld [vmem:[%s731 + $0x10] sm:$0xf]
      %v7436 = vld [vmem:[%s731 + $0x14] sm:$0x1]
      %v7437 = vld [vmem:[%s731 + $0x18] sm:$0xe]
      %v7438 = vld [vmem:[%s731 + $0x1c] sm:$0xf]
      %v7439 = vld [vmem:[%s731 + $0x20] sm:$0x1]
      %v7440 = vld [vmem:[%s731 + $0x24] sm:$0xe]
      %v7441 = vld [vmem:[%s731 + $0x28] sm:$0xf]
      %v7442 = vld [vmem:[%s731 + $0x2c] sm:$0x1]
      %v7443 = vld [vmem:[%s731 + $0x30] sm:$0xe]
      %v7444 = vld [vmem:[%s731 + $0x34] sm:$0xf]
      %v7445 = vld [vmem:[%s731 + $0x38] sm:$0x1]
      %v7446 = vld [vmem:[%s731 + $0x3c] sm:$0xe]
      %v7447 = vld [vmem:[%s731 + $0x40] sm:$0xf]
      %v7448 = vld [vmem:[%s731 + $0x44] sm:$0x1]
      %v7449 = vld [vmem:[%s731 + $0x48] sm:$0xe]
      %v7450 = vld [vmem:[%s731 + $0x4c] sm:$0xf]
      %v7451 = vld [vmem:[%s731 + $0x50] sm:$0x1]
      %v7452 = vld [vmem:[%s731 + $0x54] sm:$0xe]
      %v7453 = vld [vmem:[%s731 + $0x58] sm:$0xf]
      %v7454 = vld [vmem:[%s731 + $0x5c] sm:$0x1]
      %v7455 = vld [vmem:[%s731 + $0x60] sm:$0xe]
      %v7456 = vld [vmem:[%s731 + $0x64] sm:$0xf]
      %v7457 = vld [vmem:[%s731 + $0x68] sm:$0x1]
      %v7458 = vld [vmem:[%s731 + $0x6c] sm:$0xe]
      %v7459 = vld [vmem:[%s731 + $0x70] sm:$0xf]
      %v7460 = vld [vmem:[%s731 + $0x74] sm:$0x1]
      %v7461 = vld [vmem:[%s731 + $0x78] sm:$0xe]
      %v7462 = vld [vmem:[%s731 + $0x7c] sm:$0xf]
      %v7463 = vld [vmem:[%s731 + $0x80] sm:$0x1]
      %v7464 = vld [vmem:[%s731 + $0x84] sm:$0xe]
      %v7465 = vld [vmem:[%s731 + $0x88] sm:$0xf]
      %v7466 = vld [vmem:[%s731 + $0x8c] sm:$0x1]
      %v7467 = vld [vmem:[%s731 + $0x90] sm:$0xe]
      %v7468 = vld [vmem:[%s731 + $0x94] sm:$0xf]
      %v7469 = vld [vmem:[%s731 + $0x98] sm:$0x1]
      %v7470 = vld [vmem:[%s731 + $0x9c] sm:$0xe]
      %v7471 = vld [vmem:[%s731 + $0xa0] sm:$0xf]
      %v7472 = vld [vmem:[%s731 + $0xa4] sm:$0x1]
      %v7473 = vld [vmem:[%s731 + $0xa8] sm:$0xe]
      %v7474 = vld [vmem:[%s731 + $0xac] sm:$0xf]
      %v7475 = vld [vmem:[%s731 + $0xb0] sm:$0x1]
      %v7476 = vld [vmem:[%s731 + $0xb4] sm:$0xe]
      %v7477 = vld [vmem:[%s731 + $0xb8] sm:$0xf]
      %v7478 = vld [vmem:[%s731 + $0xbc] sm:$0x1]
      %v7527 = vrot.slane %v7431, 5
      %v7528 = vrot.slane %v7527, 4
      %v7529 = vrot.slane %v7432, 5
      %v7530 = vsel %vm1945, %v7528, %v7529
      %v7531 = vrot.slane %v7529, 4
      %v7532 = vrot.slane %v7433, 5
      %v7533 = vsel %vm1945, %v7531, %v7532
      %v7534 = vrot.slane %v7434, 5
      %v7535 = vrot.slane %v7534, 4
      %v7536 = vrot.slane %v7435, 5
      %v7537 = vsel %vm1945, %v7535, %v7536
      %v7538 = vrot.slane %v7536, 4
      %v7539 = vrot.slane %v7436, 5
      %v7540 = vsel %vm1945, %v7538, %v7539
      %v7541 = vrot.slane %v7437, 5
      %v7542 = vrot.slane %v7541, 4
      %v7543 = vrot.slane %v7438, 5
      %v7544 = vsel %vm1945, %v7542, %v7543
      %v7545 = vrot.slane %v7543, 4
      %v7546 = vrot.slane %v7439, 5
      %v7547 = vsel %vm1945, %v7545, %v7546
      %v7548 = vrot.slane %v7440, 5
      %v7549 = vrot.slane %v7548, 4
      %v7550 = vrot.slane %v7441, 5
      %v7551 = vsel %vm1945, %v7549, %v7550
      %v7552 = vrot.slane %v7550, 4
      %v7553 = vrot.slane %v7442, 5
      %v7554 = vsel %vm1945, %v7552, %v7553
      %v7555 = vrot.slane %v7443, 5
      %v7556 = vrot.slane %v7555, 4
      %v7557 = vrot.slane %v7444, 5
      %v7558 = vsel %vm1945, %v7556, %v7557
      %v7559 = vrot.slane %v7557, 4
      %v7560 = vrot.slane %v7445, 5
      %v7561 = vsel %vm1945, %v7559, %v7560
      %v7562 = vrot.slane %v7446, 5
      %v7563 = vrot.slane %v7562, 4
      %v7564 = vrot.slane %v7447, 5
      %v7565 = vsel %vm1945, %v7563, %v7564
      %v7566 = vrot.slane %v7564, 4
      %v7567 = vrot.slane %v7448, 5
      %v7568 = vsel %vm1945, %v7566, %v7567
      %v7569 = vrot.slane %v7449, 5
      %v7570 = vrot.slane %v7569, 4
      %v7571 = vrot.slane %v7450, 5
      %v7572 = vsel %vm1945, %v7570, %v7571
      %v7573 = vrot.slane %v7571, 4
      %v7574 = vrot.slane %v7451, 5
      %v7575 = vsel %vm1945, %v7573, %v7574
      %v7576 = vrot.slane %v7452, 5
      %v7577 = vrot.slane %v7576, 4
      %v7578 = vrot.slane %v7453, 5
      %v7579 = vsel %vm1945, %v7577, %v7578
      %v7580 = vrot.slane %v7578, 4
      %v7581 = vrot.slane %v7454, 5
      %v7582 = vsel %vm1945, %v7580, %v7581
      %v7583 = vrot.slane %v7455, 5
      %v7584 = vrot.slane %v7583, 4
      %v7585 = vrot.slane %v7456, 5
      %v7586 = vsel %vm1945, %v7584, %v7585
      %v7587 = vrot.slane %v7585, 4
      %v7588 = vrot.slane %v7457, 5
      %v7589 = vsel %vm1945, %v7587, %v7588
      %v7590 = vrot.slane %v7458, 5
      %v7591 = vrot.slane %v7590, 4
      %v7592 = vrot.slane %v7459, 5
      %v7593 = vsel %vm1945, %v7591, %v7592
      %v7594 = vrot.slane %v7592, 4
      %v7595 = vrot.slane %v7460, 5
      %v7596 = vsel %vm1945, %v7594, %v7595
      %v7597 = vrot.slane %v7461, 5
      %v7598 = vrot.slane %v7597, 4
      %v7599 = vrot.slane %v7462, 5
      %v7600 = vsel %vm1945, %v7598, %v7599
      %v7601 = vrot.slane %v7599, 4
      %v7602 = vrot.slane %v7463, 5
      %v7603 = vsel %vm1945, %v7601, %v7602
      %v7604 = vrot.slane %v7464, 5
      %v7605 = vrot.slane %v7604, 4
      %v7606 = vrot.slane %v7465, 5
      %v7607 = vsel %vm1945, %v7605, %v7606
      %v7608 = vrot.slane %v7606, 4
      %v7609 = vrot.slane %v7466, 5
      %v7610 = vsel %vm1945, %v7608, %v7609
      %v7611 = vrot.slane %v7467, 5
      %v7612 = vrot.slane %v7611, 4
      %v7613 = vrot.slane %v7468, 5
      %v7614 = vsel %vm1945, %v7612, %v7613
      %v7615 = vrot.slane %v7613, 4
      %v7616 = vrot.slane %v7469, 5
      %v7617 = vsel %vm1945, %v7615, %v7616
      %v7618 = vrot.slane %v7470, 5
      %v7619 = vrot.slane %v7618, 4
      %v7620 = vrot.slane %v7471, 5
      %v7621 = vsel %vm1945, %v7619, %v7620
      %v7622 = vrot.slane %v7620, 4
      %v7623 = vrot.slane %v7472, 5
      %v7624 = vsel %vm1945, %v7622, %v7623
      %v7625 = vrot.slane %v7473, 5
      %v7626 = vrot.slane %v7625, 4
      %v7627 = vrot.slane %v7474, 5
      %v7628 = vsel %vm1945, %v7626, %v7627
      %v7629 = vrot.slane %v7627, 4
      %v7630 = vrot.slane %v7475, 5
      %v7631 = vsel %vm1945, %v7629, %v7630
      %v7632 = vrot.slane %v7476, 5
      %v7633 = vrot.slane %v7632, 4
      %v7634 = vrot.slane %v7477, 5
      %v7635 = vsel %vm1945, %v7633, %v7634
      %v7636 = vrot.slane %v7634, 4
      %v7637 = vrot.slane %v7478, 5
      %v7638 = vsel %vm1945, %v7636, %v7637
      %v7639 = vunpack.c.l.b16 %v7530
      %v7640 = vunpack.c.l.b16 %v7533
      %v7641 = vunpack.c.l.b16 %v7537
      %v7642 = vunpack.c.l.b16 %v7540
      %v7643 = vunpack.c.l.b16 %v7544
      %v7644 = vunpack.c.l.b16 %v7547
      %v7645 = vunpack.c.l.b16 %v7551
      %v7646 = vunpack.c.l.b16 %v7554
      %v7647 = vunpack.c.l.b16 %v7558
      %v7648 = vunpack.c.l.b16 %v7561
      %v7649 = vunpack.c.l.b16 %v7565
      %v7650 = vunpack.c.l.b16 %v7568
      %v7651 = vunpack.c.l.b16 %v7572
      %v7652 = vunpack.c.l.b16 %v7575
      %v7653 = vunpack.c.l.b16 %v7579
      %v7654 = vunpack.c.l.b16 %v7582
      %v7655 = vunpack.c.l.b16 %v7586
      %v7656 = vunpack.c.l.b16 %v7589
      %v7657 = vunpack.c.l.b16 %v7593
      %v7658 = vunpack.c.l.b16 %v7596
      %v7659 = vunpack.c.l.b16 %v7600
      %v7660 = vunpack.c.l.b16 %v7603
      %v7661 = vunpack.c.l.b16 %v7607
      %v7662 = vunpack.c.l.b16 %v7610
      %v7663 = vunpack.c.l.b16 %v7614
      %v7664 = vunpack.c.l.b16 %v7617
      %v7665 = vunpack.c.l.b16 %v7621
      %v7666 = vunpack.c.l.b16 %v7624
      %v7667 = vunpack.c.l.b16 %v7628
      %v7668 = vunpack.c.l.b16 %v7631
      %v7669 = vunpack.c.l.b16 %v7635
      %v7670 = vunpack.c.l.b16 %v7638
      %v7671 = vpack.c.b16 %v7640, %v7639
      %v7672 = vpack.c.b16 %v7642, %v7641
      %v7673 = vpack.c.b16 %v7644, %v7643
      %v7674 = vpack.c.b16 %v7646, %v7645
      %v7675 = vpack.c.b16 %v7648, %v7647
      %v7676 = vpack.c.b16 %v7650, %v7649
      %v7677 = vpack.c.b16 %v7652, %v7651
      %v7678 = vpack.c.b16 %v7654, %v7653
      %v7679 = vpack.c.b16 %v7656, %v7655
      %v7680 = vpack.c.b16 %v7658, %v7657
      %v7681 = vpack.c.b16 %v7660, %v7659
      %v7682 = vpack.c.b16 %v7662, %v7661
      %v7683 = vpack.c.b16 %v7664, %v7663
      %v7684 = vpack.c.b16 %v7666, %v7665
      %v7685 = vpack.c.b16 %v7668, %v7667
      %v7686 = vpack.c.b16 %v7670, %v7669
      %7687 = vrot.lane.b32.xlu0 %v7671, 40
      %v7688 = vpop.permute.xlu0 %7687
      %7689 = vrot.lane.b32.xlu0 %v7672, 40
      %v7690 = vpop.permute.xlu0 %7689
      %7691 = vrot.lane.b32.xlu0 %v7673, 40
      %v7692 = vpop.permute.xlu0 %7691
      %7693 = vrot.lane.b32.xlu0 %v7674, 40
      %v7694 = vpop.permute.xlu0 %7693
      %7695 = vrot.lane.b32.xlu0 %v7675, 40
      %v7696 = vpop.permute.xlu0 %7695
      %7697 = vrot.lane.b32.xlu0 %v7676, 40
      %v7698 = vpop.permute.xlu0 %7697
      %7699 = vrot.lane.b32.xlu0 %v7677, 40
      %v7700 = vpop.permute.xlu0 %7699
      %7701 = vrot.lane.b32.xlu0 %v7678, 40
      %v7702 = vpop.permute.xlu0 %7701
      %7703 = vrot.lane.b32.xlu0 %v7679, 40
      %v7704 = vpop.permute.xlu0 %7703
      %7705 = vrot.lane.b32.xlu0 %v7680, 40
      %v7706 = vpop.permute.xlu0 %7705
      %7707 = vrot.lane.b32.xlu0 %v7681, 40
      %v7708 = vpop.permute.xlu0 %7707
      %7709 = vrot.lane.b32.xlu0 %v7682, 40
      %v7710 = vpop.permute.xlu0 %7709
      %7711 = vrot.lane.b32.xlu0 %v7683, 40
      %v7712 = vpop.permute.xlu0 %7711
      %7713 = vrot.lane.b32.xlu0 %v7684, 40
      %v7714 = vpop.permute.xlu0 %7713
      %7715 = vrot.lane.b32.xlu0 %v7685, 40
      %v7716 = vpop.permute.xlu0 %7715
      %7717 = vrot.lane.b32.xlu0 %v7686, 40
      %v7718 = vpop.permute.xlu0 %7717
      %7735 = vst.msk [vmem:[#allocation3] sm:$0xff] %vm3197, %v7688
      %7736 = vst.msk [vmem:[#allocation3 + $0x8] sm:$0xff] %vm3197, %v7690
      %7737 = vst.msk [vmem:[#allocation3 + $0x10] sm:$0xff] %vm3197, %v7692
      %7738 = vst.msk [vmem:[#allocation3 + $0x18] sm:$0xff] %vm3197, %v7694
      %7739 = vst.msk [vmem:[#allocation3 + $0x20] sm:$0xff] %vm3197, %v7696
      %7740 = vst.msk [vmem:[#allocation3 + $0x28] sm:$0xff] %vm3197, %v7698
      %7741 = vst.msk [vmem:[#allocation3 + $0x30] sm:$0xff] %vm3197, %v7700
      %7742 = vst.msk [vmem:[#allocation3 + $0x38] sm:$0xff] %vm3197, %v7702
      %7743 = vst.msk [vmem:[#allocation3 + $0x40] sm:$0xff] %vm3197, %v7704
      %7744 = vst.msk [vmem:[#allocation3 + $0x48] sm:$0xff] %vm3197, %v7706
      %7745 = vst.msk [vmem:[#allocation3 + $0x50] sm:$0xff] %vm3197, %v7708
      %7746 = vst.msk [vmem:[#allocation3 + $0x58] sm:$0xff] %vm3197, %v7710
      %7747 = vst.msk [vmem:[#allocation3 + $0x60] sm:$0xff] %vm3197, %v7712
      %7748 = vst.msk [vmem:[#allocation3 + $0x68] sm:$0xff] %vm3197, %v7714
      %7749 = vst.msk [vmem:[#allocation3 + $0x70] sm:$0xff] %vm3197, %v7716
      %7750 = vst.msk [vmem:[#allocation3 + $0x78] sm:$0xff] %vm3197, %v7718
      %v7751 = vld [vmem:[%s3214] sm:$0xf]
      %v7752 = vld [vmem:[%s3214 + $0x4] sm:$0xf]
      %v7753 = vld [vmem:[%s3214 + $0xc] sm:$0xf]
      %v7754 = vld [vmem:[%s3214 + $0x10] sm:$0xf]
      %v7755 = vld [vmem:[%s3214 + $0x18] sm:$0xf]
      %v7756 = vld [vmem:[%s3214 + $0x1c] sm:$0xf]
      %v7757 = vld [vmem:[%s3214 + $0x24] sm:$0xf]
      %v7758 = vld [vmem:[%s3214 + $0x28] sm:$0xf]
      %v7759 = vld [vmem:[%s3214 + $0x30] sm:$0xf]
      %v7760 = vld [vmem:[%s3214 + $0x34] sm:$0xf]
      %v7761 = vld [vmem:[%s3214 + $0x3c] sm:$0xf]
      %v7762 = vld [vmem:[%s3214 + $0x40] sm:$0xf]
      %v7763 = vld [vmem:[%s3214 + $0x48] sm:$0xf]
      %v7764 = vld [vmem:[%s3214 + $0x4c] sm:$0xf]
      %v7765 = vld [vmem:[%s3214 + $0x54] sm:$0xf]
      %v7766 = vld [vmem:[%s3214 + $0x58] sm:$0xf]
      %v7767 = vld [vmem:[%s3214 + $0x60] sm:$0xf]
      %v7768 = vld [vmem:[%s3214 + $0x64] sm:$0xf]
      %v7769 = vld [vmem:[%s3214 + $0x6c] sm:$0xf]
      %v7770 = vld [vmem:[%s3214 + $0x70] sm:$0xf]
      %v7771 = vld [vmem:[%s3214 + $0x78] sm:$0xf]
      %v7772 = vld [vmem:[%s3214 + $0x7c] sm:$0xf]
      %v7773 = vld [vmem:[%s3214 + $0x84] sm:$0xf]
      %v7774 = vld [vmem:[%s3214 + $0x88] sm:$0xf]
      %v7775 = vld [vmem:[%s3214 + $0x90] sm:$0xf]
      %v7776 = vld [vmem:[%s3214 + $0x94] sm:$0xf]
      %v7777 = vld [vmem:[%s3214 + $0x9c] sm:$0xf]
      %v7778 = vld [vmem:[%s3214 + $0xa0] sm:$0xf]
      %v7779 = vld [vmem:[%s3214 + $0xa8] sm:$0xf]
      %v7780 = vld [vmem:[%s3214 + $0xac] sm:$0xf]
      %v7781 = vld [vmem:[%s3214 + $0xb4] sm:$0xf]
      %v7782 = vld [vmem:[%s3214 + $0xb8] sm:$0xf]
      %v7815 = vunpack.c.l.b16 %v7751
      %v7816 = vunpack.c.l.b16 %v7752
      %v7817 = vunpack.c.l.b16 %v7753
      %v7818 = vunpack.c.l.b16 %v7754
      %v7819 = vunpack.c.l.b16 %v7755
      %v7820 = vunpack.c.l.b16 %v7756
      %v7821 = vunpack.c.l.b16 %v7757
      %v7822 = vunpack.c.l.b16 %v7758
      %v7823 = vunpack.c.l.b16 %v7759
      %v7824 = vunpack.c.l.b16 %v7760
      %v7825 = vunpack.c.l.b16 %v7761
      %v7826 = vunpack.c.l.b16 %v7762
      %v7827 = vunpack.c.l.b16 %v7763
      %v7828 = vunpack.c.l.b16 %v7764
      %v7829 = vunpack.c.l.b16 %v7765
      %v7830 = vunpack.c.l.b16 %v7766
      %v7831 = vunpack.c.l.b16 %v7767
      %v7832 = vunpack.c.l.b16 %v7768
      %v7833 = vunpack.c.l.b16 %v7769
      %v7834 = vunpack.c.l.b16 %v7770
      %v7835 = vunpack.c.l.b16 %v7771
      %v7836 = vunpack.c.l.b16 %v7772
      %v7837 = vunpack.c.l.b16 %v7773
      %v7838 = vunpack.c.l.b16 %v7774
      %v7839 = vunpack.c.l.b16 %v7775
      %v7840 = vunpack.c.l.b16 %v7776
      %v7841 = vunpack.c.l.b16 %v7777
      %v7842 = vunpack.c.l.b16 %v7778
      %v7843 = vunpack.c.l.b16 %v7779
      %v7844 = vunpack.c.l.b16 %v7780
      %v7845 = vunpack.c.l.b16 %v7781
      %v7846 = vunpack.c.l.b16 %v7782
      %v7847 = vpack.c.b16 %v7816, %v7815
      %v7848 = vpack.c.b16 %v7818, %v7817
      %v7849 = vpack.c.b16 %v7820, %v7819
      %v7850 = vpack.c.b16 %v7822, %v7821
      %v7851 = vpack.c.b16 %v7824, %v7823
      %v7852 = vpack.c.b16 %v7826, %v7825
      %v7853 = vpack.c.b16 %v7828, %v7827
      %v7854 = vpack.c.b16 %v7830, %v7829
      %v7855 = vpack.c.b16 %v7832, %v7831
      %v7856 = vpack.c.b16 %v7834, %v7833
      %v7857 = vpack.c.b16 %v7836, %v7835
      %v7858 = vpack.c.b16 %v7838, %v7837
      %v7859 = vpack.c.b16 %v7840, %v7839
      %v7860 = vpack.c.b16 %v7842, %v7841
      %v7861 = vpack.c.b16 %v7844, %v7843
      %v7862 = vpack.c.b16 %v7846, %v7845
      %7863 = vrot.lane.b32.xlu0 %v7847, 48
      %v7864 = vpop.permute.xlu0 %7863
      %7865 = vrot.lane.b32.xlu0 %v7848, 48
      %v7866 = vpop.permute.xlu0 %7865
      %7867 = vrot.lane.b32.xlu0 %v7849, 48
      %v7868 = vpop.permute.xlu0 %7867
      %7869 = vrot.lane.b32.xlu0 %v7850, 48
      %v7870 = vpop.permute.xlu0 %7869
      %7871 = vrot.lane.b32.xlu0 %v7851, 48
      %v7872 = vpop.permute.xlu0 %7871
      %7873 = vrot.lane.b32.xlu0 %v7852, 48
      %v7874 = vpop.permute.xlu0 %7873
      %7875 = vrot.lane.b32.xlu0 %v7853, 48
      %v7876 = vpop.permute.xlu0 %7875
      %7877 = vrot.lane.b32.xlu0 %v7854, 48
      %v7878 = vpop.permute.xlu0 %7877
      %7879 = vrot.lane.b32.xlu0 %v7855, 48
      %v7880 = vpop.permute.xlu0 %7879
      %7881 = vrot.lane.b32.xlu0 %v7856, 48
      %v7882 = vpop.permute.xlu0 %7881
      %7883 = vrot.lane.b32.xlu0 %v7857, 48
      %v7884 = vpop.permute.xlu0 %7883
      %7885 = vrot.lane.b32.xlu0 %v7858, 48
      %v7886 = vpop.permute.xlu0 %7885
      %7887 = vrot.lane.b32.xlu0 %v7859, 48
      %v7888 = vpop.permute.xlu0 %7887
      %7889 = vrot.lane.b32.xlu0 %v7860, 48
      %v7890 = vpop.permute.xlu0 %7889
      %7891 = vrot.lane.b32.xlu0 %v7861, 48
      %v7892 = vpop.permute.xlu0 %7891
      %7893 = vrot.lane.b32.xlu0 %v7862, 48
      %v7894 = vpop.permute.xlu0 %7893
      %7911 = vst.msk [vmem:[#allocation3] sm:$0xff] %vm3375, %v7864
      %7912 = vst.msk [vmem:[#allocation3 + $0x8] sm:$0xff] %vm3375, %v7866
      %7913 = vst.msk [vmem:[#allocation3 + $0x10] sm:$0xff] %vm3375, %v7868
      %7914 = vst.msk [vmem:[#allocation3 + $0x18] sm:$0xff] %vm3375, %v7870
      %7915 = vst.msk [vmem:[#allocation3 + $0x20] sm:$0xff] %vm3375, %v7872
      %7916 = vst.msk [vmem:[#allocation3 + $0x28] sm:$0xff] %vm3375, %v7874
      %7917 = vst.msk [vmem:[#allocation3 + $0x30] sm:$0xff] %vm3375, %v7876
      %7918 = vst.msk [vmem:[#allocation3 + $0x38] sm:$0xff] %vm3375, %v7878
      %7919 = vst.msk [vmem:[#allocation3 + $0x40] sm:$0xff] %vm3375, %v7880
      %7920 = vst.msk [vmem:[#allocation3 + $0x48] sm:$0xff] %vm3375, %v7882
      %7921 = vst.msk [vmem:[#allocation3 + $0x50] sm:$0xff] %vm3375, %v7884
      %7922 = vst.msk [vmem:[#allocation3 + $0x58] sm:$0xff] %vm3375, %v7886
      %7923 = vst.msk [vmem:[#allocation3 + $0x60] sm:$0xff] %vm3375, %v7888
      %7924 = vst.msk [vmem:[#allocation3 + $0x68] sm:$0xff] %vm3375, %v7890
      %7925 = vst.msk [vmem:[#allocation3 + $0x70] sm:$0xff] %vm3375, %v7892
      %7926 = vst.msk [vmem:[#allocation3 + $0x78] sm:$0xff] %vm3375, %v7894
      %v7927 = vld [vmem:[%s3214] sm:$0xf]
      %v7928 = vld [vmem:[%s3214 + $0x4] sm:$0xf]
      %v7929 = vld [vmem:[%s3214 + $0x8] sm:$0x1]
      %v7930 = vld [vmem:[%s3214 + $0xc] sm:$0xf]
      %v7931 = vld [vmem:[%s3214 + $0x10] sm:$0xf]
      %v7932 = vld [vmem:[%s3214 + $0x14] sm:$0x1]
      %v7933 = vld [vmem:[%s3214 + $0x18] sm:$0xf]
      %v7934 = vld [vmem:[%s3214 + $0x1c] sm:$0xf]
      %v7935 = vld [vmem:[%s3214 + $0x20] sm:$0x1]
      %v7936 = vld [vmem:[%s3214 + $0x24] sm:$0xf]
      %v7937 = vld [vmem:[%s3214 + $0x28] sm:$0xf]
      %v7938 = vld [vmem:[%s3214 + $0x2c] sm:$0x1]
      %v7939 = vld [vmem:[%s3214 + $0x30] sm:$0xf]
      %v7940 = vld [vmem:[%s3214 + $0x34] sm:$0xf]
      %v7941 = vld [vmem:[%s3214 + $0x38] sm:$0x1]
      %v7942 = vld [vmem:[%s3214 + $0x3c] sm:$0xf]
      %v7943 = vld [vmem:[%s3214 + $0x40] sm:$0xf]
      %v7944 = vld [vmem:[%s3214 + $0x44] sm:$0x1]
      %v7945 = vld [vmem:[%s3214 + $0x48] sm:$0xf]
      %v7946 = vld [vmem:[%s3214 + $0x4c] sm:$0xf]
      %v7947 = vld [vmem:[%s3214 + $0x50] sm:$0x1]
      %v7948 = vld [vmem:[%s3214 + $0x54] sm:$0xf]
      %v7949 = vld [vmem:[%s3214 + $0x58] sm:$0xf]
      %v7950 = vld [vmem:[%s3214 + $0x5c] sm:$0x1]
      %v7951 = vld [vmem:[%s3214 + $0x60] sm:$0xf]
      %v7952 = vld [vmem:[%s3214 + $0x64] sm:$0xf]
      %v7953 = vld [vmem:[%s3214 + $0x68] sm:$0x1]
      %v7954 = vld [vmem:[%s3214 + $0x6c] sm:$0xf]
      %v7955 = vld [vmem:[%s3214 + $0x70] sm:$0xf]
      %v7956 = vld [vmem:[%s3214 + $0x74] sm:$0x1]
      %v7957 = vld [vmem:[%s3214 + $0x78] sm:$0xf]
      %v7958 = vld [vmem:[%s3214 + $0x7c] sm:$0xf]
      %v7959 = vld [vmem:[%s3214 + $0x80] sm:$0x1]
      %v7960 = vld [vmem:[%s3214 + $0x84] sm:$0xf]
      %v7961 = vld [vmem:[%s3214 + $0x88] sm:$0xf]
      %v7962 = vld [vmem:[%s3214 + $0x8c] sm:$0x1]
      %v7963 = vld [vmem:[%s3214 + $0x90] sm:$0xf]
      %v7964 = vld [vmem:[%s3214 + $0x94] sm:$0xf]
      %v7965 = vld [vmem:[%s3214 + $0x98] sm:$0x1]
      %v7966 = vld [vmem:[%s3214 + $0x9c] sm:$0xf]
      %v7967 = vld [vmem:[%s3214 + $0xa0] sm:$0xf]
      %v7968 = vld [vmem:[%s3214 + $0xa4] sm:$0x1]
      %v7969 = vld [vmem:[%s3214 + $0xa8] sm:$0xf]
      %v7970 = vld [vmem:[%s3214 + $0xac] sm:$0xf]
      %v7971 = vld [vmem:[%s3214 + $0xb0] sm:$0x1]
      %v7972 = vld [vmem:[%s3214 + $0xb4] sm:$0xf]
      %v7973 = vld [vmem:[%s3214 + $0xb8] sm:$0xf]
      %v7974 = vld [vmem:[%s3214 + $0xbc] sm:$0x1]
      %v7976 = vshrl.u32 %v7927, 16
      %v7978 = vrot.slane %v7976, 4
      %v7979 = vshll.u32 %v7927, 16
      %v7981 = vrot.slane %v7979, 5
      %v7982 = vor.u32 %v7978, %v7981
      %v7983 = vrot.slane %v7982, 4
      %v7985 = vshll.u32 %v7928, 16
      %v7987 = vrot.slane %v7985, 5
      %v7988 = vsel %vm1349, %v7983, %v7987
      %v7989 = vshrl.u32 %v7928, 16
      %v7991 = vrot.slane %v7989, 4
      %v7992 = vor.u32 %v7991, %v7987
      %v7993 = vrot.slane %v7992, 4
      %v7995 = vshll.u32 %v7929, 16
      %v7997 = vrot.slane %v7995, 5
      %v7998 = vsel %vm1349, %v7993, %v7997
      %v8000 = vshrl.u32 %v7930, 16
      %v8002 = vrot.slane %v8000, 4
      %v8003 = vshll.u32 %v7930, 16
      %v8005 = vrot.slane %v8003, 5
      %v8006 = vor.u32 %v8002, %v8005
      %v8007 = vrot.slane %v8006, 4
      %v8009 = vshll.u32 %v7931, 16
      %v8011 = vrot.slane %v8009, 5
      %v8012 = vsel %vm1349, %v8007, %v8011
      %v8013 = vshrl.u32 %v7931, 16
      %v8015 = vrot.slane %v8013, 4
      %v8016 = vor.u32 %v8015, %v8011
      %v8017 = vrot.slane %v8016, 4
      %v8019 = vshll.u32 %v7932, 16
      %v8021 = vrot.slane %v8019, 5
      %v8022 = vsel %vm1349, %v8017, %v8021
      %v8024 = vshrl.u32 %v7933, 16
      %v8026 = vrot.slane %v8024, 4
      %v8027 = vshll.u32 %v7933, 16
      %v8029 = vrot.slane %v8027, 5
      %v8030 = vor.u32 %v8026, %v8029
      %v8031 = vrot.slane %v8030, 4
      %v8033 = vshll.u32 %v7934, 16
      %v8035 = vrot.slane %v8033, 5
      %v8036 = vsel %vm1349, %v8031, %v8035
      %v8037 = vshrl.u32 %v7934, 16
      %v8039 = vrot.slane %v8037, 4
      %v8040 = vor.u32 %v8039, %v8035
      %v8041 = vrot.slane %v8040, 4
      %v8043 = vshll.u32 %v7935, 16
      %v8045 = vrot.slane %v8043, 5
      %v8046 = vsel %vm1349, %v8041, %v8045
      %v8048 = vshrl.u32 %v7936, 16
      %v8050 = vrot.slane %v8048, 4
      %v8051 = vshll.u32 %v7936, 16
      %v8053 = vrot.slane %v8051, 5
      %v8054 = vor.u32 %v8050, %v8053
      %v8055 = vrot.slane %v8054, 4
      %v8057 = vshll.u32 %v7937, 16
      %v8059 = vrot.slane %v8057, 5
      %v8060 = vsel %vm1349, %v8055, %v8059
      %v8061 = vshrl.u32 %v7937, 16
      %v8063 = vrot.slane %v8061, 4
      %v8064 = vor.u32 %v8063, %v8059
      %v8065 = vrot.slane %v8064, 4
      %v8067 = vshll.u32 %v7938, 16
      %v8069 = vrot.slane %v8067, 5
      %v8070 = vsel %vm1349, %v8065, %v8069
      %v8072 = vshrl.u32 %v7939, 16
      %v8074 = vrot.slane %v8072, 4
      %v8075 = vshll.u32 %v7939, 16
      %v8077 = vrot.slane %v8075, 5
      %v8078 = vor.u32 %v8074, %v8077
      %v8079 = vrot.slane %v8078, 4
      %v8081 = vshll.u32 %v7940, 16
      %v8083 = vrot.slane %v8081, 5
      %v8084 = vsel %vm1349, %v8079, %v8083
      %v8085 = vshrl.u32 %v7940, 16
      %v8087 = vrot.slane %v8085, 4
      %v8088 = vor.u32 %v8087, %v8083
      %v8089 = vrot.slane %v8088, 4
      %v8091 = vshll.u32 %v7941, 16
      %v8093 = vrot.slane %v8091, 5
      %v8094 = vsel %vm1349, %v8089, %v8093
      %v8096 = vshrl.u32 %v7942, 16
      %v8098 = vrot.slane %v8096, 4
      %v8099 = vshll.u32 %v7942, 16
      %v8101 = vrot.slane %v8099, 5
      %v8102 = vor.u32 %v8098, %v8101
      %v8103 = vrot.slane %v8102, 4
      %v8105 = vshll.u32 %v7943, 16
      %v8107 = vrot.slane %v8105, 5
      %v8108 = vsel %vm1349, %v8103, %v8107
      %v8109 = vshrl.u32 %v7943, 16
      %v8111 = vrot.slane %v8109, 4
      %v8112 = vor.u32 %v8111, %v8107
      %v8113 = vrot.slane %v8112, 4
      %v8115 = vshll.u32 %v7944, 16
      %v8117 = vrot.slane %v8115, 5
      %v8118 = vsel %vm1349, %v8113, %v8117
      %v8120 = vshrl.u32 %v7945, 16
      %v8122 = vrot.slane %v8120, 4
      %v8123 = vshll.u32 %v7945, 16
      %v8125 = vrot.slane %v8123, 5
      %v8126 = vor.u32 %v8122, %v8125
      %v8127 = vrot.slane %v8126, 4
      %v8129 = vshll.u32 %v7946, 16
      %v8131 = vrot.slane %v8129, 5
      %v8132 = vsel %vm1349, %v8127, %v8131
      %v8133 = vshrl.u32 %v7946, 16
      %v8135 = vrot.slane %v8133, 4
      %v8136 = vor.u32 %v8135, %v8131
      %v8137 = vrot.slane %v8136, 4
      %v8139 = vshll.u32 %v7947, 16
      %v8141 = vrot.slane %v8139, 5
      %v8142 = vsel %vm1349, %v8137, %v8141
      %v8144 = vshrl.u32 %v7948, 16
      %v8146 = vrot.slane %v8144, 4
      %v8147 = vshll.u32 %v7948, 16
      %v8149 = vrot.slane %v8147, 5
      %v8150 = vor.u32 %v8146, %v8149
      %v8151 = vrot.slane %v8150, 4
      %v8153 = vshll.u32 %v7949, 16
      %v8155 = vrot.slane %v8153, 5
      %v8156 = vsel %vm1349, %v8151, %v8155
      %v8157 = vshrl.u32 %v7949, 16
      %v8159 = vrot.slane %v8157, 4
      %v8160 = vor.u32 %v8159, %v8155
      %v8161 = vrot.slane %v8160, 4
      %v8163 = vshll.u32 %v7950, 16
      %v8165 = vrot.slane %v8163, 5
      %v8166 = vsel %vm1349, %v8161, %v8165
      %v8168 = vshrl.u32 %v7951, 16
      %v8170 = vrot.slane %v8168, 4
      %v8171 = vshll.u32 %v7951, 16
      %v8173 = vrot.slane %v8171, 5
      %v8174 = vor.u32 %v8170, %v8173
      %v8175 = vrot.slane %v8174, 4
      %v8177 = vshll.u32 %v7952, 16
      %v8179 = vrot.slane %v8177, 5
      %v8180 = vsel %vm1349, %v8175, %v8179
      %v8181 = vshrl.u32 %v7952, 16
      %v8183 = vrot.slane %v8181, 4
      %v8184 = vor.u32 %v8183, %v8179
      %v8185 = vrot.slane %v8184, 4
      %v8187 = vshll.u32 %v7953, 16
      %v8189 = vrot.slane %v8187, 5
      %v8190 = vsel %vm1349, %v8185, %v8189
      %v8192 = vshrl.u32 %v7954, 16
      %v8194 = vrot.slane %v8192, 4
      %v8195 = vshll.u32 %v7954, 16
      %v8197 = vrot.slane %v8195, 5
      %v8198 = vor.u32 %v8194, %v8197
      %v8199 = vrot.slane %v8198, 4
      %v8201 = vshll.u32 %v7955, 16
      %v8203 = vrot.slane %v8201, 5
      %v8204 = vsel %vm1349, %v8199, %v8203
      %v8205 = vshrl.u32 %v7955, 16
      %v8207 = vrot.slane %v8205, 4
      %v8208 = vor.u32 %v8207, %v8203
      %v8209 = vrot.slane %v8208, 4
      %v8211 = vshll.u32 %v7956, 16
      %v8213 = vrot.slane %v8211, 5
      %v8214 = vsel %vm1349, %v8209, %v8213
      %v8216 = vshrl.u32 %v7957, 16
      %v8218 = vrot.slane %v8216, 4
      %v8219 = vshll.u32 %v7957, 16
      %v8221 = vrot.slane %v8219, 5
      %v8222 = vor.u32 %v8218, %v8221
      %v8223 = vrot.slane %v8222, 4
      %v8225 = vshll.u32 %v7958, 16
      %v8227 = vrot.slane %v8225, 5
      %v8228 = vsel %vm1349, %v8223, %v8227
      %v8229 = vshrl.u32 %v7958, 16
      %v8231 = vrot.slane %v8229, 4
      %v8232 = vor.u32 %v8231, %v8227
      %v8233 = vrot.slane %v8232, 4
      %v8235 = vshll.u32 %v7959, 16
      %v8237 = vrot.slane %v8235, 5
      %v8238 = vsel %vm1349, %v8233, %v8237
      %v8240 = vshrl.u32 %v7960, 16
      %v8242 = vrot.slane %v8240, 4
      %v8243 = vshll.u32 %v7960, 16
      %v8245 = vrot.slane %v8243, 5
      %v8246 = vor.u32 %v8242, %v8245
      %v8247 = vrot.slane %v8246, 4
      %v8249 = vshll.u32 %v7961, 16
      %v8251 = vrot.slane %v8249, 5
      %v8252 = vsel %vm1349, %v8247, %v8251
      %v8253 = vshrl.u32 %v7961, 16
      %v8255 = vrot.slane %v8253, 4
      %v8256 = vor.u32 %v8255, %v8251
      %v8257 = vrot.slane %v8256, 4
      %v8259 = vshll.u32 %v7962, 16
      %v8261 = vrot.slane %v8259, 5
      %v8262 = vsel %vm1349, %v8257, %v8261
      %v8264 = vshrl.u32 %v7963, 16
      %v8266 = vrot.slane %v8264, 4
      %v8267 = vshll.u32 %v7963, 16
      %v8269 = vrot.slane %v8267, 5
      %v8270 = vor.u32 %v8266, %v8269
      %v8271 = vrot.slane %v8270, 4
      %v8273 = vshll.u32 %v7964, 16
      %v8275 = vrot.slane %v8273, 5
      %v8276 = vsel %vm1349, %v8271, %v8275
      %v8277 = vshrl.u32 %v7964, 16
      %v8279 = vrot.slane %v8277, 4
      %v8280 = vor.u32 %v8279, %v8275
      %v8281 = vrot.slane %v8280, 4
      %v8283 = vshll.u32 %v7965, 16
      %v8285 = vrot.slane %v8283, 5
      %v8286 = vsel %vm1349, %v8281, %v8285
      %v8288 = vshrl.u32 %v7966, 16
      %v8290 = vrot.slane %v8288, 4
      %v8291 = vshll.u32 %v7966, 16
      %v8293 = vrot.slane %v8291, 5
      %v8294 = vor.u32 %v8290, %v8293
      %v8295 = vrot.slane %v8294, 4
      %v8297 = vshll.u32 %v7967, 16
      %v8299 = vrot.slane %v8297, 5
      %v8300 = vsel %vm1349, %v8295, %v8299
      %v8301 = vshrl.u32 %v7967, 16
      %v8303 = vrot.slane %v8301, 4
      %v8304 = vor.u32 %v8303, %v8299
      %v8305 = vrot.slane %v8304, 4
      %v8307 = vshll.u32 %v7968, 16
      %v8309 = vrot.slane %v8307, 5
      %v8310 = vsel %vm1349, %v8305, %v8309
      %v8312 = vshrl.u32 %v7969, 16
      %v8314 = vrot.slane %v8312, 4
      %v8315 = vshll.u32 %v7969, 16
      %v8317 = vrot.slane %v8315, 5
      %v8318 = vor.u32 %v8314, %v8317
      %v8319 = vrot.slane %v8318, 4
      %v8321 = vshll.u32 %v7970, 16
      %v8323 = vrot.slane %v8321, 5
      %v8324 = vsel %vm1349, %v8319, %v8323
      %v8325 = vshrl.u32 %v7970, 16
      %v8327 = vrot.slane %v8325, 4
      %v8328 = vor.u32 %v8327, %v8323
      %v8329 = vrot.slane %v8328, 4
      %v8331 = vshll.u32 %v7971, 16
      %v8333 = vrot.slane %v8331, 5
      %v8334 = vsel %vm1349, %v8329, %v8333
      %v8336 = vshrl.u32 %v7972, 16
      %v8338 = vrot.slane %v8336, 4
      %v8339 = vshll.u32 %v7972, 16
      %v8341 = vrot.slane %v8339, 5
      %v8342 = vor.u32 %v8338, %v8341
      %v8343 = vrot.slane %v8342, 4
      %v8345 = vshll.u32 %v7973, 16
      %v8347 = vrot.slane %v8345, 5
      %v8348 = vsel %vm1349, %v8343, %v8347
      %v8349 = vshrl.u32 %v7973, 16
      %v8351 = vrot.slane %v8349, 4
      %v8352 = vor.u32 %v8351, %v8347
      %v8353 = vrot.slane %v8352, 4
      %v8355 = vshll.u32 %v7974, 16
      %v8357 = vrot.slane %v8355, 5
      %v8358 = vsel %vm1349, %v8353, %v8357
      %v8359 = vunpack.c.l.b16 %v7988
      %v8360 = vunpack.c.l.b16 %v7998
      %v8361 = vunpack.c.l.b16 %v8012
      %v8362 = vunpack.c.l.b16 %v8022
      %v8363 = vunpack.c.l.b16 %v8036
      %v8364 = vunpack.c.l.b16 %v8046
      %v8365 = vunpack.c.l.b16 %v8060
      %v8366 = vunpack.c.l.b16 %v8070
      %v8367 = vunpack.c.l.b16 %v8084
      %v8368 = vunpack.c.l.b16 %v8094
      %v8369 = vunpack.c.l.b16 %v8108
      %v8370 = vunpack.c.l.b16 %v8118
      %v8371 = vunpack.c.l.b16 %v8132
      %v8372 = vunpack.c.l.b16 %v8142
      %v8373 = vunpack.c.l.b16 %v8156
      %v8374 = vunpack.c.l.b16 %v8166
      %v8375 = vunpack.c.l.b16 %v8180
      %v8376 = vunpack.c.l.b16 %v8190
      %v8377 = vunpack.c.l.b16 %v8204
      %v8378 = vunpack.c.l.b16 %v8214
      %v8379 = vunpack.c.l.b16 %v8228
      %v8380 = vunpack.c.l.b16 %v8238
      %v8381 = vunpack.c.l.b16 %v8252
      %v8382 = vunpack.c.l.b16 %v8262
      %v8383 = vunpack.c.l.b16 %v8276
      %v8384 = vunpack.c.l.b16 %v8286
      %v8385 = vunpack.c.l.b16 %v8300
      %v8386 = vunpack.c.l.b16 %v8310
      %v8387 = vunpack.c.l.b16 %v8324
      %v8388 = vunpack.c.l.b16 %v8334
      %v8389 = vunpack.c.l.b16 %v8348
      %v8390 = vunpack.c.l.b16 %v8358
      %v8391 = vpack.c.b16 %v8360, %v8359
      %v8392 = vpack.c.b16 %v8362, %v8361
      %v8393 = vpack.c.b16 %v8364, %v8363
      %v8394 = vpack.c.b16 %v8366, %v8365
      %v8395 = vpack.c.b16 %v8368, %v8367
      %v8396 = vpack.c.b16 %v8370, %v8369
      %v8397 = vpack.c.b16 %v8372, %v8371
      %v8398 = vpack.c.b16 %v8374, %v8373
      %v8399 = vpack.c.b16 %v8376, %v8375
      %v8400 = vpack.c.b16 %v8378, %v8377
      %v8401 = vpack.c.b16 %v8380, %v8379
      %v8402 = vpack.c.b16 %v8382, %v8381
      %v8403 = vpack.c.b16 %v8384, %v8383
      %v8404 = vpack.c.b16 %v8386, %v8385
      %v8405 = vpack.c.b16 %v8388, %v8387
      %v8406 = vpack.c.b16 %v8390, %v8389
      %8407 = vrot.lane.b32.xlu0 %v8391, 56
      %v8408 = vpop.permute.xlu0 %8407
      %8409 = vrot.lane.b32.xlu0 %v8392, 56
      %v8410 = vpop.permute.xlu0 %8409
      %8411 = vrot.lane.b32.xlu0 %v8393, 56
      %v8412 = vpop.permute.xlu0 %8411
      %8413 = vrot.lane.b32.xlu0 %v8394, 56
      %v8414 = vpop.permute.xlu0 %8413
      %8415 = vrot.lane.b32.xlu0 %v8395, 56
      %v8416 = vpop.permute.xlu0 %8415
      %8417 = vrot.lane.b32.xlu0 %v8396, 56
      %v8418 = vpop.permute.xlu0 %8417
      %8419 = vrot.lane.b32.xlu0 %v8397, 56
      %v8420 = vpop.permute.xlu0 %8419
      %8421 = vrot.lane.b32.xlu0 %v8398, 56
      %v8422 = vpop.permute.xlu0 %8421
      %8423 = vrot.lane.b32.xlu0 %v8399, 56
      %v8424 = vpop.permute.xlu0 %8423
      %8425 = vrot.lane.b32.xlu0 %v8400, 56
      %v8426 = vpop.permute.xlu0 %8425
      %8427 = vrot.lane.b32.xlu0 %v8401, 56
      %v8428 = vpop.permute.xlu0 %8427
      %8429 = vrot.lane.b32.xlu0 %v8402, 56
      %v8430 = vpop.permute.xlu0 %8429
      %8431 = vrot.lane.b32.xlu0 %v8403, 56
      %v8432 = vpop.permute.xlu0 %8431
      %8433 = vrot.lane.b32.xlu0 %v8404, 56
      %v8434 = vpop.permute.xlu0 %8433
      %8435 = vrot.lane.b32.xlu0 %v8405, 56
      %v8436 = vpop.permute.xlu0 %8435
      %8437 = vrot.lane.b32.xlu0 %v8406, 56
      %v8438 = vpop.permute.xlu0 %8437
      %8455 = vst.msk [vmem:[#allocation3] sm:$0xff] %vm3920, %v8408
      %8456 = vst.msk [vmem:[#allocation3 + $0x8] sm:$0xff] %vm3920, %v8410
      %8457 = vst.msk [vmem:[#allocation3 + $0x10] sm:$0xff] %vm3920, %v8412
      %8458 = vst.msk [vmem:[#allocation3 + $0x18] sm:$0xff] %vm3920, %v8414
      %8459 = vst.msk [vmem:[#allocation3 + $0x20] sm:$0xff] %vm3920, %v8416
      %8460 = vst.msk [vmem:[#allocation3 + $0x28] sm:$0xff] %vm3920, %v8418
      %8461 = vst.msk [vmem:[#allocation3 + $0x30] sm:$0xff] %vm3920, %v8420
      %8462 = vst.msk [vmem:[#allocation3 + $0x38] sm:$0xff] %vm3920, %v8422
      %8463 = vst.msk [vmem:[#allocation3 + $0x40] sm:$0xff] %vm3920, %v8424
      %8464 = vst.msk [vmem:[#allocation3 + $0x48] sm:$0xff] %vm3920, %v8426
      %8465 = vst.msk [vmem:[#allocation3 + $0x50] sm:$0xff] %vm3920, %v8428
      %8466 = vst.msk [vmem:[#allocation3 + $0x58] sm:$0xff] %vm3920, %v8430
      %8467 = vst.msk [vmem:[#allocation3 + $0x60] sm:$0xff] %vm3920, %v8432
      %8468 = vst.msk [vmem:[#allocation3 + $0x68] sm:$0xff] %vm3920, %v8434
      %8469 = vst.msk [vmem:[#allocation3 + $0x70] sm:$0xff] %vm3920, %v8436
      %8470 = vst.msk [vmem:[#allocation3 + $0x78] sm:$0xff] %vm3920, %v8438
      %v8471 = vld [vmem:[%s3214] sm:$0xe]
      %v8472 = vld [vmem:[%s3214 + $0x4] sm:$0xf]
      %v8473 = vld [vmem:[%s3214 + $0x8] sm:$0x1]
      %v8474 = vld [vmem:[%s3214 + $0xc] sm:$0xe]
      %v8475 = vld [vmem:[%s3214 + $0x10] sm:$0xf]
      %v8476 = vld [vmem:[%s3214 + $0x14] sm:$0x1]
      %v8477 = vld [vmem:[%s3214 + $0x18] sm:$0xe]
      %v8478 = vld [vmem:[%s3214 + $0x1c] sm:$0xf]
      %v8479 = vld [vmem:[%s3214 + $0x20] sm:$0x1]
      %v8480 = vld [vmem:[%s3214 + $0x24] sm:$0xe]
      %v8481 = vld [vmem:[%s3214 + $0x28] sm:$0xf]
      %v8482 = vld [vmem:[%s3214 + $0x2c] sm:$0x1]
      %v8483 = vld [vmem:[%s3214 + $0x30] sm:$0xe]
      %v8484 = vld [vmem:[%s3214 + $0x34] sm:$0xf]
      %v8485 = vld [vmem:[%s3214 + $0x38] sm:$0x1]
      %v8486 = vld [vmem:[%s3214 + $0x3c] sm:$0xe]
      %v8487 = vld [vmem:[%s3214 + $0x40] sm:$0xf]
      %v8488 = vld [vmem:[%s3214 + $0x44] sm:$0x1]
      %v8489 = vld [vmem:[%s3214 + $0x48] sm:$0xe]
      %v8490 = vld [vmem:[%s3214 + $0x4c] sm:$0xf]
      %v8491 = vld [vmem:[%s3214 + $0x50] sm:$0x1]
      %v8492 = vld [vmem:[%s3214 + $0x54] sm:$0xe]
      %v8493 = vld [vmem:[%s3214 + $0x58] sm:$0xf]
      %v8494 = vld [vmem:[%s3214 + $0x5c] sm:$0x1]
      %v8495 = vld [vmem:[%s3214 + $0x60] sm:$0xe]
      %v8496 = vld [vmem:[%s3214 + $0x64] sm:$0xf]
      %v8497 = vld [vmem:[%s3214 + $0x68] sm:$0x1]
      %v8498 = vld [vmem:[%s3214 + $0x6c] sm:$0xe]
      %v8499 = vld [vmem:[%s3214 + $0x70] sm:$0xf]
      %v8500 = vld [vmem:[%s3214 + $0x74] sm:$0x1]
      %v8501 = vld [vmem:[%s3214 + $0x78] sm:$0xe]
      %v8502 = vld [vmem:[%s3214 + $0x7c] sm:$0xf]
      %v8503 = vld [vmem:[%s3214 + $0x80] sm:$0x1]
      %v8504 = vld [vmem:[%s3214 + $0x84] sm:$0xe]
      %v8505 = vld [vmem:[%s3214 + $0x88] sm:$0xf]
      %v8506 = vld [vmem:[%s3214 + $0x8c] sm:$0x1]
      %v8507 = vld [vmem:[%s3214 + $0x90] sm:$0xe]
      %v8508 = vld [vmem:[%s3214 + $0x94] sm:$0xf]
      %v8509 = vld [vmem:[%s3214 + $0x98] sm:$0x1]
      %v8510 = vld [vmem:[%s3214 + $0x9c] sm:$0xe]
      %v8511 = vld [vmem:[%s3214 + $0xa0] sm:$0xf]
      %v8512 = vld [vmem:[%s3214 + $0xa4] sm:$0x1]
      %v8513 = vld [vmem:[%s3214 + $0xa8] sm:$0xe]
      %v8514 = vld [vmem:[%s3214 + $0xac] sm:$0xf]
      %v8515 = vld [vmem:[%s3214 + $0xb0] sm:$0x1]
      %v8516 = vld [vmem:[%s3214 + $0xb4] sm:$0xe]
      %v8517 = vld [vmem:[%s3214 + $0xb8] sm:$0xf]
      %v8518 = vld [vmem:[%s3214 + $0xbc] sm:$0x1]
      %v8567 = vrot.slane %v8471, 5
      %v8568 = vrot.slane %v8567, 4
      %v8569 = vrot.slane %v8472, 5
      %v8570 = vsel %vm1945, %v8568, %v8569
      %v8571 = vrot.slane %v8569, 4
      %v8572 = vrot.slane %v8473, 5
      %v8573 = vsel %vm1945, %v8571, %v8572
      %v8574 = vrot.slane %v8474, 5
      %v8575 = vrot.slane %v8574, 4
      %v8576 = vrot.slane %v8475, 5
      %v8577 = vsel %vm1945, %v8575, %v8576
      %v8578 = vrot.slane %v8576, 4
      %v8579 = vrot.slane %v8476, 5
      %v8580 = vsel %vm1945, %v8578, %v8579
      %v8581 = vrot.slane %v8477, 5
      %v8582 = vrot.slane %v8581, 4
      %v8583 = vrot.slane %v8478, 5
      %v8584 = vsel %vm1945, %v8582, %v8583
      %v8585 = vrot.slane %v8583, 4
      %v8586 = vrot.slane %v8479, 5
      %v8587 = vsel %vm1945, %v8585, %v8586
      %v8588 = vrot.slane %v8480, 5
      %v8589 = vrot.slane %v8588, 4
      %v8590 = vrot.slane %v8481, 5
      %v8591 = vsel %vm1945, %v8589, %v8590
      %v8592 = vrot.slane %v8590, 4
      %v8593 = vrot.slane %v8482, 5
      %v8594 = vsel %vm1945, %v8592, %v8593
      %v8595 = vrot.slane %v8483, 5
      %v8596 = vrot.slane %v8595, 4
      %v8597 = vrot.slane %v8484, 5
      %v8598 = vsel %vm1945, %v8596, %v8597
      %v8599 = vrot.slane %v8597, 4
      %v8600 = vrot.slane %v8485, 5
      %v8601 = vsel %vm1945, %v8599, %v8600
      %v8602 = vrot.slane %v8486, 5
      %v8603 = vrot.slane %v8602, 4
      %v8604 = vrot.slane %v8487, 5
      %v8605 = vsel %vm1945, %v8603, %v8604
      %v8606 = vrot.slane %v8604, 4
      %v8607 = vrot.slane %v8488, 5
      %v8608 = vsel %vm1945, %v8606, %v8607
      %v8609 = vrot.slane %v8489, 5
      %v8610 = vrot.slane %v8609, 4
      %v8611 = vrot.slane %v8490, 5
      %v8612 = vsel %vm1945, %v8610, %v8611
      %v8613 = vrot.slane %v8611, 4
      %v8614 = vrot.slane %v8491, 5
      %v8615 = vsel %vm1945, %v8613, %v8614
      %v8616 = vrot.slane %v8492, 5
      %v8617 = vrot.slane %v8616, 4
      %v8618 = vrot.slane %v8493, 5
      %v8619 = vsel %vm1945, %v8617, %v8618
      %v8620 = vrot.slane %v8618, 4
      %v8621 = vrot.slane %v8494, 5
      %v8622 = vsel %vm1945, %v8620, %v8621
      %v8623 = vrot.slane %v8495, 5
      %v8624 = vrot.slane %v8623, 4
      %v8625 = vrot.slane %v8496, 5
      %v8626 = vsel %vm1945, %v8624, %v8625
      %v8627 = vrot.slane %v8625, 4
      %v8628 = vrot.slane %v8497, 5
      %v8629 = vsel %vm1945, %v8627, %v8628
      %v8630 = vrot.slane %v8498, 5
      %v8631 = vrot.slane %v8630, 4
      %v8632 = vrot.slane %v8499, 5
      %v8633 = vsel %vm1945, %v8631, %v8632
      %v8634 = vrot.slane %v8632, 4
      %v8635 = vrot.slane %v8500, 5
      %v8636 = vsel %vm1945, %v8634, %v8635
      %v8637 = vrot.slane %v8501, 5
      %v8638 = vrot.slane %v8637, 4
      %v8639 = vrot.slane %v8502, 5
      %v8640 = vsel %vm1945, %v8638, %v8639
      %v8641 = vrot.slane %v8639, 4
      %v8642 = vrot.slane %v8503, 5
      %v8643 = vsel %vm1945, %v8641, %v8642
      %v8644 = vrot.slane %v8504, 5
      %v8645 = vrot.slane %v8644, 4
      %v8646 = vrot.slane %v8505, 5
      %v8647 = vsel %vm1945, %v8645, %v8646
      %v8648 = vrot.slane %v8646, 4
      %v8649 = vrot.slane %v8506, 5
      %v8650 = vsel %vm1945, %v8648, %v8649
      %v8651 = vrot.slane %v8507, 5
      %v8652 = vrot.slane %v8651, 4
      %v8653 = vrot.slane %v8508, 5
      %v8654 = vsel %vm1945, %v8652, %v8653
      %v8655 = vrot.slane %v8653, 4
      %v8656 = vrot.slane %v8509, 5
      %v8657 = vsel %vm1945, %v8655, %v8656
      %v8658 = vrot.slane %v8510, 5
      %v8659 = vrot.slane %v8658, 4
      %v8660 = vrot.slane %v8511, 5
      %v8661 = vsel %vm1945, %v8659, %v8660
      %v8662 = vrot.slane %v8660, 4
      %v8663 = vrot.slane %v8512, 5
      %v8664 = vsel %vm1945, %v8662, %v8663
      %v8665 = vrot.slane %v8513, 5
      %v8666 = vrot.slane %v8665, 4
      %v8667 = vrot.slane %v8514, 5
      %v8668 = vsel %vm1945, %v8666, %v8667
      %v8669 = vrot.slane %v8667, 4
      %v8670 = vrot.slane %v8515, 5
      %v8671 = vsel %vm1945, %v8669, %v8670
      %v8672 = vrot.slane %v8516, 5
      %v8673 = vrot.slane %v8672, 4
      %v8674 = vrot.slane %v8517, 5
      %v8675 = vsel %vm1945, %v8673, %v8674
      %v8676 = vrot.slane %v8674, 4
      %v8677 = vrot.slane %v8518, 5
      %v8678 = vsel %vm1945, %v8676, %v8677
      %v8679 = vunpack.c.l.b16 %v8570
      %v8680 = vunpack.c.l.b16 %v8573
      %v8681 = vunpack.c.l.b16 %v8577
      %v8682 = vunpack.c.l.b16 %v8580
      %v8683 = vunpack.c.l.b16 %v8584
      %v8684 = vunpack.c.l.b16 %v8587
      %v8685 = vunpack.c.l.b16 %v8591
      %v8686 = vunpack.c.l.b16 %v8594
      %v8687 = vunpack.c.l.b16 %v8598
      %v8688 = vunpack.c.l.b16 %v8601
      %v8689 = vunpack.c.l.b16 %v8605
      %v8690 = vunpack.c.l.b16 %v8608
      %v8691 = vunpack.c.l.b16 %v8612
      %v8692 = vunpack.c.l.b16 %v8615
      %v8693 = vunpack.c.l.b16 %v8619
      %v8694 = vunpack.c.l.b16 %v8622
      %v8695 = vunpack.c.l.b16 %v8626
      %v8696 = vunpack.c.l.b16 %v8629
      %v8697 = vunpack.c.l.b16 %v8633
      %v8698 = vunpack.c.l.b16 %v8636
      %v8699 = vunpack.c.l.b16 %v8640
      %v8700 = vunpack.c.l.b16 %v8643
      %v8701 = vunpack.c.l.b16 %v8647
      %v8702 = vunpack.c.l.b16 %v8650
      %v8703 = vunpack.c.l.b16 %v8654
      %v8704 = vunpack.c.l.b16 %v8657
      %v8705 = vunpack.c.l.b16 %v8661
      %v8706 = vunpack.c.l.b16 %v8664
      %v8707 = vunpack.c.l.b16 %v8668
      %v8708 = vunpack.c.l.b16 %v8671
      %v8709 = vunpack.c.l.b16 %v8675
      %v8710 = vunpack.c.l.b16 %v8678
      %v8711 = vpack.c.b16 %v8680, %v8679
      %v8712 = vpack.c.b16 %v8682, %v8681
      %v8713 = vpack.c.b16 %v8684, %v8683
      %v8714 = vpack.c.b16 %v8686, %v8685
      %v8715 = vpack.c.b16 %v8688, %v8687
      %v8716 = vpack.c.b16 %v8690, %v8689
      %v8717 = vpack.c.b16 %v8692, %v8691
      %v8718 = vpack.c.b16 %v8694, %v8693
      %v8719 = vpack.c.b16 %v8696, %v8695
      %v8720 = vpack.c.b16 %v8698, %v8697
      %v8721 = vpack.c.b16 %v8700, %v8699
      %v8722 = vpack.c.b16 %v8702, %v8701
      %v8723 = vpack.c.b16 %v8704, %v8703
      %v8724 = vpack.c.b16 %v8706, %v8705
      %v8725 = vpack.c.b16 %v8708, %v8707
      %v8726 = vpack.c.b16 %v8710, %v8709
      %8727 = vrot.lane.b32.xlu0 %v8711, 64
      %v8728 = vpop.permute.xlu0 %8727
      %8729 = vrot.lane.b32.xlu0 %v8712, 64
      %v8730 = vpop.permute.xlu0 %8729
      %8731 = vrot.lane.b32.xlu0 %v8713, 64
      %v8732 = vpop.permute.xlu0 %8731
      %8733 = vrot.lane.b32.xlu0 %v8714, 64
      %v8734 = vpop.permute.xlu0 %8733
      %8735 = vrot.lane.b32.xlu0 %v8715, 64
      %v8736 = vpop.permute.xlu0 %8735
      %8737 = vrot.lane.b32.xlu0 %v8716, 64
      %v8738 = vpop.permute.xlu0 %8737
      %8739 = vrot.lane.b32.xlu0 %v8717, 64
      %v8740 = vpop.permute.xlu0 %8739
      %8741 = vrot.lane.b32.xlu0 %v8718, 64
      %v8742 = vpop.permute.xlu0 %8741
      %8743 = vrot.lane.b32.xlu0 %v8719, 64
      %v8744 = vpop.permute.xlu0 %8743
      %8745 = vrot.lane.b32.xlu0 %v8720, 64
      %v8746 = vpop.permute.xlu0 %8745
      %8747 = vrot.lane.b32.xlu0 %v8721, 64
      %v8748 = vpop.permute.xlu0 %8747
      %8749 = vrot.lane.b32.xlu0 %v8722, 64
      %v8750 = vpop.permute.xlu0 %8749
      %8751 = vrot.lane.b32.xlu0 %v8723, 64
      %v8752 = vpop.permute.xlu0 %8751
      %8753 = vrot.lane.b32.xlu0 %v8724, 64
      %v8754 = vpop.permute.xlu0 %8753
      %8755 = vrot.lane.b32.xlu0 %v8725, 64
      %v8756 = vpop.permute.xlu0 %8755
      %8757 = vrot.lane.b32.xlu0 %v8726, 64
      %v8758 = vpop.permute.xlu0 %8757
      %8775 = vst.msk [vmem:[#allocation3] sm:$0xff] %vm4241, %v8728
      %8776 = vst.msk [vmem:[#allocation3 + $0x8] sm:$0xff] %vm4241, %v8730
      %8777 = vst.msk [vmem:[#allocation3 + $0x10] sm:$0xff] %vm4241, %v8732
      %8778 = vst.msk [vmem:[#allocation3 + $0x18] sm:$0xff] %vm4241, %v8734
      %8779 = vst.msk [vmem:[#allocation3 + $0x20] sm:$0xff] %vm4241, %v8736
      %8780 = vst.msk [vmem:[#allocation3 + $0x28] sm:$0xff] %vm4241, %v8738
      %8781 = vst.msk [vmem:[#allocation3 + $0x30] sm:$0xff] %vm4241, %v8740
      %8782 = vst.msk [vmem:[#allocation3 + $0x38] sm:$0xff] %vm4241, %v8742
      %8783 = vst.msk [vmem:[#allocation3 + $0x40] sm:$0xff] %vm4241, %v8744
      %8784 = vst.msk [vmem:[#allocation3 + $0x48] sm:$0xff] %vm4241, %v8746
      %8785 = vst.msk [vmem:[#allocation3 + $0x50] sm:$0xff] %vm4241, %v8748
      %8786 = vst.msk [vmem:[#allocation3 + $0x58] sm:$0xff] %vm4241, %v8750
      %8787 = vst.msk [vmem:[#allocation3 + $0x60] sm:$0xff] %vm4241, %v8752
      %8788 = vst.msk [vmem:[#allocation3 + $0x68] sm:$0xff] %vm4241, %v8754
      %8789 = vst.msk [vmem:[#allocation3 + $0x70] sm:$0xff] %vm4241, %v8756
      %8790 = vst.msk [vmem:[#allocation3 + $0x78] sm:$0xff] %vm4241, %v8758
      %v8791 = vld [vmem:[#allocation3] sm:$0xff]
      %v8792 = vld [vmem:[#allocation3 + $0x8] sm:$0xff]
      %v8793 = vld [vmem:[#allocation3 + $0x10] sm:$0xff]
      %v8794 = vld [vmem:[#allocation3 + $0x18] sm:$0xff]
      %v8795 = vld [vmem:[#allocation3 + $0x20] sm:$0xff]
      %v8796 = vld [vmem:[#allocation3 + $0x28] sm:$0xff]
      %v8797 = vld [vmem:[#allocation3 + $0x30] sm:$0xff]
      %v8798 = vld [vmem:[#allocation3 + $0x38] sm:$0xff]
      %v8799 = vld [vmem:[#allocation3 + $0x40] sm:$0xff]
      %v8800 = vld [vmem:[#allocation3 + $0x48] sm:$0xff]
      %v8801 = vld [vmem:[#allocation3 + $0x50] sm:$0xff]
      %v8802 = vld [vmem:[#allocation3 + $0x58] sm:$0xff]
      %v8803 = vld [vmem:[#allocation3 + $0x60] sm:$0xff]
      %v8804 = vld [vmem:[#allocation3 + $0x68] sm:$0xff]
      %v8805 = vld [vmem:[#allocation3 + $0x70] sm:$0xff]
      %v8806 = vld [vmem:[#allocation3 + $0x78] sm:$0xff]
      %v8807 = vld [vmem:[%s4] sm:$0xf]
      %v8808 = vld [vmem:[%s4 + $0x4] sm:$0xf]
      %v8809 = vld [vmem:[%s4 + $0x8] sm:$0xf]
      %v8810 = vld [vmem:[%s4 + $0xc] sm:$0xf]
      %v8811 = vld [vmem:[%s4 + $0x10] sm:$0xf]
      %v8812 = vld [vmem:[%s4 + $0x14] sm:$0xf]
      %v8813 = vld [vmem:[%s4 + $0x18] sm:$0xf]
      %v8814 = vld [vmem:[%s4 + $0x1c] sm:$0xf]
      %v8815 = vld [vmem:[%s4 + $0x20] sm:$0xf]
      %v8825 = vunpack.c.l.b16 %v8807
      %v8826 = vunpack.c.l.b16 %v8808
      %v8827 = vunpack.c.l.b16 %v8809
      %v8828 = vunpack.c.l.b16 %v8810
      %v8829 = vunpack.c.l.b16 %v8811
      %v8830 = vunpack.c.l.b16 %v8812
      %v8831 = vunpack.c.l.b16 %v8813
      %v8832 = vunpack.c.l.b16 %v8814
      %v8833 = vunpack.c.l.b16 %v8815
      %v8834 = vpack.c.b16 %v8826, %v8825
      %v8835 = vpack.c.b16 %v8828, %v8827
      %v8836 = vpack.c.b16 %v8830, %v8829
      %v8837 = vpack.c.b16 %v8832, %v8831
      %v8838 = vpack.c.b16 %v8833, %v8833
      %v8844 = vsel %vm4310, %v8791, 0
      %v8847 = vsel %vm4310, %v8792, 0
      %v8850 = vsel %vm4310, %v8793, 0
      %v8853 = vsel %vm4310, %v8794, 0
      %v8856 = vsel %vm4310, %v8795, 0
      %v8859 = vsel %vm4310, %v8796, 0
      %v8862 = vsel %vm4310, %v8797, 0
      %v8865 = vsel %vm4310, %v8798, 0
      %v8868 = vsel %vm4310, %v8799, 0
      %v8871 = vsel %vm4310, %v8800, 0
      %v8874 = vsel %vm4310, %v8801, 0
      %v8877 = vsel %vm4310, %v8802, 0
      %v8880 = vsel %vm4310, %v8803, 0
      %v8883 = vsel %vm4310, %v8804, 0
      %v8886 = vsel %vm4310, %v8805, 0
      %v8889 = vsel %vm4310, %v8806, 0
      %v8892 = vsel %vm4359, %v8838, 0
      %8894 = vmatprep.subr.bf16.mxu0 0
      %8895 = vmatpush1.bf16.msra.mxu0 %v8834
      %8896 = vmatprep.subr.bf16.mxu0 0
      %8897 = vmatpush1.bf16.msra.mxu0 %v8835
      %8898 = vmatprep.subr.bf16.mxu0 0
      %8899 = vmatpush1.bf16.msra.mxu0 %v8836
      %8900 = vmatprep.subr.bf16.mxu0 0
      %8901 = vmatpush1.bf16.msra.mxu0 %v8837
      %8902 = vmatprep.subr.bf16.mxu0 0
      %8903 = vmatpush1.bf16.msra.mxu0 %v8892
      %8904 = vmatprep.subr.bf16.mxu0 0
      %8905 = vmatpush1.bf16.msra.mxu0 0
      %8906 = vmatprep.subr.bf16.mxu0 0
      %8907 = vmatpush1.bf16.msra.mxu0 0
      %8908 = vmatprep.subr.bf16.mxu0 0
      %8909 = vmatpush1.bf16.msra.mxu0 0
      %8910 = vmatprep.subr.bf16.mxu0 0
      %8911 = vmatpush1.bf16.msra.mxu0 0
      %8912 = vmatprep.subr.bf16.mxu0 0
      %8913 = vmatpush1.bf16.msra.mxu0 0
      %8914 = vmatprep.subr.bf16.mxu0 0
      %8915 = vmatpush1.bf16.msra.mxu0 0
      %8916 = vmatprep.subr.bf16.mxu0 0
      %8917 = vmatpush1.bf16.msra.mxu0 0
      %8918 = vmatprep.subr.bf16.mxu0 0
      %8919 = vmatpush1.bf16.msra.mxu0 0
      %8920 = vmatprep.subr.bf16.mxu0 0
      %8921 = vmatpush1.bf16.msra.mxu0 0
      %8922 = vmatprep.subr.bf16.mxu0 0
      %8923 = vmatpush1.bf16.msra.mxu0 0
      %8924 = vmatprep.subr.bf16.mxu0 0
      %8925 = vmatpush1.bf16.msra.mxu0 0
      %8926 = vmatprep.mubr.bf16.mxu0 0
      %8927 = vmatmul.mubr.bf16.gmra.mrb[0].mxu0 %v8844
      %v8928 = vpop.f32.mrb[0].mxu0
      %v8929 = vadd.f32 0.0, %v8928
      %v8930 = vpop.f32.mrb[0].mxu0
      %v8931 = vpop.f32.mrb[0].mxu0
      %v8932 = vadd.f32 0.0, %v8931
      %v8933 = vpop.f32.mrb[0].mxu0
      %8934 = vmatprep.mubr.bf16.mxu0 0
      %8935 = vmatmul.mubr.bf16.gmra.mrb[0].mxu0 %v8847
      %v8936 = vpop.f32.mrb[0].mxu0
      %v8937 = vadd.f32 0.0, %v8936
      %v8938 = vpop.f32.mrb[0].mxu0
      %v8939 = vpop.f32.mrb[0].mxu0
      %v8940 = vadd.f32 0.0, %v8939
      %v8941 = vpop.f32.mrb[0].mxu0
      %8942 = vmatprep.mubr.bf16.mxu0 0
      %8943 = vmatmul.mubr.bf16.gmra.mrb[0].mxu0 %v8850
      %v8944 = vpop.f32.mrb[0].mxu0
      %v8945 = vadd.f32 0.0, %v8944
      %v8946 = vpop.f32.mrb[0].mxu0
      %v8947 = vpop.f32.mrb[0].mxu0
      %v8948 = vadd.f32 0.0, %v8947
      %v8949 = vpop.f32.mrb[0].mxu0
      %8950 = vmatprep.mubr.bf16.mxu0 0
      %8951 = vmatmul.mubr.bf16.gmra.mrb[0].mxu0 %v8853
      %v8952 = vpop.f32.mrb[0].mxu0
      %v8953 = vadd.f32 0.0, %v8952
      %v8954 = vpop.f32.mrb[0].mxu0
      %v8955 = vpop.f32.mrb[0].mxu0
      %v8956 = vadd.f32 0.0, %v8955
      %v8957 = vpop.f32.mrb[0].mxu0
      %8958 = vmatprep.mubr.bf16.mxu0 0
      %8959 = vmatmul.mubr.bf16.gmra.mrb[0].mxu0 %v8856
      %v8960 = vpop.f32.mrb[0].mxu0
      %v8961 = vadd.f32 0.0, %v8960
      %v8962 = vpop.f32.mrb[0].mxu0
      %v8963 = vpop.f32.mrb[0].mxu0
      %v8964 = vadd.f32 0.0, %v8963
      %v8965 = vpop.f32.mrb[0].mxu0
      %8966 = vmatprep.mubr.bf16.mxu0 0
      %8967 = vmatmul.mubr.bf16.gmra.mrb[0].mxu0 %v8859
      %v8968 = vpop.f32.mrb[0].mxu0
      %v8969 = vadd.f32 0.0, %v8968
      %v8970 = vpop.f32.mrb[0].mxu0
      %v8971 = vpop.f32.mrb[0].mxu0
      %v8972 = vadd.f32 0.0, %v8971
      %v8973 = vpop.f32.mrb[0].mxu0
      %8974 = vmatprep.mubr.bf16.mxu0 0
      %8975 = vmatmul.mubr.bf16.gmra.mrb[0].mxu0 %v8862
      %v8976 = vpop.f32.mrb[0].mxu0
      %v8977 = vadd.f32 0.0, %v8976
      %v8978 = vpop.f32.mrb[0].mxu0
      %v8979 = vpop.f32.mrb[0].mxu0
      %v8980 = vadd.f32 0.0, %v8979
      %v8981 = vpop.f32.mrb[0].mxu0
      %8982 = vmatprep.mubr.bf16.mxu0 0
      %8983 = vmatmul.mubr.bf16.gmra.mrb[0].mxu0 %v8865
      %v8984 = vpop.f32.mrb[0].mxu0
      %v8985 = vadd.f32 0.0, %v8984
      %v8986 = vpop.f32.mrb[0].mxu0
      %v8987 = vpop.f32.mrb[0].mxu0
      %v8988 = vadd.f32 0.0, %v8987
      %v8989 = vpop.f32.mrb[0].mxu0
      %8990 = vmatprep.mubr.bf16.mxu0 0
      %8991 = vmatmul.mubr.bf16.gmra.mrb[0].mxu0 %v8868
      %v8992 = vpop.f32.mrb[0].mxu0
      %v8993 = vadd.f32 0.0, %v8992
      %v8994 = vpop.f32.mrb[0].mxu0
      %v8995 = vpop.f32.mrb[0].mxu0
      %v8996 = vadd.f32 0.0, %v8995
      %v8997 = vpop.f32.mrb[0].mxu0
      %8998 = vmatprep.mubr.bf16.mxu0 0
      %8999 = vmatmul.mubr.bf16.gmra.mrb[0].mxu0 %v8871
      %v9000 = vpop.f32.mrb[0].mxu0
      %v9001 = vadd.f32 0.0, %v9000
      %v9002 = vpop.f32.mrb[0].mxu0
      %v9003 = vpop.f32.mrb[0].mxu0
      %v9004 = vadd.f32 0.0, %v9003
      %v9005 = vpop.f32.mrb[0].mxu0
      %9006 = vmatprep.mubr.bf16.mxu0 0
      %9007 = vmatmul.mubr.bf16.gmra.mrb[0].mxu0 %v8874
      %v9008 = vpop.f32.mrb[0].mxu0
      %v9009 = vadd.f32 0.0, %v9008
      %v9010 = vpop.f32.mrb[0].mxu0
      %v9011 = vpop.f32.mrb[0].mxu0
      %v9012 = vadd.f32 0.0, %v9011
      %v9013 = vpop.f32.mrb[0].mxu0
      %9014 = vmatprep.mubr.bf16.mxu0 0
      %9015 = vmatmul.mubr.bf16.gmra.mrb[0].mxu0 %v8877
      %v9016 = vpop.f32.mrb[0].mxu0
      %v9017 = vadd.f32 0.0, %v9016
      %v9018 = vpop.f32.mrb[0].mxu0
      %v9019 = vpop.f32.mrb[0].mxu0
      %v9020 = vadd.f32 0.0, %v9019
      %v9021 = vpop.f32.mrb[0].mxu0
      %9022 = vmatprep.mubr.bf16.mxu0 0
      %9023 = vmatmul.mubr.bf16.gmra.mrb[0].mxu0 %v8880
      %v9024 = vpop.f32.mrb[0].mxu0
      %v9025 = vadd.f32 0.0, %v9024
      %v9026 = vpop.f32.mrb[0].mxu0
      %v9027 = vpop.f32.mrb[0].mxu0
      %v9028 = vadd.f32 0.0, %v9027
      %v9029 = vpop.f32.mrb[0].mxu0
      %9030 = vmatprep.mubr.bf16.mxu0 0
      %9031 = vmatmul.mubr.bf16.gmra.mrb[0].mxu0 %v8883
      %v9032 = vpop.f32.mrb[0].mxu0
      %v9033 = vadd.f32 0.0, %v9032
      %v9034 = vpop.f32.mrb[0].mxu0
      %v9035 = vpop.f32.mrb[0].mxu0
      %v9036 = vadd.f32 0.0, %v9035
      %v9037 = vpop.f32.mrb[0].mxu0
      %9038 = vmatprep.mubr.bf16.mxu0 0
      %9039 = vmatmul.mubr.bf16.gmra.mrb[0].mxu0 %v8886
      %v9040 = vpop.f32.mrb[0].mxu0
      %v9041 = vadd.f32 0.0, %v9040
      %v9042 = vpop.f32.mrb[0].mxu0
      %v9043 = vpop.f32.mrb[0].mxu0
      %v9044 = vadd.f32 0.0, %v9043
      %v9045 = vpop.f32.mrb[0].mxu0
      %9046 = vmatprep.mubr.bf16.mxu0 0
      %9047 = vmatmul.mubr.bf16.gmra.mrb[0].mxu0 %v8889
      %v9048 = vpop.f32.mrb[0].mxu0
      %v9049 = vadd.f32 0.0, %v9048
      %v9050 = vpop.f32.mrb[0].mxu0
      %v9051 = vpop.f32.mrb[0].mxu0
      %v9052 = vadd.f32 0.0, %v9051
      %v9053 = vpop.f32.mrb[0].mxu0
      %9054 = vdwg.mxu0
      %v9055 = vld [vmem:[%s5] sm:$0x1]
      %v9056 = vld [vmem:[%s6] sm:$0x1]
      %v9057 = vsel %vm1282, %v8929, 0.0
      %v9058 = vsel %vm1282, %v8932, 0.0
      %v9059 = vadd.f32 %v9057, %v9058
      %v9060 = vsel %vm1282, %v8937, 0.0
      %v9061 = vadd.f32 %v9059, %v9060
      %v9062 = vsel %vm1282, %v8940, 0.0
      %v9063 = vadd.f32 %v9061, %v9062
      %v9064 = vsel %vm1282, %v8945, 0.0
      %v9065 = vadd.f32 %v9063, %v9064
      %v9066 = vsel %vm1282, %v8948, 0.0
      %v9067 = vadd.f32 %v9065, %v9066
      %v9068 = vsel %vm1282, %v8953, 0.0
      %v9069 = vadd.f32 %v9067, %v9068
      %v9070 = vsel %vm1282, %v8956, 0.0
      %v9071 = vadd.f32 %v9069, %v9070
      %v9072 = vsel %vm1282, %v8961, 0.0
      %v9073 = vadd.f32 %v9071, %v9072
      %v9074 = vsel %vm1282, %v8964, 0.0
      %v9075 = vadd.f32 %v9073, %v9074
      %v9076 = vsel %vm1282, %v8969, 0.0
      %v9077 = vadd.f32 %v9075, %v9076
      %v9078 = vsel %vm1282, %v8972, 0.0
      %v9079 = vadd.f32 %v9077, %v9078
      %v9080 = vsel %vm1282, %v8977, 0.0
      %v9081 = vadd.f32 %v9079, %v9080
      %v9082 = vsel %vm1282, %v8980, 0.0
      %v9083 = vadd.f32 %v9081, %v9082
      %v9084 = vsel %vm1282, %v8985, 0.0
      %v9085 = vadd.f32 %v9083, %v9084
      %v9086 = vsel %vm1282, %v8988, 0.0
      %v9087 = vadd.f32 %v9085, %v9086
      %v9088 = vsel %vm1282, %v8993, 0.0
      %v9089 = vadd.f32 %v9087, %v9088
      %v9090 = vsel %vm1282, %v8996, 0.0
      %v9091 = vadd.f32 %v9089, %v9090
      %v9092 = vsel %vm1282, %v9001, 0.0
      %v9093 = vadd.f32 %v9091, %v9092
      %v9094 = vsel %vm1282, %v9004, 0.0
      %v9095 = vadd.f32 %v9093, %v9094
      %v9096 = vsel %vm1282, %v9009, 0.0
      %v9097 = vadd.f32 %v9095, %v9096
      %v9098 = vsel %vm1282, %v9012, 0.0
      %v9099 = vadd.f32 %v9097, %v9098
      %v9100 = vsel %vm1282, %v9017, 0.0
      %v9101 = vadd.f32 %v9099, %v9100
      %v9102 = vsel %vm1282, %v9020, 0.0
      %v9103 = vadd.f32 %v9101, %v9102
      %v9104 = vsel %vm1282, %v9025, 0.0
      %v9105 = vadd.f32 %v9103, %v9104
      %v9106 = vsel %vm1282, %v9028, 0.0
      %v9107 = vadd.f32 %v9105, %v9106
      %v9108 = vsel %vm1282, %v9033, 0.0
      %v9109 = vadd.f32 %v9107, %v9108
      %v9110 = vsel %vm1282, %v9036, 0.0
      %v9111 = vadd.f32 %v9109, %v9110
      %v9112 = vsel %vm1282, %v9041, 0.0
      %v9113 = vadd.f32 %v9111, %v9112
      %v9114 = vsel %vm1282, %v9044, 0.0
      %v9115 = vadd.f32 %v9113, %v9114
      %v9116 = vsel %vm1282, %v9049, 0.0
      %v9117 = vadd.f32 %v9115, %v9116
      %v9118 = vsel %vm1282, %v9052, 0.0
      %v9119 = vadd.f32 %v9117, %v9118
      %v9120 = vrot.slane %v9119, 4
      %v9121 = vadd.f32 %v9119, %v9120
      %v9122 = vrot.slane %v9121, 2
      %v9123 = vadd.f32 %v9121, %v9122
      %v9124 = vrot.slane %v9123, 1
      %v9125 = vadd.f32 %v9123, %v9124
      %v9126 = vmul.f32 %v9125, %v4595
      %v9127 = vsub.f32 %v8929, %v9126
      %v9128 = vsub.f32 %v8932, %v9126
      %v9129 = vsub.f32 %v8937, %v9126
      %v9130 = vsub.f32 %v8940, %v9126
      %v9131 = vsub.f32 %v8945, %v9126
      %v9132 = vsub.f32 %v8948, %v9126
      %v9133 = vsub.f32 %v8953, %v9126
      %v9134 = vsub.f32 %v8956, %v9126
      %v9135 = vsub.f32 %v8961, %v9126
      %v9136 = vsub.f32 %v8964, %v9126
      %v9137 = vsub.f32 %v8969, %v9126
      %v9138 = vsub.f32 %v8972, %v9126
      %v9139 = vsub.f32 %v8977, %v9126
      %v9140 = vsub.f32 %v8980, %v9126
      %v9141 = vsub.f32 %v8985, %v9126
      %v9142 = vsub.f32 %v8988, %v9126
      %v9143 = vsub.f32 %v8993, %v9126
      %v9144 = vsub.f32 %v8996, %v9126
      %v9145 = vsub.f32 %v9001, %v9126
      %v9146 = vsub.f32 %v9004, %v9126
      %v9147 = vsub.f32 %v9009, %v9126
      %v9148 = vsub.f32 %v9012, %v9126
      %v9149 = vsub.f32 %v9017, %v9126
      %v9150 = vsub.f32 %v9020, %v9126
      %v9151 = vsub.f32 %v9025, %v9126
      %v9152 = vsub.f32 %v9028, %v9126
      %v9153 = vsub.f32 %v9033, %v9126
      %v9154 = vsub.f32 %v9036, %v9126
      %v9155 = vsub.f32 %v9041, %v9126
      %v9156 = vsub.f32 %v9044, %v9126
      %v9157 = vsub.f32 %v9049, %v9126
      %v9158 = vsub.f32 %v9052, %v9126
      %v9159 = vmul.f32 %v9127, %v9127
      %v9160 = vmul.f32 %v9128, %v9128
      %v9161 = vmul.f32 %v9129, %v9129
      %v9162 = vmul.f32 %v9130, %v9130
      %v9163 = vmul.f32 %v9131, %v9131
      %v9164 = vmul.f32 %v9132, %v9132
      %v9165 = vmul.f32 %v9133, %v9133
      %v9166 = vmul.f32 %v9134, %v9134
      %v9167 = vmul.f32 %v9135, %v9135
      %v9168 = vmul.f32 %v9136, %v9136
      %v9169 = vmul.f32 %v9137, %v9137
      %v9170 = vmul.f32 %v9138, %v9138
      %v9171 = vmul.f32 %v9139, %v9139
      %v9172 = vmul.f32 %v9140, %v9140
      %v9173 = vmul.f32 %v9141, %v9141
      %v9174 = vmul.f32 %v9142, %v9142
      %v9175 = vmul.f32 %v9143, %v9143
      %v9176 = vmul.f32 %v9144, %v9144
      %v9177 = vmul.f32 %v9145, %v9145
      %v9178 = vmul.f32 %v9146, %v9146
      %v9179 = vmul.f32 %v9147, %v9147
      %v9180 = vmul.f32 %v9148, %v9148
      %v9181 = vmul.f32 %v9149, %v9149
      %v9182 = vmul.f32 %v9150, %v9150
      %v9183 = vmul.f32 %v9151, %v9151
      %v9184 = vmul.f32 %v9152, %v9152
      %v9185 = vmul.f32 %v9153, %v9153
      %v9186 = vmul.f32 %v9154, %v9154
      %v9187 = vmul.f32 %v9155, %v9155
      %v9188 = vmul.f32 %v9156, %v9156
      %v9189 = vmul.f32 %v9157, %v9157
      %v9190 = vmul.f32 %v9158, %v9158
      %v9191 = vsel %vm1282, %v9159, 0.0
      %v9192 = vsel %vm1282, %v9160, 0.0
      %v9193 = vadd.f32 %v9191, %v9192
      %v9194 = vsel %vm1282, %v9161, 0.0
      %v9195 = vadd.f32 %v9193, %v9194
      %v9196 = vsel %vm1282, %v9162, 0.0
      %v9197 = vadd.f32 %v9195, %v9196
      %v9198 = vsel %vm1282, %v9163, 0.0
      %v9199 = vadd.f32 %v9197, %v9198
      %v9200 = vsel %vm1282, %v9164, 0.0
      %v9201 = vadd.f32 %v9199, %v9200
      %v9202 = vsel %vm1282, %v9165, 0.0
      %v9203 = vadd.f32 %v9201, %v9202
      %v9204 = vsel %vm1282, %v9166, 0.0
      %v9205 = vadd.f32 %v9203, %v9204
      %v9206 = vsel %vm1282, %v9167, 0.0
      %v9207 = vadd.f32 %v9205, %v9206
      %v9208 = vsel %vm1282, %v9168, 0.0
      %v9209 = vadd.f32 %v9207, %v9208
      %v9210 = vsel %vm1282, %v9169, 0.0
      %v9211 = vadd.f32 %v9209, %v9210
      %v9212 = vsel %vm1282, %v9170, 0.0
      %v9213 = vadd.f32 %v9211, %v9212
      %v9214 = vsel %vm1282, %v9171, 0.0
      %v9215 = vadd.f32 %v9213, %v9214
      %v9216 = vsel %vm1282, %v9172, 0.0
      %v9217 = vadd.f32 %v9215, %v9216
      %v9218 = vsel %vm1282, %v9173, 0.0
      %v9219 = vadd.f32 %v9217, %v9218
      %v9220 = vsel %vm1282, %v9174, 0.0
      %v9221 = vadd.f32 %v9219, %v9220
      %v9222 = vsel %vm1282, %v9175, 0.0
      %v9223 = vadd.f32 %v9221, %v9222
      %v9224 = vsel %vm1282, %v9176, 0.0
      %v9225 = vadd.f32 %v9223, %v9224
      %v9226 = vsel %vm1282, %v9177, 0.0
      %v9227 = vadd.f32 %v9225, %v9226
      %v9228 = vsel %vm1282, %v9178, 0.0
      %v9229 = vadd.f32 %v9227, %v9228
      %v9230 = vsel %vm1282, %v9179, 0.0
      %v9231 = vadd.f32 %v9229, %v9230
      %v9232 = vsel %vm1282, %v9180, 0.0
      %v9233 = vadd.f32 %v9231, %v9232
      %v9234 = vsel %vm1282, %v9181, 0.0
      %v9235 = vadd.f32 %v9233, %v9234
      %v9236 = vsel %vm1282, %v9182, 0.0
      %v9237 = vadd.f32 %v9235, %v9236
      %v9238 = vsel %vm1282, %v9183, 0.0
      %v9239 = vadd.f32 %v9237, %v9238
      %v9240 = vsel %vm1282, %v9184, 0.0
      %v9241 = vadd.f32 %v9239, %v9240
      %v9242 = vsel %vm1282, %v9185, 0.0
      %v9243 = vadd.f32 %v9241, %v9242
      %v9244 = vsel %vm1282, %v9186, 0.0
      %v9245 = vadd.f32 %v9243, %v9244
      %v9246 = vsel %vm1282, %v9187, 0.0
      %v9247 = vadd.f32 %v9245, %v9246
      %v9248 = vsel %vm1282, %v9188, 0.0
      %v9249 = vadd.f32 %v9247, %v9248
      %v9250 = vsel %vm1282, %v9189, 0.0
      %v9251 = vadd.f32 %v9249, %v9250
      %v9252 = vsel %vm1282, %v9190, 0.0
      %v9253 = vadd.f32 %v9251, %v9252
      %v9254 = vrot.slane %v9253, 4
      %v9255 = vadd.f32 %v9253, %v9254
      %v9256 = vrot.slane %v9255, 2
      %v9257 = vadd.f32 %v9255, %v9256
      %v9258 = vrot.slane %v9257, 1
      %v9259 = vadd.f32 %v9257, %v9258
      %v9260 = vmul.f32 %v9259, %v4595
      %v9261 = vadd.f32 %v9260, 1e-05
      %v9262 = vrsqrt.pop %v9261
      %v9263 = vmul.f32 %v9127, %v9262
      %v9264 = vmul.f32 %v9128, %v9262
      %v9265 = vmul.f32 %v9129, %v9262
      %v9266 = vmul.f32 %v9130, %v9262
      %v9267 = vmul.f32 %v9131, %v9262
      %v9268 = vmul.f32 %v9132, %v9262
      %v9269 = vmul.f32 %v9133, %v9262
      %v9270 = vmul.f32 %v9134, %v9262
      %v9271 = vmul.f32 %v9135, %v9262
      %v9272 = vmul.f32 %v9136, %v9262
      %v9273 = vmul.f32 %v9137, %v9262
      %v9274 = vmul.f32 %v9138, %v9262
      %v9275 = vmul.f32 %v9139, %v9262
      %v9276 = vmul.f32 %v9140, %v9262
      %v9277 = vmul.f32 %v9141, %v9262
      %v9278 = vmul.f32 %v9142, %v9262
      %v9279 = vmul.f32 %v9143, %v9262
      %v9280 = vmul.f32 %v9144, %v9262
      %v9281 = vmul.f32 %v9145, %v9262
      %v9282 = vmul.f32 %v9146, %v9262
      %v9283 = vmul.f32 %v9147, %v9262
      %v9284 = vmul.f32 %v9148, %v9262
      %v9285 = vmul.f32 %v9149, %v9262
      %v9286 = vmul.f32 %v9150, %v9262
      %v9287 = vmul.f32 %v9151, %v9262
      %v9288 = vmul.f32 %v9152, %v9262
      %v9289 = vmul.f32 %v9153, %v9262
      %v9290 = vmul.f32 %v9154, %v9262
      %v9291 = vmul.f32 %v9155, %v9262
      %v9292 = vmul.f32 %v9156, %v9262
      %v9293 = vmul.f32 %v9157, %v9262
      %v9294 = vmul.f32 %v9158, %v9262
      %v9296 = vlaneseq
      %v9297 = vshrl.u32 %v9296, 7
      %v9298 = vsub.s32 0, %v9297
      %v9299 = vrot.slane %v9055, %v9298
      %v9301 = vmul.f32 %v9263, %v9299
      %v9302 = vmul.f32 %v9264, %v9299
      %v9303 = vmul.f32 %v9265, %v9299
      %v9304 = vmul.f32 %v9266, %v9299
      %v9305 = vmul.f32 %v9267, %v9299
      %v9306 = vmul.f32 %v9268, %v9299
      %v9307 = vmul.f32 %v9269, %v9299
      %v9308 = vmul.f32 %v9270, %v9299
      %v9309 = vmul.f32 %v9271, %v9299
      %v9310 = vmul.f32 %v9272, %v9299
      %v9311 = vmul.f32 %v9273, %v9299
      %v9312 = vmul.f32 %v9274, %v9299
      %v9313 = vmul.f32 %v9275, %v9299
      %v9314 = vmul.f32 %v9276, %v9299
      %v9315 = vmul.f32 %v9277, %v9299
      %v9316 = vmul.f32 %v9278, %v9299
      %v9317 = vmul.f32 %v9279, %v9299
      %v9318 = vmul.f32 %v9280, %v9299
      %v9319 = vmul.f32 %v9281, %v9299
      %v9320 = vmul.f32 %v9282, %v9299
      %v9321 = vmul.f32 %v9283, %v9299
      %v9322 = vmul.f32 %v9284, %v9299
      %v9323 = vmul.f32 %v9285, %v9299
      %v9324 = vmul.f32 %v9286, %v9299
      %v9325 = vmul.f32 %v9287, %v9299
      %v9326 = vmul.f32 %v9288, %v9299
      %v9327 = vmul.f32 %v9289, %v9299
      %v9328 = vmul.f32 %v9290, %v9299
      %v9329 = vmul.f32 %v9291, %v9299
      %v9330 = vmul.f32 %v9292, %v9299
      %v9331 = vmul.f32 %v9293, %v9299
      %v9332 = vmul.f32 %v9294, %v9299
      %v9334 = vlaneseq
      %v9335 = vshrl.u32 %v9334, 7
      %v9336 = vsub.s32 0, %v9335
      %v9337 = vrot.slane %v9056, %v9336
      %v9339 = vadd.f32 %v9301, %v9337
      %v9340 = vadd.f32 %v9302, %v9337
      %v9341 = vadd.f32 %v9303, %v9337
      %v9342 = vadd.f32 %v9304, %v9337
      %v9343 = vadd.f32 %v9305, %v9337
      %v9344 = vadd.f32 %v9306, %v9337
      %v9345 = vadd.f32 %v9307, %v9337
      %v9346 = vadd.f32 %v9308, %v9337
      %v9347 = vadd.f32 %v9309, %v9337
      %v9348 = vadd.f32 %v9310, %v9337
      %v9349 = vadd.f32 %v9311, %v9337
      %v9350 = vadd.f32 %v9312, %v9337
      %v9351 = vadd.f32 %v9313, %v9337
      %v9352 = vadd.f32 %v9314, %v9337
      %v9353 = vadd.f32 %v9315, %v9337
      %v9354 = vadd.f32 %v9316, %v9337
      %v9355 = vadd.f32 %v9317, %v9337
      %v9356 = vadd.f32 %v9318, %v9337
      %v9357 = vadd.f32 %v9319, %v9337
      %v9358 = vadd.f32 %v9320, %v9337
      %v9359 = vadd.f32 %v9321, %v9337
      %v9360 = vadd.f32 %v9322, %v9337
      %v9361 = vadd.f32 %v9323, %v9337
      %v9362 = vadd.f32 %v9324, %v9337
      %v9363 = vadd.f32 %v9325, %v9337
      %v9364 = vadd.f32 %v9326, %v9337
      %v9365 = vadd.f32 %v9327, %v9337
      %v9366 = vadd.f32 %v9328, %v9337
      %v9367 = vadd.f32 %v9329, %v9337
      %v9368 = vadd.f32 %v9330, %v9337
      %v9369 = vadd.f32 %v9331, %v9337
      %v9370 = vadd.f32 %v9332, %v9337
      %v9371 = vld [vmem:[%s273] sm:$0xff]
      %v9372 = vld [vmem:[%s273 + $0x8] sm:$0xff]
      %v9373 = vld [vmem:[%s273 + $0x10] sm:$0xff]
      %v9374 = vld [vmem:[%s273 + $0x18] sm:$0xff]
      %v9375 = vld [vmem:[%s273 + $0x20] sm:$0xff]
      %v9376 = vld [vmem:[%s273 + $0x28] sm:$0xff]
      %v9377 = vld [vmem:[%s273 + $0x30] sm:$0xff]
      %v9378 = vld [vmem:[%s273 + $0x38] sm:$0xff]
      %v9379 = vld [vmem:[%s273 + $0x40] sm:$0xff]
      %v9380 = vld [vmem:[%s273 + $0x48] sm:$0xff]
      %v9381 = vld [vmem:[%s273 + $0x50] sm:$0xff]
      %v9382 = vld [vmem:[%s273 + $0x58] sm:$0xff]
      %v9383 = vld [vmem:[%s273 + $0x60] sm:$0xff]
      %v9384 = vld [vmem:[%s273 + $0x68] sm:$0xff]
      %v9385 = vld [vmem:[%s273 + $0x70] sm:$0xff]
      %v9386 = vld [vmem:[%s273 + $0x78] sm:$0xff]
      %v9387 = vld [vmem:[%s273 + $0x80] sm:$0xff]
      %v9388 = vld [vmem:[%s273 + $0x88] sm:$0xff]
      %v9389 = vld [vmem:[%s273 + $0x90] sm:$0xff]
      %v9390 = vld [vmem:[%s273 + $0x98] sm:$0xff]
      %v9391 = vld [vmem:[%s273 + $0xa0] sm:$0xff]
      %v9392 = vld [vmem:[%s273 + $0xa8] sm:$0xff]
      %v9393 = vld [vmem:[%s273 + $0xb0] sm:$0xff]
      %v9394 = vld [vmem:[%s273 + $0xb8] sm:$0xff]
      %v9395 = vld [vmem:[%s273 + $0xc0] sm:$0xff]
      %v9396 = vld [vmem:[%s273 + $0xc8] sm:$0xff]
      %v9397 = vld [vmem:[%s273 + $0xd0] sm:$0xff]
      %v9398 = vld [vmem:[%s273 + $0xd8] sm:$0xff]
      %v9399 = vld [vmem:[%s273 + $0xe0] sm:$0xff]
      %v9400 = vld [vmem:[%s273 + $0xe8] sm:$0xff]
      %v9401 = vld [vmem:[%s273 + $0xf0] sm:$0xff]
      %v9402 = vld [vmem:[%s273 + $0xf8] sm:$0xff]
      %v9403 = vadd.f32 %v9339, %v9371
      %v9404 = vadd.f32 %v9340, %v9372
      %v9405 = vadd.f32 %v9341, %v9373
      %v9406 = vadd.f32 %v9342, %v9374
      %v9407 = vadd.f32 %v9343, %v9375
      %v9408 = vadd.f32 %v9344, %v9376
      %v9409 = vadd.f32 %v9345, %v9377
      %v9410 = vadd.f32 %v9346, %v9378
      %v9411 = vadd.f32 %v9347, %v9379
      %v9412 = vadd.f32 %v9348, %v9380
      %v9413 = vadd.f32 %v9349, %v9381
      %v9414 = vadd.f32 %v9350, %v9382
      %v9415 = vadd.f32 %v9351, %v9383
      %v9416 = vadd.f32 %v9352, %v9384
      %v9417 = vadd.f32 %v9353, %v9385
      %v9418 = vadd.f32 %v9354, %v9386
      %v9419 = vadd.f32 %v9355, %v9387
      %v9420 = vadd.f32 %v9356, %v9388
      %v9421 = vadd.f32 %v9357, %v9389
      %v9422 = vadd.f32 %v9358, %v9390
      %v9423 = vadd.f32 %v9359, %v9391
      %v9424 = vadd.f32 %v9360, %v9392
      %v9425 = vadd.f32 %v9361, %v9393
      %v9426 = vadd.f32 %v9362, %v9394
      %v9427 = vadd.f32 %v9363, %v9395
      %v9428 = vadd.f32 %v9364, %v9396
      %v9429 = vadd.f32 %v9365, %v9397
      %v9430 = vadd.f32 %v9366, %v9398
      %v9431 = vadd.f32 %v9367, %v9399
      %v9432 = vadd.f32 %v9368, %v9400
      %v9433 = vadd.f32 %v9369, %v9401
      %v9434 = vadd.f32 %v9370, %v9402
      %9435 = vst.msk [vmem:[%s278] sm:$0xff] %vm1282, %v9403
      %9436 = vst.msk [vmem:[%s278 + $0x8] sm:$0xff] %vm1282, %v9404
      %9437 = vst.msk [vmem:[%s278 + $0x10] sm:$0xff] %vm1282, %v9405
      %9438 = vst.msk [vmem:[%s278 + $0x18] sm:$0xff] %vm1282, %v9406
      %9439 = vst.msk [vmem:[%s278 + $0x20] sm:$0xff] %vm1282, %v9407
      %9440 = vst.msk [vmem:[%s278 + $0x28] sm:$0xff] %vm1282, %v9408
      %9441 = vst.msk [vmem:[%s278 + $0x30] sm:$0xff] %vm1282, %v9409
      %9442 = vst.msk [vmem:[%s278 + $0x38] sm:$0xff] %vm1282, %v9410
      %9443 = vst.msk [vmem:[%s278 + $0x40] sm:$0xff] %vm1282, %v9411
      %9444 = vst.msk [vmem:[%s278 + $0x48] sm:$0xff] %vm1282, %v9412
      %9445 = vst.msk [vmem:[%s278 + $0x50] sm:$0xff] %vm1282, %v9413
      %9446 = vst.msk [vmem:[%s278 + $0x58] sm:$0xff] %vm1282, %v9414
      %9447 = vst.msk [vmem:[%s278 + $0x60] sm:$0xff] %vm1282, %v9415
      %9448 = vst.msk [vmem:[%s278 + $0x68] sm:$0xff] %vm1282, %v9416
      %9449 = vst.msk [vmem:[%s278 + $0x70] sm:$0xff] %vm1282, %v9417
      %9450 = vst.msk [vmem:[%s278 + $0x78] sm:$0xff] %vm1282, %v9418
      %9451 = vst.msk [vmem:[%s278 + $0x80] sm:$0xff] %vm1282, %v9419
      %9452 = vst.msk [vmem:[%s278 + $0x88] sm:$0xff] %vm1282, %v9420
      %9453 = vst.msk [vmem:[%s278 + $0x90] sm:$0xff] %vm1282, %v9421
      %9454 = vst.msk [vmem:[%s278 + $0x98] sm:$0xff] %vm1282, %v9422
      %9455 = vst.msk [vmem:[%s278 + $0xa0] sm:$0xff] %vm1282, %v9423
      %9456 = vst.msk [vmem:[%s278 + $0xa8] sm:$0xff] %vm1282, %v9424
      %9457 = vst.msk [vmem:[%s278 + $0xb0] sm:$0xff] %vm1282, %v9425
      %9458 = vst.msk [vmem:[%s278 + $0xb8] sm:$0xff] %vm1282, %v9426
      %9459 = vst.msk [vmem:[%s278 + $0xc0] sm:$0xff] %vm1282, %v9427
      %9460 = vst.msk [vmem:[%s278 + $0xc8] sm:$0xff] %vm1282, %v9428
      %9461 = vst.msk [vmem:[%s278 + $0xd0] sm:$0xff] %vm1282, %v9429
      %9462 = vst.msk [vmem:[%s278 + $0xd8] sm:$0xff] %vm1282, %v9430
      %9463 = vst.msk [vmem:[%s278 + $0xe0] sm:$0xff] %vm1282, %v9431
      %9464 = vst.msk [vmem:[%s278 + $0xe8] sm:$0xff] %vm1282, %v9432
      %9465 = vst.msk [vmem:[%s278 + $0xf0] sm:$0xff] %vm1282, %v9433
      %9466 = vst.msk [vmem:[%s278 + $0xf8] sm:$0xff] %vm1282, %v9434
      %p9467 = scmp.lt.s32.totalorder %s18, 1
      %s9468 = scalar_select %p9467, %s18, 1
      %s9469 = smul.addr %s9468, 32
      %s9470 = smul.addr %s9469, 8
      %s9471 = scalar_lea.vmem %s7, %s9470
      // Predicated region
      $region49: #{tpu_custom_call.1} parent=47 // pred_check
        %p9472 = pneg %p188
      $region50: #{tpu_custom_call.1} parent=47 // pred_check_branch
        %9474 = sbr.rel (%p9472) target = $region52
      $region51: #{tpu_custom_call.1} parent=47 // pred_region
        _
      $region52: #{tpu_custom_call.1} parent=47 // pred_fallthru
        _
    $region48: #{tpu_custom_call.1} parent=5 // pred_fallthru
      _
    %p9475 = scmp.le.s32.totalorder 2, %s13
    // Predicated region
    $region53: #{tpu_custom_call.1} parent=5 // pred_check
      %p9476 = pneg %p9475
    $region54: #{tpu_custom_call.1} parent=5 // pred_check_branch
      %9478 = sbr.rel (%p9476) target = $region56
    $region55: #{tpu_custom_call.1} parent=5 // pred_region
      %s9479 = ssub.s32 %s13, 2
      // Predicated region
      $region57: #{tpu_custom_call.1} parent=55 // pred_check
        %p9480 = pneg %p194
      $region58: #{tpu_custom_call.1} parent=55 // pred_check_branch
        %9482 = sbr.rel (%p9480) target = $region60
      $region59: #{tpu_custom_call.1} parent=55 // pred_region
        %p9483 = scmp.lt.s32.totalorder %s19, 1
        %s9484 = scalar_select %p9483, %s19, 1
        %s9485 = smul.addr %s9484, 32
        %s9486 = smul.addr %s9485, 8
        %s9487 = scalar_lea.vmem %s7, %s9486
      $region60: #{tpu_custom_call.1} parent=55 // pred_fallthru
        _
    $region56: #{tpu_custom_call.1} parent=5 // pred_fallthru
      _
  $region6: #{tpu_custom_call.1} parent=0 // loop_footer
    %s17 = sadd.s32 1, %s13
  $region7: #{tpu_custom_call.1} parent=0 // loop_footer_branch
    %12 = sbr.rel target = $region3
  $region8: #{tpu_custom_call.1} parent=0 // loop_exit
    _

</llo_original>
